<compile_context>
chip_gen: v7x
topology: tpu7x:2x2x1
jax: 0.10.0
libtpu: 0.0.40
codegen_flags: <defaults>
</compile_context>

<pallas_src>
import functools

import jax
import jax.numpy as jnp
from jax import lax
from jax.experimental import pallas as pl
from jax.experimental.pallas import tpu as pltpu


def _round_up(v, m):
    return ((v + m - 1) // m) * m


# ---------------------------------------------------------------------------
# Pallas kernel: one batch element per grid step, (C, S) lane-dense tiles.
# ---------------------------------------------------------------------------
def _depth_gating_kernel(D, H, W, KS, P,
                         x_ref, w1_ref, b1_ref, w0_ref, b0_ref,
                         wd_ref, bd_ref, hpos_ref, wpos_ref,
                         o_ref, zp_ref):
    pad = (KS - 1) // 2
    C, S = o_ref.shape

    x = x_ref[...].astype(jnp.float32)                         # (C, S)

    # ---- pointwise 1x1x1 convs (channel mixing) on the MXU ----------------
    x1 = jnp.dot(w1_ref[...], x, preferred_element_type=jnp.float32) + b1_ref[...]
    z = jnp.dot(w0_ref[...], x, preferred_element_type=jnp.float32) + b0_ref[...]

    # ---- depthwise KSxKSxKS conv via shifted reads of a zero-padded copy --
    # zp[:, P:P+S] = z, zeros elsewhere.  A tap at spatial offset
    # (dd, dh, dw) is the static slice zp[:, P+off : P+off+S] with
    # off = dd*H*W + dh*W + dw.  Out-of-range D offsets land in the zero pad;
    # out-of-range H/W offsets are killed by the per-(dh,dw) validity mask.
    zp_ref[...] = jnp.zeros(zp_ref.shape, jnp.float32)
    zp_ref[:, P:P + S] = z

    h_pos = hpos_ref[...]                                       # (1, S) int32
    w_pos = wpos_ref[...]                                       # (1, S) int32
    wd = wd_ref[...].astype(jnp.float32)                        # (C, KS**3)

    acc = jnp.zeros((C, S), jnp.float32)
    for kh in range(KS):
        dh = kh - pad
        for kw in range(KS):
            dw = kw - pad
            grp = jnp.zeros((C, S), jnp.float32)
            for kd in range(KS):
                dd = kd - pad
                off = dd * H * W + dh * W + dw
                tap = zp_ref[:, P + off:P + off + S]            # (C, S)
                widx = (kd * KS + kh) * KS + kw
                grp = grp + wd[:, widx:widx + 1] * tap
            valid = ((h_pos + dh >= 0) & (h_pos + dh < H) &
                     (w_pos + dw >= 0) & (w_pos + dw < W))      # (1, S)
            acc = acc + jnp.where(valid, grp, 0.0)

    # ---- sigmoid gate (EUP exp) and gating multiply ------------------------
    u = acc + bd_ref[...]
    gate = 1.0 / (1.0 + jnp.exp(-u))
    o_ref[...] = (x1 * gate).astype(o_ref.dtype)


# ---------------------------------------------------------------------------
# Wrapper: layout plumbing (free reshapes) + pallas_call.
# ---------------------------------------------------------------------------
def depth_gating_forward(x, params, kernel_size=5):
    """x: (N, C, D, H, W) float32 -> (N, C, D, H, W)."""
    N, C, D, H, W = x.shape
    S = D * H * W
    KS = kernel_size
    pad = (KS - 1) // 2
    # Flattened-S zero-pad covering the largest tap offset, rounded up to a
    # lane multiple so the center store is 128-aligned.
    P = _round_up(pad * (H * W + W + 1), 128)

    x_flat = x.reshape(N, C, S)
    w1 = params["w1"].reshape(C, C).astype(jnp.float32)
    b1 = params["b1"].reshape(C, 1).astype(jnp.float32)
    w0 = params["w0"].reshape(C, C).astype(jnp.float32)
    b0 = params["b0"].reshape(C, 1).astype(jnp.float32)
    wd = params["wd"].reshape(C, KS * KS * KS).astype(jnp.float32)
    bd = params["bd"].reshape(C, 1).astype(jnp.float32)

    # Per-position h / w coordinates (precomputed so the kernel only does
    # compares, no in-kernel integer div/mod).
    s_idx = jnp.arange(S, dtype=jnp.int32)
    wpos = (s_idx % W).reshape(1, S)
    hpos = ((s_idx // W) % H).reshape(1, S)

    kernel = functools.partial(_depth_gating_kernel, D, H, W, KS, P)
    const = lambda n: (0, 0)

    out = pl.pallas_call(
        kernel,
        out_shape=jax.ShapeDtypeStruct((N, C, S), x.dtype),
        grid_spec=pltpu.PrefetchScalarGridSpec(
            num_scalar_prefetch=0,
            grid=(N,),
            in_specs=[
                pl.BlockSpec((None, C, S), lambda n: (n, 0, 0)),   # x
                pl.BlockSpec((C, C), const),                       # w1
                pl.BlockSpec((C, 1), const),                       # b1
                pl.BlockSpec((C, C), const),                       # w0
                pl.BlockSpec((C, 1), const),                       # b0
                pl.BlockSpec((C, KS * KS * KS), const),            # wd (depthwise)
                pl.BlockSpec((C, 1), const),                       # bd
                pl.BlockSpec((1, S), const),                       # h coords
                pl.BlockSpec((1, S), const),                       # w coords
            ],
            out_specs=pl.BlockSpec((None, C, S), lambda n: (n, 0, 0)),
            scratch_shapes=[pltpu.VMEM((C, S + 2 * P), jnp.float32)],
        ),
        compiler_params=pltpu.CompilerParams(
            dimension_semantics=("parallel",),
            vmem_limit_bytes=48 * 1024 * 1024,
        ),
    )(x_flat, w1, b1, w0, b0, wd, bd, hpos, wpos)

    return out.reshape(N, C, D, H, W)


# ---------------------------------------------------------------------------
# Pure-JAX reference (for correctness check only).
# ---------------------------------------------------------------------------
def depth_gating_reference(x, params, kernel_size=5):
    pad = (kernel_size - 1) // 2
    C = x.shape[1]
    dn = ("NCDHW", "OIDHW", "NCDHW")
    hi = lax.Precision.HIGHEST

    def conv(inp, w, b, padding, groups=1):
        out = lax.conv_general_dilated(
            inp, w, window_strides=(1, 1, 1), padding=padding,
            dimension_numbers=dn, feature_group_count=groups, precision=hi)
        return out + b.reshape(1, -1, 1, 1, 1)

    x1 = conv(x, params["w1"], params["b1"], [(0, 0)] * 3)
    z = conv(x, params["w0"], params["b0"], [(0, 0)] * 3)
    dw = conv(z, params["wd"], params["bd"], [(pad, pad)] * 3, groups=C)
    return x1 * jax.nn.sigmoid(dw)


# ---------------------------------------------------------------------------
if __name__ == "__main__":
    key = jax.random.PRNGKey(0)
    N, C = 2, 4
    D, H, W = 4, 8, 16
    KS = 5

    ks = jax.random.split(key, 7)
    x = jax.random.normal(ks[0], (N, C, D, H, W), jnp.float32)
    params = {
        "w1": 0.1 * jax.random.normal(ks[1], (C, C, 1, 1, 1), jnp.float32),
        "b1": 0.1 * jax.random.normal(ks[2], (C,), jnp.float32),
        "w0": 0.1 * jax.random.normal(ks[3], (C, C, 1, 1, 1), jnp.float32),
        "b0": 0.1 * jax.random.normal(ks[4], (C,), jnp.float32),
        "wd": 0.1 * jax.random.normal(ks[5], (C, 1, KS, KS, KS), jnp.float32),
        "bd": 0.1 * jax.random.normal(ks[6], (C,), jnp.float32),
    }

    fwd = jax.jit(functools.partial(depth_gating_forward, kernel_size=KS))
    out = fwd(x, params)
    jax.block_until_ready(out)

    assert out.shape == (N, C, D, H, W)
    assert bool(jnp.all(jnp.isfinite(out)))

    ref = depth_gating_reference(x, params, kernel_size=KS)
    err = float(jnp.max(jnp.abs(out - ref)))
    assert err < 2e-3, f"max abs err vs reference = {err}"

    print("KERNEL_OK")
</pallas_src>

<mosaic_0001>
module attributes {stable_mosaic.version = 11 : i64} {
  func.func @_depth_gating_kernel(%arg0: i32, %arg1: memref<1x4x512xf32, #tpu.memory_space<vmem>>, %arg2: memref<4x4xf32, #tpu.memory_space<vmem>>, %arg3: memref<4x1xf32, #tpu.memory_space<vmem>>, %arg4: memref<4x4xf32, #tpu.memory_space<vmem>>, %arg5: memref<4x1xf32, #tpu.memory_space<vmem>>, %arg6: memref<4x125xf32, #tpu.memory_space<vmem>>, %arg7: memref<4x1xf32, #tpu.memory_space<vmem>>, %arg8: memref<1x512xi32, #tpu.memory_space<vmem>>, %arg9: memref<1x512xi32, #tpu.memory_space<vmem>>, %arg10: memref<1x4x512xf32, #tpu.memory_space<vmem>>, %arg11: memref<4x1280xf32, #tpu.memory_space<vmem>>) attributes {dimension_semantics = [#tpu.dimension_semantics<parallel>], iteration_bounds = array<i64: 2>, scalar_prefetch = 0 : i64, scratch_operands = 1 : i64, tpu.core_type = #tpu.core_type<tc>, window_params = [{transform_indices = @transform_0, window_bounds = array<i64: 1, 4, 512>}, {pipeline_mode = #tpu.pipeline_mode<synchronous>, transform_indices = @transform_1, window_bounds = array<i64: 4, 4>}, {pipeline_mode = #tpu.pipeline_mode<synchronous>, transform_indices = @transform_2, window_bounds = array<i64: 4, 1>}, {pipeline_mode = #tpu.pipeline_mode<synchronous>, transform_indices = @transform_3, window_bounds = array<i64: 4, 4>}, {pipeline_mode = #tpu.pipeline_mode<synchronous>, transform_indices = @transform_4, window_bounds = array<i64: 4, 1>}, {pipeline_mode = #tpu.pipeline_mode<synchronous>, transform_indices = @transform_5, window_bounds = array<i64: 4, 125>}, {pipeline_mode = #tpu.pipeline_mode<synchronous>, transform_indices = @transform_6, window_bounds = array<i64: 4, 1>}, {pipeline_mode = #tpu.pipeline_mode<synchronous>, transform_indices = @transform_7, window_bounds = array<i64: 1, 512>}, {pipeline_mode = #tpu.pipeline_mode<synchronous>, transform_indices = @transform_8, window_bounds = array<i64: 1, 512>}, {transform_indices = @transform_9, window_bounds = array<i64: 1, 4, 512>}]} {
    %c0 = arith.constant 0 : index
    %c0_0 = arith.constant 0 : index
    %c0_1 = arith.constant 0 : index
    %0 = vector.load %arg1[%c0, %c0_0, %c0_1] : memref<1x4x512xf32, #tpu.memory_space<vmem>>, vector<1x4x512xf32>
    %1 = vector.shape_cast %0 : vector<1x4x512xf32> to vector<4x512xf32>
    %c0_2 = arith.constant 0 : index
    %c0_3 = arith.constant 0 : index
    %2 = vector.load %arg2[%c0_2, %c0_3] : memref<4x4xf32, #tpu.memory_space<vmem>>, vector<4x4xf32>
    %cst = arith.constant dense<0.000000e+00> : vector<4x512xf32>
    %3 = tpu.matmul %2, %1, %cst {dimension_numbers = #tpu.dot_dimension_numbers<[1], [0], [0], [1], [0, 0, 1, 1], [], []>} : vector<4x4xf32>, vector<4x512xf32>, vector<4x512xf32> -> vector<4x512xf32>
    %c0_4 = arith.constant 0 : index
    %c0_5 = arith.constant 0 : index
    %4 = vector.load %arg3[%c0_4, %c0_5] : memref<4x1xf32, #tpu.memory_space<vmem>>, vector<4x1xf32>
    %5 = vector.broadcast %4 : vector<4x1xf32> to vector<4x512xf32>
    %6 = arith.addf %3, %5 : vector<4x512xf32>
    %c0_6 = arith.constant 0 : index
    %c0_7 = arith.constant 0 : index
    %7 = vector.load %arg4[%c0_6, %c0_7] : memref<4x4xf32, #tpu.memory_space<vmem>>, vector<4x4xf32>
    %cst_8 = arith.constant dense<0.000000e+00> : vector<4x512xf32>
    %8 = tpu.matmul %7, %1, %cst_8 {dimension_numbers = #tpu.dot_dimension_numbers<[1], [0], [0], [1], [0, 0, 1, 1], [], []>} : vector<4x4xf32>, vector<4x512xf32>, vector<4x512xf32> -> vector<4x512xf32>
    %c0_9 = arith.constant 0 : index
    %c0_10 = arith.constant 0 : index
    %9 = vector.load %arg5[%c0_9, %c0_10] : memref<4x1xf32, #tpu.memory_space<vmem>>, vector<4x1xf32>
    %10 = vector.broadcast %9 : vector<4x1xf32> to vector<4x512xf32>
    %11 = arith.addf %8, %10 : vector<4x512xf32>
    %cst_11 = arith.constant 0.000000e+00 : f32
    %12 = vector.broadcast %cst_11 : f32 to vector<4x1280xf32>
    %c0_12 = arith.constant 0 : index
    %c0_13 = arith.constant 0 : index
    %13 = vector.load %arg11[%c0_12, %c0_13] : memref<4x1280xf32, #tpu.memory_space<vmem>>, vector<4x1280xf32>
    tpu.vector_store %arg11[%c0_12, %c0_13], %12 {strides = array<i32>} : memref<4x1280xf32, #tpu.memory_space<vmem>>, vector<4x1280xf32>,
    %c0_14 = arith.constant 0 : index
    %c384 = arith.constant 384 : index
    %14 = vector.load %arg11[%c0_14, %c384] : memref<4x1280xf32, #tpu.memory_space<vmem>>, vector<4x512xf32>
    tpu.vector_store %arg11[%c0_14, %c384], %11 {strides = array<i32>} : memref<4x1280xf32, #tpu.memory_space<vmem>>, vector<4x512xf32>,
    %c0_15 = arith.constant 0 : index
    %c0_16 = arith.constant 0 : index
    %15 = vector.load %arg8[%c0_15, %c0_16] : memref<1x512xi32, #tpu.memory_space<vmem>>, vector<1x512xi32>
    %c0_17 = arith.constant 0 : index
    %c0_18 = arith.constant 0 : index
    %16 = vector.load %arg9[%c0_17, %c0_18] : memref<1x512xi32, #tpu.memory_space<vmem>>, vector<1x512xi32>
    %c0_19 = arith.constant 0 : index
    %c0_20 = arith.constant 0 : index
    %17 = vector.load %arg6[%c0_19, %c0_20] : memref<4x125xf32, #tpu.memory_space<vmem>>, vector<4x125xf32>
    %cst_21 = arith.constant 0.000000e+00 : f32
    %18 = vector.broadcast %cst_21 : f32 to vector<4x512xf32>
    %cst_22 = arith.constant 0.000000e+00 : f32
    %19 = vector.broadcast %cst_22 : f32 to vector<4x512xf32>
    %c0_23 = arith.constant 0 : index
    %c94 = arith.constant 94 : index
    %20 = vector.load %arg11[%c0_23, %c94] : memref<4x1280xf32, #tpu.memory_space<vmem>>, vector<4x512xf32>
    %21 = vector.extract_strided_slice %17 {offsets = [0, 0], sizes = [4, 1], strides = [1, 1]} : vector<4x125xf32> to vector<4x1xf32>
    %22 = vector.broadcast %21 : vector<4x1xf32> to vector<4x512xf32>
    %23 = arith.mulf %22, %20 : vector<4x512xf32>
    %24 = arith.addf %19, %23 : vector<4x512xf32>
    %c0_24 = arith.constant 0 : index
    %c222 = arith.constant 222 : index
    %25 = vector.load %arg11[%c0_24, %c222] : memref<4x1280xf32, #tpu.memory_space<vmem>>, vector<4x512xf32>
    %26 = vector.extract_strided_slice %17 {offsets = [0, 25], sizes = [4, 1], strides = [1, 1]} : vector<4x125xf32> to vector<4x1xf32>
    %27 = vector.broadcast %26 : vector<4x1xf32> to vector<4x512xf32>
    %28 = arith.mulf %27, %25 : vector<4x512xf32>
    %29 = arith.addf %24, %28 : vector<4x512xf32>
    %c0_25 = arith.constant 0 : index
    %c350 = arith.constant 350 : index
    %30 = vector.load %arg11[%c0_25, %c350] : memref<4x1280xf32, #tpu.memory_space<vmem>>, vector<4x512xf32>
    %31 = vector.extract_strided_slice %17 {offsets = [0, 50], sizes = [4, 1], strides = [1, 1]} : vector<4x125xf32> to vector<4x1xf32>
    %32 = vector.broadcast %31 : vector<4x1xf32> to vector<4x512xf32>
    %33 = arith.mulf %32, %30 : vector<4x512xf32>
    %34 = arith.addf %29, %33 : vector<4x512xf32>
    %c0_26 = arith.constant 0 : index
    %c478 = arith.constant 478 : index
    %35 = vector.load %arg11[%c0_26, %c478] : memref<4x1280xf32, #tpu.memory_space<vmem>>, vector<4x512xf32>
    %36 = vector.extract_strided_slice %17 {offsets = [0, 75], sizes = [4, 1], strides = [1, 1]} : vector<4x125xf32> to vector<4x1xf32>
    %37 = vector.broadcast %36 : vector<4x1xf32> to vector<4x512xf32>
    %38 = arith.mulf %37, %35 : vector<4x512xf32>
    %39 = arith.addf %34, %38 : vector<4x512xf32>
    %c0_27 = arith.constant 0 : index
    %c606 = arith.constant 606 : index
    %40 = vector.load %arg11[%c0_27, %c606] : memref<4x1280xf32, #tpu.memory_space<vmem>>, vector<4x512xf32>
    %41 = vector.extract_strided_slice %17 {offsets = [0, 100], sizes = [4, 1], strides = [1, 1]} : vector<4x125xf32> to vector<4x1xf32>
    %42 = vector.broadcast %41 : vector<4x1xf32> to vector<4x512xf32>
    %43 = arith.mulf %42, %40 : vector<4x512xf32>
    %44 = arith.addf %39, %43 : vector<4x512xf32>
    %c-2_i32 = arith.constant -2 : i32
    %45 = vector.broadcast %c-2_i32 : i32 to vector<1x512xi32>
    %46 = arith.addi %15, %45 : vector<1x512xi32>
    %c0_i32 = arith.constant 0 : i32
    %47 = vector.broadcast %c0_i32 : i32 to vector<1x512xi32>
    %48 = arith.cmpi sge, %46, %47 : vector<1x512xi32>
    %c-2_i32_28 = arith.constant -2 : i32
    %49 = vector.broadcast %c-2_i32_28 : i32 to vector<1x512xi32>
    %50 = arith.addi %15, %49 : vector<1x512xi32>
    %c8_i32 = arith.constant 8 : i32
    %51 = vector.broadcast %c8_i32 : i32 to vector<1x512xi32>
    %52 = arith.cmpi slt, %50, %51 : vector<1x512xi32>
    %53 = arith.andi %48, %52 : vector<1x512xi1>
    %c-2_i32_29 = arith.constant -2 : i32
    %54 = vector.broadcast %c-2_i32_29 : i32 to vector<1x512xi32>
    %55 = arith.addi %16, %54 : vector<1x512xi32>
    %c0_i32_30 = arith.constant 0 : i32
    %56 = vector.broadcast %c0_i32_30 : i32 to vector<1x512xi32>
    %57 = arith.cmpi sge, %55, %56 : vector<1x512xi32>
    %58 = arith.andi %53, %57 : vector<1x512xi1>
    %c-2_i32_31 = arith.constant -2 : i32
    %59 = vector.broadcast %c-2_i32_31 : i32 to vector<1x512xi32>
    %60 = arith.addi %16, %59 : vector<1x512xi32>
    %c16_i32 = arith.constant 16 : i32
    %61 = vector.broadcast %c16_i32 : i32 to vector<1x512xi32>
    %62 = arith.cmpi slt, %60, %61 : vector<1x512xi32>
    %63 = arith.andi %58, %62 : vector<1x512xi1>
    %cst_32 = arith.constant 0.000000e+00 : f32
    %64 = vector.shape_cast %63 : vector<1x512xi1> to vector<1x512xi1>
    %65 = vector.broadcast %64 : vector<1x512xi1> to vector<4x512xi1>
    %66 = vector.broadcast %cst_32 : f32 to vector<4x512xf32>
    %67 = arith.select %65, %44, %66 : vector<4x512xi1>, vector<4x512xf32>
    %68 = arith.addf %18, %67 : vector<4x512xf32>
    %cst_33 = arith.constant 0.000000e+00 : f32
    %69 = vector.broadcast %cst_33 : f32 to vector<4x512xf32>
    %c0_34 = arith.constant 0 : index
    %c95 = arith.constant 95 : index
    %70 = vector.load %arg11[%c0_34, %c95] : memref<4x1280xf32, #tpu.memory_space<vmem>>, vector<4x512xf32>
    %71 = vector.extract_strided_slice %17 {offsets = [0, 1], sizes = [4, 1], strides = [1, 1]} : vector<4x125xf32> to vector<4x1xf32>
    %72 = vector.broadcast %71 : vector<4x1xf32> to vector<4x512xf32>
    %73 = arith.mulf %72, %70 : vector<4x512xf32>
    %74 = arith.addf %69, %73 : vector<4x512xf32>
    %c0_35 = arith.constant 0 : index
    %c223 = arith.constant 223 : index
    %75 = vector.load %arg11[%c0_35, %c223] : memref<4x1280xf32, #tpu.memory_space<vmem>>, vector<4x512xf32>
    %76 = vector.extract_strided_slice %17 {offsets = [0, 26], sizes = [4, 1], strides = [1, 1]} : vector<4x125xf32> to vector<4x1xf32>
    %77 = vector.broadcast %76 : vector<4x1xf32> to vector<4x512xf32>
    %78 = arith.mulf %77, %75 : vector<4x512xf32>
    %79 = arith.addf %74, %78 : vector<4x512xf32>
    %c0_36 = arith.constant 0 : index
    %c351 = arith.constant 351 : index
    %80 = vector.load %arg11[%c0_36, %c351] : memref<4x1280xf32, #tpu.memory_space<vmem>>, vector<4x512xf32>
    %81 = vector.extract_strided_slice %17 {offsets = [0, 51], sizes = [4, 1], strides = [1, 1]} : vector<4x125xf32> to vector<4x1xf32>
    %82 = vector.broadcast %81 : vector<4x1xf32> to vector<4x512xf32>
    %83 = arith.mulf %82, %80 : vector<4x512xf32>
    %84 = arith.addf %79, %83 : vector<4x512xf32>
    %c0_37 = arith.constant 0 : index
    %c479 = arith.constant 479 : index
    %85 = vector.load %arg11[%c0_37, %c479] : memref<4x1280xf32, #tpu.memory_space<vmem>>, vector<4x512xf32>
    %86 = vector.extract_strided_slice %17 {offsets = [0, 76], sizes = [4, 1], strides = [1, 1]} : vector<4x125xf32> to vector<4x1xf32>
    %87 = vector.broadcast %86 : vector<4x1xf32> to vector<4x512xf32>
    %88 = arith.mulf %87, %85 : vector<4x512xf32>
    %89 = arith.addf %84, %88 : vector<4x512xf32>
    %c0_38 = arith.constant 0 : index
    %c607 = arith.constant 607 : index
    %90 = vector.load %arg11[%c0_38, %c607] : memref<4x1280xf32, #tpu.memory_space<vmem>>, vector<4x512xf32>
    %91 = vector.extract_strided_slice %17 {offsets = [0, 101], sizes = [4, 1], strides = [1, 1]} : vector<4x125xf32> to vector<4x1xf32>
    %92 = vector.broadcast %91 : vector<4x1xf32> to vector<4x512xf32>
    %93 = arith.mulf %92, %90 : vector<4x512xf32>
    %94 = arith.addf %89, %93 : vector<4x512xf32>
    %c-2_i32_39 = arith.constant -2 : i32
    %95 = vector.broadcast %c-2_i32_39 : i32 to vector<1x512xi32>
    %96 = arith.addi %15, %95 : vector<1x512xi32>
    %c0_i32_40 = arith.constant 0 : i32
    %97 = vector.broadcast %c0_i32_40 : i32 to vector<1x512xi32>
    %98 = arith.cmpi sge, %96, %97 : vector<1x512xi32>
    %c-2_i32_41 = arith.constant -2 : i32
    %99 = vector.broadcast %c-2_i32_41 : i32 to vector<1x512xi32>
    %100 = arith.addi %15, %99 : vector<1x512xi32>
    %c8_i32_42 = arith.constant 8 : i32
    %101 = vector.broadcast %c8_i32_42 : i32 to vector<1x512xi32>
    %102 = arith.cmpi slt, %100, %101 : vector<1x512xi32>
    %103 = arith.andi %98, %102 : vector<1x512xi1>
    %c-1_i32 = arith.constant -1 : i32
    %104 = vector.broadcast %c-1_i32 : i32 to vector<1x512xi32>
    %105 = arith.addi %16, %104 : vector<1x512xi32>
    %c0_i32_43 = arith.constant 0 : i32
    %106 = vector.broadcast %c0_i32_43 : i32 to vector<1x512xi32>
    %107 = arith.cmpi sge, %105, %106 : vector<1x512xi32>
    %108 = arith.andi %103, %107 : vector<1x512xi1>
    %c-1_i32_44 = arith.constant -1 : i32
    %109 = vector.broadcast %c-1_i32_44 : i32 to vector<1x512xi32>
    %110 = arith.addi %16, %109 : vector<1x512xi32>
    %c16_i32_45 = arith.constant 16 : i32
    %111 = vector.broadcast %c16_i32_45 : i32 to vector<1x512xi32>
    %112 = arith.cmpi slt, %110, %111 : vector<1x512xi32>
    %113 = arith.andi %108, %112 : vector<1x512xi1>
    %cst_46 = arith.constant 0.000000e+00 : f32
    %114 = vector.shape_cast %113 : vector<1x512xi1> to vector<1x512xi1>
    %115 = vector.broadcast %114 : vector<1x512xi1> to vector<4x512xi1>
    %116 = vector.broadcast %cst_46 : f32 to vector<4x512xf32>
    %117 = arith.select %115, %94, %116 : vector<4x512xi1>, vector<4x512xf32>
    %118 = arith.addf %68, %117 : vector<4x512xf32>
    %cst_47 = arith.constant 0.000000e+00 : f32
    %119 = vector.broadcast %cst_47 : f32 to vector<4x512xf32>
    %c0_48 = arith.constant 0 : index
    %c96 = arith.constant 96 : index
    %120 = vector.load %arg11[%c0_48, %c96] : memref<4x1280xf32, #tpu.memory_space<vmem>>, vector<4x512xf32>
    %121 = vector.extract_strided_slice %17 {offsets = [0, 2], sizes = [4, 1], strides = [1, 1]} : vector<4x125xf32> to vector<4x1xf32>
    %122 = vector.broadcast %121 : vector<4x1xf32> to vector<4x512xf32>
    %123 = arith.mulf %122, %120 : vector<4x512xf32>
    %124 = arith.addf %119, %123 : vector<4x512xf32>
    %c0_49 = arith.constant 0 : index
    %c224 = arith.constant 224 : index
    %125 = vector.load %arg11[%c0_49, %c224] : memref<4x1280xf32, #tpu.memory_space<vmem>>, vector<4x512xf32>
    %126 = vector.extract_strided_slice %17 {offsets = [0, 27], sizes = [4, 1], strides = [1, 1]} : vector<4x125xf32> to vector<4x1xf32>
    %127 = vector.broadcast %126 : vector<4x1xf32> to vector<4x512xf32>
    %128 = arith.mulf %127, %125 : vector<4x512xf32>
    %129 = arith.addf %124, %128 : vector<4x512xf32>
    %c0_50 = arith.constant 0 : index
    %c352 = arith.constant 352 : index
    %130 = vector.load %arg11[%c0_50, %c352] : memref<4x1280xf32, #tpu.memory_space<vmem>>, vector<4x512xf32>
    %131 = vector.extract_strided_slice %17 {offsets = [0, 52], sizes = [4, 1], strides = [1, 1]} : vector<4x125xf32> to vector<4x1xf32>
    %132 = vector.broadcast %131 : vector<4x1xf32> to vector<4x512xf32>
    %133 = arith.mulf %132, %130 : vector<4x512xf32>
    %134 = arith.addf %129, %133 : vector<4x512xf32>
    %c0_51 = arith.constant 0 : index
    %c480 = arith.constant 480 : index
    %135 = vector.load %arg11[%c0_51, %c480] : memref<4x1280xf32, #tpu.memory_space<vmem>>, vector<4x512xf32>
    %136 = vector.extract_strided_slice %17 {offsets = [0, 77], sizes = [4, 1], strides = [1, 1]} : vector<4x125xf32> to vector<4x1xf32>
    %137 = vector.broadcast %136 : vector<4x1xf32> to vector<4x512xf32>
    %138 = arith.mulf %137, %135 : vector<4x512xf32>
    %139 = arith.addf %134, %138 : vector<4x512xf32>
    %c0_52 = arith.constant 0 : index
    %c608 = arith.constant 608 : index
    %140 = vector.load %arg11[%c0_52, %c608] : memref<4x1280xf32, #tpu.memory_space<vmem>>, vector<4x512xf32>
    %141 = vector.extract_strided_slice %17 {offsets = [0, 102], sizes = [4, 1], strides = [1, 1]} : vector<4x125xf32> to vector<4x1xf32>
    %142 = vector.broadcast %141 : vector<4x1xf32> to vector<4x512xf32>
    %143 = arith.mulf %142, %140 : vector<4x512xf32>
    %144 = arith.addf %139, %143 : vector<4x512xf32>
    %c-2_i32_53 = arith.constant -2 : i32
    %145 = vector.broadcast %c-2_i32_53 : i32 to vector<1x512xi32>
    %146 = arith.addi %15, %145 : vector<1x512xi32>
    %c0_i32_54 = arith.constant 0 : i32
    %147 = vector.broadcast %c0_i32_54 : i32 to vector<1x512xi32>
    %148 = arith.cmpi sge, %146, %147 : vector<1x512xi32>
    %c-2_i32_55 = arith.constant -2 : i32
    %149 = vector.broadcast %c-2_i32_55 : i32 to vector<1x512xi32>
    %150 = arith.addi %15, %149 : vector<1x512xi32>
    %c8_i32_56 = arith.constant 8 : i32
    %151 = vector.broadcast %c8_i32_56 : i32 to vector<1x512xi32>
    %152 = arith.cmpi slt, %150, %151 : vector<1x512xi32>
    %153 = arith.andi %148, %152 : vector<1x512xi1>
    %c0_i32_57 = arith.constant 0 : i32
    %154 = vector.broadcast %c0_i32_57 : i32 to vector<1x512xi32>
    %155 = arith.addi %16, %154 : vector<1x512xi32>
    %c0_i32_58 = arith.constant 0 : i32
    %156 = vector.broadcast %c0_i32_58 : i32 to vector<1x512xi32>
    %157 = arith.cmpi sge, %155, %156 : vector<1x512xi32>
    %158 = arith.andi %153, %157 : vector<1x512xi1>
    %c0_i32_59 = arith.constant 0 : i32
    %159 = vector.broadcast %c0_i32_59 : i32 to vector<1x512xi32>
    %160 = arith.addi %16, %159 : vector<1x512xi32>
    %c16_i32_60 = arith.constant 16 : i32
    %161 = vector.broadcast %c16_i32_60 : i32 to vector<1x512xi32>
    %162 = arith.cmpi slt, %160, %161 : vector<1x512xi32>
    %163 = arith.andi %158, %162 : vector<1x512xi1>
    %cst_61 = arith.constant 0.000000e+00 : f32
    %164 = vector.shape_cast %163 : vector<1x512xi1> to vector<1x512xi1>
    %165 = vector.broadcast %164 : vector<1x512xi1> to vector<4x512xi1>
    %166 = vector.broadcast %cst_61 : f32 to vector<4x512xf32>
    %167 = arith.select %165, %144, %166 : vector<4x512xi1>, vector<4x512xf32>
    %168 = arith.addf %118, %167 : vector<4x512xf32>
    %cst_62 = arith.constant 0.000000e+00 : f32
    %169 = vector.broadcast %cst_62 : f32 to vector<4x512xf32>
    %c0_63 = arith.constant 0 : index
    %c97 = arith.constant 97 : index
    %170 = vector.load %arg11[%c0_63, %c97] : memref<4x1280xf32, #tpu.memory_space<vmem>>, vector<4x512xf32>
    %171 = vector.extract_strided_slice %17 {offsets = [0, 3], sizes = [4, 1], strides = [1, 1]} : vector<4x125xf32> to vector<4x1xf32>
    %172 = vector.broadcast %171 : vector<4x1xf32> to vector<4x512xf32>
    %173 = arith.mulf %172, %170 : vector<4x512xf32>
    %174 = arith.addf %169, %173 : vector<4x512xf32>
    %c0_64 = arith.constant 0 : index
    %c225 = arith.constant 225 : index
    %175 = vector.load %arg11[%c0_64, %c225] : memref<4x1280xf32, #tpu.memory_space<vmem>>, vector<4x512xf32>
    %176 = vector.extract_strided_slice %17 {offsets = [0, 28], sizes = [4, 1], strides = [1, 1]} : vector<4x125xf32> to vector<4x1xf32>
    %177 = vector.broadcast %176 : vector<4x1xf32> to vector<4x512xf32>
    %178 = arith.mulf %177, %175 : vector<4x512xf32>
    %179 = arith.addf %174, %178 : vector<4x512xf32>
    %c0_65 = arith.constant 0 : index
    %c353 = arith.constant 353 : index
    %180 = vector.load %arg11[%c0_65, %c353] : memref<4x1280xf32, #tpu.memory_space<vmem>>, vector<4x512xf32>
    %181 = vector.extract_strided_slice %17 {offsets = [0, 53], sizes = [4, 1], strides = [1, 1]} : vector<4x125xf32> to vector<4x1xf32>
    %182 = vector.broadcast %181 : vector<4x1xf32> to vector<4x512xf32>
    %183 = arith.mulf %182, %180 : vector<4x512xf32>
    %184 = arith.addf %179, %183 : vector<4x512xf32>
    %c0_66 = arith.constant 0 : index
    %c481 = arith.constant 481 : index
    %185 = vector.load %arg11[%c0_66, %c481] : memref<4x1280xf32, #tpu.memory_space<vmem>>, vector<4x512xf32>
    %186 = vector.extract_strided_slice %17 {offsets = [0, 78], sizes = [4, 1], strides = [1, 1]} : vector<4x125xf32> to vector<4x1xf32>
    %187 = vector.broadcast %186 : vector<4x1xf32> to vector<4x512xf32>
    %188 = arith.mulf %187, %185 : vector<4x512xf32>
    %189 = arith.addf %184, %188 : vector<4x512xf32>
    %c0_67 = arith.constant 0 : index
    %c609 = arith.constant 609 : index
    %190 = vector.load %arg11[%c0_67, %c609] : memref<4x1280xf32, #tpu.memory_space<vmem>>, vector<4x512xf32>
    %191 = vector.extract_strided_slice %17 {offsets = [0, 103], sizes = [4, 1], strides = [1, 1]} : vector<4x125xf32> to vector<4x1xf32>
    %192 = vector.broadcast %191 : vector<4x1xf32> to vector<4x512xf32>
    %193 = arith.mulf %192, %190 : vector<4x512xf32>
    %194 = arith.addf %189, %193 : vector<4x512xf32>
    %c-2_i32_68 = arith.constant -2 : i32
    %195 = vector.broadcast %c-2_i32_68 : i32 to vector<1x512xi32>
    %196 = arith.addi %15, %195 : vector<1x512xi32>
    %c0_i32_69 = arith.constant 0 : i32
    %197 = vector.broadcast %c0_i32_69 : i32 to vector<1x512xi32>
    %198 = arith.cmpi sge, %196, %197 : vector<1x512xi32>
    %c-2_i32_70 = arith.constant -2 : i32
    %199 = vector.broadcast %c-2_i32_70 : i32 to vector<1x512xi32>
    %200 = arith.addi %15, %199 : vector<1x512xi32>
    %c8_i32_71 = arith.constant 8 : i32
    %201 = vector.broadcast %c8_i32_71 : i32 to vector<1x512xi32>
    %202 = arith.cmpi slt, %200, %201 : vector<1x512xi32>
    %203 = arith.andi %198, %202 : vector<1x512xi1>
    %c1_i32 = arith.constant 1 : i32
    %204 = vector.broadcast %c1_i32 : i32 to vector<1x512xi32>
    %205 = arith.addi %16, %204 : vector<1x512xi32>
    %c0_i32_72 = arith.constant 0 : i32
    %206 = vector.broadcast %c0_i32_72 : i32 to vector<1x512xi32>
    %207 = arith.cmpi sge, %205, %206 : vector<1x512xi32>
    %208 = arith.andi %203, %207 : vector<1x512xi1>
    %c1_i32_73 = arith.constant 1 : i32
    %209 = vector.broadcast %c1_i32_73 : i32 to vector<1x512xi32>
    %210 = arith.addi %16, %209 : vector<1x512xi32>
    %c16_i32_74 = arith.constant 16 : i32
    %211 = vector.broadcast %c16_i32_74 : i32 to vector<1x512xi32>
    %212 = arith.cmpi slt, %210, %211 : vector<1x512xi32>
    %213 = arith.andi %208, %212 : vector<1x512xi1>
    %cst_75 = arith.constant 0.000000e+00 : f32
    %214 = vector.shape_cast %213 : vector<1x512xi1> to vector<1x512xi1>
    %215 = vector.broadcast %214 : vector<1x512xi1> to vector<4x512xi1>
    %216 = vector.broadcast %cst_75 : f32 to vector<4x512xf32>
    %217 = arith.select %215, %194, %216 : vector<4x512xi1>, vector<4x512xf32>
    %218 = arith.addf %168, %217 : vector<4x512xf32>
    %cst_76 = arith.constant 0.000000e+00 : f32
    %219 = vector.broadcast %cst_76 : f32 to vector<4x512xf32>
    %c0_77 = arith.constant 0 : index
    %c98 = arith.constant 98 : index
    %220 = vector.load %arg11[%c0_77, %c98] : memref<4x1280xf32, #tpu.memory_space<vmem>>, vector<4x512xf32>
    %221 = vector.extract_strided_slice %17 {offsets = [0, 4], sizes = [4, 1], strides = [1, 1]} : vector<4x125xf32> to vector<4x1xf32>
    %222 = vector.broadcast %221 : vector<4x1xf32> to vector<4x512xf32>
    %223 = arith.mulf %222, %220 : vector<4x512xf32>
    %224 = arith.addf %219, %223 : vector<4x512xf32>
    %c0_78 = arith.constant 0 : index
    %c226 = arith.constant 226 : index
    %225 = vector.load %arg11[%c0_78, %c226] : memref<4x1280xf32, #tpu.memory_space<vmem>>, vector<4x512xf32>
    %226 = vector.extract_strided_slice %17 {offsets = [0, 29], sizes = [4, 1], strides = [1, 1]} : vector<4x125xf32> to vector<4x1xf32>
    %227 = vector.broadcast %226 : vector<4x1xf32> to vector<4x512xf32>
    %228 = arith.mulf %227, %225 : vector<4x512xf32>
    %229 = arith.addf %224, %228 : vector<4x512xf32>
    %c0_79 = arith.constant 0 : index
    %c354 = arith.constant 354 : index
    %230 = vector.load %arg11[%c0_79, %c354] : memref<4x1280xf32, #tpu.memory_space<vmem>>, vector<4x512xf32>
    %231 = vector.extract_strided_slice %17 {offsets = [0, 54], sizes = [4, 1], strides = [1, 1]} : vector<4x125xf32> to vector<4x1xf32>
    %232 = vector.broadcast %231 : vector<4x1xf32> to vector<4x512xf32>
    %233 = arith.mulf %232, %230 : vector<4x512xf32>
    %234 = arith.addf %229, %233 : vector<4x512xf32>
    %c0_80 = arith.constant 0 : index
    %c482 = arith.constant 482 : index
    %235 = vector.load %arg11[%c0_80, %c482] : memref<4x1280xf32, #tpu.memory_space<vmem>>, vector<4x512xf32>
    %236 = vector.extract_strided_slice %17 {offsets = [0, 79], sizes = [4, 1], strides = [1, 1]} : vector<4x125xf32> to vector<4x1xf32>
    %237 = vector.broadcast %236 : vector<4x1xf32> to vector<4x512xf32>
    %238 = arith.mulf %237, %235 : vector<4x512xf32>
    %239 = arith.addf %234, %238 : vector<4x512xf32>
    %c0_81 = arith.constant 0 : index
    %c610 = arith.constant 610 : index
    %240 = vector.load %arg11[%c0_81, %c610] : memref<4x1280xf32, #tpu.memory_space<vmem>>, vector<4x512xf32>
    %241 = vector.extract_strided_slice %17 {offsets = [0, 104], sizes = [4, 1], strides = [1, 1]} : vector<4x125xf32> to vector<4x1xf32>
    %242 = vector.broadcast %241 : vector<4x1xf32> to vector<4x512xf32>
    %243 = arith.mulf %242, %240 : vector<4x512xf32>
    %244 = arith.addf %239, %243 : vector<4x512xf32>
    %c-2_i32_82 = arith.constant -2 : i32
    %245 = vector.broadcast %c-2_i32_82 : i32 to vector<1x512xi32>
    %246 = arith.addi %15, %245 : vector<1x512xi32>
    %c0_i32_83 = arith.constant 0 : i32
    %247 = vector.broadcast %c0_i32_83 : i32 to vector<1x512xi32>
    %248 = arith.cmpi sge, %246, %247 : vector<1x512xi32>
    %c-2_i32_84 = arith.constant -2 : i32
    %249 = vector.broadcast %c-2_i32_84 : i32 to vector<1x512xi32>
    %250 = arith.addi %15, %249 : vector<1x512xi32>
    %c8_i32_85 = arith.constant 8 : i32
    %251 = vector.broadcast %c8_i32_85 : i32 to vector<1x512xi32>
    %252 = arith.cmpi slt, %250, %251 : vector<1x512xi32>
    %253 = arith.andi %248, %252 : vector<1x512xi1>
    %c2_i32 = arith.constant 2 : i32
    %254 = vector.broadcast %c2_i32 : i32 to vector<1x512xi32>
    %255 = arith.addi %16, %254 : vector<1x512xi32>
    %c0_i32_86 = arith.constant 0 : i32
    %256 = vector.broadcast %c0_i32_86 : i32 to vector<1x512xi32>
    %257 = arith.cmpi sge, %255, %256 : vector<1x512xi32>
    %258 = arith.andi %253, %257 : vector<1x512xi1>
    %c2_i32_87 = arith.constant 2 : i32
    %259 = vector.broadcast %c2_i32_87 : i32 to vector<1x512xi32>
    %260 = arith.addi %16, %259 : vector<1x512xi32>
    %c16_i32_88 = arith.constant 16 : i32
    %261 = vector.broadcast %c16_i32_88 : i32 to vector<1x512xi32>
    %262 = arith.cmpi slt, %260, %261 : vector<1x512xi32>
    %263 = arith.andi %258, %262 : vector<1x512xi1>
    %cst_89 = arith.constant 0.000000e+00 : f32
    %264 = vector.shape_cast %263 : vector<1x512xi1> to vector<1x512xi1>
    %265 = vector.broadcast %264 : vector<1x512xi1> to vector<4x512xi1>
    %266 = vector.broadcast %cst_89 : f32 to vector<4x512xf32>
    %267 = arith.select %265, %244, %266 : vector<4x512xi1>, vector<4x512xf32>
    %268 = arith.addf %218, %267 : vector<4x512xf32>
    %cst_90 = arith.constant 0.000000e+00 : f32
    %269 = vector.broadcast %cst_90 : f32 to vector<4x512xf32>
    %c0_91 = arith.constant 0 : index
    %c110 = arith.constant 110 : index
    %270 = vector.load %arg11[%c0_91, %c110] : memref<4x1280xf32, #tpu.memory_space<vmem>>, vector<4x512xf32>
    %271 = vector.extract_strided_slice %17 {offsets = [0, 5], sizes = [4, 1], strides = [1, 1]} : vector<4x125xf32> to vector<4x1xf32>
    %272 = vector.broadcast %271 : vector<4x1xf32> to vector<4x512xf32>
    %273 = arith.mulf %272, %270 : vector<4x512xf32>
    %274 = arith.addf %269, %273 : vector<4x512xf32>
    %c0_92 = arith.constant 0 : index
    %c238 = arith.constant 238 : index
    %275 = vector.load %arg11[%c0_92, %c238] : memref<4x1280xf32, #tpu.memory_space<vmem>>, vector<4x512xf32>
    %276 = vector.extract_strided_slice %17 {offsets = [0, 30], sizes = [4, 1], strides = [1, 1]} : vector<4x125xf32> to vector<4x1xf32>
    %277 = vector.broadcast %276 : vector<4x1xf32> to vector<4x512xf32>
    %278 = arith.mulf %277, %275 : vector<4x512xf32>
    %279 = arith.addf %274, %278 : vector<4x512xf32>
    %c0_93 = arith.constant 0 : index
    %c366 = arith.constant 366 : index
    %280 = vector.load %arg11[%c0_93, %c366] : memref<4x1280xf32, #tpu.memory_space<vmem>>, vector<4x512xf32>
    %281 = vector.extract_strided_slice %17 {offsets = [0, 55], sizes = [4, 1], strides = [1, 1]} : vector<4x125xf32> to vector<4x1xf32>
    %282 = vector.broadcast %281 : vector<4x1xf32> to vector<4x512xf32>
    %283 = arith.mulf %282, %280 : vector<4x512xf32>
    %284 = arith.addf %279, %283 : vector<4x512xf32>
    %c0_94 = arith.constant 0 : index
    %c494 = arith.constant 494 : index
    %285 = vector.load %arg11[%c0_94, %c494] : memref<4x1280xf32, #tpu.memory_space<vmem>>, vector<4x512xf32>
    %286 = vector.extract_strided_slice %17 {offsets = [0, 80], sizes = [4, 1], strides = [1, 1]} : vector<4x125xf32> to vector<4x1xf32>
    %287 = vector.broadcast %286 : vector<4x1xf32> to vector<4x512xf32>
    %288 = arith.mulf %287, %285 : vector<4x512xf32>
    %289 = arith.addf %284, %288 : vector<4x512xf32>
    %c0_95 = arith.constant 0 : index
    %c622 = arith.constant 622 : index
    %290 = vector.load %arg11[%c0_95, %c622] : memref<4x1280xf32, #tpu.memory_space<vmem>>, vector<4x512xf32>
    %291 = vector.extract_strided_slice %17 {offsets = [0, 105], sizes = [4, 1], strides = [1, 1]} : vector<4x125xf32> to vector<4x1xf32>
    %292 = vector.broadcast %291 : vector<4x1xf32> to vector<4x512xf32>
    %293 = arith.mulf %292, %290 : vector<4x512xf32>
    %294 = arith.addf %289, %293 : vector<4x512xf32>
    %c-1_i32_96 = arith.constant -1 : i32
    %295 = vector.broadcast %c-1_i32_96 : i32 to vector<1x512xi32>
    %296 = arith.addi %15, %295 : vector<1x512xi32>
    %c0_i32_97 = arith.constant 0 : i32
    %297 = vector.broadcast %c0_i32_97 : i32 to vector<1x512xi32>
    %298 = arith.cmpi sge, %296, %297 : vector<1x512xi32>
    %c-1_i32_98 = arith.constant -1 : i32
    %299 = vector.broadcast %c-1_i32_98 : i32 to vector<1x512xi32>
    %300 = arith.addi %15, %299 : vector<1x512xi32>
    %c8_i32_99 = arith.constant 8 : i32
    %301 = vector.broadcast %c8_i32_99 : i32 to vector<1x512xi32>
    %302 = arith.cmpi slt, %300, %301 : vector<1x512xi32>
    %303 = arith.andi %298, %302 : vector<1x512xi1>
    %c-2_i32_100 = arith.constant -2 : i32
    %304 = vector.broadcast %c-2_i32_100 : i32 to vector<1x512xi32>
    %305 = arith.addi %16, %304 : vector<1x512xi32>
    %c0_i32_101 = arith.constant 0 : i32
    %306 = vector.broadcast %c0_i32_101 : i32 to vector<1x512xi32>
    %307 = arith.cmpi sge, %305, %306 : vector<1x512xi32>
    %308 = arith.andi %303, %307 : vector<1x512xi1>
    %c-2_i32_102 = arith.constant -2 : i32
    %309 = vector.broadcast %c-2_i32_102 : i32 to vector<1x512xi32>
    %310 = arith.addi %16, %309 : vector<1x512xi32>
    %c16_i32_103 = arith.constant 16 : i32
    %311 = vector.broadcast %c16_i32_103 : i32 to vector<1x512xi32>
    %312 = arith.cmpi slt, %310, %311 : vector<1x512xi32>
    %313 = arith.andi %308, %312 : vector<1x512xi1>
    %cst_104 = arith.constant 0.000000e+00 : f32
    %314 = vector.shape_cast %313 : vector<1x512xi1> to vector<1x512xi1>
    %315 = vector.broadcast %314 : vector<1x512xi1> to vector<4x512xi1>
    %316 = vector.broadcast %cst_104 : f32 to vector<4x512xf32>
    %317 = arith.select %315, %294, %316 : vector<4x512xi1>, vector<4x512xf32>
    %318 = arith.addf %268, %317 : vector<4x512xf32>
    %cst_105 = arith.constant 0.000000e+00 : f32
    %319 = vector.broadcast %cst_105 : f32 to vector<4x512xf32>
    %c0_106 = arith.constant 0 : index
    %c111 = arith.constant 111 : index
    %320 = vector.load %arg11[%c0_106, %c111] : memref<4x1280xf32, #tpu.memory_space<vmem>>, vector<4x512xf32>
    %321 = vector.extract_strided_slice %17 {offsets = [0, 6], sizes = [4, 1], strides = [1, 1]} : vector<4x125xf32> to vector<4x1xf32>
    %322 = vector.broadcast %321 : vector<4x1xf32> to vector<4x512xf32>
    %323 = arith.mulf %322, %320 : vector<4x512xf32>
    %324 = arith.addf %319, %323 : vector<4x512xf32>
    %c0_107 = arith.constant 0 : index
    %c239 = arith.constant 239 : index
    %325 = vector.load %arg11[%c0_107, %c239] : memref<4x1280xf32, #tpu.memory_space<vmem>>, vector<4x512xf32>
    %326 = vector.extract_strided_slice %17 {offsets = [0, 31], sizes = [4, 1], strides = [1, 1]} : vector<4x125xf32> to vector<4x1xf32>
    %327 = vector.broadcast %326 : vector<4x1xf32> to vector<4x512xf32>
    %328 = arith.mulf %327, %325 : vector<4x512xf32>
    %329 = arith.addf %324, %328 : vector<4x512xf32>
    %c0_108 = arith.constant 0 : index
    %c367 = arith.constant 367 : index
    %330 = vector.load %arg11[%c0_108, %c367] : memref<4x1280xf32, #tpu.memory_space<vmem>>, vector<4x512xf32>
    %331 = vector.extract_strided_slice %17 {offsets = [0, 56], sizes = [4, 1], strides = [1, 1]} : vector<4x125xf32> to vector<4x1xf32>
    %332 = vector.broadcast %331 : vector<4x1xf32> to vector<4x512xf32>
    %333 = arith.mulf %332, %330 : vector<4x512xf32>
    %334 = arith.addf %329, %333 : vector<4x512xf32>
    %c0_109 = arith.constant 0 : index
    %c495 = arith.constant 495 : index
    %335 = vector.load %arg11[%c0_109, %c495] : memref<4x1280xf32, #tpu.memory_space<vmem>>, vector<4x512xf32>
    %336 = vector.extract_strided_slice %17 {offsets = [0, 81], sizes = [4, 1], strides = [1, 1]} : vector<4x125xf32> to vector<4x1xf32>
    %337 = vector.broadcast %336 : vector<4x1xf32> to vector<4x512xf32>
    %338 = arith.mulf %337, %335 : vector<4x512xf32>
    %339 = arith.addf %334, %338 : vector<4x512xf32>
    %c0_110 = arith.constant 0 : index
    %c623 = arith.constant 623 : index
    %340 = vector.load %arg11[%c0_110, %c623] : memref<4x1280xf32, #tpu.memory_space<vmem>>, vector<4x512xf32>
    %341 = vector.extract_strided_slice %17 {offsets = [0, 106], sizes = [4, 1], strides = [1, 1]} : vector<4x125xf32> to vector<4x1xf32>
    %342 = vector.broadcast %341 : vector<4x1xf32> to vector<4x512xf32>
    %343 = arith.mulf %342, %340 : vector<4x512xf32>
    %344 = arith.addf %339, %343 : vector<4x512xf32>
    %c-1_i32_111 = arith.constant -1 : i32
    %345 = vector.broadcast %c-1_i32_111 : i32 to vector<1x512xi32>
    %346 = arith.addi %15, %345 : vector<1x512xi32>
    %c0_i32_112 = arith.constant 0 : i32
    %347 = vector.broadcast %c0_i32_112 : i32 to vector<1x512xi32>
    %348 = arith.cmpi sge, %346, %347 : vector<1x512xi32>
    %c-1_i32_113 = arith.constant -1 : i32
    %349 = vector.broadcast %c-1_i32_113 : i32 to vector<1x512xi32>
    %350 = arith.addi %15, %349 : vector<1x512xi32>
    %c8_i32_114 = arith.constant 8 : i32
    %351 = vector.broadcast %c8_i32_114 : i32 to vector<1x512xi32>
    %352 = arith.cmpi slt, %350, %351 : vector<1x512xi32>
    %353 = arith.andi %348, %352 : vector<1x512xi1>
    %c-1_i32_115 = arith.constant -1 : i32
    %354 = vector.broadcast %c-1_i32_115 : i32 to vector<1x512xi32>
    %355 = arith.addi %16, %354 : vector<1x512xi32>
    %c0_i32_116 = arith.constant 0 : i32
    %356 = vector.broadcast %c0_i32_116 : i32 to vector<1x512xi32>
    %357 = arith.cmpi sge, %355, %356 : vector<1x512xi32>
    %358 = arith.andi %353, %357 : vector<1x512xi1>
    %c-1_i32_117 = arith.constant -1 : i32
    %359 = vector.broadcast %c-1_i32_117 : i32 to vector<1x512xi32>
    %360 = arith.addi %16, %359 : vector<1x512xi32>
    %c16_i32_118 = arith.constant 16 : i32
    %361 = vector.broadcast %c16_i32_118 : i32 to vector<1x512xi32>
    %362 = arith.cmpi slt, %360, %361 : vector<1x512xi32>
    %363 = arith.andi %358, %362 : vector<1x512xi1>
    %cst_119 = arith.constant 0.000000e+00 : f32
    %364 = vector.shape_cast %363 : vector<1x512xi1> to vector<1x512xi1>
    %365 = vector.broadcast %364 : vector<1x512xi1> to vector<4x512xi1>
    %366 = vector.broadcast %cst_119 : f32 to vector<4x512xf32>
    %367 = arith.select %365, %344, %366 : vector<4x512xi1>, vector<4x512xf32>
    %368 = arith.addf %318, %367 : vector<4x512xf32>
    %cst_120 = arith.constant 0.000000e+00 : f32
    %369 = vector.broadcast %cst_120 : f32 to vector<4x512xf32>
    %c0_121 = arith.constant 0 : index
    %c112 = arith.constant 112 : index
    %370 = vector.load %arg11[%c0_121, %c112] : memref<4x1280xf32, #tpu.memory_space<vmem>>, vector<4x512xf32>
    %371 = vector.extract_strided_slice %17 {offsets = [0, 7], sizes = [4, 1], strides = [1, 1]} : vector<4x125xf32> to vector<4x1xf32>
    %372 = vector.broadcast %371 : vector<4x1xf32> to vector<4x512xf32>
    %373 = arith.mulf %372, %370 : vector<4x512xf32>
    %374 = arith.addf %369, %373 : vector<4x512xf32>
    %c0_122 = arith.constant 0 : index
    %c240 = arith.constant 240 : index
    %375 = vector.load %arg11[%c0_122, %c240] : memref<4x1280xf32, #tpu.memory_space<vmem>>, vector<4x512xf32>
    %376 = vector.extract_strided_slice %17 {offsets = [0, 32], sizes = [4, 1], strides = [1, 1]} : vector<4x125xf32> to vector<4x1xf32>
    %377 = vector.broadcast %376 : vector<4x1xf32> to vector<4x512xf32>
    %378 = arith.mulf %377, %375 : vector<4x512xf32>
    %379 = arith.addf %374, %378 : vector<4x512xf32>
    %c0_123 = arith.constant 0 : index
    %c368 = arith.constant 368 : index
    %380 = vector.load %arg11[%c0_123, %c368] : memref<4x1280xf32, #tpu.memory_space<vmem>>, vector<4x512xf32>
    %381 = vector.extract_strided_slice %17 {offsets = [0, 57], sizes = [4, 1], strides = [1, 1]} : vector<4x125xf32> to vector<4x1xf32>
    %382 = vector.broadcast %381 : vector<4x1xf32> to vector<4x512xf32>
    %383 = arith.mulf %382, %380 : vector<4x512xf32>
    %384 = arith.addf %379, %383 : vector<4x512xf32>
    %c0_124 = arith.constant 0 : index
    %c496 = arith.constant 496 : index
    %385 = vector.load %arg11[%c0_124, %c496] : memref<4x1280xf32, #tpu.memory_space<vmem>>, vector<4x512xf32>
    %386 = vector.extract_strided_slice %17 {offsets = [0, 82], sizes = [4, 1], strides = [1, 1]} : vector<4x125xf32> to vector<4x1xf32>
    %387 = vector.broadcast %386 : vector<4x1xf32> to vector<4x512xf32>
    %388 = arith.mulf %387, %385 : vector<4x512xf32>
    %389 = arith.addf %384, %388 : vector<4x512xf32>
    %c0_125 = arith.constant 0 : index
    %c624 = arith.constant 624 : index
    %390 = vector.load %arg11[%c0_125, %c624] : memref<4x1280xf32, #tpu.memory_space<vmem>>, vector<4x512xf32>
    %391 = vector.extract_strided_slice %17 {offsets = [0, 107], sizes = [4, 1], strides = [1, 1]} : vector<4x125xf32> to vector<4x1xf32>
    %392 = vector.broadcast %391 : vector<4x1xf32> to vector<4x512xf32>
    %393 = arith.mulf %392, %390 : vector<4x512xf32>
    %394 = arith.addf %389, %393 : vector<4x512xf32>
    %c-1_i32_126 = arith.constant -1 : i32
    %395 = vector.broadcast %c-1_i32_126 : i32 to vector<1x512xi32>
    %396 = arith.addi %15, %395 : vector<1x512xi32>
    %c0_i32_127 = arith.constant 0 : i32
    %397 = vector.broadcast %c0_i32_127 : i32 to vector<1x512xi32>
    %398 = arith.cmpi sge, %396, %397 : vector<1x512xi32>
    %c-1_i32_128 = arith.constant -1 : i32
    %399 = vector.broadcast %c-1_i32_128 : i32 to vector<1x512xi32>
    %400 = arith.addi %15, %399 : vector<1x512xi32>
    %c8_i32_129 = arith.constant 8 : i32
    %401 = vector.broadcast %c8_i32_129 : i32 to vector<1x512xi32>
    %402 = arith.cmpi slt, %400, %401 : vector<1x512xi32>
    %403 = arith.andi %398, %402 : vector<1x512xi1>
    %c0_i32_130 = arith.constant 0 : i32
    %404 = vector.broadcast %c0_i32_130 : i32 to vector<1x512xi32>
    %405 = arith.addi %16, %404 : vector<1x512xi32>
    %c0_i32_131 = arith.constant 0 : i32
    %406 = vector.broadcast %c0_i32_131 : i32 to vector<1x512xi32>
    %407 = arith.cmpi sge, %405, %406 : vector<1x512xi32>
    %408 = arith.andi %403, %407 : vector<1x512xi1>
    %c0_i32_132 = arith.constant 0 : i32
    %409 = vector.broadcast %c0_i32_132 : i32 to vector<1x512xi32>
    %410 = arith.addi %16, %409 : vector<1x512xi32>
    %c16_i32_133 = arith.constant 16 : i32
    %411 = vector.broadcast %c16_i32_133 : i32 to vector<1x512xi32>
    %412 = arith.cmpi slt, %410, %411 : vector<1x512xi32>
    %413 = arith.andi %408, %412 : vector<1x512xi1>
    %cst_134 = arith.constant 0.000000e+00 : f32
    %414 = vector.shape_cast %413 : vector<1x512xi1> to vector<1x512xi1>
    %415 = vector.broadcast %414 : vector<1x512xi1> to vector<4x512xi1>
    %416 = vector.broadcast %cst_134 : f32 to vector<4x512xf32>
    %417 = arith.select %415, %394, %416 : vector<4x512xi1>, vector<4x512xf32>
    %418 = arith.addf %368, %417 : vector<4x512xf32>
    %cst_135 = arith.constant 0.000000e+00 : f32
    %419 = vector.broadcast %cst_135 : f32 to vector<4x512xf32>
    %c0_136 = arith.constant 0 : index
    %c113 = arith.constant 113 : index
    %420 = vector.load %arg11[%c0_136, %c113] : memref<4x1280xf32, #tpu.memory_space<vmem>>, vector<4x512xf32>
    %421 = vector.extract_strided_slice %17 {offsets = [0, 8], sizes = [4, 1], strides = [1, 1]} : vector<4x125xf32> to vector<4x1xf32>
    %422 = vector.broadcast %421 : vector<4x1xf32> to vector<4x512xf32>
    %423 = arith.mulf %422, %420 : vector<4x512xf32>
    %424 = arith.addf %419, %423 : vector<4x512xf32>
    %c0_137 = arith.constant 0 : index
    %c241 = arith.constant 241 : index
    %425 = vector.load %arg11[%c0_137, %c241] : memref<4x1280xf32, #tpu.memory_space<vmem>>, vector<4x512xf32>
    %426 = vector.extract_strided_slice %17 {offsets = [0, 33], sizes = [4, 1], strides = [1, 1]} : vector<4x125xf32> to vector<4x1xf32>
    %427 = vector.broadcast %426 : vector<4x1xf32> to vector<4x512xf32>
    %428 = arith.mulf %427, %425 : vector<4x512xf32>
    %429 = arith.addf %424, %428 : vector<4x512xf32>
    %c0_138 = arith.constant 0 : index
    %c369 = arith.constant 369 : index
    %430 = vector.load %arg11[%c0_138, %c369] : memref<4x1280xf32, #tpu.memory_space<vmem>>, vector<4x512xf32>
    %431 = vector.extract_strided_slice %17 {offsets = [0, 58], sizes = [4, 1], strides = [1, 1]} : vector<4x125xf32> to vector<4x1xf32>
    %432 = vector.broadcast %431 : vector<4x1xf32> to vector<4x512xf32>
    %433 = arith.mulf %432, %430 : vector<4x512xf32>
    %434 = arith.addf %429, %433 : vector<4x512xf32>
    %c0_139 = arith.constant 0 : index
    %c497 = arith.constant 497 : index
    %435 = vector.load %arg11[%c0_139, %c497] : memref<4x1280xf32, #tpu.memory_space<vmem>>, vector<4x512xf32>
    %436 = vector.extract_strided_slice %17 {offsets = [0, 83], sizes = [4, 1], strides = [1, 1]} : vector<4x125xf32> to vector<4x1xf32>
    %437 = vector.broadcast %436 : vector<4x1xf32> to vector<4x512xf32>
    %438 = arith.mulf %437, %435 : vector<4x512xf32>
    %439 = arith.addf %434, %438 : vector<4x512xf32>
    %c0_140 = arith.constant 0 : index
    %c625 = arith.constant 625 : index
    %440 = vector.load %arg11[%c0_140, %c625] : memref<4x1280xf32, #tpu.memory_space<vmem>>, vector<4x512xf32>
    %441 = vector.extract_strided_slice %17 {offsets = [0, 108], sizes = [4, 1], strides = [1, 1]} : vector<4x125xf32> to vector<4x1xf32>
    %442 = vector.broadcast %441 : vector<4x1xf32> to vector<4x512xf32>
    %443 = arith.mulf %442, %440 : vector<4x512xf32>
    %444 = arith.addf %439, %443 : vector<4x512xf32>
    %c-1_i32_141 = arith.constant -1 : i32
    %445 = vector.broadcast %c-1_i32_141 : i32 to vector<1x512xi32>
    %446 = arith.addi %15, %445 : vector<1x512xi32>
    %c0_i32_142 = arith.constant 0 : i32
    %447 = vector.broadcast %c0_i32_142 : i32 to vector<1x512xi32>
    %448 = arith.cmpi sge, %446, %447 : vector<1x512xi32>
    %c-1_i32_143 = arith.constant -1 : i32
    %449 = vector.broadcast %c-1_i32_143 : i32 to vector<1x512xi32>
    %450 = arith.addi %15, %449 : vector<1x512xi32>
    %c8_i32_144 = arith.constant 8 : i32
    %451 = vector.broadcast %c8_i32_144 : i32 to vector<1x512xi32>
    %452 = arith.cmpi slt, %450, %451 : vector<1x512xi32>
    %453 = arith.andi %448, %452 : vector<1x512xi1>
    %c1_i32_145 = arith.constant 1 : i32
    %454 = vector.broadcast %c1_i32_145 : i32 to vector<1x512xi32>
    %455 = arith.addi %16, %454 : vector<1x512xi32>
    %c0_i32_146 = arith.constant 0 : i32
    %456 = vector.broadcast %c0_i32_146 : i32 to vector<1x512xi32>
    %457 = arith.cmpi sge, %455, %456 : vector<1x512xi32>
    %458 = arith.andi %453, %457 : vector<1x512xi1>
    %c1_i32_147 = arith.constant 1 : i32
    %459 = vector.broadcast %c1_i32_147 : i32 to vector<1x512xi32>
    %460 = arith.addi %16, %459 : vector<1x512xi32>
    %c16_i32_148 = arith.constant 16 : i32
    %461 = vector.broadcast %c16_i32_148 : i32 to vector<1x512xi32>
    %462 = arith.cmpi slt, %460, %461 : vector<1x512xi32>
    %463 = arith.andi %458, %462 : vector<1x512xi1>
    %cst_149 = arith.constant 0.000000e+00 : f32
    %464 = vector.shape_cast %463 : vector<1x512xi1> to vector<1x512xi1>
    %465 = vector.broadcast %464 : vector<1x512xi1> to vector<4x512xi1>
    %466 = vector.broadcast %cst_149 : f32 to vector<4x512xf32>
    %467 = arith.select %465, %444, %466 : vector<4x512xi1>, vector<4x512xf32>
    %468 = arith.addf %418, %467 : vector<4x512xf32>
    %cst_150 = arith.constant 0.000000e+00 : f32
    %469 = vector.broadcast %cst_150 : f32 to vector<4x512xf32>
    %c0_151 = arith.constant 0 : index
    %c114 = arith.constant 114 : index
    %470 = vector.load %arg11[%c0_151, %c114] : memref<4x1280xf32, #tpu.memory_space<vmem>>, vector<4x512xf32>
    %471 = vector.extract_strided_slice %17 {offsets = [0, 9], sizes = [4, 1], strides = [1, 1]} : vector<4x125xf32> to vector<4x1xf32>
    %472 = vector.broadcast %471 : vector<4x1xf32> to vector<4x512xf32>
    %473 = arith.mulf %472, %470 : vector<4x512xf32>
    %474 = arith.addf %469, %473 : vector<4x512xf32>
    %c0_152 = arith.constant 0 : index
    %c242 = arith.constant 242 : index
    %475 = vector.load %arg11[%c0_152, %c242] : memref<4x1280xf32, #tpu.memory_space<vmem>>, vector<4x512xf32>
    %476 = vector.extract_strided_slice %17 {offsets = [0, 34], sizes = [4, 1], strides = [1, 1]} : vector<4x125xf32> to vector<4x1xf32>
    %477 = vector.broadcast %476 : vector<4x1xf32> to vector<4x512xf32>
    %478 = arith.mulf %477, %475 : vector<4x512xf32>
    %479 = arith.addf %474, %478 : vector<4x512xf32>
    %c0_153 = arith.constant 0 : index
    %c370 = arith.constant 370 : index
    %480 = vector.load %arg11[%c0_153, %c370] : memref<4x1280xf32, #tpu.memory_space<vmem>>, vector<4x512xf32>
    %481 = vector.extract_strided_slice %17 {offsets = [0, 59], sizes = [4, 1], strides = [1, 1]} : vector<4x125xf32> to vector<4x1xf32>
    %482 = vector.broadcast %481 : vector<4x1xf32> to vector<4x512xf32>
    %483 = arith.mulf %482, %480 : vector<4x512xf32>
    %484 = arith.addf %479, %483 : vector<4x512xf32>
    %c0_154 = arith.constant 0 : index
    %c498 = arith.constant 498 : index
    %485 = vector.load %arg11[%c0_154, %c498] : memref<4x1280xf32, #tpu.memory_space<vmem>>, vector<4x512xf32>
    %486 = vector.extract_strided_slice %17 {offsets = [0, 84], sizes = [4, 1], strides = [1, 1]} : vector<4x125xf32> to vector<4x1xf32>
    %487 = vector.broadcast %486 : vector<4x1xf32> to vector<4x512xf32>
    %488 = arith.mulf %487, %485 : vector<4x512xf32>
    %489 = arith.addf %484, %488 : vector<4x512xf32>
    %c0_155 = arith.constant 0 : index
    %c626 = arith.constant 626 : index
    %490 = vector.load %arg11[%c0_155, %c626] : memref<4x1280xf32, #tpu.memory_space<vmem>>, vector<4x512xf32>
    %491 = vector.extract_strided_slice %17 {offsets = [0, 109], sizes = [4, 1], strides = [1, 1]} : vector<4x125xf32> to vector<4x1xf32>
    %492 = vector.broadcast %491 : vector<4x1xf32> to vector<4x512xf32>
    %493 = arith.mulf %492, %490 : vector<4x512xf32>
    %494 = arith.addf %489, %493 : vector<4x512xf32>
    %c-1_i32_156 = arith.constant -1 : i32
    %495 = vector.broadcast %c-1_i32_156 : i32 to vector<1x512xi32>
    %496 = arith.addi %15, %495 : vector<1x512xi32>
    %c0_i32_157 = arith.constant 0 : i32
    %497 = vector.broadcast %c0_i32_157 : i32 to vector<1x512xi32>
    %498 = arith.cmpi sge, %496, %497 : vector<1x512xi32>
    %c-1_i32_158 = arith.constant -1 : i32
    %499 = vector.broadcast %c-1_i32_158 : i32 to vector<1x512xi32>
    %500 = arith.addi %15, %499 : vector<1x512xi32>
    %c8_i32_159 = arith.constant 8 : i32
    %501 = vector.broadcast %c8_i32_159 : i32 to vector<1x512xi32>
    %502 = arith.cmpi slt, %500, %501 : vector<1x512xi32>
    %503 = arith.andi %498, %502 : vector<1x512xi1>
    %c2_i32_160 = arith.constant 2 : i32
    %504 = vector.broadcast %c2_i32_160 : i32 to vector<1x512xi32>
    %505 = arith.addi %16, %504 : vector<1x512xi32>
    %c0_i32_161 = arith.constant 0 : i32
    %506 = vector.broadcast %c0_i32_161 : i32 to vector<1x512xi32>
    %507 = arith.cmpi sge, %505, %506 : vector<1x512xi32>
    %508 = arith.andi %503, %507 : vector<1x512xi1>
    %c2_i32_162 = arith.constant 2 : i32
    %509 = vector.broadcast %c2_i32_162 : i32 to vector<1x512xi32>
    %510 = arith.addi %16, %509 : vector<1x512xi32>
    %c16_i32_163 = arith.constant 16 : i32
    %511 = vector.broadcast %c16_i32_163 : i32 to vector<1x512xi32>
    %512 = arith.cmpi slt, %510, %511 : vector<1x512xi32>
    %513 = arith.andi %508, %512 : vector<1x512xi1>
    %cst_164 = arith.constant 0.000000e+00 : f32
    %514 = vector.shape_cast %513 : vector<1x512xi1> to vector<1x512xi1>
    %515 = vector.broadcast %514 : vector<1x512xi1> to vector<4x512xi1>
    %516 = vector.broadcast %cst_164 : f32 to vector<4x512xf32>
    %517 = arith.select %515, %494, %516 : vector<4x512xi1>, vector<4x512xf32>
    %518 = arith.addf %468, %517 : vector<4x512xf32>
    %cst_165 = arith.constant 0.000000e+00 : f32
    %519 = vector.broadcast %cst_165 : f32 to vector<4x512xf32>
    %c0_166 = arith.constant 0 : index
    %c126 = arith.constant 126 : index
    %520 = vector.load %arg11[%c0_166, %c126] : memref<4x1280xf32, #tpu.memory_space<vmem>>, vector<4x512xf32>
    %521 = vector.extract_strided_slice %17 {offsets = [0, 10], sizes = [4, 1], strides = [1, 1]} : vector<4x125xf32> to vector<4x1xf32>
    %522 = vector.broadcast %521 : vector<4x1xf32> to vector<4x512xf32>
    %523 = arith.mulf %522, %520 : vector<4x512xf32>
    %524 = arith.addf %519, %523 : vector<4x512xf32>
    %c0_167 = arith.constant 0 : index
    %c254 = arith.constant 254 : index
    %525 = vector.load %arg11[%c0_167, %c254] : memref<4x1280xf32, #tpu.memory_space<vmem>>, vector<4x512xf32>
    %526 = vector.extract_strided_slice %17 {offsets = [0, 35], sizes = [4, 1], strides = [1, 1]} : vector<4x125xf32> to vector<4x1xf32>
    %527 = vector.broadcast %526 : vector<4x1xf32> to vector<4x512xf32>
    %528 = arith.mulf %527, %525 : vector<4x512xf32>
    %529 = arith.addf %524, %528 : vector<4x512xf32>
    %c0_168 = arith.constant 0 : index
    %c382 = arith.constant 382 : index
    %530 = vector.load %arg11[%c0_168, %c382] : memref<4x1280xf32, #tpu.memory_space<vmem>>, vector<4x512xf32>
    %531 = vector.extract_strided_slice %17 {offsets = [0, 60], sizes = [4, 1], strides = [1, 1]} : vector<4x125xf32> to vector<4x1xf32>
    %532 = vector.broadcast %531 : vector<4x1xf32> to vector<4x512xf32>
    %533 = arith.mulf %532, %530 : vector<4x512xf32>
    %534 = arith.addf %529, %533 : vector<4x512xf32>
    %c0_169 = arith.constant 0 : index
    %c510 = arith.constant 510 : index
    %535 = vector.load %arg11[%c0_169, %c510] : memref<4x1280xf32, #tpu.memory_space<vmem>>, vector<4x512xf32>
    %536 = vector.extract_strided_slice %17 {offsets = [0, 85], sizes = [4, 1], strides = [1, 1]} : vector<4x125xf32> to vector<4x1xf32>
    %537 = vector.broadcast %536 : vector<4x1xf32> to vector<4x512xf32>
    %538 = arith.mulf %537, %535 : vector<4x512xf32>
    %539 = arith.addf %534, %538 : vector<4x512xf32>
    %c0_170 = arith.constant 0 : index
    %c638 = arith.constant 638 : index
    %540 = vector.load %arg11[%c0_170, %c638] : memref<4x1280xf32, #tpu.memory_space<vmem>>, vector<4x512xf32>
    %541 = vector.extract_strided_slice %17 {offsets = [0, 110], sizes = [4, 1], strides = [1, 1]} : vector<4x125xf32> to vector<4x1xf32>
    %542 = vector.broadcast %541 : vector<4x1xf32> to vector<4x512xf32>
    %543 = arith.mulf %542, %540 : vector<4x512xf32>
    %544 = arith.addf %539, %543 : vector<4x512xf32>
    %c0_i32_171 = arith.constant 0 : i32
    %545 = vector.broadcast %c0_i32_171 : i32 to vector<1x512xi32>
    %546 = arith.addi %15, %545 : vector<1x512xi32>
    %c0_i32_172 = arith.constant 0 : i32
    %547 = vector.broadcast %c0_i32_172 : i32 to vector<1x512xi32>
    %548 = arith.cmpi sge, %546, %547 : vector<1x512xi32>
    %c0_i32_173 = arith.constant 0 : i32
    %549 = vector.broadcast %c0_i32_173 : i32 to vector<1x512xi32>
    %550 = arith.addi %15, %549 : vector<1x512xi32>
    %c8_i32_174 = arith.constant 8 : i32
    %551 = vector.broadcast %c8_i32_174 : i32 to vector<1x512xi32>
    %552 = arith.cmpi slt, %550, %551 : vector<1x512xi32>
    %553 = arith.andi %548, %552 : vector<1x512xi1>
    %c-2_i32_175 = arith.constant -2 : i32
    %554 = vector.broadcast %c-2_i32_175 : i32 to vector<1x512xi32>
    %555 = arith.addi %16, %554 : vector<1x512xi32>
    %c0_i32_176 = arith.constant 0 : i32
    %556 = vector.broadcast %c0_i32_176 : i32 to vector<1x512xi32>
    %557 = arith.cmpi sge, %555, %556 : vector<1x512xi32>
    %558 = arith.andi %553, %557 : vector<1x512xi1>
    %c-2_i32_177 = arith.constant -2 : i32
    %559 = vector.broadcast %c-2_i32_177 : i32 to vector<1x512xi32>
    %560 = arith.addi %16, %559 : vector<1x512xi32>
    %c16_i32_178 = arith.constant 16 : i32
    %561 = vector.broadcast %c16_i32_178 : i32 to vector<1x512xi32>
    %562 = arith.cmpi slt, %560, %561 : vector<1x512xi32>
    %563 = arith.andi %558, %562 : vector<1x512xi1>
    %cst_179 = arith.constant 0.000000e+00 : f32
    %564 = vector.shape_cast %563 : vector<1x512xi1> to vector<1x512xi1>
    %565 = vector.broadcast %564 : vector<1x512xi1> to vector<4x512xi1>
    %566 = vector.broadcast %cst_179 : f32 to vector<4x512xf32>
    %567 = arith.select %565, %544, %566 : vector<4x512xi1>, vector<4x512xf32>
    %568 = arith.addf %518, %567 : vector<4x512xf32>
    %cst_180 = arith.constant 0.000000e+00 : f32
    %569 = vector.broadcast %cst_180 : f32 to vector<4x512xf32>
    %c0_181 = arith.constant 0 : index
    %c127 = arith.constant 127 : index
    %570 = vector.load %arg11[%c0_181, %c127] : memref<4x1280xf32, #tpu.memory_space<vmem>>, vector<4x512xf32>
    %571 = vector.extract_strided_slice %17 {offsets = [0, 11], sizes = [4, 1], strides = [1, 1]} : vector<4x125xf32> to vector<4x1xf32>
    %572 = vector.broadcast %571 : vector<4x1xf32> to vector<4x512xf32>
    %573 = arith.mulf %572, %570 : vector<4x512xf32>
    %574 = arith.addf %569, %573 : vector<4x512xf32>
    %c0_182 = arith.constant 0 : index
    %c255 = arith.constant 255 : index
    %575 = vector.load %arg11[%c0_182, %c255] : memref<4x1280xf32, #tpu.memory_space<vmem>>, vector<4x512xf32>
    %576 = vector.extract_strided_slice %17 {offsets = [0, 36], sizes = [4, 1], strides = [1, 1]} : vector<4x125xf32> to vector<4x1xf32>
    %577 = vector.broadcast %576 : vector<4x1xf32> to vector<4x512xf32>
    %578 = arith.mulf %577, %575 : vector<4x512xf32>
    %579 = arith.addf %574, %578 : vector<4x512xf32>
    %c0_183 = arith.constant 0 : index
    %c383 = arith.constant 383 : index
    %580 = vector.load %arg11[%c0_183, %c383] : memref<4x1280xf32, #tpu.memory_space<vmem>>, vector<4x512xf32>
    %581 = vector.extract_strided_slice %17 {offsets = [0, 61], sizes = [4, 1], strides = [1, 1]} : vector<4x125xf32> to vector<4x1xf32>
    %582 = vector.broadcast %581 : vector<4x1xf32> to vector<4x512xf32>
    %583 = arith.mulf %582, %580 : vector<4x512xf32>
    %584 = arith.addf %579, %583 : vector<4x512xf32>
    %c0_184 = arith.constant 0 : index
    %c511 = arith.constant 511 : index
    %585 = vector.load %arg11[%c0_184, %c511] : memref<4x1280xf32, #tpu.memory_space<vmem>>, vector<4x512xf32>
    %586 = vector.extract_strided_slice %17 {offsets = [0, 86], sizes = [4, 1], strides = [1, 1]} : vector<4x125xf32> to vector<4x1xf32>
    %587 = vector.broadcast %586 : vector<4x1xf32> to vector<4x512xf32>
    %588 = arith.mulf %587, %585 : vector<4x512xf32>
    %589 = arith.addf %584, %588 : vector<4x512xf32>
    %c0_185 = arith.constant 0 : index
    %c639 = arith.constant 639 : index
    %590 = vector.load %arg11[%c0_185, %c639] : memref<4x1280xf32, #tpu.memory_space<vmem>>, vector<4x512xf32>
    %591 = vector.extract_strided_slice %17 {offsets = [0, 111], sizes = [4, 1], strides = [1, 1]} : vector<4x125xf32> to vector<4x1xf32>
    %592 = vector.broadcast %591 : vector<4x1xf32> to vector<4x512xf32>
    %593 = arith.mulf %592, %590 : vector<4x512xf32>
    %594 = arith.addf %589, %593 : vector<4x512xf32>
    %c0_i32_186 = arith.constant 0 : i32
    %595 = vector.broadcast %c0_i32_186 : i32 to vector<1x512xi32>
    %596 = arith.addi %15, %595 : vector<1x512xi32>
    %c0_i32_187 = arith.constant 0 : i32
    %597 = vector.broadcast %c0_i32_187 : i32 to vector<1x512xi32>
    %598 = arith.cmpi sge, %596, %597 : vector<1x512xi32>
    %c0_i32_188 = arith.constant 0 : i32
    %599 = vector.broadcast %c0_i32_188 : i32 to vector<1x512xi32>
    %600 = arith.addi %15, %599 : vector<1x512xi32>
    %c8_i32_189 = arith.constant 8 : i32
    %601 = vector.broadcast %c8_i32_189 : i32 to vector<1x512xi32>
    %602 = arith.cmpi slt, %600, %601 : vector<1x512xi32>
    %603 = arith.andi %598, %602 : vector<1x512xi1>
    %c-1_i32_190 = arith.constant -1 : i32
    %604 = vector.broadcast %c-1_i32_190 : i32 to vector<1x512xi32>
    %605 = arith.addi %16, %604 : vector<1x512xi32>
    %c0_i32_191 = arith.constant 0 : i32
    %606 = vector.broadcast %c0_i32_191 : i32 to vector<1x512xi32>
    %607 = arith.cmpi sge, %605, %606 : vector<1x512xi32>
    %608 = arith.andi %603, %607 : vector<1x512xi1>
    %c-1_i32_192 = arith.constant -1 : i32
    %609 = vector.broadcast %c-1_i32_192 : i32 to vector<1x512xi32>
    %610 = arith.addi %16, %609 : vector<1x512xi32>
    %c16_i32_193 = arith.constant 16 : i32
    %611 = vector.broadcast %c16_i32_193 : i32 to vector<1x512xi32>
    %612 = arith.cmpi slt, %610, %611 : vector<1x512xi32>
    %613 = arith.andi %608, %612 : vector<1x512xi1>
    %cst_194 = arith.constant 0.000000e+00 : f32
    %614 = vector.shape_cast %613 : vector<1x512xi1> to vector<1x512xi1>
    %615 = vector.broadcast %614 : vector<1x512xi1> to vector<4x512xi1>
    %616 = vector.broadcast %cst_194 : f32 to vector<4x512xf32>
    %617 = arith.select %615, %594, %616 : vector<4x512xi1>, vector<4x512xf32>
    %618 = arith.addf %568, %617 : vector<4x512xf32>
    %cst_195 = arith.constant 0.000000e+00 : f32
    %619 = vector.broadcast %cst_195 : f32 to vector<4x512xf32>
    %c0_196 = arith.constant 0 : index
    %c128 = arith.constant 128 : index
    %620 = vector.load %arg11[%c0_196, %c128] : memref<4x1280xf32, #tpu.memory_space<vmem>>, vector<4x512xf32>
    %621 = vector.extract_strided_slice %17 {offsets = [0, 12], sizes = [4, 1], strides = [1, 1]} : vector<4x125xf32> to vector<4x1xf32>
    %622 = vector.broadcast %621 : vector<4x1xf32> to vector<4x512xf32>
    %623 = arith.mulf %622, %620 : vector<4x512xf32>
    %624 = arith.addf %619, %623 : vector<4x512xf32>
    %c0_197 = arith.constant 0 : index
    %c256 = arith.constant 256 : index
    %625 = vector.load %arg11[%c0_197, %c256] : memref<4x1280xf32, #tpu.memory_space<vmem>>, vector<4x512xf32>
    %626 = vector.extract_strided_slice %17 {offsets = [0, 37], sizes = [4, 1], strides = [1, 1]} : vector<4x125xf32> to vector<4x1xf32>
    %627 = vector.broadcast %626 : vector<4x1xf32> to vector<4x512xf32>
    %628 = arith.mulf %627, %625 : vector<4x512xf32>
    %629 = arith.addf %624, %628 : vector<4x512xf32>
    %c0_198 = arith.constant 0 : index
    %c384_199 = arith.constant 384 : index
    %630 = vector.load %arg11[%c0_198, %c384_199] : memref<4x1280xf32, #tpu.memory_space<vmem>>, vector<4x512xf32>
    %631 = vector.extract_strided_slice %17 {offsets = [0, 62], sizes = [4, 1], strides = [1, 1]} : vector<4x125xf32> to vector<4x1xf32>
    %632 = vector.broadcast %631 : vector<4x1xf32> to vector<4x512xf32>
    %633 = arith.mulf %632, %630 : vector<4x512xf32>
    %634 = arith.addf %629, %633 : vector<4x512xf32>
    %c0_200 = arith.constant 0 : index
    %c512 = arith.constant 512 : index
    %635 = vector.load %arg11[%c0_200, %c512] : memref<4x1280xf32, #tpu.memory_space<vmem>>, vector<4x512xf32>
    %636 = vector.extract_strided_slice %17 {offsets = [0, 87], sizes = [4, 1], strides = [1, 1]} : vector<4x125xf32> to vector<4x1xf32>
    %637 = vector.broadcast %636 : vector<4x1xf32> to vector<4x512xf32>
    %638 = arith.mulf %637, %635 : vector<4x512xf32>
    %639 = arith.addf %634, %638 : vector<4x512xf32>
    %c0_201 = arith.constant 0 : index
    %c640 = arith.constant 640 : index
    %640 = vector.load %arg11[%c0_201, %c640] : memref<4x1280xf32, #tpu.memory_space<vmem>>, vector<4x512xf32>
    %641 = vector.extract_strided_slice %17 {offsets = [0, 112], sizes = [4, 1], strides = [1, 1]} : vector<4x125xf32> to vector<4x1xf32>
    %642 = vector.broadcast %641 : vector<4x1xf32> to vector<4x512xf32>
    %643 = arith.mulf %642, %640 : vector<4x512xf32>
    %644 = arith.addf %639, %643 : vector<4x512xf32>
    %c0_i32_202 = arith.constant 0 : i32
    %645 = vector.broadcast %c0_i32_202 : i32 to vector<1x512xi32>
    %646 = arith.addi %15, %645 : vector<1x512xi32>
    %c0_i32_203 = arith.constant 0 : i32
    %647 = vector.broadcast %c0_i32_203 : i32 to vector<1x512xi32>
    %648 = arith.cmpi sge, %646, %647 : vector<1x512xi32>
    %c0_i32_204 = arith.constant 0 : i32
    %649 = vector.broadcast %c0_i32_204 : i32 to vector<1x512xi32>
    %650 = arith.addi %15, %649 : vector<1x512xi32>
    %c8_i32_205 = arith.constant 8 : i32
    %651 = vector.broadcast %c8_i32_205 : i32 to vector<1x512xi32>
    %652 = arith.cmpi slt, %650, %651 : vector<1x512xi32>
    %653 = arith.andi %648, %652 : vector<1x512xi1>
    %c0_i32_206 = arith.constant 0 : i32
    %654 = vector.broadcast %c0_i32_206 : i32 to vector<1x512xi32>
    %655 = arith.addi %16, %654 : vector<1x512xi32>
    %c0_i32_207 = arith.constant 0 : i32
    %656 = vector.broadcast %c0_i32_207 : i32 to vector<1x512xi32>
    %657 = arith.cmpi sge, %655, %656 : vector<1x512xi32>
    %658 = arith.andi %653, %657 : vector<1x512xi1>
    %c0_i32_208 = arith.constant 0 : i32
    %659 = vector.broadcast %c0_i32_208 : i32 to vector<1x512xi32>
    %660 = arith.addi %16, %659 : vector<1x512xi32>
    %c16_i32_209 = arith.constant 16 : i32
    %661 = vector.broadcast %c16_i32_209 : i32 to vector<1x512xi32>
    %662 = arith.cmpi slt, %660, %661 : vector<1x512xi32>
    %663 = arith.andi %658, %662 : vector<1x512xi1>
    %cst_210 = arith.constant 0.000000e+00 : f32
    %664 = vector.shape_cast %663 : vector<1x512xi1> to vector<1x512xi1>
    %665 = vector.broadcast %664 : vector<1x512xi1> to vector<4x512xi1>
    %666 = vector.broadcast %cst_210 : f32 to vector<4x512xf32>
    %667 = arith.select %665, %644, %666 : vector<4x512xi1>, vector<4x512xf32>
    %668 = arith.addf %618, %667 : vector<4x512xf32>
    %cst_211 = arith.constant 0.000000e+00 : f32
    %669 = vector.broadcast %cst_211 : f32 to vector<4x512xf32>
    %c0_212 = arith.constant 0 : index
    %c129 = arith.constant 129 : index
    %670 = vector.load %arg11[%c0_212, %c129] : memref<4x1280xf32, #tpu.memory_space<vmem>>, vector<4x512xf32>
    %671 = vector.extract_strided_slice %17 {offsets = [0, 13], sizes = [4, 1], strides = [1, 1]} : vector<4x125xf32> to vector<4x1xf32>
    %672 = vector.broadcast %671 : vector<4x1xf32> to vector<4x512xf32>
    %673 = arith.mulf %672, %670 : vector<4x512xf32>
    %674 = arith.addf %669, %673 : vector<4x512xf32>
    %c0_213 = arith.constant 0 : index
    %c257 = arith.constant 257 : index
    %675 = vector.load %arg11[%c0_213, %c257] : memref<4x1280xf32, #tpu.memory_space<vmem>>, vector<4x512xf32>
    %676 = vector.extract_strided_slice %17 {offsets = [0, 38], sizes = [4, 1], strides = [1, 1]} : vector<4x125xf32> to vector<4x1xf32>
    %677 = vector.broadcast %676 : vector<4x1xf32> to vector<4x512xf32>
    %678 = arith.mulf %677, %675 : vector<4x512xf32>
    %679 = arith.addf %674, %678 : vector<4x512xf32>
    %c0_214 = arith.constant 0 : index
    %c385 = arith.constant 385 : index
    %680 = vector.load %arg11[%c0_214, %c385] : memref<4x1280xf32, #tpu.memory_space<vmem>>, vector<4x512xf32>
    %681 = vector.extract_strided_slice %17 {offsets = [0, 63], sizes = [4, 1], strides = [1, 1]} : vector<4x125xf32> to vector<4x1xf32>
    %682 = vector.broadcast %681 : vector<4x1xf32> to vector<4x512xf32>
    %683 = arith.mulf %682, %680 : vector<4x512xf32>
    %684 = arith.addf %679, %683 : vector<4x512xf32>
    %c0_215 = arith.constant 0 : index
    %c513 = arith.constant 513 : index
    %685 = vector.load %arg11[%c0_215, %c513] : memref<4x1280xf32, #tpu.memory_space<vmem>>, vector<4x512xf32>
    %686 = vector.extract_strided_slice %17 {offsets = [0, 88], sizes = [4, 1], strides = [1, 1]} : vector<4x125xf32> to vector<4x1xf32>
    %687 = vector.broadcast %686 : vector<4x1xf32> to vector<4x512xf32>
    %688 = arith.mulf %687, %685 : vector<4x512xf32>
    %689 = arith.addf %684, %688 : vector<4x512xf32>
    %c0_216 = arith.constant 0 : index
    %c641 = arith.constant 641 : index
    %690 = vector.load %arg11[%c0_216, %c641] : memref<4x1280xf32, #tpu.memory_space<vmem>>, vector<4x512xf32>
    %691 = vector.extract_strided_slice %17 {offsets = [0, 113], sizes = [4, 1], strides = [1, 1]} : vector<4x125xf32> to vector<4x1xf32>
    %692 = vector.broadcast %691 : vector<4x1xf32> to vector<4x512xf32>
    %693 = arith.mulf %692, %690 : vector<4x512xf32>
    %694 = arith.addf %689, %693 : vector<4x512xf32>
    %c0_i32_217 = arith.constant 0 : i32
    %695 = vector.broadcast %c0_i32_217 : i32 to vector<1x512xi32>
    %696 = arith.addi %15, %695 : vector<1x512xi32>
    %c0_i32_218 = arith.constant 0 : i32
    %697 = vector.broadcast %c0_i32_218 : i32 to vector<1x512xi32>
    %698 = arith.cmpi sge, %696, %697 : vector<1x512xi32>
    %c0_i32_219 = arith.constant 0 : i32
    %699 = vector.broadcast %c0_i32_219 : i32 to vector<1x512xi32>
    %700 = arith.addi %15, %699 : vector<1x512xi32>
    %c8_i32_220 = arith.constant 8 : i32
    %701 = vector.broadcast %c8_i32_220 : i32 to vector<1x512xi32>
    %702 = arith.cmpi slt, %700, %701 : vector<1x512xi32>
    %703 = arith.andi %698, %702 : vector<1x512xi1>
    %c1_i32_221 = arith.constant 1 : i32
    %704 = vector.broadcast %c1_i32_221 : i32 to vector<1x512xi32>
    %705 = arith.addi %16, %704 : vector<1x512xi32>
    %c0_i32_222 = arith.constant 0 : i32
    %706 = vector.broadcast %c0_i32_222 : i32 to vector<1x512xi32>
    %707 = arith.cmpi sge, %705, %706 : vector<1x512xi32>
    %708 = arith.andi %703, %707 : vector<1x512xi1>
    %c1_i32_223 = arith.constant 1 : i32
    %709 = vector.broadcast %c1_i32_223 : i32 to vector<1x512xi32>
    %710 = arith.addi %16, %709 : vector<1x512xi32>
    %c16_i32_224 = arith.constant 16 : i32
    %711 = vector.broadcast %c16_i32_224 : i32 to vector<1x512xi32>
    %712 = arith.cmpi slt, %710, %711 : vector<1x512xi32>
    %713 = arith.andi %708, %712 : vector<1x512xi1>
    %cst_225 = arith.constant 0.000000e+00 : f32
    %714 = vector.shape_cast %713 : vector<1x512xi1> to vector<1x512xi1>
    %715 = vector.broadcast %714 : vector<1x512xi1> to vector<4x512xi1>
    %716 = vector.broadcast %cst_225 : f32 to vector<4x512xf32>
    %717 = arith.select %715, %694, %716 : vector<4x512xi1>, vector<4x512xf32>
    %718 = arith.addf %668, %717 : vector<4x512xf32>
    %cst_226 = arith.constant 0.000000e+00 : f32
    %719 = vector.broadcast %cst_226 : f32 to vector<4x512xf32>
    %c0_227 = arith.constant 0 : index
    %c130 = arith.constant 130 : index
    %720 = vector.load %arg11[%c0_227, %c130] : memref<4x1280xf32, #tpu.memory_space<vmem>>, vector<4x512xf32>
    %721 = vector.extract_strided_slice %17 {offsets = [0, 14], sizes = [4, 1], strides = [1, 1]} : vector<4x125xf32> to vector<4x1xf32>
    %722 = vector.broadcast %721 : vector<4x1xf32> to vector<4x512xf32>
    %723 = arith.mulf %722, %720 : vector<4x512xf32>
    %724 = arith.addf %719, %723 : vector<4x512xf32>
    %c0_228 = arith.constant 0 : index
    %c258 = arith.constant 258 : index
    %725 = vector.load %arg11[%c0_228, %c258] : memref<4x1280xf32, #tpu.memory_space<vmem>>, vector<4x512xf32>
    %726 = vector.extract_strided_slice %17 {offsets = [0, 39], sizes = [4, 1], strides = [1, 1]} : vector<4x125xf32> to vector<4x1xf32>
    %727 = vector.broadcast %726 : vector<4x1xf32> to vector<4x512xf32>
    %728 = arith.mulf %727, %725 : vector<4x512xf32>
    %729 = arith.addf %724, %728 : vector<4x512xf32>
    %c0_229 = arith.constant 0 : index
    %c386 = arith.constant 386 : index
    %730 = vector.load %arg11[%c0_229, %c386] : memref<4x1280xf32, #tpu.memory_space<vmem>>, vector<4x512xf32>
    %731 = vector.extract_strided_slice %17 {offsets = [0, 64], sizes = [4, 1], strides = [1, 1]} : vector<4x125xf32> to vector<4x1xf32>
    %732 = vector.broadcast %731 : vector<4x1xf32> to vector<4x512xf32>
    %733 = arith.mulf %732, %730 : vector<4x512xf32>
    %734 = arith.addf %729, %733 : vector<4x512xf32>
    %c0_230 = arith.constant 0 : index
    %c514 = arith.constant 514 : index
    %735 = vector.load %arg11[%c0_230, %c514] : memref<4x1280xf32, #tpu.memory_space<vmem>>, vector<4x512xf32>
    %736 = vector.extract_strided_slice %17 {offsets = [0, 89], sizes = [4, 1], strides = [1, 1]} : vector<4x125xf32> to vector<4x1xf32>
    %737 = vector.broadcast %736 : vector<4x1xf32> to vector<4x512xf32>
    %738 = arith.mulf %737, %735 : vector<4x512xf32>
    %739 = arith.addf %734, %738 : vector<4x512xf32>
    %c0_231 = arith.constant 0 : index
    %c642 = arith.constant 642 : index
    %740 = vector.load %arg11[%c0_231, %c642] : memref<4x1280xf32, #tpu.memory_space<vmem>>, vector<4x512xf32>
    %741 = vector.extract_strided_slice %17 {offsets = [0, 114], sizes = [4, 1], strides = [1, 1]} : vector<4x125xf32> to vector<4x1xf32>
    %742 = vector.broadcast %741 : vector<4x1xf32> to vector<4x512xf32>
    %743 = arith.mulf %742, %740 : vector<4x512xf32>
    %744 = arith.addf %739, %743 : vector<4x512xf32>
    %c0_i32_232 = arith.constant 0 : i32
    %745 = vector.broadcast %c0_i32_232 : i32 to vector<1x512xi32>
    %746 = arith.addi %15, %745 : vector<1x512xi32>
    %c0_i32_233 = arith.constant 0 : i32
    %747 = vector.broadcast %c0_i32_233 : i32 to vector<1x512xi32>
    %748 = arith.cmpi sge, %746, %747 : vector<1x512xi32>
    %c0_i32_234 = arith.constant 0 : i32
    %749 = vector.broadcast %c0_i32_234 : i32 to vector<1x512xi32>
    %750 = arith.addi %15, %749 : vector<1x512xi32>
    %c8_i32_235 = arith.constant 8 : i32
    %751 = vector.broadcast %c8_i32_235 : i32 to vector<1x512xi32>
    %752 = arith.cmpi slt, %750, %751 : vector<1x512xi32>
    %753 = arith.andi %748, %752 : vector<1x512xi1>
    %c2_i32_236 = arith.constant 2 : i32
    %754 = vector.broadcast %c2_i32_236 : i32 to vector<1x512xi32>
    %755 = arith.addi %16, %754 : vector<1x512xi32>
    %c0_i32_237 = arith.constant 0 : i32
    %756 = vector.broadcast %c0_i32_237 : i32 to vector<1x512xi32>
    %757 = arith.cmpi sge, %755, %756 : vector<1x512xi32>
    %758 = arith.andi %753, %757 : vector<1x512xi1>
    %c2_i32_238 = arith.constant 2 : i32
    %759 = vector.broadcast %c2_i32_238 : i32 to vector<1x512xi32>
    %760 = arith.addi %16, %759 : vector<1x512xi32>
    %c16_i32_239 = arith.constant 16 : i32
    %761 = vector.broadcast %c16_i32_239 : i32 to vector<1x512xi32>
    %762 = arith.cmpi slt, %760, %761 : vector<1x512xi32>
    %763 = arith.andi %758, %762 : vector<1x512xi1>
    %cst_240 = arith.constant 0.000000e+00 : f32
    %764 = vector.shape_cast %763 : vector<1x512xi1> to vector<1x512xi1>
    %765 = vector.broadcast %764 : vector<1x512xi1> to vector<4x512xi1>
    %766 = vector.broadcast %cst_240 : f32 to vector<4x512xf32>
    %767 = arith.select %765, %744, %766 : vector<4x512xi1>, vector<4x512xf32>
    %768 = arith.addf %718, %767 : vector<4x512xf32>
    %cst_241 = arith.constant 0.000000e+00 : f32
    %769 = vector.broadcast %cst_241 : f32 to vector<4x512xf32>
    %c0_242 = arith.constant 0 : index
    %c142 = arith.constant 142 : index
    %770 = vector.load %arg11[%c0_242, %c142] : memref<4x1280xf32, #tpu.memory_space<vmem>>, vector<4x512xf32>
    %771 = vector.extract_strided_slice %17 {offsets = [0, 15], sizes = [4, 1], strides = [1, 1]} : vector<4x125xf32> to vector<4x1xf32>
    %772 = vector.broadcast %771 : vector<4x1xf32> to vector<4x512xf32>
    %773 = arith.mulf %772, %770 : vector<4x512xf32>
    %774 = arith.addf %769, %773 : vector<4x512xf32>
    %c0_243 = arith.constant 0 : index
    %c270 = arith.constant 270 : index
    %775 = vector.load %arg11[%c0_243, %c270] : memref<4x1280xf32, #tpu.memory_space<vmem>>, vector<4x512xf32>
    %776 = vector.extract_strided_slice %17 {offsets = [0, 40], sizes = [4, 1], strides = [1, 1]} : vector<4x125xf32> to vector<4x1xf32>
    %777 = vector.broadcast %776 : vector<4x1xf32> to vector<4x512xf32>
    %778 = arith.mulf %777, %775 : vector<4x512xf32>
    %779 = arith.addf %774, %778 : vector<4x512xf32>
    %c0_244 = arith.constant 0 : index
    %c398 = arith.constant 398 : index
    %780 = vector.load %arg11[%c0_244, %c398] : memref<4x1280xf32, #tpu.memory_space<vmem>>, vector<4x512xf32>
    %781 = vector.extract_strided_slice %17 {offsets = [0, 65], sizes = [4, 1], strides = [1, 1]} : vector<4x125xf32> to vector<4x1xf32>
    %782 = vector.broadcast %781 : vector<4x1xf32> to vector<4x512xf32>
    %783 = arith.mulf %782, %780 : vector<4x512xf32>
    %784 = arith.addf %779, %783 : vector<4x512xf32>
    %c0_245 = arith.constant 0 : index
    %c526 = arith.constant 526 : index
    %785 = vector.load %arg11[%c0_245, %c526] : memref<4x1280xf32, #tpu.memory_space<vmem>>, vector<4x512xf32>
    %786 = vector.extract_strided_slice %17 {offsets = [0, 90], sizes = [4, 1], strides = [1, 1]} : vector<4x125xf32> to vector<4x1xf32>
    %787 = vector.broadcast %786 : vector<4x1xf32> to vector<4x512xf32>
    %788 = arith.mulf %787, %785 : vector<4x512xf32>
    %789 = arith.addf %784, %788 : vector<4x512xf32>
    %c0_246 = arith.constant 0 : index
    %c654 = arith.constant 654 : index
    %790 = vector.load %arg11[%c0_246, %c654] : memref<4x1280xf32, #tpu.memory_space<vmem>>, vector<4x512xf32>
    %791 = vector.extract_strided_slice %17 {offsets = [0, 115], sizes = [4, 1], strides = [1, 1]} : vector<4x125xf32> to vector<4x1xf32>
    %792 = vector.broadcast %791 : vector<4x1xf32> to vector<4x512xf32>
    %793 = arith.mulf %792, %790 : vector<4x512xf32>
    %794 = arith.addf %789, %793 : vector<4x512xf32>
    %c1_i32_247 = arith.constant 1 : i32
    %795 = vector.broadcast %c1_i32_247 : i32 to vector<1x512xi32>
    %796 = arith.addi %15, %795 : vector<1x512xi32>
    %c0_i32_248 = arith.constant 0 : i32
    %797 = vector.broadcast %c0_i32_248 : i32 to vector<1x512xi32>
    %798 = arith.cmpi sge, %796, %797 : vector<1x512xi32>
    %c1_i32_249 = arith.constant 1 : i32
    %799 = vector.broadcast %c1_i32_249 : i32 to vector<1x512xi32>
    %800 = arith.addi %15, %799 : vector<1x512xi32>
    %c8_i32_250 = arith.constant 8 : i32
    %801 = vector.broadcast %c8_i32_250 : i32 to vector<1x512xi32>
    %802 = arith.cmpi slt, %800, %801 : vector<1x512xi32>
    %803 = arith.andi %798, %802 : vector<1x512xi1>
    %c-2_i32_251 = arith.constant -2 : i32
    %804 = vector.broadcast %c-2_i32_251 : i32 to vector<1x512xi32>
    %805 = arith.addi %16, %804 : vector<1x512xi32>
    %c0_i32_252 = arith.constant 0 : i32
    %806 = vector.broadcast %c0_i32_252 : i32 to vector<1x512xi32>
    %807 = arith.cmpi sge, %805, %806 : vector<1x512xi32>
    %808 = arith.andi %803, %807 : vector<1x512xi1>
    %c-2_i32_253 = arith.constant -2 : i32
    %809 = vector.broadcast %c-2_i32_253 : i32 to vector<1x512xi32>
    %810 = arith.addi %16, %809 : vector<1x512xi32>
    %c16_i32_254 = arith.constant 16 : i32
    %811 = vector.broadcast %c16_i32_254 : i32 to vector<1x512xi32>
    %812 = arith.cmpi slt, %810, %811 : vector<1x512xi32>
    %813 = arith.andi %808, %812 : vector<1x512xi1>
    %cst_255 = arith.constant 0.000000e+00 : f32
    %814 = vector.shape_cast %813 : vector<1x512xi1> to vector<1x512xi1>
    %815 = vector.broadcast %814 : vector<1x512xi1> to vector<4x512xi1>
    %816 = vector.broadcast %cst_255 : f32 to vector<4x512xf32>
    %817 = arith.select %815, %794, %816 : vector<4x512xi1>, vector<4x512xf32>
    %818 = arith.addf %768, %817 : vector<4x512xf32>
    %cst_256 = arith.constant 0.000000e+00 : f32
    %819 = vector.broadcast %cst_256 : f32 to vector<4x512xf32>
    %c0_257 = arith.constant 0 : index
    %c143 = arith.constant 143 : index
    %820 = vector.load %arg11[%c0_257, %c143] : memref<4x1280xf32, #tpu.memory_space<vmem>>, vector<4x512xf32>
    %821 = vector.extract_strided_slice %17 {offsets = [0, 16], sizes = [4, 1], strides = [1, 1]} : vector<4x125xf32> to vector<4x1xf32>
    %822 = vector.broadcast %821 : vector<4x1xf32> to vector<4x512xf32>
    %823 = arith.mulf %822, %820 : vector<4x512xf32>
    %824 = arith.addf %819, %823 : vector<4x512xf32>
    %c0_258 = arith.constant 0 : index
    %c271 = arith.constant 271 : index
    %825 = vector.load %arg11[%c0_258, %c271] : memref<4x1280xf32, #tpu.memory_space<vmem>>, vector<4x512xf32>
    %826 = vector.extract_strided_slice %17 {offsets = [0, 41], sizes = [4, 1], strides = [1, 1]} : vector<4x125xf32> to vector<4x1xf32>
    %827 = vector.broadcast %826 : vector<4x1xf32> to vector<4x512xf32>
    %828 = arith.mulf %827, %825 : vector<4x512xf32>
    %829 = arith.addf %824, %828 : vector<4x512xf32>
    %c0_259 = arith.constant 0 : index
    %c399 = arith.constant 399 : index
    %830 = vector.load %arg11[%c0_259, %c399] : memref<4x1280xf32, #tpu.memory_space<vmem>>, vector<4x512xf32>
    %831 = vector.extract_strided_slice %17 {offsets = [0, 66], sizes = [4, 1], strides = [1, 1]} : vector<4x125xf32> to vector<4x1xf32>
    %832 = vector.broadcast %831 : vector<4x1xf32> to vector<4x512xf32>
    %833 = arith.mulf %832, %830 : vector<4x512xf32>
    %834 = arith.addf %829, %833 : vector<4x512xf32>
    %c0_260 = arith.constant 0 : index
    %c527 = arith.constant 527 : index
    %835 = vector.load %arg11[%c0_260, %c527] : memref<4x1280xf32, #tpu.memory_space<vmem>>, vector<4x512xf32>
    %836 = vector.extract_strided_slice %17 {offsets = [0, 91], sizes = [4, 1], strides = [1, 1]} : vector<4x125xf32> to vector<4x1xf32>
    %837 = vector.broadcast %836 : vector<4x1xf32> to vector<4x512xf32>
    %838 = arith.mulf %837, %835 : vector<4x512xf32>
    %839 = arith.addf %834, %838 : vector<4x512xf32>
    %c0_261 = arith.constant 0 : index
    %c655 = arith.constant 655 : index
    %840 = vector.load %arg11[%c0_261, %c655] : memref<4x1280xf32, #tpu.memory_space<vmem>>, vector<4x512xf32>
    %841 = vector.extract_strided_slice %17 {offsets = [0, 116], sizes = [4, 1], strides = [1, 1]} : vector<4x125xf32> to vector<4x1xf32>
    %842 = vector.broadcast %841 : vector<4x1xf32> to vector<4x512xf32>
    %843 = arith.mulf %842, %840 : vector<4x512xf32>
    %844 = arith.addf %839, %843 : vector<4x512xf32>
    %c1_i32_262 = arith.constant 1 : i32
    %845 = vector.broadcast %c1_i32_262 : i32 to vector<1x512xi32>
    %846 = arith.addi %15, %845 : vector<1x512xi32>
    %c0_i32_263 = arith.constant 0 : i32
    %847 = vector.broadcast %c0_i32_263 : i32 to vector<1x512xi32>
    %848 = arith.cmpi sge, %846, %847 : vector<1x512xi32>
    %c1_i32_264 = arith.constant 1 : i32
    %849 = vector.broadcast %c1_i32_264 : i32 to vector<1x512xi32>
    %850 = arith.addi %15, %849 : vector<1x512xi32>
    %c8_i32_265 = arith.constant 8 : i32
    %851 = vector.broadcast %c8_i32_265 : i32 to vector<1x512xi32>
    %852 = arith.cmpi slt, %850, %851 : vector<1x512xi32>
    %853 = arith.andi %848, %852 : vector<1x512xi1>
    %c-1_i32_266 = arith.constant -1 : i32
    %854 = vector.broadcast %c-1_i32_266 : i32 to vector<1x512xi32>
    %855 = arith.addi %16, %854 : vector<1x512xi32>
    %c0_i32_267 = arith.constant 0 : i32
    %856 = vector.broadcast %c0_i32_267 : i32 to vector<1x512xi32>
    %857 = arith.cmpi sge, %855, %856 : vector<1x512xi32>
    %858 = arith.andi %853, %857 : vector<1x512xi1>
    %c-1_i32_268 = arith.constant -1 : i32
    %859 = vector.broadcast %c-1_i32_268 : i32 to vector<1x512xi32>
    %860 = arith.addi %16, %859 : vector<1x512xi32>
    %c16_i32_269 = arith.constant 16 : i32
    %861 = vector.broadcast %c16_i32_269 : i32 to vector<1x512xi32>
    %862 = arith.cmpi slt, %860, %861 : vector<1x512xi32>
    %863 = arith.andi %858, %862 : vector<1x512xi1>
    %cst_270 = arith.constant 0.000000e+00 : f32
    %864 = vector.shape_cast %863 : vector<1x512xi1> to vector<1x512xi1>
    %865 = vector.broadcast %864 : vector<1x512xi1> to vector<4x512xi1>
    %866 = vector.broadcast %cst_270 : f32 to vector<4x512xf32>
    %867 = arith.select %865, %844, %866 : vector<4x512xi1>, vector<4x512xf32>
    %868 = arith.addf %818, %867 : vector<4x512xf32>
    %cst_271 = arith.constant 0.000000e+00 : f32
    %869 = vector.broadcast %cst_271 : f32 to vector<4x512xf32>
    %c0_272 = arith.constant 0 : index
    %c144 = arith.constant 144 : index
    %870 = vector.load %arg11[%c0_272, %c144] : memref<4x1280xf32, #tpu.memory_space<vmem>>, vector<4x512xf32>
    %871 = vector.extract_strided_slice %17 {offsets = [0, 17], sizes = [4, 1], strides = [1, 1]} : vector<4x125xf32> to vector<4x1xf32>
    %872 = vector.broadcast %871 : vector<4x1xf32> to vector<4x512xf32>
    %873 = arith.mulf %872, %870 : vector<4x512xf32>
    %874 = arith.addf %869, %873 : vector<4x512xf32>
    %c0_273 = arith.constant 0 : index
    %c272 = arith.constant 272 : index
    %875 = vector.load %arg11[%c0_273, %c272] : memref<4x1280xf32, #tpu.memory_space<vmem>>, vector<4x512xf32>
    %876 = vector.extract_strided_slice %17 {offsets = [0, 42], sizes = [4, 1], strides = [1, 1]} : vector<4x125xf32> to vector<4x1xf32>
    %877 = vector.broadcast %876 : vector<4x1xf32> to vector<4x512xf32>
    %878 = arith.mulf %877, %875 : vector<4x512xf32>
    %879 = arith.addf %874, %878 : vector<4x512xf32>
    %c0_274 = arith.constant 0 : index
    %c400 = arith.constant 400 : index
    %880 = vector.load %arg11[%c0_274, %c400] : memref<4x1280xf32, #tpu.memory_space<vmem>>, vector<4x512xf32>
    %881 = vector.extract_strided_slice %17 {offsets = [0, 67], sizes = [4, 1], strides = [1, 1]} : vector<4x125xf32> to vector<4x1xf32>
    %882 = vector.broadcast %881 : vector<4x1xf32> to vector<4x512xf32>
    %883 = arith.mulf %882, %880 : vector<4x512xf32>
    %884 = arith.addf %879, %883 : vector<4x512xf32>
    %c0_275 = arith.constant 0 : index
    %c528 = arith.constant 528 : index
    %885 = vector.load %arg11[%c0_275, %c528] : memref<4x1280xf32, #tpu.memory_space<vmem>>, vector<4x512xf32>
    %886 = vector.extract_strided_slice %17 {offsets = [0, 92], sizes = [4, 1], strides = [1, 1]} : vector<4x125xf32> to vector<4x1xf32>
    %887 = vector.broadcast %886 : vector<4x1xf32> to vector<4x512xf32>
    %888 = arith.mulf %887, %885 : vector<4x512xf32>
    %889 = arith.addf %884, %888 : vector<4x512xf32>
    %c0_276 = arith.constant 0 : index
    %c656 = arith.constant 656 : index
    %890 = vector.load %arg11[%c0_276, %c656] : memref<4x1280xf32, #tpu.memory_space<vmem>>, vector<4x512xf32>
    %891 = vector.extract_strided_slice %17 {offsets = [0, 117], sizes = [4, 1], strides = [1, 1]} : vector<4x125xf32> to vector<4x1xf32>
    %892 = vector.broadcast %891 : vector<4x1xf32> to vector<4x512xf32>
    %893 = arith.mulf %892, %890 : vector<4x512xf32>
    %894 = arith.addf %889, %893 : vector<4x512xf32>
    %c1_i32_277 = arith.constant 1 : i32
    %895 = vector.broadcast %c1_i32_277 : i32 to vector<1x512xi32>
    %896 = arith.addi %15, %895 : vector<1x512xi32>
    %c0_i32_278 = arith.constant 0 : i32
    %897 = vector.broadcast %c0_i32_278 : i32 to vector<1x512xi32>
    %898 = arith.cmpi sge, %896, %897 : vector<1x512xi32>
    %c1_i32_279 = arith.constant 1 : i32
    %899 = vector.broadcast %c1_i32_279 : i32 to vector<1x512xi32>
    %900 = arith.addi %15, %899 : vector<1x512xi32>
    %c8_i32_280 = arith.constant 8 : i32
    %901 = vector.broadcast %c8_i32_280 : i32 to vector<1x512xi32>
    %902 = arith.cmpi slt, %900, %901 : vector<1x512xi32>
    %903 = arith.andi %898, %902 : vector<1x512xi1>
    %c0_i32_281 = arith.constant 0 : i32
    %904 = vector.broadcast %c0_i32_281 : i32 to vector<1x512xi32>
    %905 = arith.addi %16, %904 : vector<1x512xi32>
    %c0_i32_282 = arith.constant 0 : i32
    %906 = vector.broadcast %c0_i32_282 : i32 to vector<1x512xi32>
    %907 = arith.cmpi sge, %905, %906 : vector<1x512xi32>
    %908 = arith.andi %903, %907 : vector<1x512xi1>
    %c0_i32_283 = arith.constant 0 : i32
    %909 = vector.broadcast %c0_i32_283 : i32 to vector<1x512xi32>
    %910 = arith.addi %16, %909 : vector<1x512xi32>
    %c16_i32_284 = arith.constant 16 : i32
    %911 = vector.broadcast %c16_i32_284 : i32 to vector<1x512xi32>
    %912 = arith.cmpi slt, %910, %911 : vector<1x512xi32>
    %913 = arith.andi %908, %912 : vector<1x512xi1>
    %cst_285 = arith.constant 0.000000e+00 : f32
    %914 = vector.shape_cast %913 : vector<1x512xi1> to vector<1x512xi1>
    %915 = vector.broadcast %914 : vector<1x512xi1> to vector<4x512xi1>
    %916 = vector.broadcast %cst_285 : f32 to vector<4x512xf32>
    %917 = arith.select %915, %894, %916 : vector<4x512xi1>, vector<4x512xf32>
    %918 = arith.addf %868, %917 : vector<4x512xf32>
    %cst_286 = arith.constant 0.000000e+00 : f32
    %919 = vector.broadcast %cst_286 : f32 to vector<4x512xf32>
    %c0_287 = arith.constant 0 : index
    %c145 = arith.constant 145 : index
    %920 = vector.load %arg11[%c0_287, %c145] : memref<4x1280xf32, #tpu.memory_space<vmem>>, vector<4x512xf32>
    %921 = vector.extract_strided_slice %17 {offsets = [0, 18], sizes = [4, 1], strides = [1, 1]} : vector<4x125xf32> to vector<4x1xf32>
    %922 = vector.broadcast %921 : vector<4x1xf32> to vector<4x512xf32>
    %923 = arith.mulf %922, %920 : vector<4x512xf32>
    %924 = arith.addf %919, %923 : vector<4x512xf32>
    %c0_288 = arith.constant 0 : index
    %c273 = arith.constant 273 : index
    %925 = vector.load %arg11[%c0_288, %c273] : memref<4x1280xf32, #tpu.memory_space<vmem>>, vector<4x512xf32>
    %926 = vector.extract_strided_slice %17 {offsets = [0, 43], sizes = [4, 1], strides = [1, 1]} : vector<4x125xf32> to vector<4x1xf32>
    %927 = vector.broadcast %926 : vector<4x1xf32> to vector<4x512xf32>
    %928 = arith.mulf %927, %925 : vector<4x512xf32>
    %929 = arith.addf %924, %928 : vector<4x512xf32>
    %c0_289 = arith.constant 0 : index
    %c401 = arith.constant 401 : index
    %930 = vector.load %arg11[%c0_289, %c401] : memref<4x1280xf32, #tpu.memory_space<vmem>>, vector<4x512xf32>
    %931 = vector.extract_strided_slice %17 {offsets = [0, 68], sizes = [4, 1], strides = [1, 1]} : vector<4x125xf32> to vector<4x1xf32>
    %932 = vector.broadcast %931 : vector<4x1xf32> to vector<4x512xf32>
    %933 = arith.mulf %932, %930 : vector<4x512xf32>
    %934 = arith.addf %929, %933 : vector<4x512xf32>
    %c0_290 = arith.constant 0 : index
    %c529 = arith.constant 529 : index
    %935 = vector.load %arg11[%c0_290, %c529] : memref<4x1280xf32, #tpu.memory_space<vmem>>, vector<4x512xf32>
    %936 = vector.extract_strided_slice %17 {offsets = [0, 93], sizes = [4, 1], strides = [1, 1]} : vector<4x125xf32> to vector<4x1xf32>
    %937 = vector.broadcast %936 : vector<4x1xf32> to vector<4x512xf32>
    %938 = arith.mulf %937, %935 : vector<4x512xf32>
    %939 = arith.addf %934, %938 : vector<4x512xf32>
    %c0_291 = arith.constant 0 : index
    %c657 = arith.constant 657 : index
    %940 = vector.load %arg11[%c0_291, %c657] : memref<4x1280xf32, #tpu.memory_space<vmem>>, vector<4x512xf32>
    %941 = vector.extract_strided_slice %17 {offsets = [0, 118], sizes = [4, 1], strides = [1, 1]} : vector<4x125xf32> to vector<4x1xf32>
    %942 = vector.broadcast %941 : vector<4x1xf32> to vector<4x512xf32>
    %943 = arith.mulf %942, %940 : vector<4x512xf32>
    %944 = arith.addf %939, %943 : vector<4x512xf32>
    %c1_i32_292 = arith.constant 1 : i32
    %945 = vector.broadcast %c1_i32_292 : i32 to vector<1x512xi32>
    %946 = arith.addi %15, %945 : vector<1x512xi32>
    %c0_i32_293 = arith.constant 0 : i32
    %947 = vector.broadcast %c0_i32_293 : i32 to vector<1x512xi32>
    %948 = arith.cmpi sge, %946, %947 : vector<1x512xi32>
    %c1_i32_294 = arith.constant 1 : i32
    %949 = vector.broadcast %c1_i32_294 : i32 to vector<1x512xi32>
    %950 = arith.addi %15, %949 : vector<1x512xi32>
    %c8_i32_295 = arith.constant 8 : i32
    %951 = vector.broadcast %c8_i32_295 : i32 to vector<1x512xi32>
    %952 = arith.cmpi slt, %950, %951 : vector<1x512xi32>
    %953 = arith.andi %948, %952 : vector<1x512xi1>
    %c1_i32_296 = arith.constant 1 : i32
    %954 = vector.broadcast %c1_i32_296 : i32 to vector<1x512xi32>
    %955 = arith.addi %16, %954 : vector<1x512xi32>
    %c0_i32_297 = arith.constant 0 : i32
    %956 = vector.broadcast %c0_i32_297 : i32 to vector<1x512xi32>
    %957 = arith.cmpi sge, %955, %956 : vector<1x512xi32>
    %958 = arith.andi %953, %957 : vector<1x512xi1>
    %c1_i32_298 = arith.constant 1 : i32
    %959 = vector.broadcast %c1_i32_298 : i32 to vector<1x512xi32>
    %960 = arith.addi %16, %959 : vector<1x512xi32>
    %c16_i32_299 = arith.constant 16 : i32
    %961 = vector.broadcast %c16_i32_299 : i32 to vector<1x512xi32>
    %962 = arith.cmpi slt, %960, %961 : vector<1x512xi32>
    %963 = arith.andi %958, %962 : vector<1x512xi1>
    %cst_300 = arith.constant 0.000000e+00 : f32
    %964 = vector.shape_cast %963 : vector<1x512xi1> to vector<1x512xi1>
    %965 = vector.broadcast %964 : vector<1x512xi1> to vector<4x512xi1>
    %966 = vector.broadcast %cst_300 : f32 to vector<4x512xf32>
    %967 = arith.select %965, %944, %966 : vector<4x512xi1>, vector<4x512xf32>
    %968 = arith.addf %918, %967 : vector<4x512xf32>
    %cst_301 = arith.constant 0.000000e+00 : f32
    %969 = vector.broadcast %cst_301 : f32 to vector<4x512xf32>
    %c0_302 = arith.constant 0 : index
    %c146 = arith.constant 146 : index
    %970 = vector.load %arg11[%c0_302, %c146] : memref<4x1280xf32, #tpu.memory_space<vmem>>, vector<4x512xf32>
    %971 = vector.extract_strided_slice %17 {offsets = [0, 19], sizes = [4, 1], strides = [1, 1]} : vector<4x125xf32> to vector<4x1xf32>
    %972 = vector.broadcast %971 : vector<4x1xf32> to vector<4x512xf32>
    %973 = arith.mulf %972, %970 : vector<4x512xf32>
    %974 = arith.addf %969, %973 : vector<4x512xf32>
    %c0_303 = arith.constant 0 : index
    %c274 = arith.constant 274 : index
    %975 = vector.load %arg11[%c0_303, %c274] : memref<4x1280xf32, #tpu.memory_space<vmem>>, vector<4x512xf32>
    %976 = vector.extract_strided_slice %17 {offsets = [0, 44], sizes = [4, 1], strides = [1, 1]} : vector<4x125xf32> to vector<4x1xf32>
    %977 = vector.broadcast %976 : vector<4x1xf32> to vector<4x512xf32>
    %978 = arith.mulf %977, %975 : vector<4x512xf32>
    %979 = arith.addf %974, %978 : vector<4x512xf32>
    %c0_304 = arith.constant 0 : index
    %c402 = arith.constant 402 : index
    %980 = vector.load %arg11[%c0_304, %c402] : memref<4x1280xf32, #tpu.memory_space<vmem>>, vector<4x512xf32>
    %981 = vector.extract_strided_slice %17 {offsets = [0, 69], sizes = [4, 1], strides = [1, 1]} : vector<4x125xf32> to vector<4x1xf32>
    %982 = vector.broadcast %981 : vector<4x1xf32> to vector<4x512xf32>
    %983 = arith.mulf %982, %980 : vector<4x512xf32>
    %984 = arith.addf %979, %983 : vector<4x512xf32>
    %c0_305 = arith.constant 0 : index
    %c530 = arith.constant 530 : index
    %985 = vector.load %arg11[%c0_305, %c530] : memref<4x1280xf32, #tpu.memory_space<vmem>>, vector<4x512xf32>
    %986 = vector.extract_strided_slice %17 {offsets = [0, 94], sizes = [4, 1], strides = [1, 1]} : vector<4x125xf32> to vector<4x1xf32>
    %987 = vector.broadcast %986 : vector<4x1xf32> to vector<4x512xf32>
    %988 = arith.mulf %987, %985 : vector<4x512xf32>
    %989 = arith.addf %984, %988 : vector<4x512xf32>
    %c0_306 = arith.constant 0 : index
    %c658 = arith.constant 658 : index
    %990 = vector.load %arg11[%c0_306, %c658] : memref<4x1280xf32, #tpu.memory_space<vmem>>, vector<4x512xf32>
    %991 = vector.extract_strided_slice %17 {offsets = [0, 119], sizes = [4, 1], strides = [1, 1]} : vector<4x125xf32> to vector<4x1xf32>
    %992 = vector.broadcast %991 : vector<4x1xf32> to vector<4x512xf32>
    %993 = arith.mulf %992, %990 : vector<4x512xf32>
    %994 = arith.addf %989, %993 : vector<4x512xf32>
    %c1_i32_307 = arith.constant 1 : i32
    %995 = vector.broadcast %c1_i32_307 : i32 to vector<1x512xi32>
    %996 = arith.addi %15, %995 : vector<1x512xi32>
    %c0_i32_308 = arith.constant 0 : i32
    %997 = vector.broadcast %c0_i32_308 : i32 to vector<1x512xi32>
    %998 = arith.cmpi sge, %996, %997 : vector<1x512xi32>
    %c1_i32_309 = arith.constant 1 : i32
    %999 = vector.broadcast %c1_i32_309 : i32 to vector<1x512xi32>
    %1000 = arith.addi %15, %999 : vector<1x512xi32>
    %c8_i32_310 = arith.constant 8 : i32
    %1001 = vector.broadcast %c8_i32_310 : i32 to vector<1x512xi32>
    %1002 = arith.cmpi slt, %1000, %1001 : vector<1x512xi32>
    %1003 = arith.andi %998, %1002 : vector<1x512xi1>
    %c2_i32_311 = arith.constant 2 : i32
    %1004 = vector.broadcast %c2_i32_311 : i32 to vector<1x512xi32>
    %1005 = arith.addi %16, %1004 : vector<1x512xi32>
    %c0_i32_312 = arith.constant 0 : i32
    %1006 = vector.broadcast %c0_i32_312 : i32 to vector<1x512xi32>
    %1007 = arith.cmpi sge, %1005, %1006 : vector<1x512xi32>
    %1008 = arith.andi %1003, %1007 : vector<1x512xi1>
    %c2_i32_313 = arith.constant 2 : i32
    %1009 = vector.broadcast %c2_i32_313 : i32 to vector<1x512xi32>
    %1010 = arith.addi %16, %1009 : vector<1x512xi32>
    %c16_i32_314 = arith.constant 16 : i32
    %1011 = vector.broadcast %c16_i32_314 : i32 to vector<1x512xi32>
    %1012 = arith.cmpi slt, %1010, %1011 : vector<1x512xi32>
    %1013 = arith.andi %1008, %1012 : vector<1x512xi1>
    %cst_315 = arith.constant 0.000000e+00 : f32
    %1014 = vector.shape_cast %1013 : vector<1x512xi1> to vector<1x512xi1>
    %1015 = vector.broadcast %1014 : vector<1x512xi1> to vector<4x512xi1>
    %1016 = vector.broadcast %cst_315 : f32 to vector<4x512xf32>
    %1017 = arith.select %1015, %994, %1016 : vector<4x512xi1>, vector<4x512xf32>
    %1018 = arith.addf %968, %1017 : vector<4x512xf32>
    %cst_316 = arith.constant 0.000000e+00 : f32
    %1019 = vector.broadcast %cst_316 : f32 to vector<4x512xf32>
    %c0_317 = arith.constant 0 : index
    %c158 = arith.constant 158 : index
    %1020 = vector.load %arg11[%c0_317, %c158] : memref<4x1280xf32, #tpu.memory_space<vmem>>, vector<4x512xf32>
    %1021 = vector.extract_strided_slice %17 {offsets = [0, 20], sizes = [4, 1], strides = [1, 1]} : vector<4x125xf32> to vector<4x1xf32>
    %1022 = vector.broadcast %1021 : vector<4x1xf32> to vector<4x512xf32>
    %1023 = arith.mulf %1022, %1020 : vector<4x512xf32>
    %1024 = arith.addf %1019, %1023 : vector<4x512xf32>
    %c0_318 = arith.constant 0 : index
    %c286 = arith.constant 286 : index
    %1025 = vector.load %arg11[%c0_318, %c286] : memref<4x1280xf32, #tpu.memory_space<vmem>>, vector<4x512xf32>
    %1026 = vector.extract_strided_slice %17 {offsets = [0, 45], sizes = [4, 1], strides = [1, 1]} : vector<4x125xf32> to vector<4x1xf32>
    %1027 = vector.broadcast %1026 : vector<4x1xf32> to vector<4x512xf32>
    %1028 = arith.mulf %1027, %1025 : vector<4x512xf32>
    %1029 = arith.addf %1024, %1028 : vector<4x512xf32>
    %c0_319 = arith.constant 0 : index
    %c414 = arith.constant 414 : index
    %1030 = vector.load %arg11[%c0_319, %c414] : memref<4x1280xf32, #tpu.memory_space<vmem>>, vector<4x512xf32>
    %1031 = vector.extract_strided_slice %17 {offsets = [0, 70], sizes = [4, 1], strides = [1, 1]} : vector<4x125xf32> to vector<4x1xf32>
    %1032 = vector.broadcast %1031 : vector<4x1xf32> to vector<4x512xf32>
    %1033 = arith.mulf %1032, %1030 : vector<4x512xf32>
    %1034 = arith.addf %1029, %1033 : vector<4x512xf32>
    %c0_320 = arith.constant 0 : index
    %c542 = arith.constant 542 : index
    %1035 = vector.load %arg11[%c0_320, %c542] : memref<4x1280xf32, #tpu.memory_space<vmem>>, vector<4x512xf32>
    %1036 = vector.extract_strided_slice %17 {offsets = [0, 95], sizes = [4, 1], strides = [1, 1]} : vector<4x125xf32> to vector<4x1xf32>
    %1037 = vector.broadcast %1036 : vector<4x1xf32> to vector<4x512xf32>
    %1038 = arith.mulf %1037, %1035 : vector<4x512xf32>
    %1039 = arith.addf %1034, %1038 : vector<4x512xf32>
    %c0_321 = arith.constant 0 : index
    %c670 = arith.constant 670 : index
    %1040 = vector.load %arg11[%c0_321, %c670] : memref<4x1280xf32, #tpu.memory_space<vmem>>, vector<4x512xf32>
    %1041 = vector.extract_strided_slice %17 {offsets = [0, 120], sizes = [4, 1], strides = [1, 1]} : vector<4x125xf32> to vector<4x1xf32>
    %1042 = vector.broadcast %1041 : vector<4x1xf32> to vector<4x512xf32>
    %1043 = arith.mulf %1042, %1040 : vector<4x512xf32>
    %1044 = arith.addf %1039, %1043 : vector<4x512xf32>
    %c2_i32_322 = arith.constant 2 : i32
    %1045 = vector.broadcast %c2_i32_322 : i32 to vector<1x512xi32>
    %1046 = arith.addi %15, %1045 : vector<1x512xi32>
    %c0_i32_323 = arith.constant 0 : i32
    %1047 = vector.broadcast %c0_i32_323 : i32 to vector<1x512xi32>
    %1048 = arith.cmpi sge, %1046, %1047 : vector<1x512xi32>
    %c2_i32_324 = arith.constant 2 : i32
    %1049 = vector.broadcast %c2_i32_324 : i32 to vector<1x512xi32>
    %1050 = arith.addi %15, %1049 : vector<1x512xi32>
    %c8_i32_325 = arith.constant 8 : i32
    %1051 = vector.broadcast %c8_i32_325 : i32 to vector<1x512xi32>
    %1052 = arith.cmpi slt, %1050, %1051 : vector<1x512xi32>
    %1053 = arith.andi %1048, %1052 : vector<1x512xi1>
    %c-2_i32_326 = arith.constant -2 : i32
    %1054 = vector.broadcast %c-2_i32_326 : i32 to vector<1x512xi32>
    %1055 = arith.addi %16, %1054 : vector<1x512xi32>
    %c0_i32_327 = arith.constant 0 : i32
    %1056 = vector.broadcast %c0_i32_327 : i32 to vector<1x512xi32>
    %1057 = arith.cmpi sge, %1055, %1056 : vector<1x512xi32>
    %1058 = arith.andi %1053, %1057 : vector<1x512xi1>
    %c-2_i32_328 = arith.constant -2 : i32
    %1059 = vector.broadcast %c-2_i32_328 : i32 to vector<1x512xi32>
    %1060 = arith.addi %16, %1059 : vector<1x512xi32>
    %c16_i32_329 = arith.constant 16 : i32
    %1061 = vector.broadcast %c16_i32_329 : i32 to vector<1x512xi32>
    %1062 = arith.cmpi slt, %1060, %1061 : vector<1x512xi32>
    %1063 = arith.andi %1058, %1062 : vector<1x512xi1>
    %cst_330 = arith.constant 0.000000e+00 : f32
    %1064 = vector.shape_cast %1063 : vector<1x512xi1> to vector<1x512xi1>
    %1065 = vector.broadcast %1064 : vector<1x512xi1> to vector<4x512xi1>
    %1066 = vector.broadcast %cst_330 : f32 to vector<4x512xf32>
    %1067 = arith.select %1065, %1044, %1066 : vector<4x512xi1>, vector<4x512xf32>
    %1068 = arith.addf %1018, %1067 : vector<4x512xf32>
    %cst_331 = arith.constant 0.000000e+00 : f32
    %1069 = vector.broadcast %cst_331 : f32 to vector<4x512xf32>
    %c0_332 = arith.constant 0 : index
    %c159 = arith.constant 159 : index
    %1070 = vector.load %arg11[%c0_332, %c159] : memref<4x1280xf32, #tpu.memory_space<vmem>>, vector<4x512xf32>
    %1071 = vector.extract_strided_slice %17 {offsets = [0, 21], sizes = [4, 1], strides = [1, 1]} : vector<4x125xf32> to vector<4x1xf32>
    %1072 = vector.broadcast %1071 : vector<4x1xf32> to vector<4x512xf32>
    %1073 = arith.mulf %1072, %1070 : vector<4x512xf32>
    %1074 = arith.addf %1069, %1073 : vector<4x512xf32>
    %c0_333 = arith.constant 0 : index
    %c287 = arith.constant 287 : index
    %1075 = vector.load %arg11[%c0_333, %c287] : memref<4x1280xf32, #tpu.memory_space<vmem>>, vector<4x512xf32>
    %1076 = vector.extract_strided_slice %17 {offsets = [0, 46], sizes = [4, 1], strides = [1, 1]} : vector<4x125xf32> to vector<4x1xf32>
    %1077 = vector.broadcast %1076 : vector<4x1xf32> to vector<4x512xf32>
    %1078 = arith.mulf %1077, %1075 : vector<4x512xf32>
    %1079 = arith.addf %1074, %1078 : vector<4x512xf32>
    %c0_334 = arith.constant 0 : index
    %c415 = arith.constant 415 : index
    %1080 = vector.load %arg11[%c0_334, %c415] : memref<4x1280xf32, #tpu.memory_space<vmem>>, vector<4x512xf32>
    %1081 = vector.extract_strided_slice %17 {offsets = [0, 71], sizes = [4, 1], strides = [1, 1]} : vector<4x125xf32> to vector<4x1xf32>
    %1082 = vector.broadcast %1081 : vector<4x1xf32> to vector<4x512xf32>
    %1083 = arith.mulf %1082, %1080 : vector<4x512xf32>
    %1084 = arith.addf %1079, %1083 : vector<4x512xf32>
    %c0_335 = arith.constant 0 : index
    %c543 = arith.constant 543 : index
    %1085 = vector.load %arg11[%c0_335, %c543] : memref<4x1280xf32, #tpu.memory_space<vmem>>, vector<4x512xf32>
    %1086 = vector.extract_strided_slice %17 {offsets = [0, 96], sizes = [4, 1], strides = [1, 1]} : vector<4x125xf32> to vector<4x1xf32>
    %1087 = vector.broadcast %1086 : vector<4x1xf32> to vector<4x512xf32>
    %1088 = arith.mulf %1087, %1085 : vector<4x512xf32>
    %1089 = arith.addf %1084, %1088 : vector<4x512xf32>
    %c0_336 = arith.constant 0 : index
    %c671 = arith.constant 671 : index
    %1090 = vector.load %arg11[%c0_336, %c671] : memref<4x1280xf32, #tpu.memory_space<vmem>>, vector<4x512xf32>
    %1091 = vector.extract_strided_slice %17 {offsets = [0, 121], sizes = [4, 1], strides = [1, 1]} : vector<4x125xf32> to vector<4x1xf32>
    %1092 = vector.broadcast %1091 : vector<4x1xf32> to vector<4x512xf32>
    %1093 = arith.mulf %1092, %1090 : vector<4x512xf32>
    %1094 = arith.addf %1089, %1093 : vector<4x512xf32>
    %c2_i32_337 = arith.constant 2 : i32
    %1095 = vector.broadcast %c2_i32_337 : i32 to vector<1x512xi32>
    %1096 = arith.addi %15, %1095 : vector<1x512xi32>
    %c0_i32_338 = arith.constant 0 : i32
    %1097 = vector.broadcast %c0_i32_338 : i32 to vector<1x512xi32>
    %1098 = arith.cmpi sge, %1096, %1097 : vector<1x512xi32>
    %c2_i32_339 = arith.constant 2 : i32
    %1099 = vector.broadcast %c2_i32_339 : i32 to vector<1x512xi32>
    %1100 = arith.addi %15, %1099 : vector<1x512xi32>
    %c8_i32_340 = arith.constant 8 : i32
    %1101 = vector.broadcast %c8_i32_340 : i32 to vector<1x512xi32>
    %1102 = arith.cmpi slt, %1100, %1101 : vector<1x512xi32>
    %1103 = arith.andi %1098, %1102 : vector<1x512xi1>
    %c-1_i32_341 = arith.constant -1 : i32
    %1104 = vector.broadcast %c-1_i32_341 : i32 to vector<1x512xi32>
    %1105 = arith.addi %16, %1104 : vector<1x512xi32>
    %c0_i32_342 = arith.constant 0 : i32
    %1106 = vector.broadcast %c0_i32_342 : i32 to vector<1x512xi32>
    %1107 = arith.cmpi sge, %1105, %1106 : vector<1x512xi32>
    %1108 = arith.andi %1103, %1107 : vector<1x512xi1>
    %c-1_i32_343 = arith.constant -1 : i32
    %1109 = vector.broadcast %c-1_i32_343 : i32 to vector<1x512xi32>
    %1110 = arith.addi %16, %1109 : vector<1x512xi32>
    %c16_i32_344 = arith.constant 16 : i32
    %1111 = vector.broadcast %c16_i32_344 : i32 to vector<1x512xi32>
    %1112 = arith.cmpi slt, %1110, %1111 : vector<1x512xi32>
    %1113 = arith.andi %1108, %1112 : vector<1x512xi1>
    %cst_345 = arith.constant 0.000000e+00 : f32
    %1114 = vector.shape_cast %1113 : vector<1x512xi1> to vector<1x512xi1>
    %1115 = vector.broadcast %1114 : vector<1x512xi1> to vector<4x512xi1>
    %1116 = vector.broadcast %cst_345 : f32 to vector<4x512xf32>
    %1117 = arith.select %1115, %1094, %1116 : vector<4x512xi1>, vector<4x512xf32>
    %1118 = arith.addf %1068, %1117 : vector<4x512xf32>
    %cst_346 = arith.constant 0.000000e+00 : f32
    %1119 = vector.broadcast %cst_346 : f32 to vector<4x512xf32>
    %c0_347 = arith.constant 0 : index
    %c160 = arith.constant 160 : index
    %1120 = vector.load %arg11[%c0_347, %c160] : memref<4x1280xf32, #tpu.memory_space<vmem>>, vector<4x512xf32>
    %1121 = vector.extract_strided_slice %17 {offsets = [0, 22], sizes = [4, 1], strides = [1, 1]} : vector<4x125xf32> to vector<4x1xf32>
    %1122 = vector.broadcast %1121 : vector<4x1xf32> to vector<4x512xf32>
    %1123 = arith.mulf %1122, %1120 : vector<4x512xf32>
    %1124 = arith.addf %1119, %1123 : vector<4x512xf32>
    %c0_348 = arith.constant 0 : index
    %c288 = arith.constant 288 : index
    %1125 = vector.load %arg11[%c0_348, %c288] : memref<4x1280xf32, #tpu.memory_space<vmem>>, vector<4x512xf32>
    %1126 = vector.extract_strided_slice %17 {offsets = [0, 47], sizes = [4, 1], strides = [1, 1]} : vector<4x125xf32> to vector<4x1xf32>
    %1127 = vector.broadcast %1126 : vector<4x1xf32> to vector<4x512xf32>
    %1128 = arith.mulf %1127, %1125 : vector<4x512xf32>
    %1129 = arith.addf %1124, %1128 : vector<4x512xf32>
    %c0_349 = arith.constant 0 : index
    %c416 = arith.constant 416 : index
    %1130 = vector.load %arg11[%c0_349, %c416] : memref<4x1280xf32, #tpu.memory_space<vmem>>, vector<4x512xf32>
    %1131 = vector.extract_strided_slice %17 {offsets = [0, 72], sizes = [4, 1], strides = [1, 1]} : vector<4x125xf32> to vector<4x1xf32>
    %1132 = vector.broadcast %1131 : vector<4x1xf32> to vector<4x512xf32>
    %1133 = arith.mulf %1132, %1130 : vector<4x512xf32>
    %1134 = arith.addf %1129, %1133 : vector<4x512xf32>
    %c0_350 = arith.constant 0 : index
    %c544 = arith.constant 544 : index
    %1135 = vector.load %arg11[%c0_350, %c544] : memref<4x1280xf32, #tpu.memory_space<vmem>>, vector<4x512xf32>
    %1136 = vector.extract_strided_slice %17 {offsets = [0, 97], sizes = [4, 1], strides = [1, 1]} : vector<4x125xf32> to vector<4x1xf32>
    %1137 = vector.broadcast %1136 : vector<4x1xf32> to vector<4x512xf32>
    %1138 = arith.mulf %1137, %1135 : vector<4x512xf32>
    %1139 = arith.addf %1134, %1138 : vector<4x512xf32>
    %c0_351 = arith.constant 0 : index
    %c672 = arith.constant 672 : index
    %1140 = vector.load %arg11[%c0_351, %c672] : memref<4x1280xf32, #tpu.memory_space<vmem>>, vector<4x512xf32>
    %1141 = vector.extract_strided_slice %17 {offsets = [0, 122], sizes = [4, 1], strides = [1, 1]} : vector<4x125xf32> to vector<4x1xf32>
    %1142 = vector.broadcast %1141 : vector<4x1xf32> to vector<4x512xf32>
    %1143 = arith.mulf %1142, %1140 : vector<4x512xf32>
    %1144 = arith.addf %1139, %1143 : vector<4x512xf32>
    %c2_i32_352 = arith.constant 2 : i32
    %1145 = vector.broadcast %c2_i32_352 : i32 to vector<1x512xi32>
    %1146 = arith.addi %15, %1145 : vector<1x512xi32>
    %c0_i32_353 = arith.constant 0 : i32
    %1147 = vector.broadcast %c0_i32_353 : i32 to vector<1x512xi32>
    %1148 = arith.cmpi sge, %1146, %1147 : vector<1x512xi32>
    %c2_i32_354 = arith.constant 2 : i32
    %1149 = vector.broadcast %c2_i32_354 : i32 to vector<1x512xi32>
    %1150 = arith.addi %15, %1149 : vector<1x512xi32>
    %c8_i32_355 = arith.constant 8 : i32
    %1151 = vector.broadcast %c8_i32_355 : i32 to vector<1x512xi32>
    %1152 = arith.cmpi slt, %1150, %1151 : vector<1x512xi32>
    %1153 = arith.andi %1148, %1152 : vector<1x512xi1>
    %c0_i32_356 = arith.constant 0 : i32
    %1154 = vector.broadcast %c0_i32_356 : i32 to vector<1x512xi32>
    %1155 = arith.addi %16, %1154 : vector<1x512xi32>
    %c0_i32_357 = arith.constant 0 : i32
    %1156 = vector.broadcast %c0_i32_357 : i32 to vector<1x512xi32>
    %1157 = arith.cmpi sge, %1155, %1156 : vector<1x512xi32>
    %1158 = arith.andi %1153, %1157 : vector<1x512xi1>
    %c0_i32_358 = arith.constant 0 : i32
    %1159 = vector.broadcast %c0_i32_358 : i32 to vector<1x512xi32>
    %1160 = arith.addi %16, %1159 : vector<1x512xi32>
    %c16_i32_359 = arith.constant 16 : i32
    %1161 = vector.broadcast %c16_i32_359 : i32 to vector<1x512xi32>
    %1162 = arith.cmpi slt, %1160, %1161 : vector<1x512xi32>
    %1163 = arith.andi %1158, %1162 : vector<1x512xi1>
    %cst_360 = arith.constant 0.000000e+00 : f32
    %1164 = vector.shape_cast %1163 : vector<1x512xi1> to vector<1x512xi1>
    %1165 = vector.broadcast %1164 : vector<1x512xi1> to vector<4x512xi1>
    %1166 = vector.broadcast %cst_360 : f32 to vector<4x512xf32>
    %1167 = arith.select %1165, %1144, %1166 : vector<4x512xi1>, vector<4x512xf32>
    %1168 = arith.addf %1118, %1167 : vector<4x512xf32>
    %cst_361 = arith.constant 0.000000e+00 : f32
    %1169 = vector.broadcast %cst_361 : f32 to vector<4x512xf32>
    %c0_362 = arith.constant 0 : index
    %c161 = arith.constant 161 : index
    %1170 = vector.load %arg11[%c0_362, %c161] : memref<4x1280xf32, #tpu.memory_space<vmem>>, vector<4x512xf32>
    %1171 = vector.extract_strided_slice %17 {offsets = [0, 23], sizes = [4, 1], strides = [1, 1]} : vector<4x125xf32> to vector<4x1xf32>
    %1172 = vector.broadcast %1171 : vector<4x1xf32> to vector<4x512xf32>
    %1173 = arith.mulf %1172, %1170 : vector<4x512xf32>
    %1174 = arith.addf %1169, %1173 : vector<4x512xf32>
    %c0_363 = arith.constant 0 : index
    %c289 = arith.constant 289 : index
    %1175 = vector.load %arg11[%c0_363, %c289] : memref<4x1280xf32, #tpu.memory_space<vmem>>, vector<4x512xf32>
    %1176 = vector.extract_strided_slice %17 {offsets = [0, 48], sizes = [4, 1], strides = [1, 1]} : vector<4x125xf32> to vector<4x1xf32>
    %1177 = vector.broadcast %1176 : vector<4x1xf32> to vector<4x512xf32>
    %1178 = arith.mulf %1177, %1175 : vector<4x512xf32>
    %1179 = arith.addf %1174, %1178 : vector<4x512xf32>
    %c0_364 = arith.constant 0 : index
    %c417 = arith.constant 417 : index
    %1180 = vector.load %arg11[%c0_364, %c417] : memref<4x1280xf32, #tpu.memory_space<vmem>>, vector<4x512xf32>
    %1181 = vector.extract_strided_slice %17 {offsets = [0, 73], sizes = [4, 1], strides = [1, 1]} : vector<4x125xf32> to vector<4x1xf32>
    %1182 = vector.broadcast %1181 : vector<4x1xf32> to vector<4x512xf32>
    %1183 = arith.mulf %1182, %1180 : vector<4x512xf32>
    %1184 = arith.addf %1179, %1183 : vector<4x512xf32>
    %c0_365 = arith.constant 0 : index
    %c545 = arith.constant 545 : index
    %1185 = vector.load %arg11[%c0_365, %c545] : memref<4x1280xf32, #tpu.memory_space<vmem>>, vector<4x512xf32>
    %1186 = vector.extract_strided_slice %17 {offsets = [0, 98], sizes = [4, 1], strides = [1, 1]} : vector<4x125xf32> to vector<4x1xf32>
    %1187 = vector.broadcast %1186 : vector<4x1xf32> to vector<4x512xf32>
    %1188 = arith.mulf %1187, %1185 : vector<4x512xf32>
    %1189 = arith.addf %1184, %1188 : vector<4x512xf32>
    %c0_366 = arith.constant 0 : index
    %c673 = arith.constant 673 : index
    %1190 = vector.load %arg11[%c0_366, %c673] : memref<4x1280xf32, #tpu.memory_space<vmem>>, vector<4x512xf32>
    %1191 = vector.extract_strided_slice %17 {offsets = [0, 123], sizes = [4, 1], strides = [1, 1]} : vector<4x125xf32> to vector<4x1xf32>
    %1192 = vector.broadcast %1191 : vector<4x1xf32> to vector<4x512xf32>
    %1193 = arith.mulf %1192, %1190 : vector<4x512xf32>
    %1194 = arith.addf %1189, %1193 : vector<4x512xf32>
    %c2_i32_367 = arith.constant 2 : i32
    %1195 = vector.broadcast %c2_i32_367 : i32 to vector<1x512xi32>
    %1196 = arith.addi %15, %1195 : vector<1x512xi32>
    %c0_i32_368 = arith.constant 0 : i32
    %1197 = vector.broadcast %c0_i32_368 : i32 to vector<1x512xi32>
    %1198 = arith.cmpi sge, %1196, %1197 : vector<1x512xi32>
    %c2_i32_369 = arith.constant 2 : i32
    %1199 = vector.broadcast %c2_i32_369 : i32 to vector<1x512xi32>
    %1200 = arith.addi %15, %1199 : vector<1x512xi32>
    %c8_i32_370 = arith.constant 8 : i32
    %1201 = vector.broadcast %c8_i32_370 : i32 to vector<1x512xi32>
    %1202 = arith.cmpi slt, %1200, %1201 : vector<1x512xi32>
    %1203 = arith.andi %1198, %1202 : vector<1x512xi1>
    %c1_i32_371 = arith.constant 1 : i32
    %1204 = vector.broadcast %c1_i32_371 : i32 to vector<1x512xi32>
    %1205 = arith.addi %16, %1204 : vector<1x512xi32>
    %c0_i32_372 = arith.constant 0 : i32
    %1206 = vector.broadcast %c0_i32_372 : i32 to vector<1x512xi32>
    %1207 = arith.cmpi sge, %1205, %1206 : vector<1x512xi32>
    %1208 = arith.andi %1203, %1207 : vector<1x512xi1>
    %c1_i32_373 = arith.constant 1 : i32
    %1209 = vector.broadcast %c1_i32_373 : i32 to vector<1x512xi32>
    %1210 = arith.addi %16, %1209 : vector<1x512xi32>
    %c16_i32_374 = arith.constant 16 : i32
    %1211 = vector.broadcast %c16_i32_374 : i32 to vector<1x512xi32>
    %1212 = arith.cmpi slt, %1210, %1211 : vector<1x512xi32>
    %1213 = arith.andi %1208, %1212 : vector<1x512xi1>
    %cst_375 = arith.constant 0.000000e+00 : f32
    %1214 = vector.shape_cast %1213 : vector<1x512xi1> to vector<1x512xi1>
    %1215 = vector.broadcast %1214 : vector<1x512xi1> to vector<4x512xi1>
    %1216 = vector.broadcast %cst_375 : f32 to vector<4x512xf32>
    %1217 = arith.select %1215, %1194, %1216 : vector<4x512xi1>, vector<4x512xf32>
    %1218 = arith.addf %1168, %1217 : vector<4x512xf32>
    %cst_376 = arith.constant 0.000000e+00 : f32
    %1219 = vector.broadcast %cst_376 : f32 to vector<4x512xf32>
    %c0_377 = arith.constant 0 : index
    %c162 = arith.constant 162 : index
    %1220 = vector.load %arg11[%c0_377, %c162] : memref<4x1280xf32, #tpu.memory_space<vmem>>, vector<4x512xf32>
    %1221 = vector.extract_strided_slice %17 {offsets = [0, 24], sizes = [4, 1], strides = [1, 1]} : vector<4x125xf32> to vector<4x1xf32>
    %1222 = vector.broadcast %1221 : vector<4x1xf32> to vector<4x512xf32>
    %1223 = arith.mulf %1222, %1220 : vector<4x512xf32>
    %1224 = arith.addf %1219, %1223 : vector<4x512xf32>
    %c0_378 = arith.constant 0 : index
    %c290 = arith.constant 290 : index
    %1225 = vector.load %arg11[%c0_378, %c290] : memref<4x1280xf32, #tpu.memory_space<vmem>>, vector<4x512xf32>
    %1226 = vector.extract_strided_slice %17 {offsets = [0, 49], sizes = [4, 1], strides = [1, 1]} : vector<4x125xf32> to vector<4x1xf32>
    %1227 = vector.broadcast %1226 : vector<4x1xf32> to vector<4x512xf32>
    %1228 = arith.mulf %1227, %1225 : vector<4x512xf32>
    %1229 = arith.addf %1224, %1228 : vector<4x512xf32>
    %c0_379 = arith.constant 0 : index
    %c418 = arith.constant 418 : index
    %1230 = vector.load %arg11[%c0_379, %c418] : memref<4x1280xf32, #tpu.memory_space<vmem>>, vector<4x512xf32>
    %1231 = vector.extract_strided_slice %17 {offsets = [0, 74], sizes = [4, 1], strides = [1, 1]} : vector<4x125xf32> to vector<4x1xf32>
    %1232 = vector.broadcast %1231 : vector<4x1xf32> to vector<4x512xf32>
    %1233 = arith.mulf %1232, %1230 : vector<4x512xf32>
    %1234 = arith.addf %1229, %1233 : vector<4x512xf32>
    %c0_380 = arith.constant 0 : index
    %c546 = arith.constant 546 : index
    %1235 = vector.load %arg11[%c0_380, %c546] : memref<4x1280xf32, #tpu.memory_space<vmem>>, vector<4x512xf32>
    %1236 = vector.extract_strided_slice %17 {offsets = [0, 99], sizes = [4, 1], strides = [1, 1]} : vector<4x125xf32> to vector<4x1xf32>
    %1237 = vector.broadcast %1236 : vector<4x1xf32> to vector<4x512xf32>
    %1238 = arith.mulf %1237, %1235 : vector<4x512xf32>
    %1239 = arith.addf %1234, %1238 : vector<4x512xf32>
    %c0_381 = arith.constant 0 : index
    %c674 = arith.constant 674 : index
    %1240 = vector.load %arg11[%c0_381, %c674] : memref<4x1280xf32, #tpu.memory_space<vmem>>, vector<4x512xf32>
    %1241 = vector.extract_strided_slice %17 {offsets = [0, 124], sizes = [4, 1], strides = [1, 1]} : vector<4x125xf32> to vector<4x1xf32>
    %1242 = vector.broadcast %1241 : vector<4x1xf32> to vector<4x512xf32>
    %1243 = arith.mulf %1242, %1240 : vector<4x512xf32>
    %1244 = arith.addf %1239, %1243 : vector<4x512xf32>
    %c2_i32_382 = arith.constant 2 : i32
    %1245 = vector.broadcast %c2_i32_382 : i32 to vector<1x512xi32>
    %1246 = arith.addi %15, %1245 : vector<1x512xi32>
    %c0_i32_383 = arith.constant 0 : i32
    %1247 = vector.broadcast %c0_i32_383 : i32 to vector<1x512xi32>
    %1248 = arith.cmpi sge, %1246, %1247 : vector<1x512xi32>
    %c2_i32_384 = arith.constant 2 : i32
    %1249 = vector.broadcast %c2_i32_384 : i32 to vector<1x512xi32>
    %1250 = arith.addi %15, %1249 : vector<1x512xi32>
    %c8_i32_385 = arith.constant 8 : i32
    %1251 = vector.broadcast %c8_i32_385 : i32 to vector<1x512xi32>
    %1252 = arith.cmpi slt, %1250, %1251 : vector<1x512xi32>
    %1253 = arith.andi %1248, %1252 : vector<1x512xi1>
    %c2_i32_386 = arith.constant 2 : i32
    %1254 = vector.broadcast %c2_i32_386 : i32 to vector<1x512xi32>
    %1255 = arith.addi %16, %1254 : vector<1x512xi32>
    %c0_i32_387 = arith.constant 0 : i32
    %1256 = vector.broadcast %c0_i32_387 : i32 to vector<1x512xi32>
    %1257 = arith.cmpi sge, %1255, %1256 : vector<1x512xi32>
    %1258 = arith.andi %1253, %1257 : vector<1x512xi1>
    %c2_i32_388 = arith.constant 2 : i32
    %1259 = vector.broadcast %c2_i32_388 : i32 to vector<1x512xi32>
    %1260 = arith.addi %16, %1259 : vector<1x512xi32>
    %c16_i32_389 = arith.constant 16 : i32
    %1261 = vector.broadcast %c16_i32_389 : i32 to vector<1x512xi32>
    %1262 = arith.cmpi slt, %1260, %1261 : vector<1x512xi32>
    %1263 = arith.andi %1258, %1262 : vector<1x512xi1>
    %cst_390 = arith.constant 0.000000e+00 : f32
    %1264 = vector.shape_cast %1263 : vector<1x512xi1> to vector<1x512xi1>
    %1265 = vector.broadcast %1264 : vector<1x512xi1> to vector<4x512xi1>
    %1266 = vector.broadcast %cst_390 : f32 to vector<4x512xf32>
    %1267 = arith.select %1265, %1244, %1266 : vector<4x512xi1>, vector<4x512xf32>
    %1268 = arith.addf %1218, %1267 : vector<4x512xf32>
    %c0_391 = arith.constant 0 : index
    %c0_392 = arith.constant 0 : index
    %1269 = vector.load %arg7[%c0_391, %c0_392] : memref<4x1xf32, #tpu.memory_space<vmem>>, vector<4x1xf32>
    %1270 = vector.broadcast %1269 : vector<4x1xf32> to vector<4x512xf32>
    %1271 = arith.addf %1268, %1270 : vector<4x512xf32>
    %cst_393 = arith.constant 0.000000e+00 : f32
    %1272 = vector.broadcast %cst_393 : f32 to vector<4x512xf32>
    %1273 = arith.subf %1272, %1271 : vector<4x512xf32>
    %1274 = math.exp %1273 : vector<4x512xf32>
    %cst_394 = arith.constant 1.000000e+00 : f32
    %1275 = vector.broadcast %cst_394 : f32 to vector<4x512xf32>
    %1276 = arith.addf %1275, %1274 : vector<4x512xf32>
    %cst_395 = arith.constant 1.000000e+00 : f32
    %1277 = vector.broadcast %cst_395 : f32 to vector<4x512xf32>
    %1278 = arith.divf %1277, %1276 : vector<4x512xf32>
    %1279 = arith.mulf %6, %1278 : vector<4x512xf32>
    %c0_396 = arith.constant 0 : index
    %c0_397 = arith.constant 0 : index
    %c0_398 = arith.constant 0 : index
    %1280 = vector.load %arg10[%c0_396, %c0_397, %c0_398] : memref<1x4x512xf32, #tpu.memory_space<vmem>>, vector<1x4x512xf32>
    %1281 = vector.shape_cast %1280 : vector<1x4x512xf32> to vector<4x512xf32>
    %1282 = vector.shape_cast %1279 : vector<4x512xf32> to vector<1x4x512xf32>
    tpu.vector_store %arg10[%c0_396, %c0_397, %c0_398], %1282 {strides = array<i32>} : memref<1x4x512xf32, #tpu.memory_space<vmem>>, vector<1x4x512xf32>,
    return
  }
  func.func @transform_0(%arg0: i32) -> (i32, i32, i32) {
    %c0_i32 = arith.constant 0 : i32
    %c0_i32_0 = arith.constant 0 : i32
    %c0_i32_1 = arith.constant 0 : i32
    return %arg0, %c0_i32, %c0_i32_0 : i32, i32, i32
  }
  func.func @transform_1(%arg0: i32) -> (i32, i32) {
    %c0_i32 = arith.constant 0 : i32
    %c0_i32_0 = arith.constant 0 : i32
    %c0_i32_1 = arith.constant 0 : i32
    return %c0_i32, %c0_i32_0 : i32, i32
  }
  func.func @transform_2(%arg0: i32) -> (i32, i32) {
    %c0_i32 = arith.constant 0 : i32
    %c0_i32_0 = arith.constant 0 : i32
    %c0_i32_1 = arith.constant 0 : i32
    return %c0_i32, %c0_i32_0 : i32, i32
  }
  func.func @transform_3(%arg0: i32) -> (i32, i32) {
    %c0_i32 = arith.constant 0 : i32
    %c0_i32_0 = arith.constant 0 : i32
    %c0_i32_1 = arith.constant 0 : i32
    return %c0_i32, %c0_i32_0 : i32, i32
  }
  func.func @transform_4(%arg0: i32) -> (i32, i32) {
    %c0_i32 = arith.constant 0 : i32
    %c0_i32_0 = arith.constant 0 : i32
    %c0_i32_1 = arith.constant 0 : i32
    return %c0_i32, %c0_i32_0 : i32, i32
  }
  func.func @transform_5(%arg0: i32) -> (i32, i32) {
    %c0_i32 = arith.constant 0 : i32
    %c0_i32_0 = arith.constant 0 : i32
    %c0_i32_1 = arith.constant 0 : i32
    return %c0_i32, %c0_i32_0 : i32, i32
  }
  func.func @transform_6(%arg0: i32) -> (i32, i32) {
    %c0_i32 = arith.constant 0 : i32
    %c0_i32_0 = arith.constant 0 : i32
    %c0_i32_1 = arith.constant 0 : i32
    return %c0_i32, %c0_i32_0 : i32, i32
  }
  func.func @transform_7(%arg0: i32) -> (i32, i32) {
    %c0_i32 = arith.constant 0 : i32
    %c0_i32_0 = arith.constant 0 : i32
    %c0_i32_1 = arith.constant 0 : i32
    return %c0_i32, %c0_i32_0 : i32, i32
  }
  func.func @transform_8(%arg0: i32) -> (i32, i32) {
    %c0_i32 = arith.constant 0 : i32
    %c0_i32_0 = arith.constant 0 : i32
    %c0_i32_1 = arith.constant 0 : i32
    return %c0_i32, %c0_i32_0 : i32, i32
  }
  func.func @transform_9(%arg0: i32) -> (i32, i32, i32) {
    %c0_i32 = arith.constant 0 : i32
    %c0_i32_0 = arith.constant 0 : i32
    %c0_i32_1 = arith.constant 0 : i32
    return %arg0, %c0_i32, %c0_i32_0 : i32, i32, i32
  }
}

</mosaic_0001>

<llo_original>
// kernel: depth_gating_forward.1
$region0: #{depth_gating_forward.1}
  #allocation0 [shape = 'u32[]', space=smem, size = 0x4, offset = 0x4, fixed_abs, tag = 'smem constant byte address 0x4 - core index']
  #allocation1 [shape = 'u32[144,128]{1,0:T(1,128)}', space=vmem, size = 0x12000, scoped, tag = 'internal scratch']
  #allocation2 [shape = 'f32[4,1280]{1,0:T(4,128)}', space=vmem, size = 0x5000, scoped, tag = 'scratch operand']
  %s0 = inlined_call_operand.vmem [shape: f32[2,4,512], index: 0, kind: input, shape index: {}]
  %s1 = inlined_call_operand.vmem [shape: f32[4,4], index: 1, kind: input, shape index: {}]
  %s2 = inlined_call_operand.vmem [shape: f32[4,1], index: 2, kind: input, shape index: {}]
  %s3 = inlined_call_operand.vmem [shape: f32[4,4], index: 3, kind: input, shape index: {}]
  %s4 = inlined_call_operand.vmem [shape: f32[4,1], index: 4, kind: input, shape index: {}]
  %s5 = inlined_call_operand.vmem [shape: f32[4,125], index: 5, kind: input, shape index: {}]
  %s6 = inlined_call_operand.vmem [shape: f32[4,1], index: 6, kind: input, shape index: {}]
  %s7 = inlined_call_operand.vmem [shape: s32[1,512], index: 7, kind: input, shape index: {}]
  %s8 = inlined_call_operand.vmem [shape: s32[1,512], index: 8, kind: input, shape index: {}]
  %s9 = inlined_call_operand.vmem [shape: f32[2,4,512], index: 9, kind: output, shape index: {}]
  %s10 = sld [smem:[#allocation0]]
  $region69: #{depth_gating_forward.1} parent=0
    _
  %s12 = ssub.s32 1, %s10
  %s13 = scalar_select 0, %s12, %s10
  loop: start=0, step=1, limit=4
  $region2: #{depth_gating_forward.1} parent=0 // loop_pre_header
    _
  $region3: #{depth_gating_forward.1} parent=0 // loop_header
    %s15 = sphi 0, %s19
    %p16 = scmp.ge.s32.totalorder %s15, 4
    %s25 = sphi 0, %s27
    %s28 = sphi 0, %s25
    %s29 = sphi 0, %s28
    %s45 = sphi 0, %s29
    %s49 = sphi 0, %s49
    %s51 = sphi 0, %s49
    %s52 = sphi 0, %s51
    %s66 = sphi 0, %s52
    %s70 = sphi 0, %s70
    %s72 = sphi 0, %s70
    %s73 = sphi 0, %s72
    %s87 = sphi 0, %s73
    %s91 = sphi 0, %s91
    %s93 = sphi 0, %s91
    %s94 = sphi 0, %s93
    %s108 = sphi 0, %s94
    %s112 = sphi 0, %s112
    %s114 = sphi 0, %s112
    %s115 = sphi 0, %s114
    %s129 = sphi 0, %s115
    %s133 = sphi 0, %s133
    %s135 = sphi 0, %s133
    %s136 = sphi 0, %s135
    %s150 = sphi 0, %s136
    %s154 = sphi 0, %s154
    %s156 = sphi 0, %s154
    %s157 = sphi 0, %s156
    %s171 = sphi 0, %s157
    %s175 = sphi 0, %s175
    %s177 = sphi 0, %s175
    %s178 = sphi 0, %s177
    %s192 = sphi 0, %s178
    %s196 = sphi 0, %s196
    %s198 = sphi 0, %s196
    %s199 = sphi 0, %s198
    %s213 = sphi 0, %s199
    %s219 = sphi 0, %s221
    %s222 = sphi 0, %s219
    %s223 = sphi 0, %s222
    %s239 = sphi 0, %s223
  $region4: #{depth_gating_forward.1} parent=0 // loop_header_branch
    %18 = sbr.rel (%p16) target = $region8
  $region5: #{depth_gating_forward.1} parent=0 // loop_body
    %s20 = ssub.s32 %s15, 1
    %s21 = ssub.s32 %s15, 2
    %s22 = sadd.s32 %s15, 1
    %s23 = ssub.s32 %s15, %s22
    %p24 = scmp.eq.s32.totalorder %s23, 0
    %s26 = sadd.s32 %s25, 1
    %s27 = scalar_select %p24, %s25, %s26
    %p30 = pneg %p24
    %p31 = scmp.eq.s32.totalorder %s15, 1
    %p32 = por %p30, %p31
    %p33 = scmp.ne.s32.totalorder %s25, %s28
    %p34 = scmp.eq.s32.totalorder %s15, 0
    %p35 = por %p33, %p34
    %p36 = scmp.ne.s32.totalorder %s25, %s28
    %p37 = scmp.eq.s32.totalorder %s20, 1
    %p38 = por %p36, %p37
    %p39 = scmp.ne.s32.totalorder %s28, %s29
    %p40 = scmp.eq.s32.totalorder %s20, 0
    %p41 = por %p39, %p40
    %p42 = scmp.ne.s32.totalorder %s28, %s29
    %p43 = scmp.eq.s32.totalorder %s21, 1
    %p44 = por %p42, %p43
    %p46 = scmp.ne.s32.totalorder %s29, %s45
    %p47 = scmp.eq.s32.totalorder %s21, 0
    %p48 = por %p46, %p47
    %s50 = sadd.s32 %s49, 1
    %p53 = scmp.eq.s32.totalorder %s15, 1
    %p54 = scmp.ne.s32.totalorder %s49, %s51
    %p55 = scmp.eq.s32.totalorder %s15, 0
    %p56 = por %p54, %p55
    %p57 = scmp.ne.s32.totalorder %s49, %s51
    %p58 = scmp.eq.s32.totalorder %s20, 1
    %p59 = por %p57, %p58
    %p60 = scmp.ne.s32.totalorder %s51, %s52
    %p61 = scmp.eq.s32.totalorder %s20, 0
    %p62 = por %p60, %p61
    %p63 = scmp.ne.s32.totalorder %s51, %s52
    %p64 = scmp.eq.s32.totalorder %s21, 1
    %p65 = por %p63, %p64
    %p67 = scmp.ne.s32.totalorder %s52, %s66
    %p68 = scmp.eq.s32.totalorder %s21, 0
    %p69 = por %p67, %p68
    %s71 = sadd.s32 %s70, 1
    %p74 = scmp.eq.s32.totalorder %s15, 1
    %p75 = scmp.ne.s32.totalorder %s70, %s72
    %p76 = scmp.eq.s32.totalorder %s15, 0
    %p77 = por %p75, %p76
    %p78 = scmp.ne.s32.totalorder %s70, %s72
    %p79 = scmp.eq.s32.totalorder %s20, 1
    %p80 = por %p78, %p79
    %p81 = scmp.ne.s32.totalorder %s72, %s73
    %p82 = scmp.eq.s32.totalorder %s20, 0
    %p83 = por %p81, %p82
    %p84 = scmp.ne.s32.totalorder %s72, %s73
    %p85 = scmp.eq.s32.totalorder %s21, 1
    %p86 = por %p84, %p85
    %p88 = scmp.ne.s32.totalorder %s73, %s87
    %p89 = scmp.eq.s32.totalorder %s21, 0
    %p90 = por %p88, %p89
    %s92 = sadd.s32 %s91, 1
    %p95 = scmp.eq.s32.totalorder %s15, 1
    %p96 = scmp.ne.s32.totalorder %s91, %s93
    %p97 = scmp.eq.s32.totalorder %s15, 0
    %p98 = por %p96, %p97
    %p99 = scmp.ne.s32.totalorder %s91, %s93
    %p100 = scmp.eq.s32.totalorder %s20, 1
    %p101 = por %p99, %p100
    %p102 = scmp.ne.s32.totalorder %s93, %s94
    %p103 = scmp.eq.s32.totalorder %s20, 0
    %p104 = por %p102, %p103
    %p105 = scmp.ne.s32.totalorder %s93, %s94
    %p106 = scmp.eq.s32.totalorder %s21, 1
    %p107 = por %p105, %p106
    %p109 = scmp.ne.s32.totalorder %s94, %s108
    %p110 = scmp.eq.s32.totalorder %s21, 0
    %p111 = por %p109, %p110
    %s113 = sadd.s32 %s112, 1
    %p116 = scmp.eq.s32.totalorder %s15, 1
    %p117 = scmp.ne.s32.totalorder %s112, %s114
    %p118 = scmp.eq.s32.totalorder %s15, 0
    %p119 = por %p117, %p118
    %p120 = scmp.ne.s32.totalorder %s112, %s114
    %p121 = scmp.eq.s32.totalorder %s20, 1
    %p122 = por %p120, %p121
    %p123 = scmp.ne.s32.totalorder %s114, %s115
    %p124 = scmp.eq.s32.totalorder %s20, 0
    %p125 = por %p123, %p124
    %p126 = scmp.ne.s32.totalorder %s114, %s115
    %p127 = scmp.eq.s32.totalorder %s21, 1
    %p128 = por %p126, %p127
    %p130 = scmp.ne.s32.totalorder %s115, %s129
    %p131 = scmp.eq.s32.totalorder %s21, 0
    %p132 = por %p130, %p131
    %s134 = sadd.s32 %s133, 1
    %p137 = scmp.eq.s32.totalorder %s15, 1
    %p138 = scmp.ne.s32.totalorder %s133, %s135
    %p139 = scmp.eq.s32.totalorder %s15, 0
    %p140 = por %p138, %p139
    %p141 = scmp.ne.s32.totalorder %s133, %s135
    %p142 = scmp.eq.s32.totalorder %s20, 1
    %p143 = por %p141, %p142
    %p144 = scmp.ne.s32.totalorder %s135, %s136
    %p145 = scmp.eq.s32.totalorder %s20, 0
    %p146 = por %p144, %p145
    %p147 = scmp.ne.s32.totalorder %s135, %s136
    %p148 = scmp.eq.s32.totalorder %s21, 1
    %p149 = por %p147, %p148
    %p151 = scmp.ne.s32.totalorder %s136, %s150
    %p152 = scmp.eq.s32.totalorder %s21, 0
    %p153 = por %p151, %p152
    %s155 = sadd.s32 %s154, 1
    %p158 = scmp.eq.s32.totalorder %s15, 1
    %p159 = scmp.ne.s32.totalorder %s154, %s156
    %p160 = scmp.eq.s32.totalorder %s15, 0
    %p161 = por %p159, %p160
    %p162 = scmp.ne.s32.totalorder %s154, %s156
    %p163 = scmp.eq.s32.totalorder %s20, 1
    %p164 = por %p162, %p163
    %p165 = scmp.ne.s32.totalorder %s156, %s157
    %p166 = scmp.eq.s32.totalorder %s20, 0
    %p167 = por %p165, %p166
    %p168 = scmp.ne.s32.totalorder %s156, %s157
    %p169 = scmp.eq.s32.totalorder %s21, 1
    %p170 = por %p168, %p169
    %p172 = scmp.ne.s32.totalorder %s157, %s171
    %p173 = scmp.eq.s32.totalorder %s21, 0
    %p174 = por %p172, %p173
    %s176 = sadd.s32 %s175, 1
    %p179 = scmp.eq.s32.totalorder %s15, 1
    %p180 = scmp.ne.s32.totalorder %s175, %s177
    %p181 = scmp.eq.s32.totalorder %s15, 0
    %p182 = por %p180, %p181
    %p183 = scmp.ne.s32.totalorder %s175, %s177
    %p184 = scmp.eq.s32.totalorder %s20, 1
    %p185 = por %p183, %p184
    %p186 = scmp.ne.s32.totalorder %s177, %s178
    %p187 = scmp.eq.s32.totalorder %s20, 0
    %p188 = por %p186, %p187
    %p189 = scmp.ne.s32.totalorder %s177, %s178
    %p190 = scmp.eq.s32.totalorder %s21, 1
    %p191 = por %p189, %p190
    %p193 = scmp.ne.s32.totalorder %s178, %s192
    %p194 = scmp.eq.s32.totalorder %s21, 0
    %p195 = por %p193, %p194
    %s197 = sadd.s32 %s196, 1
    %p200 = scmp.eq.s32.totalorder %s15, 1
    %p201 = scmp.ne.s32.totalorder %s196, %s198
    %p202 = scmp.eq.s32.totalorder %s15, 0
    %p203 = por %p201, %p202
    %p204 = scmp.ne.s32.totalorder %s196, %s198
    %p205 = scmp.eq.s32.totalorder %s20, 1
    %p206 = por %p204, %p205
    %p207 = scmp.ne.s32.totalorder %s198, %s199
    %p208 = scmp.eq.s32.totalorder %s20, 0
    %p209 = por %p207, %p208
    %p210 = scmp.ne.s32.totalorder %s198, %s199
    %p211 = scmp.eq.s32.totalorder %s21, 1
    %p212 = por %p210, %p211
    %p214 = scmp.ne.s32.totalorder %s199, %s213
    %p215 = scmp.eq.s32.totalorder %s21, 0
    %p216 = por %p214, %p215
    %s217 = ssub.s32 %s15, %s22
    %p218 = scmp.eq.s32.totalorder %s217, 0
    %s220 = sadd.s32 %s219, 1
    %s221 = scalar_select %p218, %s219, %s220
    %p224 = pneg %p218
    %p225 = scmp.eq.s32.totalorder %s15, 1
    %p226 = por %p224, %p225
    %p227 = scmp.ne.s32.totalorder %s219, %s222
    %p228 = scmp.eq.s32.totalorder %s15, 0
    %p229 = por %p227, %p228
    %p230 = scmp.ne.s32.totalorder %s219, %s222
    %p231 = scmp.eq.s32.totalorder %s20, 1
    %p232 = por %p230, %p231
    %p233 = scmp.ne.s32.totalorder %s222, %s223
    %p234 = scmp.eq.s32.totalorder %s20, 0
    %p235 = por %p233, %p234
    %p236 = scmp.ne.s32.totalorder %s222, %s223
    %p237 = scmp.eq.s32.totalorder %s21, 1
    %p238 = por %p236, %p237
    %p240 = scmp.ne.s32.totalorder %s223, %s239
    %p241 = scmp.eq.s32.totalorder %s21, 0
    %p242 = por %p240, %p241
    %p243 = scmp.le.s32.totalorder 1, %s15
    %p244 = scmp.lt.s32.totalorder %s15, 3
    %p245 = pnand %p243, %p244
    %p246 = pneg %p245
    // Predicated region
    $region9: #{depth_gating_forward.1} parent=5 // pred_check
      _
    $region10: #{depth_gating_forward.1} parent=5 // pred_check_branch
      %248 = sbr.rel (%p245) target = $region12
    $region11: #{depth_gating_forward.1} parent=5 // pred_region
      %s249 = ssub.s32 %s15, 1
      // Predicated region
      $region13: #{depth_gating_forward.1} parent=11 // pred_check
        %p250 = pneg %p62
      $region14: #{depth_gating_forward.1} parent=11 // pred_check_branch
        %252 = sbr.rel (%p250) target = $region16
      $region15: #{depth_gating_forward.1} parent=11 // pred_region
        _
      $region16: #{depth_gating_forward.1} parent=11 // pred_fallthru
        _
      // Predicated region
      $region17: #{depth_gating_forward.1} parent=11 // pred_check
        %p253 = pneg %p83
      $region18: #{depth_gating_forward.1} parent=11 // pred_check_branch
        %255 = sbr.rel (%p253) target = $region20
      $region19: #{depth_gating_forward.1} parent=11 // pred_region
        _
      $region20: #{depth_gating_forward.1} parent=11 // pred_fallthru
        _
      // Predicated region
      $region21: #{depth_gating_forward.1} parent=11 // pred_check
        %p256 = pneg %p104
      $region22: #{depth_gating_forward.1} parent=11 // pred_check_branch
        %258 = sbr.rel (%p256) target = $region24
      $region23: #{depth_gating_forward.1} parent=11 // pred_region
        _
      $region24: #{depth_gating_forward.1} parent=11 // pred_fallthru
        _
      // Predicated region
      $region25: #{depth_gating_forward.1} parent=11 // pred_check
        %p259 = pneg %p125
      $region26: #{depth_gating_forward.1} parent=11 // pred_check_branch
        %261 = sbr.rel (%p259) target = $region28
      $region27: #{depth_gating_forward.1} parent=11 // pred_region
        _
      $region28: #{depth_gating_forward.1} parent=11 // pred_fallthru
        _
      // Predicated region
      $region29: #{depth_gating_forward.1} parent=11 // pred_check
        %p262 = pneg %p146
      $region30: #{depth_gating_forward.1} parent=11 // pred_check_branch
        %264 = sbr.rel (%p262) target = $region32
      $region31: #{depth_gating_forward.1} parent=11 // pred_region
        _
      $region32: #{depth_gating_forward.1} parent=11 // pred_fallthru
        _
      // Predicated region
      $region33: #{depth_gating_forward.1} parent=11 // pred_check
        %p265 = pneg %p167
      $region34: #{depth_gating_forward.1} parent=11 // pred_check_branch
        %267 = sbr.rel (%p265) target = $region36
      $region35: #{depth_gating_forward.1} parent=11 // pred_region
        _
      $region36: #{depth_gating_forward.1} parent=11 // pred_fallthru
        _
      // Predicated region
      $region37: #{depth_gating_forward.1} parent=11 // pred_check
        %p268 = pneg %p188
      $region38: #{depth_gating_forward.1} parent=11 // pred_check_branch
        %270 = sbr.rel (%p268) target = $region40
      $region39: #{depth_gating_forward.1} parent=11 // pred_region
        _
      $region40: #{depth_gating_forward.1} parent=11 // pred_fallthru
        _
      // Predicated region
      $region41: #{depth_gating_forward.1} parent=11 // pred_check
        %p271 = pneg %p209
      $region42: #{depth_gating_forward.1} parent=11 // pred_check_branch
        %273 = sbr.rel (%p271) target = $region44
      $region43: #{depth_gating_forward.1} parent=11 // pred_region
        _
      $region44: #{depth_gating_forward.1} parent=11 // pred_fallthru
        _
    $region12: #{depth_gating_forward.1} parent=5 // pred_fallthru
      _
    %p274 = scmp.lt.s32.totalorder %s15, 2
    // Predicated region
    $region45: #{depth_gating_forward.1} parent=5 // pred_check
      %p275 = pneg %p274
    $region46: #{depth_gating_forward.1} parent=5 // pred_check_branch
      %277 = sbr.rel (%p275) target = $region48
    $region47: #{depth_gating_forward.1} parent=5 // pred_region
      // Predicated region
      $region49: #{depth_gating_forward.1} parent=47 // pred_check
        %p278 = pneg %p35
      $region50: #{depth_gating_forward.1} parent=47 // pred_check_branch
        %280 = sbr.rel (%p278) target = $region52
      $region51: #{depth_gating_forward.1} parent=47 // pred_region
        %p281 = scmp.lt.s32.totalorder %s15, 1
        %s282 = scalar_select %p281, %s15, 1
        %s283 = smul.addr %s282, 4
        %s284 = smul.addr %s283, 4
        %s285 = scalar_lea.vmem %s0, %s284
      $region52: #{depth_gating_forward.1} parent=47 // pred_fallthru
        _
    $region48: #{depth_gating_forward.1} parent=5 // pred_fallthru
      _
    %p286 = scmp.le.s32.totalorder 1, %s15
    %p287 = scmp.lt.s32.totalorder %s15, 3
    %p288 = pnand %p286, %p287
    %p289 = pneg %p288
    // Predicated region
    $region53: #{depth_gating_forward.1} parent=5 // pred_check
      _
    $region54: #{depth_gating_forward.1} parent=5 // pred_check_branch
      %291 = sbr.rel (%p288) target = $region56
    $region55: #{depth_gating_forward.1} parent=5 // pred_region
      %s292 = ssub.s32 %s15, 1
      %p293 = scmp.lt.s32.totalorder %s20, 1
      %s294 = scalar_select %p293, %s20, 1
      %s295 = smul.addr %s294, 4
      %s296 = smul.addr %s295, 4
      %s297 = scalar_lea.vmem %s0, %s296
      %p298 = pneg %p41
      %p299 = pneg %p38
      %p300 = pneg %p62
      %p301 = pneg %p59
      %p302 = pneg %p83
      %p303 = pneg %p80
      %p304 = pneg %p104
      %p305 = pneg %p101
      %p306 = pneg %p125
      %p307 = pneg %p122
      %p308 = pneg %p146
      %p309 = pneg %p143
      %p310 = pneg %p167
      %p311 = pneg %p164
      %p312 = pneg %p188
      %p313 = pneg %p185
      %p314 = pneg %p209
      %p315 = pneg %p206
      %p316 = pneg %p235
      %p317 = pneg %p232
      %p318 = scmp.lt.s32.totalorder %s20, 1
      %s319 = scalar_select %p318, %s20, 1
      %s320 = smul.addr %s319, 4
      %s321 = smul.addr %s320, 4
      %s322 = scalar_lea.vmem %s9, %s321
      %p323 = scmp.lt.s32.totalorder %s20, 1
      %s324 = scalar_select %p323, %s20, 1
      %s325 = smul.addr %s324, 4
      %s326 = smul.addr %s325, 4
      %s327 = scalar_lea.vmem %s0, %s326
      %p328 = scmp.lt.s32.totalorder %s20, 1
      %s329 = scalar_select %p328, %s20, 1
      %s330 = smul.addr %s329, 4
      %s331 = smul.addr %s330, 4
      %s332 = scalar_lea.vmem %s9, %s331
      %v333 = vld [vmem:[%s327] sm:$0xff]
      %v334 = vld [vmem:[%s327 + $0x8] sm:$0xff]
      %v335 = vld [vmem:[%s1] sm:$0xf]
      %v336 = vld [vmem:[%s2] sm:$0xf]
      %338 = vset.pattern.permute.xlu0 0
      %339 = vperm.xlu0 %338, %v336
      %v340 = vpop.permute.xlu0 %339
      %v344 = vcombine.high %v333, %v333
      %v345 = vcombine.high %v334, %v334
      %vm346 = vcmask 31744
      %v348 = vsel %vm346, %v335, 0
      %vm350 = vcmask 1043456
      %v351 = vsel %vm350, %v333, 0
      %v353 = vsel %vm350, %v344, 0
      %v355 = vsel %vm350, %v334, 0
      %v357 = vsel %vm350, %v345, 0
      %359 = vmatprep.subr.mxu0 %v353
      %360 = vmatpush1.msra.mxu0 %v351
      %361 = vmatprep.subr.mxu0 0.0
      %362 = vmatpush1.msra.mxu0 0.0
      %363 = vmatprep.subr.mxu0 0.0
      %364 = vmatpush1.msra.mxu0 0.0
      %365 = vmatprep.subr.mxu0 0.0
      %366 = vmatpush1.msra.mxu0 0.0
      %367 = vmatprep.subr.mxu0 0.0
      %368 = vmatpush1.msra.mxu0 0.0
      %369 = vmatprep.subr.mxu0 0.0
      %370 = vmatpush1.msra.mxu0 0.0
      %371 = vmatprep.subr.mxu0 0.0
      %372 = vmatpush1.msra.mxu0 0.0
      %373 = vmatprep.subr.mxu0 0.0
      %374 = vmatpush1.msra.mxu0 0.0
      %375 = vmatprep.subr.mxu0 0.0
      %376 = vmatpush1.msra.mxu0 0.0
      %377 = vmatprep.subr.mxu0 0.0
      %378 = vmatpush1.msra.mxu0 0.0
      %379 = vmatprep.subr.mxu0 0.0
      %380 = vmatpush1.msra.mxu0 0.0
      %381 = vmatprep.subr.mxu0 0.0
      %382 = vmatpush1.msra.mxu0 0.0
      %383 = vmatprep.subr.mxu0 0.0
      %384 = vmatpush1.msra.mxu0 0.0
      %385 = vmatprep.subr.mxu0 0.0
      %386 = vmatpush1.msra.mxu0 0.0
      %387 = vmatprep.subr.mxu0 0.0
      %388 = vmatpush1.msra.mxu0 0.0
      %389 = vmatprep.subr.mxu0 0.0
      %390 = vmatpush1.msra.mxu0 0.0
      %391 = vmatprep.subr.mxu0 0.0
      %392 = vmatpush1.msra.mxu0 0.0
      %393 = vmatprep.subr.mxu0 0.0
      %394 = vmatpush1.msra.mxu0 0.0
      %395 = vmatprep.subr.mxu0 0.0
      %396 = vmatpush1.msra.mxu0 0.0
      %397 = vmatprep.subr.mxu0 0.0
      %398 = vmatpush1.msra.mxu0 0.0
      %399 = vmatprep.subr.mxu0 0.0
      %400 = vmatpush1.msra.mxu0 0.0
      %401 = vmatprep.subr.mxu0 0.0
      %402 = vmatpush1.msra.mxu0 0.0
      %403 = vmatprep.subr.mxu0 0.0
      %404 = vmatpush1.msra.mxu0 0.0
      %405 = vmatprep.subr.mxu0 0.0
      %406 = vmatpush1.msra.mxu0 0.0
      %407 = vmatprep.subr.mxu0 0.0
      %408 = vmatpush1.msra.mxu0 0.0
      %409 = vmatprep.subr.mxu0 0.0
      %410 = vmatpush1.msra.mxu0 0.0
      %411 = vmatprep.subr.mxu0 0.0
      %412 = vmatpush1.msra.mxu0 0.0
      %413 = vmatprep.subr.mxu0 0.0
      %414 = vmatpush1.msra.mxu0 0.0
      %415 = vmatprep.subr.mxu0 0.0
      %416 = vmatpush1.msra.mxu0 0.0
      %417 = vmatprep.subr.mxu0 0.0
      %418 = vmatpush1.msra.mxu0 0.0
      %419 = vmatprep.subr.mxu0 0.0
      %420 = vmatpush1.msra.mxu0 0.0
      %421 = vmatprep.subr.mxu0 0.0
      %422 = vmatpush1.msra.mxu0 0.0
      %423 = vmatprep.mubr.f32.mxu0 0.0
      %424 = vmatmul.mubr.f32.gmra.mrb[0].mxu0 %v348
      %v425 = vpop.f32.mrb[0].mxu0
      %v426 = vadd.f32 %v340, %v425
      %v427 = vpop.f32.mrb[0].mxu0
      %v428 = vadd.f32 %v340, %v427
      %429 = vdwg.mxu0
      %430 = vmatprep.subr.mxu0 %v357
      %431 = vmatpush1.msra.mxu0 %v355
      %432 = vmatprep.subr.mxu0 0.0
      %433 = vmatpush1.msra.mxu0 0.0
      %434 = vmatprep.subr.mxu0 0.0
      %435 = vmatpush1.msra.mxu0 0.0
      %436 = vmatprep.subr.mxu0 0.0
      %437 = vmatpush1.msra.mxu0 0.0
      %438 = vmatprep.subr.mxu0 0.0
      %439 = vmatpush1.msra.mxu0 0.0
      %440 = vmatprep.subr.mxu0 0.0
      %441 = vmatpush1.msra.mxu0 0.0
      %442 = vmatprep.subr.mxu0 0.0
      %443 = vmatpush1.msra.mxu0 0.0
      %444 = vmatprep.subr.mxu0 0.0
      %445 = vmatpush1.msra.mxu0 0.0
      %446 = vmatprep.subr.mxu0 0.0
      %447 = vmatpush1.msra.mxu0 0.0
      %448 = vmatprep.subr.mxu0 0.0
      %449 = vmatpush1.msra.mxu0 0.0
      %450 = vmatprep.subr.mxu0 0.0
      %451 = vmatpush1.msra.mxu0 0.0
      %452 = vmatprep.subr.mxu0 0.0
      %453 = vmatpush1.msra.mxu0 0.0
      %454 = vmatprep.subr.mxu0 0.0
      %455 = vmatpush1.msra.mxu0 0.0
      %456 = vmatprep.subr.mxu0 0.0
      %457 = vmatpush1.msra.mxu0 0.0
      %458 = vmatprep.subr.mxu0 0.0
      %459 = vmatpush1.msra.mxu0 0.0
      %460 = vmatprep.subr.mxu0 0.0
      %461 = vmatpush1.msra.mxu0 0.0
      %462 = vmatprep.subr.mxu0 0.0
      %463 = vmatpush1.msra.mxu0 0.0
      %464 = vmatprep.subr.mxu0 0.0
      %465 = vmatpush1.msra.mxu0 0.0
      %466 = vmatprep.subr.mxu0 0.0
      %467 = vmatpush1.msra.mxu0 0.0
      %468 = vmatprep.subr.mxu0 0.0
      %469 = vmatpush1.msra.mxu0 0.0
      %470 = vmatprep.subr.mxu0 0.0
      %471 = vmatpush1.msra.mxu0 0.0
      %472 = vmatprep.subr.mxu0 0.0
      %473 = vmatpush1.msra.mxu0 0.0
      %474 = vmatprep.subr.mxu0 0.0
      %475 = vmatpush1.msra.mxu0 0.0
      %476 = vmatprep.subr.mxu0 0.0
      %477 = vmatpush1.msra.mxu0 0.0
      %478 = vmatprep.subr.mxu0 0.0
      %479 = vmatpush1.msra.mxu0 0.0
      %480 = vmatprep.subr.mxu0 0.0
      %481 = vmatpush1.msra.mxu0 0.0
      %482 = vmatprep.subr.mxu0 0.0
      %483 = vmatpush1.msra.mxu0 0.0
      %484 = vmatprep.subr.mxu0 0.0
      %485 = vmatpush1.msra.mxu0 0.0
      %486 = vmatprep.subr.mxu0 0.0
      %487 = vmatpush1.msra.mxu0 0.0
      %488 = vmatprep.subr.mxu0 0.0
      %489 = vmatpush1.msra.mxu0 0.0
      %490 = vmatprep.subr.mxu0 0.0
      %491 = vmatpush1.msra.mxu0 0.0
      %492 = vmatprep.subr.mxu0 0.0
      %493 = vmatpush1.msra.mxu0 0.0
      %494 = vmatprep.mubr.f32.mxu0 0.0
      %495 = vmatmul.mubr.f32.gmra.mrb[0].mxu0 %v348
      %v496 = vpop.f32.mrb[0].mxu0
      %v497 = vadd.f32 %v340, %v496
      %v498 = vpop.f32.mrb[0].mxu0
      %v499 = vadd.f32 %v340, %v498
      %500 = vdwg.mxu0
      %v501 = vld [vmem:[%s3] sm:$0xf]
      %v502 = vld [vmem:[%s4] sm:$0xf]
      %504 = vset.pattern.permute.xlu0 0
      %505 = vperm.xlu0 %504, %v502
      %v506 = vpop.permute.xlu0 %505
      %v509 = vsel %vm346, %v501, 0
      %511 = vmatprep.subr.mxu0 %v353
      %512 = vmatpush1.msra.mxu0 %v351
      %513 = vmatprep.subr.mxu0 0.0
      %514 = vmatpush1.msra.mxu0 0.0
      %515 = vmatprep.subr.mxu0 0.0
      %516 = vmatpush1.msra.mxu0 0.0
      %517 = vmatprep.subr.mxu0 0.0
      %518 = vmatpush1.msra.mxu0 0.0
      %519 = vmatprep.subr.mxu0 0.0
      %520 = vmatpush1.msra.mxu0 0.0
      %521 = vmatprep.subr.mxu0 0.0
      %522 = vmatpush1.msra.mxu0 0.0
      %523 = vmatprep.subr.mxu0 0.0
      %524 = vmatpush1.msra.mxu0 0.0
      %525 = vmatprep.subr.mxu0 0.0
      %526 = vmatpush1.msra.mxu0 0.0
      %527 = vmatprep.subr.mxu0 0.0
      %528 = vmatpush1.msra.mxu0 0.0
      %529 = vmatprep.subr.mxu0 0.0
      %530 = vmatpush1.msra.mxu0 0.0
      %531 = vmatprep.subr.mxu0 0.0
      %532 = vmatpush1.msra.mxu0 0.0
      %533 = vmatprep.subr.mxu0 0.0
      %534 = vmatpush1.msra.mxu0 0.0
      %535 = vmatprep.subr.mxu0 0.0
      %536 = vmatpush1.msra.mxu0 0.0
      %537 = vmatprep.subr.mxu0 0.0
      %538 = vmatpush1.msra.mxu0 0.0
      %539 = vmatprep.subr.mxu0 0.0
      %540 = vmatpush1.msra.mxu0 0.0
      %541 = vmatprep.subr.mxu0 0.0
      %542 = vmatpush1.msra.mxu0 0.0
      %543 = vmatprep.subr.mxu0 0.0
      %544 = vmatpush1.msra.mxu0 0.0
      %545 = vmatprep.subr.mxu0 0.0
      %546 = vmatpush1.msra.mxu0 0.0
      %547 = vmatprep.subr.mxu0 0.0
      %548 = vmatpush1.msra.mxu0 0.0
      %549 = vmatprep.subr.mxu0 0.0
      %550 = vmatpush1.msra.mxu0 0.0
      %551 = vmatprep.subr.mxu0 0.0
      %552 = vmatpush1.msra.mxu0 0.0
      %553 = vmatprep.subr.mxu0 0.0
      %554 = vmatpush1.msra.mxu0 0.0
      %555 = vmatprep.subr.mxu0 0.0
      %556 = vmatpush1.msra.mxu0 0.0
      %557 = vmatprep.subr.mxu0 0.0
      %558 = vmatpush1.msra.mxu0 0.0
      %559 = vmatprep.subr.mxu0 0.0
      %560 = vmatpush1.msra.mxu0 0.0
      %561 = vmatprep.subr.mxu0 0.0
      %562 = vmatpush1.msra.mxu0 0.0
      %563 = vmatprep.subr.mxu0 0.0
      %564 = vmatpush1.msra.mxu0 0.0
      %565 = vmatprep.subr.mxu0 0.0
      %566 = vmatpush1.msra.mxu0 0.0
      %567 = vmatprep.subr.mxu0 0.0
      %568 = vmatpush1.msra.mxu0 0.0
      %569 = vmatprep.subr.mxu0 0.0
      %570 = vmatpush1.msra.mxu0 0.0
      %571 = vmatprep.subr.mxu0 0.0
      %572 = vmatpush1.msra.mxu0 0.0
      %573 = vmatprep.subr.mxu0 0.0
      %574 = vmatpush1.msra.mxu0 0.0
      %575 = vmatprep.mubr.f32.mxu0 0.0
      %576 = vmatmul.mubr.f32.gmra.mrb[0].mxu0 %v509
      %v577 = vpop.f32.mrb[0].mxu0
      %v578 = vadd.f32 %v506, %v577
      %v579 = vpop.f32.mrb[0].mxu0
      %v580 = vadd.f32 %v506, %v579
      %581 = vdwg.mxu0
      %582 = vmatprep.subr.mxu0 %v357
      %583 = vmatpush1.msra.mxu0 %v355
      %584 = vmatprep.subr.mxu0 0.0
      %585 = vmatpush1.msra.mxu0 0.0
      %586 = vmatprep.subr.mxu0 0.0
      %587 = vmatpush1.msra.mxu0 0.0
      %588 = vmatprep.subr.mxu0 0.0
      %589 = vmatpush1.msra.mxu0 0.0
      %590 = vmatprep.subr.mxu0 0.0
      %591 = vmatpush1.msra.mxu0 0.0
      %592 = vmatprep.subr.mxu0 0.0
      %593 = vmatpush1.msra.mxu0 0.0
      %594 = vmatprep.subr.mxu0 0.0
      %595 = vmatpush1.msra.mxu0 0.0
      %596 = vmatprep.subr.mxu0 0.0
      %597 = vmatpush1.msra.mxu0 0.0
      %598 = vmatprep.subr.mxu0 0.0
      %599 = vmatpush1.msra.mxu0 0.0
      %600 = vmatprep.subr.mxu0 0.0
      %601 = vmatpush1.msra.mxu0 0.0
      %602 = vmatprep.subr.mxu0 0.0
      %603 = vmatpush1.msra.mxu0 0.0
      %604 = vmatprep.subr.mxu0 0.0
      %605 = vmatpush1.msra.mxu0 0.0
      %606 = vmatprep.subr.mxu0 0.0
      %607 = vmatpush1.msra.mxu0 0.0
      %608 = vmatprep.subr.mxu0 0.0
      %609 = vmatpush1.msra.mxu0 0.0
      %610 = vmatprep.subr.mxu0 0.0
      %611 = vmatpush1.msra.mxu0 0.0
      %612 = vmatprep.subr.mxu0 0.0
      %613 = vmatpush1.msra.mxu0 0.0
      %614 = vmatprep.subr.mxu0 0.0
      %615 = vmatpush1.msra.mxu0 0.0
      %616 = vmatprep.subr.mxu0 0.0
      %617 = vmatpush1.msra.mxu0 0.0
      %618 = vmatprep.subr.mxu0 0.0
      %619 = vmatpush1.msra.mxu0 0.0
      %620 = vmatprep.subr.mxu0 0.0
      %621 = vmatpush1.msra.mxu0 0.0
      %622 = vmatprep.subr.mxu0 0.0
      %623 = vmatpush1.msra.mxu0 0.0
      %624 = vmatprep.subr.mxu0 0.0
      %625 = vmatpush1.msra.mxu0 0.0
      %626 = vmatprep.subr.mxu0 0.0
      %627 = vmatpush1.msra.mxu0 0.0
      %628 = vmatprep.subr.mxu0 0.0
      %629 = vmatpush1.msra.mxu0 0.0
      %630 = vmatprep.subr.mxu0 0.0
      %631 = vmatpush1.msra.mxu0 0.0
      %632 = vmatprep.subr.mxu0 0.0
      %633 = vmatpush1.msra.mxu0 0.0
      %634 = vmatprep.subr.mxu0 0.0
      %635 = vmatpush1.msra.mxu0 0.0
      %636 = vmatprep.subr.mxu0 0.0
      %637 = vmatpush1.msra.mxu0 0.0
      %638 = vmatprep.subr.mxu0 0.0
      %639 = vmatpush1.msra.mxu0 0.0
      %640 = vmatprep.subr.mxu0 0.0
      %641 = vmatpush1.msra.mxu0 0.0
      %642 = vmatprep.subr.mxu0 0.0
      %643 = vmatpush1.msra.mxu0 0.0
      %644 = vmatprep.subr.mxu0 0.0
      %645 = vmatpush1.msra.mxu0 0.0
      %646 = vmatprep.mubr.f32.mxu0 0.0
      %647 = vmatmul.mubr.f32.gmra.mrb[0].mxu0 %v509
      %v648 = vpop.f32.mrb[0].mxu0
      %v649 = vadd.f32 %v506, %v648
      %v650 = vpop.f32.mrb[0].mxu0
      %v651 = vadd.f32 %v506, %v650
      %652 = vdwg.mxu0
      %653 = vst [vmem:[#allocation2] sm:$0xff] 0.0
      %654 = vst [vmem:[#allocation2 + $0x8] sm:$0xff] 0.0
      %655 = vst [vmem:[#allocation2 + $0x10] sm:$0xff] 0.0
      %656 = vst [vmem:[#allocation2 + $0x18] sm:$0xff] 0.0
      %657 = vst [vmem:[#allocation2 + $0x20] sm:$0xff] 0.0
      %v662 = vcombine.low %v578, %v580
      %v663 = vcombine.low %v649, %v651
      %666 = vst [vmem:[#allocation2 + $0xc] sm:$0xff] %v662
      %667 = vst [vmem:[#allocation2 + $0x14] sm:$0xff] %v663
      %v668 = vld [vmem:[%s7] sm:$0xf]
      %v669 = vld [vmem:[%s8] sm:$0xf]
      %v670 = vld [vmem:[%s5] sm:$0xf]
      %v671 = vld [vmem:[#allocation2] sm:$0xff]
      %v672 = vld [vmem:[#allocation2 + $0x8] sm:$0xff]
      %v673 = vld [vmem:[#allocation2 + $0x10] sm:$0xf]
      %675 = vset.pattern.permute.xlu0 0
      %676 = vperm.xlu0 %675, %v670
      %v677 = vpop.permute.xlu0 %676
      %v682 = vcombine.high %v671, %v671
      %v683 = vcombine.high %v672, %v672
      %684 = vrot.lane.b32.xlu0 %v671, 34
      %v685 = vpop.permute.xlu0 %684
      %686 = vrot.lane.b32.xlu0 %v682, 34
      %v687 = vpop.permute.xlu0 %686
      %688 = vrot.lane.b32.xlu0 %v672, 34
      %v689 = vpop.permute.xlu0 %688
      %690 = vrot.lane.b32.xlu0 %v683, 34
      %v691 = vpop.permute.xlu0 %690
      %692 = vrot.lane.b32.xlu0 %v673, 34
      %v693 = vpop.permute.xlu0 %692
      %vm694 = vcmask 277504
      %v695 = vsel %vm694, %v685, %v687
      %v696 = vsel %vm694, %v687, %v689
      %v697 = vsel %vm694, %v689, %v691
      %v698 = vsel %vm694, %v691, %v693
      %v703 = vmul.f32 %v677, %v695
      %v704 = vmul.f32 %v677, %v696
      %v705 = vmul.f32 %v677, %v697
      %v706 = vmul.f32 %v677, %v698
      %v707 = vadd.f32 %v703, 0.0
      %v708 = vadd.f32 %v704, 0.0
      %v709 = vadd.f32 %v705, 0.0
      %v710 = vadd.f32 %v706, 0.0
      %v711 = vld [vmem:[#allocation2 + $0x4] sm:$0xff]
      %v712 = vld [vmem:[#allocation2 + $0xc] sm:$0xff]
      %v713 = vld [vmem:[#allocation2 + $0x14] sm:$0xf]
      %714 = vset.pattern.permute.xlu0 25
      %715 = vperm.xlu0 %714, %v670
      %v716 = vpop.permute.xlu0 %715
      %v721 = vcombine.high %v711, %v711
      %v722 = vcombine.high %v712, %v712
      %723 = vrot.lane.b32.xlu0 %v711, 34
      %v724 = vpop.permute.xlu0 %723
      %725 = vrot.lane.b32.xlu0 %v721, 34
      %v726 = vpop.permute.xlu0 %725
      %727 = vrot.lane.b32.xlu0 %v712, 34
      %v728 = vpop.permute.xlu0 %727
      %729 = vrot.lane.b32.xlu0 %v722, 34
      %v730 = vpop.permute.xlu0 %729
      %731 = vrot.lane.b32.xlu0 %v713, 34
      %v732 = vpop.permute.xlu0 %731
      %v733 = vsel %vm694, %v724, %v726
      %v734 = vsel %vm694, %v726, %v728
      %v735 = vsel %vm694, %v728, %v730
      %v736 = vsel %vm694, %v730, %v732
      %v741 = vmul.f32 %v716, %v733
      %v742 = vmul.f32 %v716, %v734
      %v743 = vmul.f32 %v716, %v735
      %v744 = vmul.f32 %v716, %v736
      %v745 = vadd.f32 %v707, %v741
      %v746 = vadd.f32 %v708, %v742
      %v747 = vadd.f32 %v709, %v743
      %v748 = vadd.f32 %v710, %v744
      %v749 = vld [vmem:[#allocation2 + $0x8] sm:$0xff]
      %v750 = vld [vmem:[#allocation2 + $0x10] sm:$0xff]
      %v751 = vld [vmem:[#allocation2 + $0x18] sm:$0xf]
      %752 = vset.pattern.permute.xlu0 50
      %753 = vperm.xlu0 %752, %v670
      %v754 = vpop.permute.xlu0 %753
      %v759 = vcombine.high %v749, %v749
      %v760 = vcombine.high %v750, %v750
      %761 = vrot.lane.b32.xlu0 %v749, 34
      %v762 = vpop.permute.xlu0 %761
      %763 = vrot.lane.b32.xlu0 %v759, 34
      %v764 = vpop.permute.xlu0 %763
      %765 = vrot.lane.b32.xlu0 %v750, 34
      %v766 = vpop.permute.xlu0 %765
      %767 = vrot.lane.b32.xlu0 %v760, 34
      %v768 = vpop.permute.xlu0 %767
      %769 = vrot.lane.b32.xlu0 %v751, 34
      %v770 = vpop.permute.xlu0 %769
      %v771 = vsel %vm694, %v762, %v764
      %v772 = vsel %vm694, %v764, %v766
      %v773 = vsel %vm694, %v766, %v768
      %v774 = vsel %vm694, %v768, %v770
      %v779 = vmul.f32 %v754, %v771
      %v780 = vmul.f32 %v754, %v772
      %v781 = vmul.f32 %v754, %v773
      %v782 = vmul.f32 %v754, %v774
      %v783 = vadd.f32 %v745, %v779
      %v784 = vadd.f32 %v746, %v780
      %v785 = vadd.f32 %v747, %v781
      %v786 = vadd.f32 %v748, %v782
      %v787 = vld [vmem:[#allocation2 + $0xc] sm:$0xff]
      %v788 = vld [vmem:[#allocation2 + $0x14] sm:$0xff]
      %v789 = vld [vmem:[#allocation2 + $0x1c] sm:$0xf]
      %790 = vset.pattern.permute.xlu0 75
      %791 = vperm.xlu0 %790, %v670
      %v792 = vpop.permute.xlu0 %791
      %v797 = vcombine.high %v787, %v787
      %v798 = vcombine.high %v788, %v788
      %799 = vrot.lane.b32.xlu0 %v787, 34
      %v800 = vpop.permute.xlu0 %799
      %801 = vrot.lane.b32.xlu0 %v797, 34
      %v802 = vpop.permute.xlu0 %801
      %803 = vrot.lane.b32.xlu0 %v788, 34
      %v804 = vpop.permute.xlu0 %803
      %805 = vrot.lane.b32.xlu0 %v798, 34
      %v806 = vpop.permute.xlu0 %805
      %807 = vrot.lane.b32.xlu0 %v789, 34
      %v808 = vpop.permute.xlu0 %807
      %v809 = vsel %vm694, %v800, %v802
      %v810 = vsel %vm694, %v802, %v804
      %v811 = vsel %vm694, %v804, %v806
      %v812 = vsel %vm694, %v806, %v808
      %v817 = vmul.f32 %v792, %v809
      %v818 = vmul.f32 %v792, %v810
      %v819 = vmul.f32 %v792, %v811
      %v820 = vmul.f32 %v792, %v812
      %v821 = vadd.f32 %v783, %v817
      %v822 = vadd.f32 %v784, %v818
      %v823 = vadd.f32 %v785, %v819
      %v824 = vadd.f32 %v786, %v820
      %v825 = vld [vmem:[#allocation2 + $0x10] sm:$0xff]
      %v826 = vld [vmem:[#allocation2 + $0x18] sm:$0xff]
      %v827 = vld [vmem:[#allocation2 + $0x20] sm:$0xf]
      %828 = vset.pattern.permute.xlu0 100
      %829 = vperm.xlu0 %828, %v670
      %v830 = vpop.permute.xlu0 %829
      %v835 = vcombine.high %v825, %v825
      %v836 = vcombine.high %v826, %v826
      %837 = vrot.lane.b32.xlu0 %v825, 34
      %v838 = vpop.permute.xlu0 %837
      %839 = vrot.lane.b32.xlu0 %v835, 34
      %v840 = vpop.permute.xlu0 %839
      %841 = vrot.lane.b32.xlu0 %v826, 34
      %v842 = vpop.permute.xlu0 %841
      %843 = vrot.lane.b32.xlu0 %v836, 34
      %v844 = vpop.permute.xlu0 %843
      %845 = vrot.lane.b32.xlu0 %v827, 34
      %v846 = vpop.permute.xlu0 %845
      %v847 = vsel %vm694, %v838, %v840
      %v848 = vsel %vm694, %v840, %v842
      %v849 = vsel %vm694, %v842, %v844
      %v850 = vsel %vm694, %v844, %v846
      %v855 = vmul.f32 %v830, %v847
      %v856 = vmul.f32 %v830, %v848
      %v857 = vmul.f32 %v830, %v849
      %v858 = vmul.f32 %v830, %v850
      %v859 = vadd.f32 %v821, %v855
      %v860 = vadd.f32 %v822, %v856
      %v861 = vadd.f32 %v823, %v857
      %v862 = vadd.f32 %v824, %v858
      %v863 = vadd.s32 %v668, 4294967294
      %vm864 = vcmp.ge.s32.totalorder %v863, 0
      %vm865 = vcmp.lt.s32.totalorder %v863, 8
      %vm866 = vmand %vm864, %vm865
      %v867 = vadd.s32 %v669, 4294967294
      %vm868 = vcmp.ge.s32.totalorder %v867, 0
      %vm869 = vmand %vm866, %vm868
      %vm870 = vcmp.lt.s32.totalorder %v867, 16
      %vm871 = vmand %vm869, %vm870
      %v872 = vsel %vm871, 1, 0
      %v873 = vlaneseq
      %v874 = vshrl.u32 %v873, 7
      %v875 = vsub.s32 0, %v874
      %v876 = vrot.slane %v872, %v875
      %v877 = vlaneseq
      %v878 = vshrl.u32 %v877, 7
      %v879 = vsub.s32 1, %v878
      %v880 = vrot.slane %v872, %v879
      %v881 = vlaneseq
      %v882 = vshrl.u32 %v881, 7
      %v883 = vsub.s32 2, %v882
      %v884 = vrot.slane %v872, %v883
      %v885 = vlaneseq
      %v886 = vshrl.u32 %v885, 7
      %v887 = vsub.s32 3, %v886
      %v888 = vrot.slane %v872, %v887
      %vm889 = vcmp.eq.s32.totalorder %v876, 1
      %vm890 = vcmp.eq.s32.totalorder %v880, 1
      %vm891 = vcmp.eq.s32.totalorder %v884, 1
      %vm892 = vcmp.eq.s32.totalorder %v888, 1
      %v893 = vsel %vm889, %v859, 0.0
      %v894 = vsel %vm890, %v860, 0.0
      %v895 = vsel %vm891, %v861, 0.0
      %v896 = vsel %vm892, %v862, 0.0
      %v897 = vadd.f32 %v893, 0.0
      %v898 = vadd.f32 %v894, 0.0
      %v899 = vadd.f32 %v895, 0.0
      %v900 = vadd.f32 %v896, 0.0
      %v901 = vld [vmem:[#allocation2] sm:$0xff]
      %v902 = vld [vmem:[#allocation2 + $0x8] sm:$0xff]
      %v903 = vld [vmem:[#allocation2 + $0x10] sm:$0xf]
      %904 = vset.pattern.permute.xlu0 1
      %905 = vperm.xlu0 %904, %v670
      %v906 = vpop.permute.xlu0 %905
      %v911 = vcombine.high %v901, %v901
      %v912 = vcombine.high %v902, %v902
      %913 = vrot.lane.b32.xlu0 %v901, 33
      %v914 = vpop.permute.xlu0 %913
      %915 = vrot.lane.b32.xlu0 %v911, 33
      %v916 = vpop.permute.xlu0 %915
      %917 = vrot.lane.b32.xlu0 %v902, 33
      %v918 = vpop.permute.xlu0 %917
      %919 = vrot.lane.b32.xlu0 %v912, 33
      %v920 = vpop.permute.xlu0 %919
      %921 = vrot.lane.b32.xlu0 %v903, 33
      %v922 = vpop.permute.xlu0 %921
      %vm923 = vcmask 269312
      %v924 = vsel %vm923, %v914, %v916
      %v925 = vsel %vm923, %v916, %v918
      %v926 = vsel %vm923, %v918, %v920
      %v927 = vsel %vm923, %v920, %v922
      %v932 = vmul.f32 %v906, %v924
      %v933 = vmul.f32 %v906, %v925
      %v934 = vmul.f32 %v906, %v926
      %v935 = vmul.f32 %v906, %v927
      %v936 = vadd.f32 %v932, 0.0
      %v937 = vadd.f32 %v933, 0.0
      %v938 = vadd.f32 %v934, 0.0
      %v939 = vadd.f32 %v935, 0.0
      %v940 = vld [vmem:[#allocation2 + $0x4] sm:$0xff]
      %v941 = vld [vmem:[#allocation2 + $0xc] sm:$0xff]
      %v942 = vld [vmem:[#allocation2 + $0x14] sm:$0xf]
      %943 = vset.pattern.permute.xlu0 26
      %944 = vperm.xlu0 %943, %v670
      %v945 = vpop.permute.xlu0 %944
      %v950 = vcombine.high %v940, %v940
      %v951 = vcombine.high %v941, %v941
      %952 = vrot.lane.b32.xlu0 %v940, 33
      %v953 = vpop.permute.xlu0 %952
      %954 = vrot.lane.b32.xlu0 %v950, 33
      %v955 = vpop.permute.xlu0 %954
      %956 = vrot.lane.b32.xlu0 %v941, 33
      %v957 = vpop.permute.xlu0 %956
      %958 = vrot.lane.b32.xlu0 %v951, 33
      %v959 = vpop.permute.xlu0 %958
      %960 = vrot.lane.b32.xlu0 %v942, 33
      %v961 = vpop.permute.xlu0 %960
      %v962 = vsel %vm923, %v953, %v955
      %v963 = vsel %vm923, %v955, %v957
      %v964 = vsel %vm923, %v957, %v959
      %v965 = vsel %vm923, %v959, %v961
      %v970 = vmul.f32 %v945, %v962
      %v971 = vmul.f32 %v945, %v963
      %v972 = vmul.f32 %v945, %v964
      %v973 = vmul.f32 %v945, %v965
      %v974 = vadd.f32 %v936, %v970
      %v975 = vadd.f32 %v937, %v971
      %v976 = vadd.f32 %v938, %v972
      %v977 = vadd.f32 %v939, %v973
      %v978 = vld [vmem:[#allocation2 + $0x8] sm:$0xff]
      %v979 = vld [vmem:[#allocation2 + $0x10] sm:$0xff]
      %v980 = vld [vmem:[#allocation2 + $0x18] sm:$0xf]
      %981 = vset.pattern.permute.xlu0 51
      %982 = vperm.xlu0 %981, %v670
      %v983 = vpop.permute.xlu0 %982
      %v988 = vcombine.high %v978, %v978
      %v989 = vcombine.high %v979, %v979
      %990 = vrot.lane.b32.xlu0 %v978, 33
      %v991 = vpop.permute.xlu0 %990
      %992 = vrot.lane.b32.xlu0 %v988, 33
      %v993 = vpop.permute.xlu0 %992
      %994 = vrot.lane.b32.xlu0 %v979, 33
      %v995 = vpop.permute.xlu0 %994
      %996 = vrot.lane.b32.xlu0 %v989, 33
      %v997 = vpop.permute.xlu0 %996
      %998 = vrot.lane.b32.xlu0 %v980, 33
      %v999 = vpop.permute.xlu0 %998
      %v1000 = vsel %vm923, %v991, %v993
      %v1001 = vsel %vm923, %v993, %v995
      %v1002 = vsel %vm923, %v995, %v997
      %v1003 = vsel %vm923, %v997, %v999
      %v1008 = vmul.f32 %v983, %v1000
      %v1009 = vmul.f32 %v983, %v1001
      %v1010 = vmul.f32 %v983, %v1002
      %v1011 = vmul.f32 %v983, %v1003
      %v1012 = vadd.f32 %v974, %v1008
      %v1013 = vadd.f32 %v975, %v1009
      %v1014 = vadd.f32 %v976, %v1010
      %v1015 = vadd.f32 %v977, %v1011
      %v1016 = vld [vmem:[#allocation2 + $0xc] sm:$0xff]
      %v1017 = vld [vmem:[#allocation2 + $0x14] sm:$0xff]
      %v1018 = vld [vmem:[#allocation2 + $0x1c] sm:$0xf]
      %1019 = vset.pattern.permute.xlu0 76
      %1020 = vperm.xlu0 %1019, %v670
      %v1021 = vpop.permute.xlu0 %1020
      %v1026 = vcombine.high %v1016, %v1016
      %v1027 = vcombine.high %v1017, %v1017
      %1028 = vrot.lane.b32.xlu0 %v1016, 33
      %v1029 = vpop.permute.xlu0 %1028
      %1030 = vrot.lane.b32.xlu0 %v1026, 33
      %v1031 = vpop.permute.xlu0 %1030
      %1032 = vrot.lane.b32.xlu0 %v1017, 33
      %v1033 = vpop.permute.xlu0 %1032
      %1034 = vrot.lane.b32.xlu0 %v1027, 33
      %v1035 = vpop.permute.xlu0 %1034
      %1036 = vrot.lane.b32.xlu0 %v1018, 33
      %v1037 = vpop.permute.xlu0 %1036
      %v1038 = vsel %vm923, %v1029, %v1031
      %v1039 = vsel %vm923, %v1031, %v1033
      %v1040 = vsel %vm923, %v1033, %v1035
      %v1041 = vsel %vm923, %v1035, %v1037
      %v1046 = vmul.f32 %v1021, %v1038
      %v1047 = vmul.f32 %v1021, %v1039
      %v1048 = vmul.f32 %v1021, %v1040
      %v1049 = vmul.f32 %v1021, %v1041
      %v1050 = vadd.f32 %v1012, %v1046
      %v1051 = vadd.f32 %v1013, %v1047
      %v1052 = vadd.f32 %v1014, %v1048
      %v1053 = vadd.f32 %v1015, %v1049
      %v1054 = vld [vmem:[#allocation2 + $0x10] sm:$0xff]
      %v1055 = vld [vmem:[#allocation2 + $0x18] sm:$0xff]
      %v1056 = vld [vmem:[#allocation2 + $0x20] sm:$0xf]
      %1057 = vset.pattern.permute.xlu0 101
      %1058 = vperm.xlu0 %1057, %v670
      %v1059 = vpop.permute.xlu0 %1058
      %v1064 = vcombine.high %v1054, %v1054
      %v1065 = vcombine.high %v1055, %v1055
      %1066 = vrot.lane.b32.xlu0 %v1054, 33
      %v1067 = vpop.permute.xlu0 %1066
      %1068 = vrot.lane.b32.xlu0 %v1064, 33
      %v1069 = vpop.permute.xlu0 %1068
      %1070 = vrot.lane.b32.xlu0 %v1055, 33
      %v1071 = vpop.permute.xlu0 %1070
      %1072 = vrot.lane.b32.xlu0 %v1065, 33
      %v1073 = vpop.permute.xlu0 %1072
      %1074 = vrot.lane.b32.xlu0 %v1056, 33
      %v1075 = vpop.permute.xlu0 %1074
      %v1076 = vsel %vm923, %v1067, %v1069
      %v1077 = vsel %vm923, %v1069, %v1071
      %v1078 = vsel %vm923, %v1071, %v1073
      %v1079 = vsel %vm923, %v1073, %v1075
      %v1084 = vmul.f32 %v1059, %v1076
      %v1085 = vmul.f32 %v1059, %v1077
      %v1086 = vmul.f32 %v1059, %v1078
      %v1087 = vmul.f32 %v1059, %v1079
      %v1088 = vadd.f32 %v1050, %v1084
      %v1089 = vadd.f32 %v1051, %v1085
      %v1090 = vadd.f32 %v1052, %v1086
      %v1091 = vadd.f32 %v1053, %v1087
      %v1092 = vadd.s32 %v669, 4294967295
      %vm1093 = vcmp.ge.s32.totalorder %v1092, 0
      %vm1094 = vmand %vm866, %vm1093
      %vm1095 = vcmp.lt.s32.totalorder %v1092, 16
      %vm1096 = vmand %vm1094, %vm1095
      %v1097 = vsel %vm1096, 1, 0
      %v1098 = vlaneseq
      %v1099 = vshrl.u32 %v1098, 7
      %v1100 = vsub.s32 0, %v1099
      %v1101 = vrot.slane %v1097, %v1100
      %v1102 = vlaneseq
      %v1103 = vshrl.u32 %v1102, 7
      %v1104 = vsub.s32 1, %v1103
      %v1105 = vrot.slane %v1097, %v1104
      %v1106 = vlaneseq
      %v1107 = vshrl.u32 %v1106, 7
      %v1108 = vsub.s32 2, %v1107
      %v1109 = vrot.slane %v1097, %v1108
      %v1110 = vlaneseq
      %v1111 = vshrl.u32 %v1110, 7
      %v1112 = vsub.s32 3, %v1111
      %v1113 = vrot.slane %v1097, %v1112
      %vm1114 = vcmp.eq.s32.totalorder %v1101, 1
      %vm1115 = vcmp.eq.s32.totalorder %v1105, 1
      %vm1116 = vcmp.eq.s32.totalorder %v1109, 1
      %vm1117 = vcmp.eq.s32.totalorder %v1113, 1
      %v1118 = vsel %vm1114, %v1088, 0.0
      %v1119 = vsel %vm1115, %v1089, 0.0
      %v1120 = vsel %vm1116, %v1090, 0.0
      %v1121 = vsel %vm1117, %v1091, 0.0
      %v1122 = vadd.f32 %v897, %v1118
      %v1123 = vadd.f32 %v898, %v1119
      %v1124 = vadd.f32 %v899, %v1120
      %v1125 = vadd.f32 %v900, %v1121
      %v1126 = vld [vmem:[#allocation2] sm:$0xff]
      %v1127 = vld [vmem:[#allocation2 + $0x8] sm:$0xff]
      %v1128 = vld [vmem:[#allocation2 + $0x10] sm:$0xf]
      %1129 = vset.pattern.permute.xlu0 2
      %1130 = vperm.xlu0 %1129, %v670
      %v1131 = vpop.permute.xlu0 %1130
      %v1136 = vcombine.high %v1126, %v1126
      %v1137 = vcombine.high %v1127, %v1127
      %1138 = vrot.lane.b32.xlu0 %v1126, 32
      %v1139 = vpop.permute.xlu0 %1138
      %1140 = vrot.lane.b32.xlu0 %v1136, 32
      %v1141 = vpop.permute.xlu0 %1140
      %1142 = vrot.lane.b32.xlu0 %v1127, 32
      %v1143 = vpop.permute.xlu0 %1142
      %1144 = vrot.lane.b32.xlu0 %v1137, 32
      %v1145 = vpop.permute.xlu0 %1144
      %1146 = vrot.lane.b32.xlu0 %v1128, 32
      %v1147 = vpop.permute.xlu0 %1146
      %vm1148 = vcmask 261120
      %v1149 = vsel %vm1148, %v1139, %v1141
      %v1150 = vsel %vm1148, %v1141, %v1143
      %v1151 = vsel %vm1148, %v1143, %v1145
      %v1152 = vsel %vm1148, %v1145, %v1147
      %v1157 = vmul.f32 %v1131, %v1149
      %v1158 = vmul.f32 %v1131, %v1150
      %v1159 = vmul.f32 %v1131, %v1151
      %v1160 = vmul.f32 %v1131, %v1152
      %v1161 = vadd.f32 %v1157, 0.0
      %v1162 = vadd.f32 %v1158, 0.0
      %v1163 = vadd.f32 %v1159, 0.0
      %v1164 = vadd.f32 %v1160, 0.0
      %v1165 = vld [vmem:[#allocation2 + $0x4] sm:$0xff]
      %v1166 = vld [vmem:[#allocation2 + $0xc] sm:$0xff]
      %v1167 = vld [vmem:[#allocation2 + $0x14] sm:$0xf]
      %1168 = vset.pattern.permute.xlu0 27
      %1169 = vperm.xlu0 %1168, %v670
      %v1170 = vpop.permute.xlu0 %1169
      %v1175 = vcombine.high %v1165, %v1165
      %v1176 = vcombine.high %v1166, %v1166
      %1177 = vrot.lane.b32.xlu0 %v1165, 32
      %v1178 = vpop.permute.xlu0 %1177
      %1179 = vrot.lane.b32.xlu0 %v1175, 32
      %v1180 = vpop.permute.xlu0 %1179
      %1181 = vrot.lane.b32.xlu0 %v1166, 32
      %v1182 = vpop.permute.xlu0 %1181
      %1183 = vrot.lane.b32.xlu0 %v1176, 32
      %v1184 = vpop.permute.xlu0 %1183
      %1185 = vrot.lane.b32.xlu0 %v1167, 32
      %v1186 = vpop.permute.xlu0 %1185
      %v1187 = vsel %vm1148, %v1178, %v1180
      %v1188 = vsel %vm1148, %v1180, %v1182
      %v1189 = vsel %vm1148, %v1182, %v1184
      %v1190 = vsel %vm1148, %v1184, %v1186
      %v1195 = vmul.f32 %v1170, %v1187
      %v1196 = vmul.f32 %v1170, %v1188
      %v1197 = vmul.f32 %v1170, %v1189
      %v1198 = vmul.f32 %v1170, %v1190
      %v1199 = vadd.f32 %v1161, %v1195
      %v1200 = vadd.f32 %v1162, %v1196
      %v1201 = vadd.f32 %v1163, %v1197
      %v1202 = vadd.f32 %v1164, %v1198
      %v1203 = vld [vmem:[#allocation2 + $0x8] sm:$0xff]
      %v1204 = vld [vmem:[#allocation2 + $0x10] sm:$0xff]
      %v1205 = vld [vmem:[#allocation2 + $0x18] sm:$0xf]
      %1206 = vset.pattern.permute.xlu0 52
      %1207 = vperm.xlu0 %1206, %v670
      %v1208 = vpop.permute.xlu0 %1207
      %v1213 = vcombine.high %v1203, %v1203
      %v1214 = vcombine.high %v1204, %v1204
      %1215 = vrot.lane.b32.xlu0 %v1203, 32
      %v1216 = vpop.permute.xlu0 %1215
      %1217 = vrot.lane.b32.xlu0 %v1213, 32
      %v1218 = vpop.permute.xlu0 %1217
      %1219 = vrot.lane.b32.xlu0 %v1204, 32
      %v1220 = vpop.permute.xlu0 %1219
      %1221 = vrot.lane.b32.xlu0 %v1214, 32
      %v1222 = vpop.permute.xlu0 %1221
      %1223 = vrot.lane.b32.xlu0 %v1205, 32
      %v1224 = vpop.permute.xlu0 %1223
      %v1225 = vsel %vm1148, %v1216, %v1218
      %v1226 = vsel %vm1148, %v1218, %v1220
      %v1227 = vsel %vm1148, %v1220, %v1222
      %v1228 = vsel %vm1148, %v1222, %v1224
      %v1233 = vmul.f32 %v1208, %v1225
      %v1234 = vmul.f32 %v1208, %v1226
      %v1235 = vmul.f32 %v1208, %v1227
      %v1236 = vmul.f32 %v1208, %v1228
      %v1237 = vadd.f32 %v1199, %v1233
      %v1238 = vadd.f32 %v1200, %v1234
      %v1239 = vadd.f32 %v1201, %v1235
      %v1240 = vadd.f32 %v1202, %v1236
      %v1241 = vld [vmem:[#allocation2 + $0xc] sm:$0xff]
      %v1242 = vld [vmem:[#allocation2 + $0x14] sm:$0xff]
      %v1243 = vld [vmem:[#allocation2 + $0x1c] sm:$0xf]
      %1244 = vset.pattern.permute.xlu0 77
      %1245 = vperm.xlu0 %1244, %v670
      %v1246 = vpop.permute.xlu0 %1245
      %v1251 = vcombine.high %v1241, %v1241
      %v1252 = vcombine.high %v1242, %v1242
      %1253 = vrot.lane.b32.xlu0 %v1241, 32
      %v1254 = vpop.permute.xlu0 %1253
      %1255 = vrot.lane.b32.xlu0 %v1251, 32
      %v1256 = vpop.permute.xlu0 %1255
      %1257 = vrot.lane.b32.xlu0 %v1242, 32
      %v1258 = vpop.permute.xlu0 %1257
      %1259 = vrot.lane.b32.xlu0 %v1252, 32
      %v1260 = vpop.permute.xlu0 %1259
      %1261 = vrot.lane.b32.xlu0 %v1243, 32
      %v1262 = vpop.permute.xlu0 %1261
      %v1263 = vsel %vm1148, %v1254, %v1256
      %v1264 = vsel %vm1148, %v1256, %v1258
      %v1265 = vsel %vm1148, %v1258, %v1260
      %v1266 = vsel %vm1148, %v1260, %v1262
      %v1271 = vmul.f32 %v1246, %v1263
      %v1272 = vmul.f32 %v1246, %v1264
      %v1273 = vmul.f32 %v1246, %v1265
      %v1274 = vmul.f32 %v1246, %v1266
      %v1275 = vadd.f32 %v1237, %v1271
      %v1276 = vadd.f32 %v1238, %v1272
      %v1277 = vadd.f32 %v1239, %v1273
      %v1278 = vadd.f32 %v1240, %v1274
      %v1279 = vld [vmem:[#allocation2 + $0x10] sm:$0xff]
      %v1280 = vld [vmem:[#allocation2 + $0x18] sm:$0xff]
      %v1281 = vld [vmem:[#allocation2 + $0x20] sm:$0xf]
      %1282 = vset.pattern.permute.xlu0 102
      %1283 = vperm.xlu0 %1282, %v670
      %v1284 = vpop.permute.xlu0 %1283
      %v1289 = vcombine.high %v1279, %v1279
      %v1290 = vcombine.high %v1280, %v1280
      %1291 = vrot.lane.b32.xlu0 %v1279, 32
      %v1292 = vpop.permute.xlu0 %1291
      %1293 = vrot.lane.b32.xlu0 %v1289, 32
      %v1294 = vpop.permute.xlu0 %1293
      %1295 = vrot.lane.b32.xlu0 %v1280, 32
      %v1296 = vpop.permute.xlu0 %1295
      %1297 = vrot.lane.b32.xlu0 %v1290, 32
      %v1298 = vpop.permute.xlu0 %1297
      %1299 = vrot.lane.b32.xlu0 %v1281, 32
      %v1300 = vpop.permute.xlu0 %1299
      %v1301 = vsel %vm1148, %v1292, %v1294
      %v1302 = vsel %vm1148, %v1294, %v1296
      %v1303 = vsel %vm1148, %v1296, %v1298
      %v1304 = vsel %vm1148, %v1298, %v1300
      %v1309 = vmul.f32 %v1284, %v1301
      %v1310 = vmul.f32 %v1284, %v1302
      %v1311 = vmul.f32 %v1284, %v1303
      %v1312 = vmul.f32 %v1284, %v1304
      %v1313 = vadd.f32 %v1275, %v1309
      %v1314 = vadd.f32 %v1276, %v1310
      %v1315 = vadd.f32 %v1277, %v1311
      %v1316 = vadd.f32 %v1278, %v1312
      %vm1317 = vcmp.ge.s32.totalorder %v669, 0
      %vm1318 = vmand %vm866, %vm1317
      %vm1319 = vcmp.lt.s32.totalorder %v669, 16
      %vm1320 = vmand %vm1318, %vm1319
      %v1321 = vsel %vm1320, 1, 0
      %v1322 = vlaneseq
      %v1323 = vshrl.u32 %v1322, 7
      %v1324 = vsub.s32 0, %v1323
      %v1325 = vrot.slane %v1321, %v1324
      %v1326 = vlaneseq
      %v1327 = vshrl.u32 %v1326, 7
      %v1328 = vsub.s32 1, %v1327
      %v1329 = vrot.slane %v1321, %v1328
      %v1330 = vlaneseq
      %v1331 = vshrl.u32 %v1330, 7
      %v1332 = vsub.s32 2, %v1331
      %v1333 = vrot.slane %v1321, %v1332
      %v1334 = vlaneseq
      %v1335 = vshrl.u32 %v1334, 7
      %v1336 = vsub.s32 3, %v1335
      %v1337 = vrot.slane %v1321, %v1336
      %vm1338 = vcmp.eq.s32.totalorder %v1325, 1
      %vm1339 = vcmp.eq.s32.totalorder %v1329, 1
      %vm1340 = vcmp.eq.s32.totalorder %v1333, 1
      %vm1341 = vcmp.eq.s32.totalorder %v1337, 1
      %v1342 = vsel %vm1338, %v1313, 0.0
      %v1343 = vsel %vm1339, %v1314, 0.0
      %v1344 = vsel %vm1340, %v1315, 0.0
      %v1345 = vsel %vm1341, %v1316, 0.0
      %v1346 = vadd.f32 %v1122, %v1342
      %v1347 = vadd.f32 %v1123, %v1343
      %v1348 = vadd.f32 %v1124, %v1344
      %v1349 = vadd.f32 %v1125, %v1345
      %v1350 = vld [vmem:[#allocation2] sm:$0xff]
      %v1351 = vld [vmem:[#allocation2 + $0x8] sm:$0xff]
      %v1352 = vld [vmem:[#allocation2 + $0x10] sm:$0xf]
      %1353 = vset.pattern.permute.xlu0 3
      %1354 = vperm.xlu0 %1353, %v670
      %v1355 = vpop.permute.xlu0 %1354
      %v1360 = vcombine.high %v1350, %v1350
      %v1361 = vcombine.high %v1351, %v1351
      %1362 = vrot.lane.b32.xlu0 %v1350, 31
      %v1363 = vpop.permute.xlu0 %1362
      %1364 = vrot.lane.b32.xlu0 %v1360, 31
      %v1365 = vpop.permute.xlu0 %1364
      %1366 = vrot.lane.b32.xlu0 %v1351, 31
      %v1367 = vpop.permute.xlu0 %1366
      %1368 = vrot.lane.b32.xlu0 %v1361, 31
      %v1369 = vpop.permute.xlu0 %1368
      %1370 = vrot.lane.b32.xlu0 %v1352, 31
      %v1371 = vpop.permute.xlu0 %1370
      %vm1372 = vcmask 252928
      %v1373 = vsel %vm1372, %v1363, %v1365
      %v1374 = vsel %vm1372, %v1365, %v1367
      %v1375 = vsel %vm1372, %v1367, %v1369
      %v1376 = vsel %vm1372, %v1369, %v1371
      %v1381 = vmul.f32 %v1355, %v1373
      %v1382 = vmul.f32 %v1355, %v1374
      %v1383 = vmul.f32 %v1355, %v1375
      %v1384 = vmul.f32 %v1355, %v1376
      %v1385 = vadd.f32 %v1381, 0.0
      %v1386 = vadd.f32 %v1382, 0.0
      %v1387 = vadd.f32 %v1383, 0.0
      %v1388 = vadd.f32 %v1384, 0.0
      %v1389 = vld [vmem:[#allocation2 + $0x4] sm:$0xff]
      %v1390 = vld [vmem:[#allocation2 + $0xc] sm:$0xff]
      %v1391 = vld [vmem:[#allocation2 + $0x14] sm:$0xf]
      %1392 = vset.pattern.permute.xlu0 28
      %1393 = vperm.xlu0 %1392, %v670
      %v1394 = vpop.permute.xlu0 %1393
      %v1399 = vcombine.high %v1389, %v1389
      %v1400 = vcombine.high %v1390, %v1390
      %1401 = vrot.lane.b32.xlu0 %v1389, 31
      %v1402 = vpop.permute.xlu0 %1401
      %1403 = vrot.lane.b32.xlu0 %v1399, 31
      %v1404 = vpop.permute.xlu0 %1403
      %1405 = vrot.lane.b32.xlu0 %v1390, 31
      %v1406 = vpop.permute.xlu0 %1405
      %1407 = vrot.lane.b32.xlu0 %v1400, 31
      %v1408 = vpop.permute.xlu0 %1407
      %1409 = vrot.lane.b32.xlu0 %v1391, 31
      %v1410 = vpop.permute.xlu0 %1409
      %v1411 = vsel %vm1372, %v1402, %v1404
      %v1412 = vsel %vm1372, %v1404, %v1406
      %v1413 = vsel %vm1372, %v1406, %v1408
      %v1414 = vsel %vm1372, %v1408, %v1410
      %v1419 = vmul.f32 %v1394, %v1411
      %v1420 = vmul.f32 %v1394, %v1412
      %v1421 = vmul.f32 %v1394, %v1413
      %v1422 = vmul.f32 %v1394, %v1414
      %v1423 = vadd.f32 %v1385, %v1419
      %v1424 = vadd.f32 %v1386, %v1420
      %v1425 = vadd.f32 %v1387, %v1421
      %v1426 = vadd.f32 %v1388, %v1422
      %v1427 = vld [vmem:[#allocation2 + $0x8] sm:$0xff]
      %v1428 = vld [vmem:[#allocation2 + $0x10] sm:$0xff]
      %v1429 = vld [vmem:[#allocation2 + $0x18] sm:$0xf]
      %1430 = vset.pattern.permute.xlu0 53
      %1431 = vperm.xlu0 %1430, %v670
      %v1432 = vpop.permute.xlu0 %1431
      %v1437 = vcombine.high %v1427, %v1427
      %v1438 = vcombine.high %v1428, %v1428
      %1439 = vrot.lane.b32.xlu0 %v1427, 31
      %v1440 = vpop.permute.xlu0 %1439
      %1441 = vrot.lane.b32.xlu0 %v1437, 31
      %v1442 = vpop.permute.xlu0 %1441
      %1443 = vrot.lane.b32.xlu0 %v1428, 31
      %v1444 = vpop.permute.xlu0 %1443
      %1445 = vrot.lane.b32.xlu0 %v1438, 31
      %v1446 = vpop.permute.xlu0 %1445
      %1447 = vrot.lane.b32.xlu0 %v1429, 31
      %v1448 = vpop.permute.xlu0 %1447
      %v1449 = vsel %vm1372, %v1440, %v1442
      %v1450 = vsel %vm1372, %v1442, %v1444
      %v1451 = vsel %vm1372, %v1444, %v1446
      %v1452 = vsel %vm1372, %v1446, %v1448
      %v1457 = vmul.f32 %v1432, %v1449
      %v1458 = vmul.f32 %v1432, %v1450
      %v1459 = vmul.f32 %v1432, %v1451
      %v1460 = vmul.f32 %v1432, %v1452
      %v1461 = vadd.f32 %v1423, %v1457
      %v1462 = vadd.f32 %v1424, %v1458
      %v1463 = vadd.f32 %v1425, %v1459
      %v1464 = vadd.f32 %v1426, %v1460
      %v1465 = vld [vmem:[#allocation2 + $0xc] sm:$0xff]
      %v1466 = vld [vmem:[#allocation2 + $0x14] sm:$0xff]
      %v1467 = vld [vmem:[#allocation2 + $0x1c] sm:$0xf]
      %1468 = vset.pattern.permute.xlu0 78
      %1469 = vperm.xlu0 %1468, %v670
      %v1470 = vpop.permute.xlu0 %1469
      %v1475 = vcombine.high %v1465, %v1465
      %v1476 = vcombine.high %v1466, %v1466
      %1477 = vrot.lane.b32.xlu0 %v1465, 31
      %v1478 = vpop.permute.xlu0 %1477
      %1479 = vrot.lane.b32.xlu0 %v1475, 31
      %v1480 = vpop.permute.xlu0 %1479
      %1481 = vrot.lane.b32.xlu0 %v1466, 31
      %v1482 = vpop.permute.xlu0 %1481
      %1483 = vrot.lane.b32.xlu0 %v1476, 31
      %v1484 = vpop.permute.xlu0 %1483
      %1485 = vrot.lane.b32.xlu0 %v1467, 31
      %v1486 = vpop.permute.xlu0 %1485
      %v1487 = vsel %vm1372, %v1478, %v1480
      %v1488 = vsel %vm1372, %v1480, %v1482
      %v1489 = vsel %vm1372, %v1482, %v1484
      %v1490 = vsel %vm1372, %v1484, %v1486
      %v1495 = vmul.f32 %v1470, %v1487
      %v1496 = vmul.f32 %v1470, %v1488
      %v1497 = vmul.f32 %v1470, %v1489
      %v1498 = vmul.f32 %v1470, %v1490
      %v1499 = vadd.f32 %v1461, %v1495
      %v1500 = vadd.f32 %v1462, %v1496
      %v1501 = vadd.f32 %v1463, %v1497
      %v1502 = vadd.f32 %v1464, %v1498
      %v1503 = vld [vmem:[#allocation2 + $0x10] sm:$0xff]
      %v1504 = vld [vmem:[#allocation2 + $0x18] sm:$0xff]
      %v1505 = vld [vmem:[#allocation2 + $0x20] sm:$0xf]
      %1506 = vset.pattern.permute.xlu0 103
      %1507 = vperm.xlu0 %1506, %v670
      %v1508 = vpop.permute.xlu0 %1507
      %v1513 = vcombine.high %v1503, %v1503
      %v1514 = vcombine.high %v1504, %v1504
      %1515 = vrot.lane.b32.xlu0 %v1503, 31
      %v1516 = vpop.permute.xlu0 %1515
      %1517 = vrot.lane.b32.xlu0 %v1513, 31
      %v1518 = vpop.permute.xlu0 %1517
      %1519 = vrot.lane.b32.xlu0 %v1504, 31
      %v1520 = vpop.permute.xlu0 %1519
      %1521 = vrot.lane.b32.xlu0 %v1514, 31
      %v1522 = vpop.permute.xlu0 %1521
      %1523 = vrot.lane.b32.xlu0 %v1505, 31
      %v1524 = vpop.permute.xlu0 %1523
      %v1525 = vsel %vm1372, %v1516, %v1518
      %v1526 = vsel %vm1372, %v1518, %v1520
      %v1527 = vsel %vm1372, %v1520, %v1522
      %v1528 = vsel %vm1372, %v1522, %v1524
      %v1533 = vmul.f32 %v1508, %v1525
      %v1534 = vmul.f32 %v1508, %v1526
      %v1535 = vmul.f32 %v1508, %v1527
      %v1536 = vmul.f32 %v1508, %v1528
      %v1537 = vadd.f32 %v1499, %v1533
      %v1538 = vadd.f32 %v1500, %v1534
      %v1539 = vadd.f32 %v1501, %v1535
      %v1540 = vadd.f32 %v1502, %v1536
      %v1541 = vadd.s32 %v669, 1
      %vm1542 = vcmp.ge.s32.totalorder %v1541, 0
      %vm1543 = vmand %vm866, %vm1542
      %vm1544 = vcmp.lt.s32.totalorder %v1541, 16
      %vm1545 = vmand %vm1543, %vm1544
      %v1546 = vsel %vm1545, 1, 0
      %v1547 = vlaneseq
      %v1548 = vshrl.u32 %v1547, 7
      %v1549 = vsub.s32 0, %v1548
      %v1550 = vrot.slane %v1546, %v1549
      %v1551 = vlaneseq
      %v1552 = vshrl.u32 %v1551, 7
      %v1553 = vsub.s32 1, %v1552
      %v1554 = vrot.slane %v1546, %v1553
      %v1555 = vlaneseq
      %v1556 = vshrl.u32 %v1555, 7
      %v1557 = vsub.s32 2, %v1556
      %v1558 = vrot.slane %v1546, %v1557
      %v1559 = vlaneseq
      %v1560 = vshrl.u32 %v1559, 7
      %v1561 = vsub.s32 3, %v1560
      %v1562 = vrot.slane %v1546, %v1561
      %vm1563 = vcmp.eq.s32.totalorder %v1550, 1
      %vm1564 = vcmp.eq.s32.totalorder %v1554, 1
      %vm1565 = vcmp.eq.s32.totalorder %v1558, 1
      %vm1566 = vcmp.eq.s32.totalorder %v1562, 1
      %v1567 = vsel %vm1563, %v1537, 0.0
      %v1568 = vsel %vm1564, %v1538, 0.0
      %v1569 = vsel %vm1565, %v1539, 0.0
      %v1570 = vsel %vm1566, %v1540, 0.0
      %v1571 = vadd.f32 %v1346, %v1567
      %v1572 = vadd.f32 %v1347, %v1568
      %v1573 = vadd.f32 %v1348, %v1569
      %v1574 = vadd.f32 %v1349, %v1570
      %v1575 = vld [vmem:[#allocation2] sm:$0xff]
      %v1576 = vld [vmem:[#allocation2 + $0x8] sm:$0xff]
      %v1577 = vld [vmem:[#allocation2 + $0x10] sm:$0xf]
      %1578 = vset.pattern.permute.xlu0 4
      %1579 = vperm.xlu0 %1578, %v670
      %v1580 = vpop.permute.xlu0 %1579
      %v1585 = vcombine.high %v1575, %v1575
      %v1586 = vcombine.high %v1576, %v1576
      %1587 = vrot.lane.b32.xlu0 %v1575, 30
      %v1588 = vpop.permute.xlu0 %1587
      %1589 = vrot.lane.b32.xlu0 %v1585, 30
      %v1590 = vpop.permute.xlu0 %1589
      %1591 = vrot.lane.b32.xlu0 %v1576, 30
      %v1592 = vpop.permute.xlu0 %1591
      %1593 = vrot.lane.b32.xlu0 %v1586, 30
      %v1594 = vpop.permute.xlu0 %1593
      %1595 = vrot.lane.b32.xlu0 %v1577, 30
      %v1596 = vpop.permute.xlu0 %1595
      %vm1597 = vcmask 244736
      %v1598 = vsel %vm1597, %v1588, %v1590
      %v1599 = vsel %vm1597, %v1590, %v1592
      %v1600 = vsel %vm1597, %v1592, %v1594
      %v1601 = vsel %vm1597, %v1594, %v1596
      %v1606 = vmul.f32 %v1580, %v1598
      %v1607 = vmul.f32 %v1580, %v1599
      %v1608 = vmul.f32 %v1580, %v1600
      %v1609 = vmul.f32 %v1580, %v1601
      %v1610 = vadd.f32 %v1606, 0.0
      %v1611 = vadd.f32 %v1607, 0.0
      %v1612 = vadd.f32 %v1608, 0.0
      %v1613 = vadd.f32 %v1609, 0.0
      %v1614 = vld [vmem:[#allocation2 + $0x4] sm:$0xff]
      %v1615 = vld [vmem:[#allocation2 + $0xc] sm:$0xff]
      %v1616 = vld [vmem:[#allocation2 + $0x14] sm:$0xf]
      %1617 = vset.pattern.permute.xlu0 29
      %1618 = vperm.xlu0 %1617, %v670
      %v1619 = vpop.permute.xlu0 %1618
      %v1624 = vcombine.high %v1614, %v1614
      %v1625 = vcombine.high %v1615, %v1615
      %1626 = vrot.lane.b32.xlu0 %v1614, 30
      %v1627 = vpop.permute.xlu0 %1626
      %1628 = vrot.lane.b32.xlu0 %v1624, 30
      %v1629 = vpop.permute.xlu0 %1628
      %1630 = vrot.lane.b32.xlu0 %v1615, 30
      %v1631 = vpop.permute.xlu0 %1630
      %1632 = vrot.lane.b32.xlu0 %v1625, 30
      %v1633 = vpop.permute.xlu0 %1632
      %1634 = vrot.lane.b32.xlu0 %v1616, 30
      %v1635 = vpop.permute.xlu0 %1634
      %v1636 = vsel %vm1597, %v1627, %v1629
      %v1637 = vsel %vm1597, %v1629, %v1631
      %v1638 = vsel %vm1597, %v1631, %v1633
      %v1639 = vsel %vm1597, %v1633, %v1635
      %v1644 = vmul.f32 %v1619, %v1636
      %v1645 = vmul.f32 %v1619, %v1637
      %v1646 = vmul.f32 %v1619, %v1638
      %v1647 = vmul.f32 %v1619, %v1639
      %v1648 = vadd.f32 %v1610, %v1644
      %v1649 = vadd.f32 %v1611, %v1645
      %v1650 = vadd.f32 %v1612, %v1646
      %v1651 = vadd.f32 %v1613, %v1647
      %v1652 = vld [vmem:[#allocation2 + $0x8] sm:$0xff]
      %v1653 = vld [vmem:[#allocation2 + $0x10] sm:$0xff]
      %v1654 = vld [vmem:[#allocation2 + $0x18] sm:$0xf]
      %1655 = vset.pattern.permute.xlu0 54
      %1656 = vperm.xlu0 %1655, %v670
      %v1657 = vpop.permute.xlu0 %1656
      %v1662 = vcombine.high %v1652, %v1652
      %v1663 = vcombine.high %v1653, %v1653
      %1664 = vrot.lane.b32.xlu0 %v1652, 30
      %v1665 = vpop.permute.xlu0 %1664
      %1666 = vrot.lane.b32.xlu0 %v1662, 30
      %v1667 = vpop.permute.xlu0 %1666
      %1668 = vrot.lane.b32.xlu0 %v1653, 30
      %v1669 = vpop.permute.xlu0 %1668
      %1670 = vrot.lane.b32.xlu0 %v1663, 30
      %v1671 = vpop.permute.xlu0 %1670
      %1672 = vrot.lane.b32.xlu0 %v1654, 30
      %v1673 = vpop.permute.xlu0 %1672
      %v1674 = vsel %vm1597, %v1665, %v1667
      %v1675 = vsel %vm1597, %v1667, %v1669
      %v1676 = vsel %vm1597, %v1669, %v1671
      %v1677 = vsel %vm1597, %v1671, %v1673
      %v1682 = vmul.f32 %v1657, %v1674
      %v1683 = vmul.f32 %v1657, %v1675
      %v1684 = vmul.f32 %v1657, %v1676
      %v1685 = vmul.f32 %v1657, %v1677
      %v1686 = vadd.f32 %v1648, %v1682
      %v1687 = vadd.f32 %v1649, %v1683
      %v1688 = vadd.f32 %v1650, %v1684
      %v1689 = vadd.f32 %v1651, %v1685
      %v1690 = vld [vmem:[#allocation2 + $0xc] sm:$0xff]
      %v1691 = vld [vmem:[#allocation2 + $0x14] sm:$0xff]
      %v1692 = vld [vmem:[#allocation2 + $0x1c] sm:$0xf]
      %1693 = vset.pattern.permute.xlu0 79
      %1694 = vperm.xlu0 %1693, %v670
      %v1695 = vpop.permute.xlu0 %1694
      %v1700 = vcombine.high %v1690, %v1690
      %v1701 = vcombine.high %v1691, %v1691
      %1702 = vrot.lane.b32.xlu0 %v1690, 30
      %v1703 = vpop.permute.xlu0 %1702
      %1704 = vrot.lane.b32.xlu0 %v1700, 30
      %v1705 = vpop.permute.xlu0 %1704
      %1706 = vrot.lane.b32.xlu0 %v1691, 30
      %v1707 = vpop.permute.xlu0 %1706
      %1708 = vrot.lane.b32.xlu0 %v1701, 30
      %v1709 = vpop.permute.xlu0 %1708
      %1710 = vrot.lane.b32.xlu0 %v1692, 30
      %v1711 = vpop.permute.xlu0 %1710
      %v1712 = vsel %vm1597, %v1703, %v1705
      %v1713 = vsel %vm1597, %v1705, %v1707
      %v1714 = vsel %vm1597, %v1707, %v1709
      %v1715 = vsel %vm1597, %v1709, %v1711
      %v1720 = vmul.f32 %v1695, %v1712
      %v1721 = vmul.f32 %v1695, %v1713
      %v1722 = vmul.f32 %v1695, %v1714
      %v1723 = vmul.f32 %v1695, %v1715
      %v1724 = vadd.f32 %v1686, %v1720
      %v1725 = vadd.f32 %v1687, %v1721
      %v1726 = vadd.f32 %v1688, %v1722
      %v1727 = vadd.f32 %v1689, %v1723
      %v1728 = vld [vmem:[#allocation2 + $0x10] sm:$0xff]
      %v1729 = vld [vmem:[#allocation2 + $0x18] sm:$0xff]
      %v1730 = vld [vmem:[#allocation2 + $0x20] sm:$0xf]
      %1731 = vset.pattern.permute.xlu0 104
      %1732 = vperm.xlu0 %1731, %v670
      %v1733 = vpop.permute.xlu0 %1732
      %v1738 = vcombine.high %v1728, %v1728
      %v1739 = vcombine.high %v1729, %v1729
      %1740 = vrot.lane.b32.xlu0 %v1728, 30
      %v1741 = vpop.permute.xlu0 %1740
      %1742 = vrot.lane.b32.xlu0 %v1738, 30
      %v1743 = vpop.permute.xlu0 %1742
      %1744 = vrot.lane.b32.xlu0 %v1729, 30
      %v1745 = vpop.permute.xlu0 %1744
      %1746 = vrot.lane.b32.xlu0 %v1739, 30
      %v1747 = vpop.permute.xlu0 %1746
      %1748 = vrot.lane.b32.xlu0 %v1730, 30
      %v1749 = vpop.permute.xlu0 %1748
      %v1750 = vsel %vm1597, %v1741, %v1743
      %v1751 = vsel %vm1597, %v1743, %v1745
      %v1752 = vsel %vm1597, %v1745, %v1747
      %v1753 = vsel %vm1597, %v1747, %v1749
      %v1758 = vmul.f32 %v1733, %v1750
      %v1759 = vmul.f32 %v1733, %v1751
      %v1760 = vmul.f32 %v1733, %v1752
      %v1761 = vmul.f32 %v1733, %v1753
      %v1762 = vadd.f32 %v1724, %v1758
      %v1763 = vadd.f32 %v1725, %v1759
      %v1764 = vadd.f32 %v1726, %v1760
      %v1765 = vadd.f32 %v1727, %v1761
      %v1766 = vadd.s32 %v669, 2
      %vm1767 = vcmp.ge.s32.totalorder %v1766, 0
      %vm1768 = vmand %vm866, %vm1767
      %vm1769 = vcmp.lt.s32.totalorder %v1766, 16
      %vm1770 = vmand %vm1768, %vm1769
      %v1771 = vsel %vm1770, 1, 0
      %v1772 = vlaneseq
      %v1773 = vshrl.u32 %v1772, 7
      %v1774 = vsub.s32 0, %v1773
      %v1775 = vrot.slane %v1771, %v1774
      %v1776 = vlaneseq
      %v1777 = vshrl.u32 %v1776, 7
      %v1778 = vsub.s32 1, %v1777
      %v1779 = vrot.slane %v1771, %v1778
      %v1780 = vlaneseq
      %v1781 = vshrl.u32 %v1780, 7
      %v1782 = vsub.s32 2, %v1781
      %v1783 = vrot.slane %v1771, %v1782
      %v1784 = vlaneseq
      %v1785 = vshrl.u32 %v1784, 7
      %v1786 = vsub.s32 3, %v1785
      %v1787 = vrot.slane %v1771, %v1786
      %vm1788 = vcmp.eq.s32.totalorder %v1775, 1
      %vm1789 = vcmp.eq.s32.totalorder %v1779, 1
      %vm1790 = vcmp.eq.s32.totalorder %v1783, 1
      %vm1791 = vcmp.eq.s32.totalorder %v1787, 1
      %v1792 = vsel %vm1788, %v1762, 0.0
      %v1793 = vsel %vm1789, %v1763, 0.0
      %v1794 = vsel %vm1790, %v1764, 0.0
      %v1795 = vsel %vm1791, %v1765, 0.0
      %v1796 = vadd.f32 %v1571, %v1792
      %v1797 = vadd.f32 %v1572, %v1793
      %v1798 = vadd.f32 %v1573, %v1794
      %v1799 = vadd.f32 %v1574, %v1795
      %v1800 = vld [vmem:[#allocation2] sm:$0xff]
      %v1801 = vld [vmem:[#allocation2 + $0x8] sm:$0xff]
      %v1802 = vld [vmem:[#allocation2 + $0x10] sm:$0xf]
      %1803 = vset.pattern.permute.xlu0 5
      %1804 = vperm.xlu0 %1803, %v670
      %v1805 = vpop.permute.xlu0 %1804
      %v1810 = vcombine.high %v1800, %v1800
      %v1811 = vcombine.high %v1801, %v1801
      %1812 = vrot.lane.b32.xlu0 %v1800, 18
      %v1813 = vpop.permute.xlu0 %1812
      %1814 = vrot.lane.b32.xlu0 %v1810, 18
      %v1815 = vpop.permute.xlu0 %1814
      %1816 = vrot.lane.b32.xlu0 %v1801, 18
      %v1817 = vpop.permute.xlu0 %1816
      %1818 = vrot.lane.b32.xlu0 %v1811, 18
      %v1819 = vpop.permute.xlu0 %1818
      %1820 = vrot.lane.b32.xlu0 %v1802, 18
      %v1821 = vpop.permute.xlu0 %1820
      %vm1822 = vcmask 146432
      %v1823 = vsel %vm1822, %v1813, %v1815
      %v1824 = vsel %vm1822, %v1815, %v1817
      %v1825 = vsel %vm1822, %v1817, %v1819
      %v1826 = vsel %vm1822, %v1819, %v1821
      %v1831 = vmul.f32 %v1805, %v1823
      %v1832 = vmul.f32 %v1805, %v1824
      %v1833 = vmul.f32 %v1805, %v1825
      %v1834 = vmul.f32 %v1805, %v1826
      %v1835 = vadd.f32 %v1831, 0.0
      %v1836 = vadd.f32 %v1832, 0.0
      %v1837 = vadd.f32 %v1833, 0.0
      %v1838 = vadd.f32 %v1834, 0.0
      %v1839 = vld [vmem:[#allocation2 + $0x4] sm:$0xff]
      %v1840 = vld [vmem:[#allocation2 + $0xc] sm:$0xff]
      %v1841 = vld [vmem:[#allocation2 + $0x14] sm:$0xf]
      %1842 = vset.pattern.permute.xlu0 30
      %1843 = vperm.xlu0 %1842, %v670
      %v1844 = vpop.permute.xlu0 %1843
      %v1849 = vcombine.high %v1839, %v1839
      %v1850 = vcombine.high %v1840, %v1840
      %1851 = vrot.lane.b32.xlu0 %v1839, 18
      %v1852 = vpop.permute.xlu0 %1851
      %1853 = vrot.lane.b32.xlu0 %v1849, 18
      %v1854 = vpop.permute.xlu0 %1853
      %1855 = vrot.lane.b32.xlu0 %v1840, 18
      %v1856 = vpop.permute.xlu0 %1855
      %1857 = vrot.lane.b32.xlu0 %v1850, 18
      %v1858 = vpop.permute.xlu0 %1857
      %1859 = vrot.lane.b32.xlu0 %v1841, 18
      %v1860 = vpop.permute.xlu0 %1859
      %v1861 = vsel %vm1822, %v1852, %v1854
      %v1862 = vsel %vm1822, %v1854, %v1856
      %v1863 = vsel %vm1822, %v1856, %v1858
      %v1864 = vsel %vm1822, %v1858, %v1860
      %v1869 = vmul.f32 %v1844, %v1861
      %v1870 = vmul.f32 %v1844, %v1862
      %v1871 = vmul.f32 %v1844, %v1863
      %v1872 = vmul.f32 %v1844, %v1864
      %v1873 = vadd.f32 %v1835, %v1869
      %v1874 = vadd.f32 %v1836, %v1870
      %v1875 = vadd.f32 %v1837, %v1871
      %v1876 = vadd.f32 %v1838, %v1872
      %v1877 = vld [vmem:[#allocation2 + $0x8] sm:$0xff]
      %v1878 = vld [vmem:[#allocation2 + $0x10] sm:$0xff]
      %v1879 = vld [vmem:[#allocation2 + $0x18] sm:$0xf]
      %1880 = vset.pattern.permute.xlu0 55
      %1881 = vperm.xlu0 %1880, %v670
      %v1882 = vpop.permute.xlu0 %1881
      %v1887 = vcombine.high %v1877, %v1877
      %v1888 = vcombine.high %v1878, %v1878
      %1889 = vrot.lane.b32.xlu0 %v1877, 18
      %v1890 = vpop.permute.xlu0 %1889
      %1891 = vrot.lane.b32.xlu0 %v1887, 18
      %v1892 = vpop.permute.xlu0 %1891
      %1893 = vrot.lane.b32.xlu0 %v1878, 18
      %v1894 = vpop.permute.xlu0 %1893
      %1895 = vrot.lane.b32.xlu0 %v1888, 18
      %v1896 = vpop.permute.xlu0 %1895
      %1897 = vrot.lane.b32.xlu0 %v1879, 18
      %v1898 = vpop.permute.xlu0 %1897
      %v1899 = vsel %vm1822, %v1890, %v1892
      %v1900 = vsel %vm1822, %v1892, %v1894
      %v1901 = vsel %vm1822, %v1894, %v1896
      %v1902 = vsel %vm1822, %v1896, %v1898
      %v1907 = vmul.f32 %v1882, %v1899
      %v1908 = vmul.f32 %v1882, %v1900
      %v1909 = vmul.f32 %v1882, %v1901
      %v1910 = vmul.f32 %v1882, %v1902
      %v1911 = vadd.f32 %v1873, %v1907
      %v1912 = vadd.f32 %v1874, %v1908
      %v1913 = vadd.f32 %v1875, %v1909
      %v1914 = vadd.f32 %v1876, %v1910
      %v1915 = vld [vmem:[#allocation2 + $0xc] sm:$0xff]
      %v1916 = vld [vmem:[#allocation2 + $0x14] sm:$0xff]
      %v1917 = vld [vmem:[#allocation2 + $0x1c] sm:$0xf]
      %1918 = vset.pattern.permute.xlu0 80
      %1919 = vperm.xlu0 %1918, %v670
      %v1920 = vpop.permute.xlu0 %1919
      %v1925 = vcombine.high %v1915, %v1915
      %v1926 = vcombine.high %v1916, %v1916
      %1927 = vrot.lane.b32.xlu0 %v1915, 18
      %v1928 = vpop.permute.xlu0 %1927
      %1929 = vrot.lane.b32.xlu0 %v1925, 18
      %v1930 = vpop.permute.xlu0 %1929
      %1931 = vrot.lane.b32.xlu0 %v1916, 18
      %v1932 = vpop.permute.xlu0 %1931
      %1933 = vrot.lane.b32.xlu0 %v1926, 18
      %v1934 = vpop.permute.xlu0 %1933
      %1935 = vrot.lane.b32.xlu0 %v1917, 18
      %v1936 = vpop.permute.xlu0 %1935
      %v1937 = vsel %vm1822, %v1928, %v1930
      %v1938 = vsel %vm1822, %v1930, %v1932
      %v1939 = vsel %vm1822, %v1932, %v1934
      %v1940 = vsel %vm1822, %v1934, %v1936
      %v1945 = vmul.f32 %v1920, %v1937
      %v1946 = vmul.f32 %v1920, %v1938
      %v1947 = vmul.f32 %v1920, %v1939
      %v1948 = vmul.f32 %v1920, %v1940
      %v1949 = vadd.f32 %v1911, %v1945
      %v1950 = vadd.f32 %v1912, %v1946
      %v1951 = vadd.f32 %v1913, %v1947
      %v1952 = vadd.f32 %v1914, %v1948
      %v1953 = vld [vmem:[#allocation2 + $0x10] sm:$0xff]
      %v1954 = vld [vmem:[#allocation2 + $0x18] sm:$0xff]
      %v1955 = vld [vmem:[#allocation2 + $0x20] sm:$0xf]
      %1956 = vset.pattern.permute.xlu0 105
      %1957 = vperm.xlu0 %1956, %v670
      %v1958 = vpop.permute.xlu0 %1957
      %v1963 = vcombine.high %v1953, %v1953
      %v1964 = vcombine.high %v1954, %v1954
      %1965 = vrot.lane.b32.xlu0 %v1953, 18
      %v1966 = vpop.permute.xlu0 %1965
      %1967 = vrot.lane.b32.xlu0 %v1963, 18
      %v1968 = vpop.permute.xlu0 %1967
      %1969 = vrot.lane.b32.xlu0 %v1954, 18
      %v1970 = vpop.permute.xlu0 %1969
      %1971 = vrot.lane.b32.xlu0 %v1964, 18
      %v1972 = vpop.permute.xlu0 %1971
      %1973 = vrot.lane.b32.xlu0 %v1955, 18
      %v1974 = vpop.permute.xlu0 %1973
      %v1975 = vsel %vm1822, %v1966, %v1968
      %v1976 = vsel %vm1822, %v1968, %v1970
      %v1977 = vsel %vm1822, %v1970, %v1972
      %v1978 = vsel %vm1822, %v1972, %v1974
      %v1983 = vmul.f32 %v1958, %v1975
      %v1984 = vmul.f32 %v1958, %v1976
      %v1985 = vmul.f32 %v1958, %v1977
      %v1986 = vmul.f32 %v1958, %v1978
      %v1987 = vadd.f32 %v1949, %v1983
      %v1988 = vadd.f32 %v1950, %v1984
      %v1989 = vadd.f32 %v1951, %v1985
      %v1990 = vadd.f32 %v1952, %v1986
      %v1991 = vadd.s32 %v668, 4294967295
      %vm1992 = vcmp.ge.s32.totalorder %v1991, 0
      %vm1993 = vcmp.lt.s32.totalorder %v1991, 8
      %vm1994 = vmand %vm1992, %vm1993
      %vm1995 = vmand %vm1994, %vm868
      %vm1996 = vmand %vm1995, %vm870
      %v1997 = vsel %vm1996, 1, 0
      %v1998 = vlaneseq
      %v1999 = vshrl.u32 %v1998, 7
      %v2000 = vsub.s32 0, %v1999
      %v2001 = vrot.slane %v1997, %v2000
      %v2002 = vlaneseq
      %v2003 = vshrl.u32 %v2002, 7
      %v2004 = vsub.s32 1, %v2003
      %v2005 = vrot.slane %v1997, %v2004
      %v2006 = vlaneseq
      %v2007 = vshrl.u32 %v2006, 7
      %v2008 = vsub.s32 2, %v2007
      %v2009 = vrot.slane %v1997, %v2008
      %v2010 = vlaneseq
      %v2011 = vshrl.u32 %v2010, 7
      %v2012 = vsub.s32 3, %v2011
      %v2013 = vrot.slane %v1997, %v2012
      %vm2014 = vcmp.eq.s32.totalorder %v2001, 1
      %vm2015 = vcmp.eq.s32.totalorder %v2005, 1
      %vm2016 = vcmp.eq.s32.totalorder %v2009, 1
      %vm2017 = vcmp.eq.s32.totalorder %v2013, 1
      %v2018 = vsel %vm2014, %v1987, 0.0
      %v2019 = vsel %vm2015, %v1988, 0.0
      %v2020 = vsel %vm2016, %v1989, 0.0
      %v2021 = vsel %vm2017, %v1990, 0.0
      %v2022 = vadd.f32 %v1796, %v2018
      %v2023 = vadd.f32 %v1797, %v2019
      %v2024 = vadd.f32 %v1798, %v2020
      %v2025 = vadd.f32 %v1799, %v2021
      %v2026 = vld [vmem:[#allocation2] sm:$0xff]
      %v2027 = vld [vmem:[#allocation2 + $0x8] sm:$0xff]
      %v2028 = vld [vmem:[#allocation2 + $0x10] sm:$0xf]
      %2029 = vset.pattern.permute.xlu0 6
      %2030 = vperm.xlu0 %2029, %v670
      %v2031 = vpop.permute.xlu0 %2030
      %v2036 = vcombine.high %v2026, %v2026
      %v2037 = vcombine.high %v2027, %v2027
      %2038 = vrot.lane.b32.xlu0 %v2026, 17
      %v2039 = vpop.permute.xlu0 %2038
      %2040 = vrot.lane.b32.xlu0 %v2036, 17
      %v2041 = vpop.permute.xlu0 %2040
      %2042 = vrot.lane.b32.xlu0 %v2027, 17
      %v2043 = vpop.permute.xlu0 %2042
      %2044 = vrot.lane.b32.xlu0 %v2037, 17
      %v2045 = vpop.permute.xlu0 %2044
      %2046 = vrot.lane.b32.xlu0 %v2028, 17
      %v2047 = vpop.permute.xlu0 %2046
      %vm2048 = vcmask 138240
      %v2049 = vsel %vm2048, %v2039, %v2041
      %v2050 = vsel %vm2048, %v2041, %v2043
      %v2051 = vsel %vm2048, %v2043, %v2045
      %v2052 = vsel %vm2048, %v2045, %v2047
      %v2057 = vmul.f32 %v2031, %v2049
      %v2058 = vmul.f32 %v2031, %v2050
      %v2059 = vmul.f32 %v2031, %v2051
      %v2060 = vmul.f32 %v2031, %v2052
      %v2061 = vadd.f32 %v2057, 0.0
      %v2062 = vadd.f32 %v2058, 0.0
      %v2063 = vadd.f32 %v2059, 0.0
      %v2064 = vadd.f32 %v2060, 0.0
      %v2065 = vld [vmem:[#allocation2 + $0x4] sm:$0xff]
      %v2066 = vld [vmem:[#allocation2 + $0xc] sm:$0xff]
      %v2067 = vld [vmem:[#allocation2 + $0x14] sm:$0xf]
      %2068 = vset.pattern.permute.xlu0 31
      %2069 = vperm.xlu0 %2068, %v670
      %v2070 = vpop.permute.xlu0 %2069
      %v2075 = vcombine.high %v2065, %v2065
      %v2076 = vcombine.high %v2066, %v2066
      %2077 = vrot.lane.b32.xlu0 %v2065, 17
      %v2078 = vpop.permute.xlu0 %2077
      %2079 = vrot.lane.b32.xlu0 %v2075, 17
      %v2080 = vpop.permute.xlu0 %2079
      %2081 = vrot.lane.b32.xlu0 %v2066, 17
      %v2082 = vpop.permute.xlu0 %2081
      %2083 = vrot.lane.b32.xlu0 %v2076, 17
      %v2084 = vpop.permute.xlu0 %2083
      %2085 = vrot.lane.b32.xlu0 %v2067, 17
      %v2086 = vpop.permute.xlu0 %2085
      %v2087 = vsel %vm2048, %v2078, %v2080
      %v2088 = vsel %vm2048, %v2080, %v2082
      %v2089 = vsel %vm2048, %v2082, %v2084
      %v2090 = vsel %vm2048, %v2084, %v2086
      %v2095 = vmul.f32 %v2070, %v2087
      %v2096 = vmul.f32 %v2070, %v2088
      %v2097 = vmul.f32 %v2070, %v2089
      %v2098 = vmul.f32 %v2070, %v2090
      %v2099 = vadd.f32 %v2061, %v2095
      %v2100 = vadd.f32 %v2062, %v2096
      %v2101 = vadd.f32 %v2063, %v2097
      %v2102 = vadd.f32 %v2064, %v2098
      %v2103 = vld [vmem:[#allocation2 + $0x8] sm:$0xff]
      %v2104 = vld [vmem:[#allocation2 + $0x10] sm:$0xff]
      %v2105 = vld [vmem:[#allocation2 + $0x18] sm:$0xf]
      %2106 = vset.pattern.permute.xlu0 56
      %2107 = vperm.xlu0 %2106, %v670
      %v2108 = vpop.permute.xlu0 %2107
      %v2113 = vcombine.high %v2103, %v2103
      %v2114 = vcombine.high %v2104, %v2104
      %2115 = vrot.lane.b32.xlu0 %v2103, 17
      %v2116 = vpop.permute.xlu0 %2115
      %2117 = vrot.lane.b32.xlu0 %v2113, 17
      %v2118 = vpop.permute.xlu0 %2117
      %2119 = vrot.lane.b32.xlu0 %v2104, 17
      %v2120 = vpop.permute.xlu0 %2119
      %2121 = vrot.lane.b32.xlu0 %v2114, 17
      %v2122 = vpop.permute.xlu0 %2121
      %2123 = vrot.lane.b32.xlu0 %v2105, 17
      %v2124 = vpop.permute.xlu0 %2123
      %v2125 = vsel %vm2048, %v2116, %v2118
      %v2126 = vsel %vm2048, %v2118, %v2120
      %v2127 = vsel %vm2048, %v2120, %v2122
      %v2128 = vsel %vm2048, %v2122, %v2124
      %v2133 = vmul.f32 %v2108, %v2125
      %v2134 = vmul.f32 %v2108, %v2126
      %v2135 = vmul.f32 %v2108, %v2127
      %v2136 = vmul.f32 %v2108, %v2128
      %v2137 = vadd.f32 %v2099, %v2133
      %v2138 = vadd.f32 %v2100, %v2134
      %v2139 = vadd.f32 %v2101, %v2135
      %v2140 = vadd.f32 %v2102, %v2136
      %v2141 = vld [vmem:[#allocation2 + $0xc] sm:$0xff]
      %v2142 = vld [vmem:[#allocation2 + $0x14] sm:$0xff]
      %v2143 = vld [vmem:[#allocation2 + $0x1c] sm:$0xf]
      %2144 = vset.pattern.permute.xlu0 81
      %2145 = vperm.xlu0 %2144, %v670
      %v2146 = vpop.permute.xlu0 %2145
      %v2151 = vcombine.high %v2141, %v2141
      %v2152 = vcombine.high %v2142, %v2142
      %2153 = vrot.lane.b32.xlu0 %v2141, 17
      %v2154 = vpop.permute.xlu0 %2153
      %2155 = vrot.lane.b32.xlu0 %v2151, 17
      %v2156 = vpop.permute.xlu0 %2155
      %2157 = vrot.lane.b32.xlu0 %v2142, 17
      %v2158 = vpop.permute.xlu0 %2157
      %2159 = vrot.lane.b32.xlu0 %v2152, 17
      %v2160 = vpop.permute.xlu0 %2159
      %2161 = vrot.lane.b32.xlu0 %v2143, 17
      %v2162 = vpop.permute.xlu0 %2161
      %v2163 = vsel %vm2048, %v2154, %v2156
      %v2164 = vsel %vm2048, %v2156, %v2158
      %v2165 = vsel %vm2048, %v2158, %v2160
      %v2166 = vsel %vm2048, %v2160, %v2162
      %v2171 = vmul.f32 %v2146, %v2163
      %v2172 = vmul.f32 %v2146, %v2164
      %v2173 = vmul.f32 %v2146, %v2165
      %v2174 = vmul.f32 %v2146, %v2166
      %v2175 = vadd.f32 %v2137, %v2171
      %v2176 = vadd.f32 %v2138, %v2172
      %v2177 = vadd.f32 %v2139, %v2173
      %v2178 = vadd.f32 %v2140, %v2174
      %v2179 = vld [vmem:[#allocation2 + $0x10] sm:$0xff]
      %v2180 = vld [vmem:[#allocation2 + $0x18] sm:$0xff]
      %v2181 = vld [vmem:[#allocation2 + $0x20] sm:$0xf]
      %2182 = vset.pattern.permute.xlu0 106
      %2183 = vperm.xlu0 %2182, %v670
      %v2184 = vpop.permute.xlu0 %2183
      %v2189 = vcombine.high %v2179, %v2179
      %v2190 = vcombine.high %v2180, %v2180
      %2191 = vrot.lane.b32.xlu0 %v2179, 17
      %v2192 = vpop.permute.xlu0 %2191
      %2193 = vrot.lane.b32.xlu0 %v2189, 17
      %v2194 = vpop.permute.xlu0 %2193
      %2195 = vrot.lane.b32.xlu0 %v2180, 17
      %v2196 = vpop.permute.xlu0 %2195
      %2197 = vrot.lane.b32.xlu0 %v2190, 17
      %v2198 = vpop.permute.xlu0 %2197
      %2199 = vrot.lane.b32.xlu0 %v2181, 17
      %v2200 = vpop.permute.xlu0 %2199
      %v2201 = vsel %vm2048, %v2192, %v2194
      %v2202 = vsel %vm2048, %v2194, %v2196
      %v2203 = vsel %vm2048, %v2196, %v2198
      %v2204 = vsel %vm2048, %v2198, %v2200
      %v2209 = vmul.f32 %v2184, %v2201
      %v2210 = vmul.f32 %v2184, %v2202
      %v2211 = vmul.f32 %v2184, %v2203
      %v2212 = vmul.f32 %v2184, %v2204
      %v2213 = vadd.f32 %v2175, %v2209
      %v2214 = vadd.f32 %v2176, %v2210
      %v2215 = vadd.f32 %v2177, %v2211
      %v2216 = vadd.f32 %v2178, %v2212
      %vm2217 = vmand %vm1994, %vm1093
      %vm2218 = vmand %vm2217, %vm1095
      %v2219 = vsel %vm2218, 1, 0
      %v2220 = vlaneseq
      %v2221 = vshrl.u32 %v2220, 7
      %v2222 = vsub.s32 0, %v2221
      %v2223 = vrot.slane %v2219, %v2222
      %v2224 = vlaneseq
      %v2225 = vshrl.u32 %v2224, 7
      %v2226 = vsub.s32 1, %v2225
      %v2227 = vrot.slane %v2219, %v2226
      %v2228 = vlaneseq
      %v2229 = vshrl.u32 %v2228, 7
      %v2230 = vsub.s32 2, %v2229
      %v2231 = vrot.slane %v2219, %v2230
      %v2232 = vlaneseq
      %v2233 = vshrl.u32 %v2232, 7
      %v2234 = vsub.s32 3, %v2233
      %v2235 = vrot.slane %v2219, %v2234
      %vm2236 = vcmp.eq.s32.totalorder %v2223, 1
      %vm2237 = vcmp.eq.s32.totalorder %v2227, 1
      %vm2238 = vcmp.eq.s32.totalorder %v2231, 1
      %vm2239 = vcmp.eq.s32.totalorder %v2235, 1
      %v2240 = vsel %vm2236, %v2213, 0.0
      %v2241 = vsel %vm2237, %v2214, 0.0
      %v2242 = vsel %vm2238, %v2215, 0.0
      %v2243 = vsel %vm2239, %v2216, 0.0
      %v2244 = vadd.f32 %v2022, %v2240
      %v2245 = vadd.f32 %v2023, %v2241
      %v2246 = vadd.f32 %v2024, %v2242
      %v2247 = vadd.f32 %v2025, %v2243
      %v2248 = vld [vmem:[#allocation2] sm:$0xff]
      %v2249 = vld [vmem:[#allocation2 + $0x8] sm:$0xff]
      %v2250 = vld [vmem:[#allocation2 + $0x10] sm:$0xf]
      %2251 = vset.pattern.permute.xlu0 7
      %2252 = vperm.xlu0 %2251, %v670
      %v2253 = vpop.permute.xlu0 %2252
      %v2258 = vcombine.high %v2248, %v2248
      %v2259 = vcombine.high %v2249, %v2249
      %2260 = vrot.lane.b32.xlu0 %v2248, 16
      %v2261 = vpop.permute.xlu0 %2260
      %2262 = vrot.lane.b32.xlu0 %v2258, 16
      %v2263 = vpop.permute.xlu0 %2262
      %2264 = vrot.lane.b32.xlu0 %v2249, 16
      %v2265 = vpop.permute.xlu0 %2264
      %2266 = vrot.lane.b32.xlu0 %v2259, 16
      %v2267 = vpop.permute.xlu0 %2266
      %2268 = vrot.lane.b32.xlu0 %v2250, 16
      %v2269 = vpop.permute.xlu0 %2268
      %vm2270 = vcmask 130048
      %v2271 = vsel %vm2270, %v2261, %v2263
      %v2272 = vsel %vm2270, %v2263, %v2265
      %v2273 = vsel %vm2270, %v2265, %v2267
      %v2274 = vsel %vm2270, %v2267, %v2269
      %v2279 = vmul.f32 %v2253, %v2271
      %v2280 = vmul.f32 %v2253, %v2272
      %v2281 = vmul.f32 %v2253, %v2273
      %v2282 = vmul.f32 %v2253, %v2274
      %v2283 = vadd.f32 %v2279, 0.0
      %v2284 = vadd.f32 %v2280, 0.0
      %v2285 = vadd.f32 %v2281, 0.0
      %v2286 = vadd.f32 %v2282, 0.0
      %v2287 = vld [vmem:[#allocation2 + $0x4] sm:$0xff]
      %v2288 = vld [vmem:[#allocation2 + $0xc] sm:$0xff]
      %v2289 = vld [vmem:[#allocation2 + $0x14] sm:$0xf]
      %2290 = vset.pattern.permute.xlu0 32
      %2291 = vperm.xlu0 %2290, %v670
      %v2292 = vpop.permute.xlu0 %2291
      %v2297 = vcombine.high %v2287, %v2287
      %v2298 = vcombine.high %v2288, %v2288
      %2299 = vrot.lane.b32.xlu0 %v2287, 16
      %v2300 = vpop.permute.xlu0 %2299
      %2301 = vrot.lane.b32.xlu0 %v2297, 16
      %v2302 = vpop.permute.xlu0 %2301
      %2303 = vrot.lane.b32.xlu0 %v2288, 16
      %v2304 = vpop.permute.xlu0 %2303
      %2305 = vrot.lane.b32.xlu0 %v2298, 16
      %v2306 = vpop.permute.xlu0 %2305
      %2307 = vrot.lane.b32.xlu0 %v2289, 16
      %v2308 = vpop.permute.xlu0 %2307
      %v2309 = vsel %vm2270, %v2300, %v2302
      %v2310 = vsel %vm2270, %v2302, %v2304
      %v2311 = vsel %vm2270, %v2304, %v2306
      %v2312 = vsel %vm2270, %v2306, %v2308
      %v2317 = vmul.f32 %v2292, %v2309
      %v2318 = vmul.f32 %v2292, %v2310
      %v2319 = vmul.f32 %v2292, %v2311
      %v2320 = vmul.f32 %v2292, %v2312
      %v2321 = vadd.f32 %v2283, %v2317
      %v2322 = vadd.f32 %v2284, %v2318
      %v2323 = vadd.f32 %v2285, %v2319
      %v2324 = vadd.f32 %v2286, %v2320
      %v2325 = vld [vmem:[#allocation2 + $0x8] sm:$0xff]
      %v2326 = vld [vmem:[#allocation2 + $0x10] sm:$0xff]
      %v2327 = vld [vmem:[#allocation2 + $0x18] sm:$0xf]
      %2328 = vset.pattern.permute.xlu0 57
      %2329 = vperm.xlu0 %2328, %v670
      %v2330 = vpop.permute.xlu0 %2329
      %v2335 = vcombine.high %v2325, %v2325
      %v2336 = vcombine.high %v2326, %v2326
      %2337 = vrot.lane.b32.xlu0 %v2325, 16
      %v2338 = vpop.permute.xlu0 %2337
      %2339 = vrot.lane.b32.xlu0 %v2335, 16
      %v2340 = vpop.permute.xlu0 %2339
      %2341 = vrot.lane.b32.xlu0 %v2326, 16
      %v2342 = vpop.permute.xlu0 %2341
      %2343 = vrot.lane.b32.xlu0 %v2336, 16
      %v2344 = vpop.permute.xlu0 %2343
      %2345 = vrot.lane.b32.xlu0 %v2327, 16
      %v2346 = vpop.permute.xlu0 %2345
      %v2347 = vsel %vm2270, %v2338, %v2340
      %v2348 = vsel %vm2270, %v2340, %v2342
      %v2349 = vsel %vm2270, %v2342, %v2344
      %v2350 = vsel %vm2270, %v2344, %v2346
      %v2355 = vmul.f32 %v2330, %v2347
      %v2356 = vmul.f32 %v2330, %v2348
      %v2357 = vmul.f32 %v2330, %v2349
      %v2358 = vmul.f32 %v2330, %v2350
      %v2359 = vadd.f32 %v2321, %v2355
      %v2360 = vadd.f32 %v2322, %v2356
      %v2361 = vadd.f32 %v2323, %v2357
      %v2362 = vadd.f32 %v2324, %v2358
      %v2363 = vld [vmem:[#allocation2 + $0xc] sm:$0xff]
      %v2364 = vld [vmem:[#allocation2 + $0x14] sm:$0xff]
      %v2365 = vld [vmem:[#allocation2 + $0x1c] sm:$0xf]
      %2366 = vset.pattern.permute.xlu0 82
      %2367 = vperm.xlu0 %2366, %v670
      %v2368 = vpop.permute.xlu0 %2367
      %v2373 = vcombine.high %v2363, %v2363
      %v2374 = vcombine.high %v2364, %v2364
      %2375 = vrot.lane.b32.xlu0 %v2363, 16
      %v2376 = vpop.permute.xlu0 %2375
      %2377 = vrot.lane.b32.xlu0 %v2373, 16
      %v2378 = vpop.permute.xlu0 %2377
      %2379 = vrot.lane.b32.xlu0 %v2364, 16
      %v2380 = vpop.permute.xlu0 %2379
      %2381 = vrot.lane.b32.xlu0 %v2374, 16
      %v2382 = vpop.permute.xlu0 %2381
      %2383 = vrot.lane.b32.xlu0 %v2365, 16
      %v2384 = vpop.permute.xlu0 %2383
      %v2385 = vsel %vm2270, %v2376, %v2378
      %v2386 = vsel %vm2270, %v2378, %v2380
      %v2387 = vsel %vm2270, %v2380, %v2382
      %v2388 = vsel %vm2270, %v2382, %v2384
      %v2393 = vmul.f32 %v2368, %v2385
      %v2394 = vmul.f32 %v2368, %v2386
      %v2395 = vmul.f32 %v2368, %v2387
      %v2396 = vmul.f32 %v2368, %v2388
      %v2397 = vadd.f32 %v2359, %v2393
      %v2398 = vadd.f32 %v2360, %v2394
      %v2399 = vadd.f32 %v2361, %v2395
      %v2400 = vadd.f32 %v2362, %v2396
      %v2401 = vld [vmem:[#allocation2 + $0x10] sm:$0xff]
      %v2402 = vld [vmem:[#allocation2 + $0x18] sm:$0xff]
      %v2403 = vld [vmem:[#allocation2 + $0x20] sm:$0xf]
      %2404 = vset.pattern.permute.xlu0 107
      %2405 = vperm.xlu0 %2404, %v670
      %v2406 = vpop.permute.xlu0 %2405
      %v2411 = vcombine.high %v2401, %v2401
      %v2412 = vcombine.high %v2402, %v2402
      %2413 = vrot.lane.b32.xlu0 %v2401, 16
      %v2414 = vpop.permute.xlu0 %2413
      %2415 = vrot.lane.b32.xlu0 %v2411, 16
      %v2416 = vpop.permute.xlu0 %2415
      %2417 = vrot.lane.b32.xlu0 %v2402, 16
      %v2418 = vpop.permute.xlu0 %2417
      %2419 = vrot.lane.b32.xlu0 %v2412, 16
      %v2420 = vpop.permute.xlu0 %2419
      %2421 = vrot.lane.b32.xlu0 %v2403, 16
      %v2422 = vpop.permute.xlu0 %2421
      %v2423 = vsel %vm2270, %v2414, %v2416
      %v2424 = vsel %vm2270, %v2416, %v2418
      %v2425 = vsel %vm2270, %v2418, %v2420
      %v2426 = vsel %vm2270, %v2420, %v2422
      %v2431 = vmul.f32 %v2406, %v2423
      %v2432 = vmul.f32 %v2406, %v2424
      %v2433 = vmul.f32 %v2406, %v2425
      %v2434 = vmul.f32 %v2406, %v2426
      %v2435 = vadd.f32 %v2397, %v2431
      %v2436 = vadd.f32 %v2398, %v2432
      %v2437 = vadd.f32 %v2399, %v2433
      %v2438 = vadd.f32 %v2400, %v2434
      %vm2439 = vmand %vm1994, %vm1317
      %vm2440 = vmand %vm2439, %vm1319
      %v2441 = vsel %vm2440, 1, 0
      %v2442 = vlaneseq
      %v2443 = vshrl.u32 %v2442, 7
      %v2444 = vsub.s32 0, %v2443
      %v2445 = vrot.slane %v2441, %v2444
      %v2446 = vlaneseq
      %v2447 = vshrl.u32 %v2446, 7
      %v2448 = vsub.s32 1, %v2447
      %v2449 = vrot.slane %v2441, %v2448
      %v2450 = vlaneseq
      %v2451 = vshrl.u32 %v2450, 7
      %v2452 = vsub.s32 2, %v2451
      %v2453 = vrot.slane %v2441, %v2452
      %v2454 = vlaneseq
      %v2455 = vshrl.u32 %v2454, 7
      %v2456 = vsub.s32 3, %v2455
      %v2457 = vrot.slane %v2441, %v2456
      %vm2458 = vcmp.eq.s32.totalorder %v2445, 1
      %vm2459 = vcmp.eq.s32.totalorder %v2449, 1
      %vm2460 = vcmp.eq.s32.totalorder %v2453, 1
      %vm2461 = vcmp.eq.s32.totalorder %v2457, 1
      %v2462 = vsel %vm2458, %v2435, 0.0
      %v2463 = vsel %vm2459, %v2436, 0.0
      %v2464 = vsel %vm2460, %v2437, 0.0
      %v2465 = vsel %vm2461, %v2438, 0.0
      %v2466 = vadd.f32 %v2244, %v2462
      %v2467 = vadd.f32 %v2245, %v2463
      %v2468 = vadd.f32 %v2246, %v2464
      %v2469 = vadd.f32 %v2247, %v2465
      %v2470 = vld [vmem:[#allocation2] sm:$0xff]
      %v2471 = vld [vmem:[#allocation2 + $0x8] sm:$0xff]
      %v2472 = vld [vmem:[#allocation2 + $0x10] sm:$0xf]
      %2473 = vset.pattern.permute.xlu0 8
      %2474 = vperm.xlu0 %2473, %v670
      %v2475 = vpop.permute.xlu0 %2474
      %v2480 = vcombine.high %v2470, %v2470
      %v2481 = vcombine.high %v2471, %v2471
      %2482 = vrot.lane.b32.xlu0 %v2470, 15
      %v2483 = vpop.permute.xlu0 %2482
      %2484 = vrot.lane.b32.xlu0 %v2480, 15
      %v2485 = vpop.permute.xlu0 %2484
      %2486 = vrot.lane.b32.xlu0 %v2471, 15
      %v2487 = vpop.permute.xlu0 %2486
      %2488 = vrot.lane.b32.xlu0 %v2481, 15
      %v2489 = vpop.permute.xlu0 %2488
      %2490 = vrot.lane.b32.xlu0 %v2472, 15
      %v2491 = vpop.permute.xlu0 %2490
      %vm2492 = vcmask 121856
      %v2493 = vsel %vm2492, %v2483, %v2485
      %v2494 = vsel %vm2492, %v2485, %v2487
      %v2495 = vsel %vm2492, %v2487, %v2489
      %v2496 = vsel %vm2492, %v2489, %v2491
      %v2501 = vmul.f32 %v2475, %v2493
      %v2502 = vmul.f32 %v2475, %v2494
      %v2503 = vmul.f32 %v2475, %v2495
      %v2504 = vmul.f32 %v2475, %v2496
      %v2505 = vadd.f32 %v2501, 0.0
      %v2506 = vadd.f32 %v2502, 0.0
      %v2507 = vadd.f32 %v2503, 0.0
      %v2508 = vadd.f32 %v2504, 0.0
      %v2509 = vld [vmem:[#allocation2 + $0x4] sm:$0xff]
      %v2510 = vld [vmem:[#allocation2 + $0xc] sm:$0xff]
      %v2511 = vld [vmem:[#allocation2 + $0x14] sm:$0xf]
      %2512 = vset.pattern.permute.xlu0 33
      %2513 = vperm.xlu0 %2512, %v670
      %v2514 = vpop.permute.xlu0 %2513
      %v2519 = vcombine.high %v2509, %v2509
      %v2520 = vcombine.high %v2510, %v2510
      %2521 = vrot.lane.b32.xlu0 %v2509, 15
      %v2522 = vpop.permute.xlu0 %2521
      %2523 = vrot.lane.b32.xlu0 %v2519, 15
      %v2524 = vpop.permute.xlu0 %2523
      %2525 = vrot.lane.b32.xlu0 %v2510, 15
      %v2526 = vpop.permute.xlu0 %2525
      %2527 = vrot.lane.b32.xlu0 %v2520, 15
      %v2528 = vpop.permute.xlu0 %2527
      %2529 = vrot.lane.b32.xlu0 %v2511, 15
      %v2530 = vpop.permute.xlu0 %2529
      %v2531 = vsel %vm2492, %v2522, %v2524
      %v2532 = vsel %vm2492, %v2524, %v2526
      %v2533 = vsel %vm2492, %v2526, %v2528
      %v2534 = vsel %vm2492, %v2528, %v2530
      %v2539 = vmul.f32 %v2514, %v2531
      %v2540 = vmul.f32 %v2514, %v2532
      %v2541 = vmul.f32 %v2514, %v2533
      %v2542 = vmul.f32 %v2514, %v2534
      %v2543 = vadd.f32 %v2505, %v2539
      %v2544 = vadd.f32 %v2506, %v2540
      %v2545 = vadd.f32 %v2507, %v2541
      %v2546 = vadd.f32 %v2508, %v2542
      %v2547 = vld [vmem:[#allocation2 + $0x8] sm:$0xff]
      %v2548 = vld [vmem:[#allocation2 + $0x10] sm:$0xff]
      %v2549 = vld [vmem:[#allocation2 + $0x18] sm:$0xf]
      %2550 = vset.pattern.permute.xlu0 58
      %2551 = vperm.xlu0 %2550, %v670
      %v2552 = vpop.permute.xlu0 %2551
      %v2557 = vcombine.high %v2547, %v2547
      %v2558 = vcombine.high %v2548, %v2548
      %2559 = vrot.lane.b32.xlu0 %v2547, 15
      %v2560 = vpop.permute.xlu0 %2559
      %2561 = vrot.lane.b32.xlu0 %v2557, 15
      %v2562 = vpop.permute.xlu0 %2561
      %2563 = vrot.lane.b32.xlu0 %v2548, 15
      %v2564 = vpop.permute.xlu0 %2563
      %2565 = vrot.lane.b32.xlu0 %v2558, 15
      %v2566 = vpop.permute.xlu0 %2565
      %2567 = vrot.lane.b32.xlu0 %v2549, 15
      %v2568 = vpop.permute.xlu0 %2567
      %v2569 = vsel %vm2492, %v2560, %v2562
      %v2570 = vsel %vm2492, %v2562, %v2564
      %v2571 = vsel %vm2492, %v2564, %v2566
      %v2572 = vsel %vm2492, %v2566, %v2568
      %v2577 = vmul.f32 %v2552, %v2569
      %v2578 = vmul.f32 %v2552, %v2570
      %v2579 = vmul.f32 %v2552, %v2571
      %v2580 = vmul.f32 %v2552, %v2572
      %v2581 = vadd.f32 %v2543, %v2577
      %v2582 = vadd.f32 %v2544, %v2578
      %v2583 = vadd.f32 %v2545, %v2579
      %v2584 = vadd.f32 %v2546, %v2580
      %v2585 = vld [vmem:[#allocation2 + $0xc] sm:$0xff]
      %v2586 = vld [vmem:[#allocation2 + $0x14] sm:$0xff]
      %v2587 = vld [vmem:[#allocation2 + $0x1c] sm:$0xf]
      %2588 = vset.pattern.permute.xlu0 83
      %2589 = vperm.xlu0 %2588, %v670
      %v2590 = vpop.permute.xlu0 %2589
      %v2595 = vcombine.high %v2585, %v2585
      %v2596 = vcombine.high %v2586, %v2586
      %2597 = vrot.lane.b32.xlu0 %v2585, 15
      %v2598 = vpop.permute.xlu0 %2597
      %2599 = vrot.lane.b32.xlu0 %v2595, 15
      %v2600 = vpop.permute.xlu0 %2599
      %2601 = vrot.lane.b32.xlu0 %v2586, 15
      %v2602 = vpop.permute.xlu0 %2601
      %2603 = vrot.lane.b32.xlu0 %v2596, 15
      %v2604 = vpop.permute.xlu0 %2603
      %2605 = vrot.lane.b32.xlu0 %v2587, 15
      %v2606 = vpop.permute.xlu0 %2605
      %v2607 = vsel %vm2492, %v2598, %v2600
      %v2608 = vsel %vm2492, %v2600, %v2602
      %v2609 = vsel %vm2492, %v2602, %v2604
      %v2610 = vsel %vm2492, %v2604, %v2606
      %v2615 = vmul.f32 %v2590, %v2607
      %v2616 = vmul.f32 %v2590, %v2608
      %v2617 = vmul.f32 %v2590, %v2609
      %v2618 = vmul.f32 %v2590, %v2610
      %v2619 = vadd.f32 %v2581, %v2615
      %v2620 = vadd.f32 %v2582, %v2616
      %v2621 = vadd.f32 %v2583, %v2617
      %v2622 = vadd.f32 %v2584, %v2618
      %v2623 = vld [vmem:[#allocation2 + $0x10] sm:$0xff]
      %v2624 = vld [vmem:[#allocation2 + $0x18] sm:$0xff]
      %v2625 = vld [vmem:[#allocation2 + $0x20] sm:$0xf]
      %2626 = vset.pattern.permute.xlu0 108
      %2627 = vperm.xlu0 %2626, %v670
      %v2628 = vpop.permute.xlu0 %2627
      %v2633 = vcombine.high %v2623, %v2623
      %v2634 = vcombine.high %v2624, %v2624
      %2635 = vrot.lane.b32.xlu0 %v2623, 15
      %v2636 = vpop.permute.xlu0 %2635
      %2637 = vrot.lane.b32.xlu0 %v2633, 15
      %v2638 = vpop.permute.xlu0 %2637
      %2639 = vrot.lane.b32.xlu0 %v2624, 15
      %v2640 = vpop.permute.xlu0 %2639
      %2641 = vrot.lane.b32.xlu0 %v2634, 15
      %v2642 = vpop.permute.xlu0 %2641
      %2643 = vrot.lane.b32.xlu0 %v2625, 15
      %v2644 = vpop.permute.xlu0 %2643
      %v2645 = vsel %vm2492, %v2636, %v2638
      %v2646 = vsel %vm2492, %v2638, %v2640
      %v2647 = vsel %vm2492, %v2640, %v2642
      %v2648 = vsel %vm2492, %v2642, %v2644
      %v2653 = vmul.f32 %v2628, %v2645
      %v2654 = vmul.f32 %v2628, %v2646
      %v2655 = vmul.f32 %v2628, %v2647
      %v2656 = vmul.f32 %v2628, %v2648
      %v2657 = vadd.f32 %v2619, %v2653
      %v2658 = vadd.f32 %v2620, %v2654
      %v2659 = vadd.f32 %v2621, %v2655
      %v2660 = vadd.f32 %v2622, %v2656
      %vm2661 = vmand %vm1994, %vm1542
      %vm2662 = vmand %vm2661, %vm1544
      %v2663 = vsel %vm2662, 1, 0
      %v2664 = vlaneseq
      %v2665 = vshrl.u32 %v2664, 7
      %v2666 = vsub.s32 0, %v2665
      %v2667 = vrot.slane %v2663, %v2666
      %v2668 = vlaneseq
      %v2669 = vshrl.u32 %v2668, 7
      %v2670 = vsub.s32 1, %v2669
      %v2671 = vrot.slane %v2663, %v2670
      %v2672 = vlaneseq
      %v2673 = vshrl.u32 %v2672, 7
      %v2674 = vsub.s32 2, %v2673
      %v2675 = vrot.slane %v2663, %v2674
      %v2676 = vlaneseq
      %v2677 = vshrl.u32 %v2676, 7
      %v2678 = vsub.s32 3, %v2677
      %v2679 = vrot.slane %v2663, %v2678
      %vm2680 = vcmp.eq.s32.totalorder %v2667, 1
      %vm2681 = vcmp.eq.s32.totalorder %v2671, 1
      %vm2682 = vcmp.eq.s32.totalorder %v2675, 1
      %vm2683 = vcmp.eq.s32.totalorder %v2679, 1
      %v2684 = vsel %vm2680, %v2657, 0.0
      %v2685 = vsel %vm2681, %v2658, 0.0
      %v2686 = vsel %vm2682, %v2659, 0.0
      %v2687 = vsel %vm2683, %v2660, 0.0
      %v2688 = vadd.f32 %v2466, %v2684
      %v2689 = vadd.f32 %v2467, %v2685
      %v2690 = vadd.f32 %v2468, %v2686
      %v2691 = vadd.f32 %v2469, %v2687
      %v2692 = vld [vmem:[#allocation2] sm:$0xff]
      %v2693 = vld [vmem:[#allocation2 + $0x8] sm:$0xff]
      %v2694 = vld [vmem:[#allocation2 + $0x10] sm:$0xf]
      %2695 = vset.pattern.permute.xlu0 9
      %2696 = vperm.xlu0 %2695, %v670
      %v2697 = vpop.permute.xlu0 %2696
      %v2702 = vcombine.high %v2692, %v2692
      %v2703 = vcombine.high %v2693, %v2693
      %2704 = vrot.lane.b32.xlu0 %v2692, 14
      %v2705 = vpop.permute.xlu0 %2704
      %2706 = vrot.lane.b32.xlu0 %v2702, 14
      %v2707 = vpop.permute.xlu0 %2706
      %2708 = vrot.lane.b32.xlu0 %v2693, 14
      %v2709 = vpop.permute.xlu0 %2708
      %2710 = vrot.lane.b32.xlu0 %v2703, 14
      %v2711 = vpop.permute.xlu0 %2710
      %2712 = vrot.lane.b32.xlu0 %v2694, 14
      %v2713 = vpop.permute.xlu0 %2712
      %vm2714 = vcmask 113664
      %v2715 = vsel %vm2714, %v2705, %v2707
      %v2716 = vsel %vm2714, %v2707, %v2709
      %v2717 = vsel %vm2714, %v2709, %v2711
      %v2718 = vsel %vm2714, %v2711, %v2713
      %v2723 = vmul.f32 %v2697, %v2715
      %v2724 = vmul.f32 %v2697, %v2716
      %v2725 = vmul.f32 %v2697, %v2717
      %v2726 = vmul.f32 %v2697, %v2718
      %v2727 = vadd.f32 %v2723, 0.0
      %v2728 = vadd.f32 %v2724, 0.0
      %v2729 = vadd.f32 %v2725, 0.0
      %v2730 = vadd.f32 %v2726, 0.0
      %v2731 = vld [vmem:[#allocation2 + $0x4] sm:$0xff]
      %v2732 = vld [vmem:[#allocation2 + $0xc] sm:$0xff]
      %v2733 = vld [vmem:[#allocation2 + $0x14] sm:$0xf]
      %2734 = vset.pattern.permute.xlu0 34
      %2735 = vperm.xlu0 %2734, %v670
      %v2736 = vpop.permute.xlu0 %2735
      %v2741 = vcombine.high %v2731, %v2731
      %v2742 = vcombine.high %v2732, %v2732
      %2743 = vrot.lane.b32.xlu0 %v2731, 14
      %v2744 = vpop.permute.xlu0 %2743
      %2745 = vrot.lane.b32.xlu0 %v2741, 14
      %v2746 = vpop.permute.xlu0 %2745
      %2747 = vrot.lane.b32.xlu0 %v2732, 14
      %v2748 = vpop.permute.xlu0 %2747
      %2749 = vrot.lane.b32.xlu0 %v2742, 14
      %v2750 = vpop.permute.xlu0 %2749
      %2751 = vrot.lane.b32.xlu0 %v2733, 14
      %v2752 = vpop.permute.xlu0 %2751
      %v2753 = vsel %vm2714, %v2744, %v2746
      %v2754 = vsel %vm2714, %v2746, %v2748
      %v2755 = vsel %vm2714, %v2748, %v2750
      %v2756 = vsel %vm2714, %v2750, %v2752
      %v2761 = vmul.f32 %v2736, %v2753
      %v2762 = vmul.f32 %v2736, %v2754
      %v2763 = vmul.f32 %v2736, %v2755
      %v2764 = vmul.f32 %v2736, %v2756
      %v2765 = vadd.f32 %v2727, %v2761
      %v2766 = vadd.f32 %v2728, %v2762
      %v2767 = vadd.f32 %v2729, %v2763
      %v2768 = vadd.f32 %v2730, %v2764
      %v2769 = vld [vmem:[#allocation2 + $0x8] sm:$0xff]
      %v2770 = vld [vmem:[#allocation2 + $0x10] sm:$0xff]
      %v2771 = vld [vmem:[#allocation2 + $0x18] sm:$0xf]
      %2772 = vset.pattern.permute.xlu0 59
      %2773 = vperm.xlu0 %2772, %v670
      %v2774 = vpop.permute.xlu0 %2773
      %v2779 = vcombine.high %v2769, %v2769
      %v2780 = vcombine.high %v2770, %v2770
      %2781 = vrot.lane.b32.xlu0 %v2769, 14
      %v2782 = vpop.permute.xlu0 %2781
      %2783 = vrot.lane.b32.xlu0 %v2779, 14
      %v2784 = vpop.permute.xlu0 %2783
      %2785 = vrot.lane.b32.xlu0 %v2770, 14
      %v2786 = vpop.permute.xlu0 %2785
      %2787 = vrot.lane.b32.xlu0 %v2780, 14
      %v2788 = vpop.permute.xlu0 %2787
      %2789 = vrot.lane.b32.xlu0 %v2771, 14
      %v2790 = vpop.permute.xlu0 %2789
      %v2791 = vsel %vm2714, %v2782, %v2784
      %v2792 = vsel %vm2714, %v2784, %v2786
      %v2793 = vsel %vm2714, %v2786, %v2788
      %v2794 = vsel %vm2714, %v2788, %v2790
      %v2799 = vmul.f32 %v2774, %v2791
      %v2800 = vmul.f32 %v2774, %v2792
      %v2801 = vmul.f32 %v2774, %v2793
      %v2802 = vmul.f32 %v2774, %v2794
      %v2803 = vadd.f32 %v2765, %v2799
      %v2804 = vadd.f32 %v2766, %v2800
      %v2805 = vadd.f32 %v2767, %v2801
      %v2806 = vadd.f32 %v2768, %v2802
      %v2807 = vld [vmem:[#allocation2 + $0xc] sm:$0xff]
      %v2808 = vld [vmem:[#allocation2 + $0x14] sm:$0xff]
      %v2809 = vld [vmem:[#allocation2 + $0x1c] sm:$0xf]
      %2810 = vset.pattern.permute.xlu0 84
      %2811 = vperm.xlu0 %2810, %v670
      %v2812 = vpop.permute.xlu0 %2811
      %v2817 = vcombine.high %v2807, %v2807
      %v2818 = vcombine.high %v2808, %v2808
      %2819 = vrot.lane.b32.xlu0 %v2807, 14
      %v2820 = vpop.permute.xlu0 %2819
      %2821 = vrot.lane.b32.xlu0 %v2817, 14
      %v2822 = vpop.permute.xlu0 %2821
      %2823 = vrot.lane.b32.xlu0 %v2808, 14
      %v2824 = vpop.permute.xlu0 %2823
      %2825 = vrot.lane.b32.xlu0 %v2818, 14
      %v2826 = vpop.permute.xlu0 %2825
      %2827 = vrot.lane.b32.xlu0 %v2809, 14
      %v2828 = vpop.permute.xlu0 %2827
      %v2829 = vsel %vm2714, %v2820, %v2822
      %v2830 = vsel %vm2714, %v2822, %v2824
      %v2831 = vsel %vm2714, %v2824, %v2826
      %v2832 = vsel %vm2714, %v2826, %v2828
      %v2837 = vmul.f32 %v2812, %v2829
      %v2838 = vmul.f32 %v2812, %v2830
      %v2839 = vmul.f32 %v2812, %v2831
      %v2840 = vmul.f32 %v2812, %v2832
      %v2841 = vadd.f32 %v2803, %v2837
      %v2842 = vadd.f32 %v2804, %v2838
      %v2843 = vadd.f32 %v2805, %v2839
      %v2844 = vadd.f32 %v2806, %v2840
      %v2845 = vld [vmem:[#allocation2 + $0x10] sm:$0xff]
      %v2846 = vld [vmem:[#allocation2 + $0x18] sm:$0xff]
      %v2847 = vld [vmem:[#allocation2 + $0x20] sm:$0xf]
      %2848 = vset.pattern.permute.xlu0 109
      %2849 = vperm.xlu0 %2848, %v670
      %v2850 = vpop.permute.xlu0 %2849
      %v2855 = vcombine.high %v2845, %v2845
      %v2856 = vcombine.high %v2846, %v2846
      %2857 = vrot.lane.b32.xlu0 %v2845, 14
      %v2858 = vpop.permute.xlu0 %2857
      %2859 = vrot.lane.b32.xlu0 %v2855, 14
      %v2860 = vpop.permute.xlu0 %2859
      %2861 = vrot.lane.b32.xlu0 %v2846, 14
      %v2862 = vpop.permute.xlu0 %2861
      %2863 = vrot.lane.b32.xlu0 %v2856, 14
      %v2864 = vpop.permute.xlu0 %2863
      %2865 = vrot.lane.b32.xlu0 %v2847, 14
      %v2866 = vpop.permute.xlu0 %2865
      %v2867 = vsel %vm2714, %v2858, %v2860
      %v2868 = vsel %vm2714, %v2860, %v2862
      %v2869 = vsel %vm2714, %v2862, %v2864
      %v2870 = vsel %vm2714, %v2864, %v2866
      %v2875 = vmul.f32 %v2850, %v2867
      %v2876 = vmul.f32 %v2850, %v2868
      %v2877 = vmul.f32 %v2850, %v2869
      %v2878 = vmul.f32 %v2850, %v2870
      %v2879 = vadd.f32 %v2841, %v2875
      %v2880 = vadd.f32 %v2842, %v2876
      %v2881 = vadd.f32 %v2843, %v2877
      %v2882 = vadd.f32 %v2844, %v2878
      %vm2883 = vmand %vm1994, %vm1767
      %vm2884 = vmand %vm2883, %vm1769
      %v2885 = vsel %vm2884, 1, 0
      %v2886 = vlaneseq
      %v2887 = vshrl.u32 %v2886, 7
      %v2888 = vsub.s32 0, %v2887
      %v2889 = vrot.slane %v2885, %v2888
      %v2890 = vlaneseq
      %v2891 = vshrl.u32 %v2890, 7
      %v2892 = vsub.s32 1, %v2891
      %v2893 = vrot.slane %v2885, %v2892
      %v2894 = vlaneseq
      %v2895 = vshrl.u32 %v2894, 7
      %v2896 = vsub.s32 2, %v2895
      %v2897 = vrot.slane %v2885, %v2896
      %v2898 = vlaneseq
      %v2899 = vshrl.u32 %v2898, 7
      %v2900 = vsub.s32 3, %v2899
      %v2901 = vrot.slane %v2885, %v2900
      %vm2902 = vcmp.eq.s32.totalorder %v2889, 1
      %vm2903 = vcmp.eq.s32.totalorder %v2893, 1
      %vm2904 = vcmp.eq.s32.totalorder %v2897, 1
      %vm2905 = vcmp.eq.s32.totalorder %v2901, 1
      %v2906 = vsel %vm2902, %v2879, 0.0
      %v2907 = vsel %vm2903, %v2880, 0.0
      %v2908 = vsel %vm2904, %v2881, 0.0
      %v2909 = vsel %vm2905, %v2882, 0.0
      %v2910 = vadd.f32 %v2688, %v2906
      %v2911 = vadd.f32 %v2689, %v2907
      %v2912 = vadd.f32 %v2690, %v2908
      %v2913 = vadd.f32 %v2691, %v2909
      %v2914 = vld [vmem:[#allocation2] sm:$0xff]
      %v2915 = vld [vmem:[#allocation2 + $0x8] sm:$0xff]
      %v2916 = vld [vmem:[#allocation2 + $0x10] sm:$0xf]
      %2917 = vset.pattern.permute.xlu0 10
      %2918 = vperm.xlu0 %2917, %v670
      %v2919 = vpop.permute.xlu0 %2918
      %v2924 = vcombine.high %v2914, %v2914
      %v2925 = vcombine.high %v2915, %v2915
      %2926 = vrot.lane.b32.xlu0 %v2914, 2
      %v2927 = vpop.permute.xlu0 %2926
      %2928 = vrot.lane.b32.xlu0 %v2924, 2
      %v2929 = vpop.permute.xlu0 %2928
      %2930 = vrot.lane.b32.xlu0 %v2915, 2
      %v2931 = vpop.permute.xlu0 %2930
      %2932 = vrot.lane.b32.xlu0 %v2925, 2
      %v2933 = vpop.permute.xlu0 %2932
      %2934 = vrot.lane.b32.xlu0 %v2916, 2
      %v2935 = vpop.permute.xlu0 %2934
      %vm2936 = vcmask 15360
      %v2937 = vsel %vm2936, %v2927, %v2929
      %v2938 = vsel %vm2936, %v2929, %v2931
      %v2939 = vsel %vm2936, %v2931, %v2933
      %v2940 = vsel %vm2936, %v2933, %v2935
      %v2945 = vmul.f32 %v2919, %v2937
      %v2946 = vmul.f32 %v2919, %v2938
      %v2947 = vmul.f32 %v2919, %v2939
      %v2948 = vmul.f32 %v2919, %v2940
      %v2949 = vadd.f32 %v2945, 0.0
      %v2950 = vadd.f32 %v2946, 0.0
      %v2951 = vadd.f32 %v2947, 0.0
      %v2952 = vadd.f32 %v2948, 0.0
      %v2953 = vld [vmem:[#allocation2 + $0x4] sm:$0xff]
      %v2954 = vld [vmem:[#allocation2 + $0xc] sm:$0xff]
      %v2955 = vld [vmem:[#allocation2 + $0x14] sm:$0xf]
      %2956 = vset.pattern.permute.xlu0 35
      %2957 = vperm.xlu0 %2956, %v670
      %v2958 = vpop.permute.xlu0 %2957
      %v2963 = vcombine.high %v2953, %v2953
      %v2964 = vcombine.high %v2954, %v2954
      %2965 = vrot.lane.b32.xlu0 %v2953, 2
      %v2966 = vpop.permute.xlu0 %2965
      %2967 = vrot.lane.b32.xlu0 %v2963, 2
      %v2968 = vpop.permute.xlu0 %2967
      %2969 = vrot.lane.b32.xlu0 %v2954, 2
      %v2970 = vpop.permute.xlu0 %2969
      %2971 = vrot.lane.b32.xlu0 %v2964, 2
      %v2972 = vpop.permute.xlu0 %2971
      %2973 = vrot.lane.b32.xlu0 %v2955, 2
      %v2974 = vpop.permute.xlu0 %2973
      %v2975 = vsel %vm2936, %v2966, %v2968
      %v2976 = vsel %vm2936, %v2968, %v2970
      %v2977 = vsel %vm2936, %v2970, %v2972
      %v2978 = vsel %vm2936, %v2972, %v2974
      %v2983 = vmul.f32 %v2958, %v2975
      %v2984 = vmul.f32 %v2958, %v2976
      %v2985 = vmul.f32 %v2958, %v2977
      %v2986 = vmul.f32 %v2958, %v2978
      %v2987 = vadd.f32 %v2949, %v2983
      %v2988 = vadd.f32 %v2950, %v2984
      %v2989 = vadd.f32 %v2951, %v2985
      %v2990 = vadd.f32 %v2952, %v2986
      %v2991 = vld [vmem:[#allocation2 + $0x8] sm:$0xff]
      %v2992 = vld [vmem:[#allocation2 + $0x10] sm:$0xff]
      %v2993 = vld [vmem:[#allocation2 + $0x18] sm:$0xf]
      %2994 = vset.pattern.permute.xlu0 60
      %2995 = vperm.xlu0 %2994, %v670
      %v2996 = vpop.permute.xlu0 %2995
      %v3001 = vcombine.high %v2991, %v2991
      %v3002 = vcombine.high %v2992, %v2992
      %3003 = vrot.lane.b32.xlu0 %v2991, 2
      %v3004 = vpop.permute.xlu0 %3003
      %3005 = vrot.lane.b32.xlu0 %v3001, 2
      %v3006 = vpop.permute.xlu0 %3005
      %3007 = vrot.lane.b32.xlu0 %v2992, 2
      %v3008 = vpop.permute.xlu0 %3007
      %3009 = vrot.lane.b32.xlu0 %v3002, 2
      %v3010 = vpop.permute.xlu0 %3009
      %3011 = vrot.lane.b32.xlu0 %v2993, 2
      %v3012 = vpop.permute.xlu0 %3011
      %v3013 = vsel %vm2936, %v3004, %v3006
      %v3014 = vsel %vm2936, %v3006, %v3008
      %v3015 = vsel %vm2936, %v3008, %v3010
      %v3016 = vsel %vm2936, %v3010, %v3012
      %v3021 = vmul.f32 %v2996, %v3013
      %v3022 = vmul.f32 %v2996, %v3014
      %v3023 = vmul.f32 %v2996, %v3015
      %v3024 = vmul.f32 %v2996, %v3016
      %v3025 = vadd.f32 %v2987, %v3021
      %v3026 = vadd.f32 %v2988, %v3022
      %v3027 = vadd.f32 %v2989, %v3023
      %v3028 = vadd.f32 %v2990, %v3024
      %v3029 = vld [vmem:[#allocation2 + $0xc] sm:$0xff]
      %v3030 = vld [vmem:[#allocation2 + $0x14] sm:$0xff]
      %v3031 = vld [vmem:[#allocation2 + $0x1c] sm:$0xf]
      %3032 = vset.pattern.permute.xlu0 85
      %3033 = vperm.xlu0 %3032, %v670
      %v3034 = vpop.permute.xlu0 %3033
      %v3039 = vcombine.high %v3029, %v3029
      %v3040 = vcombine.high %v3030, %v3030
      %3041 = vrot.lane.b32.xlu0 %v3029, 2
      %v3042 = vpop.permute.xlu0 %3041
      %3043 = vrot.lane.b32.xlu0 %v3039, 2
      %v3044 = vpop.permute.xlu0 %3043
      %3045 = vrot.lane.b32.xlu0 %v3030, 2
      %v3046 = vpop.permute.xlu0 %3045
      %3047 = vrot.lane.b32.xlu0 %v3040, 2
      %v3048 = vpop.permute.xlu0 %3047
      %3049 = vrot.lane.b32.xlu0 %v3031, 2
      %v3050 = vpop.permute.xlu0 %3049
      %v3051 = vsel %vm2936, %v3042, %v3044
      %v3052 = vsel %vm2936, %v3044, %v3046
      %v3053 = vsel %vm2936, %v3046, %v3048
      %v3054 = vsel %vm2936, %v3048, %v3050
      %v3059 = vmul.f32 %v3034, %v3051
      %v3060 = vmul.f32 %v3034, %v3052
      %v3061 = vmul.f32 %v3034, %v3053
      %v3062 = vmul.f32 %v3034, %v3054
      %v3063 = vadd.f32 %v3025, %v3059
      %v3064 = vadd.f32 %v3026, %v3060
      %v3065 = vadd.f32 %v3027, %v3061
      %v3066 = vadd.f32 %v3028, %v3062
      %v3067 = vld [vmem:[#allocation2 + $0x10] sm:$0xff]
      %v3068 = vld [vmem:[#allocation2 + $0x18] sm:$0xff]
      %v3069 = vld [vmem:[#allocation2 + $0x20] sm:$0xf]
      %3070 = vset.pattern.permute.xlu0 110
      %3071 = vperm.xlu0 %3070, %v670
      %v3072 = vpop.permute.xlu0 %3071
      %v3077 = vcombine.high %v3067, %v3067
      %v3078 = vcombine.high %v3068, %v3068
      %3079 = vrot.lane.b32.xlu0 %v3067, 2
      %v3080 = vpop.permute.xlu0 %3079
      %3081 = vrot.lane.b32.xlu0 %v3077, 2
      %v3082 = vpop.permute.xlu0 %3081
      %3083 = vrot.lane.b32.xlu0 %v3068, 2
      %v3084 = vpop.permute.xlu0 %3083
      %3085 = vrot.lane.b32.xlu0 %v3078, 2
      %v3086 = vpop.permute.xlu0 %3085
      %3087 = vrot.lane.b32.xlu0 %v3069, 2
      %v3088 = vpop.permute.xlu0 %3087
      %v3089 = vsel %vm2936, %v3080, %v3082
      %v3090 = vsel %vm2936, %v3082, %v3084
      %v3091 = vsel %vm2936, %v3084, %v3086
      %v3092 = vsel %vm2936, %v3086, %v3088
      %v3097 = vmul.f32 %v3072, %v3089
      %v3098 = vmul.f32 %v3072, %v3090
      %v3099 = vmul.f32 %v3072, %v3091
      %v3100 = vmul.f32 %v3072, %v3092
      %v3101 = vadd.f32 %v3063, %v3097
      %v3102 = vadd.f32 %v3064, %v3098
      %v3103 = vadd.f32 %v3065, %v3099
      %v3104 = vadd.f32 %v3066, %v3100
      %vm3105 = vcmp.ge.s32.totalorder %v668, 0
      %vm3106 = vcmp.lt.s32.totalorder %v668, 8
      %vm3107 = vmand %vm3105, %vm3106
      %vm3108 = vmand %vm3107, %vm868
      %vm3109 = vmand %vm3108, %vm870
      %v3110 = vsel %vm3109, 1, 0
      %v3111 = vlaneseq
      %v3112 = vshrl.u32 %v3111, 7
      %v3113 = vsub.s32 0, %v3112
      %v3114 = vrot.slane %v3110, %v3113
      %v3115 = vlaneseq
      %v3116 = vshrl.u32 %v3115, 7
      %v3117 = vsub.s32 1, %v3116
      %v3118 = vrot.slane %v3110, %v3117
      %v3119 = vlaneseq
      %v3120 = vshrl.u32 %v3119, 7
      %v3121 = vsub.s32 2, %v3120
      %v3122 = vrot.slane %v3110, %v3121
      %v3123 = vlaneseq
      %v3124 = vshrl.u32 %v3123, 7
      %v3125 = vsub.s32 3, %v3124
      %v3126 = vrot.slane %v3110, %v3125
      %vm3127 = vcmp.eq.s32.totalorder %v3114, 1
      %vm3128 = vcmp.eq.s32.totalorder %v3118, 1
      %vm3129 = vcmp.eq.s32.totalorder %v3122, 1
      %vm3130 = vcmp.eq.s32.totalorder %v3126, 1
      %v3131 = vsel %vm3127, %v3101, 0.0
      %v3132 = vsel %vm3128, %v3102, 0.0
      %v3133 = vsel %vm3129, %v3103, 0.0
      %v3134 = vsel %vm3130, %v3104, 0.0
      %v3135 = vadd.f32 %v2910, %v3131
      %v3136 = vadd.f32 %v2911, %v3132
      %v3137 = vadd.f32 %v2912, %v3133
      %v3138 = vadd.f32 %v2913, %v3134
      %v3139 = vld [vmem:[#allocation2] sm:$0xff]
      %v3140 = vld [vmem:[#allocation2 + $0x8] sm:$0xff]
      %v3141 = vld [vmem:[#allocation2 + $0x10] sm:$0xf]
      %3142 = vset.pattern.permute.xlu0 11
      %3143 = vperm.xlu0 %3142, %v670
      %v3144 = vpop.permute.xlu0 %3143
      %v3149 = vcombine.high %v3139, %v3139
      %v3150 = vcombine.high %v3140, %v3140
      %3151 = vrot.lane.b32.xlu0 %v3139, 1
      %v3152 = vpop.permute.xlu0 %3151
      %3153 = vrot.lane.b32.xlu0 %v3149, 1
      %v3154 = vpop.permute.xlu0 %3153
      %3155 = vrot.lane.b32.xlu0 %v3140, 1
      %v3156 = vpop.permute.xlu0 %3155
      %3157 = vrot.lane.b32.xlu0 %v3150, 1
      %v3158 = vpop.permute.xlu0 %3157
      %3159 = vrot.lane.b32.xlu0 %v3141, 1
      %v3160 = vpop.permute.xlu0 %3159
      %vm3161 = vcmask 7168
      %v3162 = vsel %vm3161, %v3152, %v3154
      %v3163 = vsel %vm3161, %v3154, %v3156
      %v3164 = vsel %vm3161, %v3156, %v3158
      %v3165 = vsel %vm3161, %v3158, %v3160
      %v3170 = vmul.f32 %v3144, %v3162
      %v3171 = vmul.f32 %v3144, %v3163
      %v3172 = vmul.f32 %v3144, %v3164
      %v3173 = vmul.f32 %v3144, %v3165
      %v3174 = vadd.f32 %v3170, 0.0
      %v3175 = vadd.f32 %v3171, 0.0
      %v3176 = vadd.f32 %v3172, 0.0
      %v3177 = vadd.f32 %v3173, 0.0
      %v3178 = vld [vmem:[#allocation2 + $0x4] sm:$0xff]
      %v3179 = vld [vmem:[#allocation2 + $0xc] sm:$0xff]
      %v3180 = vld [vmem:[#allocation2 + $0x14] sm:$0xf]
      %3181 = vset.pattern.permute.xlu0 36
      %3182 = vperm.xlu0 %3181, %v670
      %v3183 = vpop.permute.xlu0 %3182
      %v3188 = vcombine.high %v3178, %v3178
      %v3189 = vcombine.high %v3179, %v3179
      %3190 = vrot.lane.b32.xlu0 %v3178, 1
      %v3191 = vpop.permute.xlu0 %3190
      %3192 = vrot.lane.b32.xlu0 %v3188, 1
      %v3193 = vpop.permute.xlu0 %3192
      %3194 = vrot.lane.b32.xlu0 %v3179, 1
      %v3195 = vpop.permute.xlu0 %3194
      %3196 = vrot.lane.b32.xlu0 %v3189, 1
      %v3197 = vpop.permute.xlu0 %3196
      %3198 = vrot.lane.b32.xlu0 %v3180, 1
      %v3199 = vpop.permute.xlu0 %3198
      %v3200 = vsel %vm3161, %v3191, %v3193
      %v3201 = vsel %vm3161, %v3193, %v3195
      %v3202 = vsel %vm3161, %v3195, %v3197
      %v3203 = vsel %vm3161, %v3197, %v3199
      %v3208 = vmul.f32 %v3183, %v3200
      %v3209 = vmul.f32 %v3183, %v3201
      %v3210 = vmul.f32 %v3183, %v3202
      %v3211 = vmul.f32 %v3183, %v3203
      %v3212 = vadd.f32 %v3174, %v3208
      %v3213 = vadd.f32 %v3175, %v3209
      %v3214 = vadd.f32 %v3176, %v3210
      %v3215 = vadd.f32 %v3177, %v3211
      %v3216 = vld [vmem:[#allocation2 + $0x8] sm:$0xff]
      %v3217 = vld [vmem:[#allocation2 + $0x10] sm:$0xff]
      %v3218 = vld [vmem:[#allocation2 + $0x18] sm:$0xf]
      %3219 = vset.pattern.permute.xlu0 61
      %3220 = vperm.xlu0 %3219, %v670
      %v3221 = vpop.permute.xlu0 %3220
      %v3226 = vcombine.high %v3216, %v3216
      %v3227 = vcombine.high %v3217, %v3217
      %3228 = vrot.lane.b32.xlu0 %v3216, 1
      %v3229 = vpop.permute.xlu0 %3228
      %3230 = vrot.lane.b32.xlu0 %v3226, 1
      %v3231 = vpop.permute.xlu0 %3230
      %3232 = vrot.lane.b32.xlu0 %v3217, 1
      %v3233 = vpop.permute.xlu0 %3232
      %3234 = vrot.lane.b32.xlu0 %v3227, 1
      %v3235 = vpop.permute.xlu0 %3234
      %3236 = vrot.lane.b32.xlu0 %v3218, 1
      %v3237 = vpop.permute.xlu0 %3236
      %v3238 = vsel %vm3161, %v3229, %v3231
      %v3239 = vsel %vm3161, %v3231, %v3233
      %v3240 = vsel %vm3161, %v3233, %v3235
      %v3241 = vsel %vm3161, %v3235, %v3237
      %v3246 = vmul.f32 %v3221, %v3238
      %v3247 = vmul.f32 %v3221, %v3239
      %v3248 = vmul.f32 %v3221, %v3240
      %v3249 = vmul.f32 %v3221, %v3241
      %v3250 = vadd.f32 %v3212, %v3246
      %v3251 = vadd.f32 %v3213, %v3247
      %v3252 = vadd.f32 %v3214, %v3248
      %v3253 = vadd.f32 %v3215, %v3249
      %v3254 = vld [vmem:[#allocation2 + $0xc] sm:$0xff]
      %v3255 = vld [vmem:[#allocation2 + $0x14] sm:$0xff]
      %v3256 = vld [vmem:[#allocation2 + $0x1c] sm:$0xf]
      %3257 = vset.pattern.permute.xlu0 86
      %3258 = vperm.xlu0 %3257, %v670
      %v3259 = vpop.permute.xlu0 %3258
      %v3264 = vcombine.high %v3254, %v3254
      %v3265 = vcombine.high %v3255, %v3255
      %3266 = vrot.lane.b32.xlu0 %v3254, 1
      %v3267 = vpop.permute.xlu0 %3266
      %3268 = vrot.lane.b32.xlu0 %v3264, 1
      %v3269 = vpop.permute.xlu0 %3268
      %3270 = vrot.lane.b32.xlu0 %v3255, 1
      %v3271 = vpop.permute.xlu0 %3270
      %3272 = vrot.lane.b32.xlu0 %v3265, 1
      %v3273 = vpop.permute.xlu0 %3272
      %3274 = vrot.lane.b32.xlu0 %v3256, 1
      %v3275 = vpop.permute.xlu0 %3274
      %v3276 = vsel %vm3161, %v3267, %v3269
      %v3277 = vsel %vm3161, %v3269, %v3271
      %v3278 = vsel %vm3161, %v3271, %v3273
      %v3279 = vsel %vm3161, %v3273, %v3275
      %v3284 = vmul.f32 %v3259, %v3276
      %v3285 = vmul.f32 %v3259, %v3277
      %v3286 = vmul.f32 %v3259, %v3278
      %v3287 = vmul.f32 %v3259, %v3279
      %v3288 = vadd.f32 %v3250, %v3284
      %v3289 = vadd.f32 %v3251, %v3285
      %v3290 = vadd.f32 %v3252, %v3286
      %v3291 = vadd.f32 %v3253, %v3287
      %v3292 = vld [vmem:[#allocation2 + $0x10] sm:$0xff]
      %v3293 = vld [vmem:[#allocation2 + $0x18] sm:$0xff]
      %v3294 = vld [vmem:[#allocation2 + $0x20] sm:$0xf]
      %3295 = vset.pattern.permute.xlu0 111
      %3296 = vperm.xlu0 %3295, %v670
      %v3297 = vpop.permute.xlu0 %3296
      %v3302 = vcombine.high %v3292, %v3292
      %v3303 = vcombine.high %v3293, %v3293
      %3304 = vrot.lane.b32.xlu0 %v3292, 1
      %v3305 = vpop.permute.xlu0 %3304
      %3306 = vrot.lane.b32.xlu0 %v3302, 1
      %v3307 = vpop.permute.xlu0 %3306
      %3308 = vrot.lane.b32.xlu0 %v3293, 1
      %v3309 = vpop.permute.xlu0 %3308
      %3310 = vrot.lane.b32.xlu0 %v3303, 1
      %v3311 = vpop.permute.xlu0 %3310
      %3312 = vrot.lane.b32.xlu0 %v3294, 1
      %v3313 = vpop.permute.xlu0 %3312
      %v3314 = vsel %vm3161, %v3305, %v3307
      %v3315 = vsel %vm3161, %v3307, %v3309
      %v3316 = vsel %vm3161, %v3309, %v3311
      %v3317 = vsel %vm3161, %v3311, %v3313
      %v3322 = vmul.f32 %v3297, %v3314
      %v3323 = vmul.f32 %v3297, %v3315
      %v3324 = vmul.f32 %v3297, %v3316
      %v3325 = vmul.f32 %v3297, %v3317
      %v3326 = vadd.f32 %v3288, %v3322
      %v3327 = vadd.f32 %v3289, %v3323
      %v3328 = vadd.f32 %v3290, %v3324
      %v3329 = vadd.f32 %v3291, %v3325
      %vm3330 = vmand %vm3107, %vm1093
      %vm3331 = vmand %vm3330, %vm1095
      %v3332 = vsel %vm3331, 1, 0
      %v3333 = vlaneseq
      %v3334 = vshrl.u32 %v3333, 7
      %v3335 = vsub.s32 0, %v3334
      %v3336 = vrot.slane %v3332, %v3335
      %v3337 = vlaneseq
      %v3338 = vshrl.u32 %v3337, 7
      %v3339 = vsub.s32 1, %v3338
      %v3340 = vrot.slane %v3332, %v3339
      %v3341 = vlaneseq
      %v3342 = vshrl.u32 %v3341, 7
      %v3343 = vsub.s32 2, %v3342
      %v3344 = vrot.slane %v3332, %v3343
      %v3345 = vlaneseq
      %v3346 = vshrl.u32 %v3345, 7
      %v3347 = vsub.s32 3, %v3346
      %v3348 = vrot.slane %v3332, %v3347
      %vm3349 = vcmp.eq.s32.totalorder %v3336, 1
      %vm3350 = vcmp.eq.s32.totalorder %v3340, 1
      %vm3351 = vcmp.eq.s32.totalorder %v3344, 1
      %vm3352 = vcmp.eq.s32.totalorder %v3348, 1
      %v3353 = vsel %vm3349, %v3326, 0.0
      %v3354 = vsel %vm3350, %v3327, 0.0
      %v3355 = vsel %vm3351, %v3328, 0.0
      %v3356 = vsel %vm3352, %v3329, 0.0
      %v3357 = vadd.f32 %v3135, %v3353
      %v3358 = vadd.f32 %v3136, %v3354
      %v3359 = vadd.f32 %v3137, %v3355
      %v3360 = vadd.f32 %v3138, %v3356
      %v3361 = vld [vmem:[#allocation2 + $0x4] sm:$0xff]
      %v3362 = vld [vmem:[#allocation2 + $0xc] sm:$0xff]
      %3363 = vset.pattern.permute.xlu0 12
      %3364 = vperm.xlu0 %3363, %v670
      %v3365 = vpop.permute.xlu0 %3364
      %v3369 = vcombine.high %v3361, %v3361
      %v3370 = vcombine.high %v3362, %v3362
      %v3373 = vmul.f32 %v3365, %v3361
      %v3374 = vmul.f32 %v3365, %v3369
      %v3375 = vmul.f32 %v3365, %v3362
      %v3376 = vmul.f32 %v3365, %v3370
      %v3377 = vadd.f32 %v3373, 0.0
      %v3378 = vadd.f32 %v3374, 0.0
      %v3379 = vadd.f32 %v3375, 0.0
      %v3380 = vadd.f32 %v3376, 0.0
      %v3381 = vld [vmem:[#allocation2 + $0x8] sm:$0xff]
      %v3382 = vld [vmem:[#allocation2 + $0x10] sm:$0xff]
      %3383 = vset.pattern.permute.xlu0 37
      %3384 = vperm.xlu0 %3383, %v670
      %v3385 = vpop.permute.xlu0 %3384
      %v3389 = vcombine.high %v3381, %v3381
      %v3390 = vcombine.high %v3382, %v3382
      %v3393 = vmul.f32 %v3385, %v3381
      %v3394 = vmul.f32 %v3385, %v3389
      %v3395 = vmul.f32 %v3385, %v3382
      %v3396 = vmul.f32 %v3385, %v3390
      %v3397 = vadd.f32 %v3377, %v3393
      %v3398 = vadd.f32 %v3378, %v3394
      %v3399 = vadd.f32 %v3379, %v3395
      %v3400 = vadd.f32 %v3380, %v3396
      %v3401 = vld [vmem:[#allocation2 + $0xc] sm:$0xff]
      %v3402 = vld [vmem:[#allocation2 + $0x14] sm:$0xff]
      %3403 = vset.pattern.permute.xlu0 62
      %3404 = vperm.xlu0 %3403, %v670
      %v3405 = vpop.permute.xlu0 %3404
      %v3409 = vcombine.high %v3401, %v3401
      %v3410 = vcombine.high %v3402, %v3402
      %v3413 = vmul.f32 %v3405, %v3401
      %v3414 = vmul.f32 %v3405, %v3409
      %v3415 = vmul.f32 %v3405, %v3402
      %v3416 = vmul.f32 %v3405, %v3410
      %v3417 = vadd.f32 %v3397, %v3413
      %v3418 = vadd.f32 %v3398, %v3414
      %v3419 = vadd.f32 %v3399, %v3415
      %v3420 = vadd.f32 %v3400, %v3416
      %v3421 = vld [vmem:[#allocation2 + $0x10] sm:$0xff]
      %v3422 = vld [vmem:[#allocation2 + $0x18] sm:$0xff]
      %3423 = vset.pattern.permute.xlu0 87
      %3424 = vperm.xlu0 %3423, %v670
      %v3425 = vpop.permute.xlu0 %3424
      %v3429 = vcombine.high %v3421, %v3421
      %v3430 = vcombine.high %v3422, %v3422
      %v3433 = vmul.f32 %v3425, %v3421
      %v3434 = vmul.f32 %v3425, %v3429
      %v3435 = vmul.f32 %v3425, %v3422
      %v3436 = vmul.f32 %v3425, %v3430
      %v3437 = vadd.f32 %v3417, %v3433
      %v3438 = vadd.f32 %v3418, %v3434
      %v3439 = vadd.f32 %v3419, %v3435
      %v3440 = vadd.f32 %v3420, %v3436
      %v3441 = vld [vmem:[#allocation2 + $0x14] sm:$0xff]
      %v3442 = vld [vmem:[#allocation2 + $0x1c] sm:$0xff]
      %3443 = vset.pattern.permute.xlu0 112
      %3444 = vperm.xlu0 %3443, %v670
      %v3445 = vpop.permute.xlu0 %3444
      %v3449 = vcombine.high %v3441, %v3441
      %v3450 = vcombine.high %v3442, %v3442
      %v3453 = vmul.f32 %v3445, %v3441
      %v3454 = vmul.f32 %v3445, %v3449
      %v3455 = vmul.f32 %v3445, %v3442
      %v3456 = vmul.f32 %v3445, %v3450
      %v3457 = vadd.f32 %v3437, %v3453
      %v3458 = vadd.f32 %v3438, %v3454
      %v3459 = vadd.f32 %v3439, %v3455
      %v3460 = vadd.f32 %v3440, %v3456
      %vm3461 = vmand %vm3107, %vm1317
      %vm3462 = vmand %vm3461, %vm1319
      %v3463 = vsel %vm3462, 1, 0
      %v3464 = vlaneseq
      %v3465 = vshrl.u32 %v3464, 7
      %v3466 = vsub.s32 0, %v3465
      %v3467 = vrot.slane %v3463, %v3466
      %v3468 = vlaneseq
      %v3469 = vshrl.u32 %v3468, 7
      %v3470 = vsub.s32 1, %v3469
      %v3471 = vrot.slane %v3463, %v3470
      %v3472 = vlaneseq
      %v3473 = vshrl.u32 %v3472, 7
      %v3474 = vsub.s32 2, %v3473
      %v3475 = vrot.slane %v3463, %v3474
      %v3476 = vlaneseq
      %v3477 = vshrl.u32 %v3476, 7
      %v3478 = vsub.s32 3, %v3477
      %v3479 = vrot.slane %v3463, %v3478
      %vm3480 = vcmp.eq.s32.totalorder %v3467, 1
      %vm3481 = vcmp.eq.s32.totalorder %v3471, 1
      %vm3482 = vcmp.eq.s32.totalorder %v3475, 1
      %vm3483 = vcmp.eq.s32.totalorder %v3479, 1
      %v3484 = vsel %vm3480, %v3457, 0.0
      %v3485 = vsel %vm3481, %v3458, 0.0
      %v3486 = vsel %vm3482, %v3459, 0.0
      %v3487 = vsel %vm3483, %v3460, 0.0
      %v3488 = vadd.f32 %v3357, %v3484
      %v3489 = vadd.f32 %v3358, %v3485
      %v3490 = vadd.f32 %v3359, %v3486
      %v3491 = vadd.f32 %v3360, %v3487
      %v3492 = vld [vmem:[#allocation2 + $0x4] sm:$0xff]
      %v3493 = vld [vmem:[#allocation2 + $0xc] sm:$0xff]
      %v3494 = vld [vmem:[#allocation2 + $0x14] sm:$0xf]
      %3495 = vset.pattern.permute.xlu0 13
      %3496 = vperm.xlu0 %3495, %v670
      %v3497 = vpop.permute.xlu0 %3496
      %v3502 = vcombine.high %v3492, %v3492
      %v3503 = vcombine.high %v3493, %v3493
      %3504 = vrot.lane.b32.xlu0 %v3492, 127
      %v3505 = vpop.permute.xlu0 %3504
      %3506 = vrot.lane.b32.xlu0 %v3502, 127
      %v3507 = vpop.permute.xlu0 %3506
      %3508 = vrot.lane.b32.xlu0 %v3493, 127
      %v3509 = vpop.permute.xlu0 %3508
      %3510 = vrot.lane.b32.xlu0 %v3503, 127
      %v3511 = vpop.permute.xlu0 %3510
      %3512 = vrot.lane.b32.xlu0 %v3494, 127
      %v3513 = vpop.permute.xlu0 %3512
      %vm3514 = vcmask 1039360
      %v3515 = vsel %vm3514, %v3505, %v3507
      %v3516 = vsel %vm3514, %v3507, %v3509
      %v3517 = vsel %vm3514, %v3509, %v3511
      %v3518 = vsel %vm3514, %v3511, %v3513
      %v3523 = vmul.f32 %v3497, %v3515
      %v3524 = vmul.f32 %v3497, %v3516
      %v3525 = vmul.f32 %v3497, %v3517
      %v3526 = vmul.f32 %v3497, %v3518
      %v3527 = vadd.f32 %v3523, 0.0
      %v3528 = vadd.f32 %v3524, 0.0
      %v3529 = vadd.f32 %v3525, 0.0
      %v3530 = vadd.f32 %v3526, 0.0
      %v3531 = vld [vmem:[#allocation2 + $0x8] sm:$0xff]
      %v3532 = vld [vmem:[#allocation2 + $0x10] sm:$0xff]
      %v3533 = vld [vmem:[#allocation2 + $0x18] sm:$0xf]
      %3534 = vset.pattern.permute.xlu0 38
      %3535 = vperm.xlu0 %3534, %v670
      %v3536 = vpop.permute.xlu0 %3535
      %v3541 = vcombine.high %v3531, %v3531
      %v3542 = vcombine.high %v3532, %v3532
      %3543 = vrot.lane.b32.xlu0 %v3531, 127
      %v3544 = vpop.permute.xlu0 %3543
      %3545 = vrot.lane.b32.xlu0 %v3541, 127
      %v3546 = vpop.permute.xlu0 %3545
      %3547 = vrot.lane.b32.xlu0 %v3532, 127
      %v3548 = vpop.permute.xlu0 %3547
      %3549 = vrot.lane.b32.xlu0 %v3542, 127
      %v3550 = vpop.permute.xlu0 %3549
      %3551 = vrot.lane.b32.xlu0 %v3533, 127
      %v3552 = vpop.permute.xlu0 %3551
      %v3553 = vsel %vm3514, %v3544, %v3546
      %v3554 = vsel %vm3514, %v3546, %v3548
      %v3555 = vsel %vm3514, %v3548, %v3550
      %v3556 = vsel %vm3514, %v3550, %v3552
      %v3561 = vmul.f32 %v3536, %v3553
      %v3562 = vmul.f32 %v3536, %v3554
      %v3563 = vmul.f32 %v3536, %v3555
      %v3564 = vmul.f32 %v3536, %v3556
      %v3565 = vadd.f32 %v3527, %v3561
      %v3566 = vadd.f32 %v3528, %v3562
      %v3567 = vadd.f32 %v3529, %v3563
      %v3568 = vadd.f32 %v3530, %v3564
      %v3569 = vld [vmem:[#allocation2 + $0xc] sm:$0xff]
      %v3570 = vld [vmem:[#allocation2 + $0x14] sm:$0xff]
      %v3571 = vld [vmem:[#allocation2 + $0x1c] sm:$0xf]
      %3572 = vset.pattern.permute.xlu0 63
      %3573 = vperm.xlu0 %3572, %v670
      %v3574 = vpop.permute.xlu0 %3573
      %v3579 = vcombine.high %v3569, %v3569
      %v3580 = vcombine.high %v3570, %v3570
      %3581 = vrot.lane.b32.xlu0 %v3569, 127
      %v3582 = vpop.permute.xlu0 %3581
      %3583 = vrot.lane.b32.xlu0 %v3579, 127
      %v3584 = vpop.permute.xlu0 %3583
      %3585 = vrot.lane.b32.xlu0 %v3570, 127
      %v3586 = vpop.permute.xlu0 %3585
      %3587 = vrot.lane.b32.xlu0 %v3580, 127
      %v3588 = vpop.permute.xlu0 %3587
      %3589 = vrot.lane.b32.xlu0 %v3571, 127
      %v3590 = vpop.permute.xlu0 %3589
      %v3591 = vsel %vm3514, %v3582, %v3584
      %v3592 = vsel %vm3514, %v3584, %v3586
      %v3593 = vsel %vm3514, %v3586, %v3588
      %v3594 = vsel %vm3514, %v3588, %v3590
      %v3599 = vmul.f32 %v3574, %v3591
      %v3600 = vmul.f32 %v3574, %v3592
      %v3601 = vmul.f32 %v3574, %v3593
      %v3602 = vmul.f32 %v3574, %v3594
      %v3603 = vadd.f32 %v3565, %v3599
      %v3604 = vadd.f32 %v3566, %v3600
      %v3605 = vadd.f32 %v3567, %v3601
      %v3606 = vadd.f32 %v3568, %v3602
      %v3607 = vld [vmem:[#allocation2 + $0x10] sm:$0xff]
      %v3608 = vld [vmem:[#allocation2 + $0x18] sm:$0xff]
      %v3609 = vld [vmem:[#allocation2 + $0x20] sm:$0xf]
      %3610 = vset.pattern.permute.xlu0 88
      %3611 = vperm.xlu0 %3610, %v670
      %v3612 = vpop.permute.xlu0 %3611
      %v3617 = vcombine.high %v3607, %v3607
      %v3618 = vcombine.high %v3608, %v3608
      %3619 = vrot.lane.b32.xlu0 %v3607, 127
      %v3620 = vpop.permute.xlu0 %3619
      %3621 = vrot.lane.b32.xlu0 %v3617, 127
      %v3622 = vpop.permute.xlu0 %3621
      %3623 = vrot.lane.b32.xlu0 %v3608, 127
      %v3624 = vpop.permute.xlu0 %3623
      %3625 = vrot.lane.b32.xlu0 %v3618, 127
      %v3626 = vpop.permute.xlu0 %3625
      %3627 = vrot.lane.b32.xlu0 %v3609, 127
      %v3628 = vpop.permute.xlu0 %3627
      %v3629 = vsel %vm3514, %v3620, %v3622
      %v3630 = vsel %vm3514, %v3622, %v3624
      %v3631 = vsel %vm3514, %v3624, %v3626
      %v3632 = vsel %vm3514, %v3626, %v3628
      %v3637 = vmul.f32 %v3612, %v3629
      %v3638 = vmul.f32 %v3612, %v3630
      %v3639 = vmul.f32 %v3612, %v3631
      %v3640 = vmul.f32 %v3612, %v3632
      %v3641 = vadd.f32 %v3603, %v3637
      %v3642 = vadd.f32 %v3604, %v3638
      %v3643 = vadd.f32 %v3605, %v3639
      %v3644 = vadd.f32 %v3606, %v3640
      %v3645 = vld [vmem:[#allocation2 + $0x14] sm:$0xff]
      %v3646 = vld [vmem:[#allocation2 + $0x1c] sm:$0xff]
      %v3647 = vld [vmem:[#allocation2 + $0x24] sm:$0xf]
      %3648 = vset.pattern.permute.xlu0 113
      %3649 = vperm.xlu0 %3648, %v670
      %v3650 = vpop.permute.xlu0 %3649
      %v3655 = vcombine.high %v3645, %v3645
      %v3656 = vcombine.high %v3646, %v3646
      %3657 = vrot.lane.b32.xlu0 %v3645, 127
      %v3658 = vpop.permute.xlu0 %3657
      %3659 = vrot.lane.b32.xlu0 %v3655, 127
      %v3660 = vpop.permute.xlu0 %3659
      %3661 = vrot.lane.b32.xlu0 %v3646, 127
      %v3662 = vpop.permute.xlu0 %3661
      %3663 = vrot.lane.b32.xlu0 %v3656, 127
      %v3664 = vpop.permute.xlu0 %3663
      %3665 = vrot.lane.b32.xlu0 %v3647, 127
      %v3666 = vpop.permute.xlu0 %3665
      %v3667 = vsel %vm3514, %v3658, %v3660
      %v3668 = vsel %vm3514, %v3660, %v3662
      %v3669 = vsel %vm3514, %v3662, %v3664
      %v3670 = vsel %vm3514, %v3664, %v3666
      %v3675 = vmul.f32 %v3650, %v3667
      %v3676 = vmul.f32 %v3650, %v3668
      %v3677 = vmul.f32 %v3650, %v3669
      %v3678 = vmul.f32 %v3650, %v3670
      %v3679 = vadd.f32 %v3641, %v3675
      %v3680 = vadd.f32 %v3642, %v3676
      %v3681 = vadd.f32 %v3643, %v3677
      %v3682 = vadd.f32 %v3644, %v3678
      %vm3683 = vmand %vm3107, %vm1542
      %vm3684 = vmand %vm3683, %vm1544
      %v3685 = vsel %vm3684, 1, 0
      %v3686 = vlaneseq
      %v3687 = vshrl.u32 %v3686, 7
      %v3688 = vsub.s32 0, %v3687
      %v3689 = vrot.slane %v3685, %v3688
      %v3690 = vlaneseq
      %v3691 = vshrl.u32 %v3690, 7
      %v3692 = vsub.s32 1, %v3691
      %v3693 = vrot.slane %v3685, %v3692
      %v3694 = vlaneseq
      %v3695 = vshrl.u32 %v3694, 7
      %v3696 = vsub.s32 2, %v3695
      %v3697 = vrot.slane %v3685, %v3696
      %v3698 = vlaneseq
      %v3699 = vshrl.u32 %v3698, 7
      %v3700 = vsub.s32 3, %v3699
      %v3701 = vrot.slane %v3685, %v3700
      %vm3702 = vcmp.eq.s32.totalorder %v3689, 1
      %vm3703 = vcmp.eq.s32.totalorder %v3693, 1
      %vm3704 = vcmp.eq.s32.totalorder %v3697, 1
      %vm3705 = vcmp.eq.s32.totalorder %v3701, 1
      %v3706 = vsel %vm3702, %v3679, 0.0
      %v3707 = vsel %vm3703, %v3680, 0.0
      %v3708 = vsel %vm3704, %v3681, 0.0
      %v3709 = vsel %vm3705, %v3682, 0.0
      %v3710 = vadd.f32 %v3488, %v3706
      %v3711 = vadd.f32 %v3489, %v3707
      %v3712 = vadd.f32 %v3490, %v3708
      %v3713 = vadd.f32 %v3491, %v3709
      %v3714 = vld [vmem:[#allocation2 + $0x4] sm:$0xff]
      %v3715 = vld [vmem:[#allocation2 + $0xc] sm:$0xff]
      %v3716 = vld [vmem:[#allocation2 + $0x14] sm:$0xf]
      %3717 = vset.pattern.permute.xlu0 14
      %3718 = vperm.xlu0 %3717, %v670
      %v3719 = vpop.permute.xlu0 %3718
      %v3724 = vcombine.high %v3714, %v3714
      %v3725 = vcombine.high %v3715, %v3715
      %3726 = vrot.lane.b32.xlu0 %v3714, 126
      %v3727 = vpop.permute.xlu0 %3726
      %3728 = vrot.lane.b32.xlu0 %v3724, 126
      %v3729 = vpop.permute.xlu0 %3728
      %3730 = vrot.lane.b32.xlu0 %v3715, 126
      %v3731 = vpop.permute.xlu0 %3730
      %3732 = vrot.lane.b32.xlu0 %v3725, 126
      %v3733 = vpop.permute.xlu0 %3732
      %3734 = vrot.lane.b32.xlu0 %v3716, 126
      %v3735 = vpop.permute.xlu0 %3734
      %vm3736 = vcmask 1031168
      %v3737 = vsel %vm3736, %v3727, %v3729
      %v3738 = vsel %vm3736, %v3729, %v3731
      %v3739 = vsel %vm3736, %v3731, %v3733
      %v3740 = vsel %vm3736, %v3733, %v3735
      %v3745 = vmul.f32 %v3719, %v3737
      %v3746 = vmul.f32 %v3719, %v3738
      %v3747 = vmul.f32 %v3719, %v3739
      %v3748 = vmul.f32 %v3719, %v3740
      %v3749 = vadd.f32 %v3745, 0.0
      %v3750 = vadd.f32 %v3746, 0.0
      %v3751 = vadd.f32 %v3747, 0.0
      %v3752 = vadd.f32 %v3748, 0.0
      %v3753 = vld [vmem:[#allocation2 + $0x8] sm:$0xff]
      %v3754 = vld [vmem:[#allocation2 + $0x10] sm:$0xff]
      %v3755 = vld [vmem:[#allocation2 + $0x18] sm:$0xf]
      %3756 = vset.pattern.permute.xlu0 39
      %3757 = vperm.xlu0 %3756, %v670
      %v3758 = vpop.permute.xlu0 %3757
      %v3763 = vcombine.high %v3753, %v3753
      %v3764 = vcombine.high %v3754, %v3754
      %3765 = vrot.lane.b32.xlu0 %v3753, 126
      %v3766 = vpop.permute.xlu0 %3765
      %3767 = vrot.lane.b32.xlu0 %v3763, 126
      %v3768 = vpop.permute.xlu0 %3767
      %3769 = vrot.lane.b32.xlu0 %v3754, 126
      %v3770 = vpop.permute.xlu0 %3769
      %3771 = vrot.lane.b32.xlu0 %v3764, 126
      %v3772 = vpop.permute.xlu0 %3771
      %3773 = vrot.lane.b32.xlu0 %v3755, 126
      %v3774 = vpop.permute.xlu0 %3773
      %v3775 = vsel %vm3736, %v3766, %v3768
      %v3776 = vsel %vm3736, %v3768, %v3770
      %v3777 = vsel %vm3736, %v3770, %v3772
      %v3778 = vsel %vm3736, %v3772, %v3774
      %v3783 = vmul.f32 %v3758, %v3775
      %v3784 = vmul.f32 %v3758, %v3776
      %v3785 = vmul.f32 %v3758, %v3777
      %v3786 = vmul.f32 %v3758, %v3778
      %v3787 = vadd.f32 %v3749, %v3783
      %v3788 = vadd.f32 %v3750, %v3784
      %v3789 = vadd.f32 %v3751, %v3785
      %v3790 = vadd.f32 %v3752, %v3786
      %v3791 = vld [vmem:[#allocation2 + $0xc] sm:$0xff]
      %v3792 = vld [vmem:[#allocation2 + $0x14] sm:$0xff]
      %v3793 = vld [vmem:[#allocation2 + $0x1c] sm:$0xf]
      %3794 = vset.pattern.permute.xlu0 64
      %3795 = vperm.xlu0 %3794, %v670
      %v3796 = vpop.permute.xlu0 %3795
      %v3801 = vcombine.high %v3791, %v3791
      %v3802 = vcombine.high %v3792, %v3792
      %3803 = vrot.lane.b32.xlu0 %v3791, 126
      %v3804 = vpop.permute.xlu0 %3803
      %3805 = vrot.lane.b32.xlu0 %v3801, 126
      %v3806 = vpop.permute.xlu0 %3805
      %3807 = vrot.lane.b32.xlu0 %v3792, 126
      %v3808 = vpop.permute.xlu0 %3807
      %3809 = vrot.lane.b32.xlu0 %v3802, 126
      %v3810 = vpop.permute.xlu0 %3809
      %3811 = vrot.lane.b32.xlu0 %v3793, 126
      %v3812 = vpop.permute.xlu0 %3811
      %v3813 = vsel %vm3736, %v3804, %v3806
      %v3814 = vsel %vm3736, %v3806, %v3808
      %v3815 = vsel %vm3736, %v3808, %v3810
      %v3816 = vsel %vm3736, %v3810, %v3812
      %v3821 = vmul.f32 %v3796, %v3813
      %v3822 = vmul.f32 %v3796, %v3814
      %v3823 = vmul.f32 %v3796, %v3815
      %v3824 = vmul.f32 %v3796, %v3816
      %v3825 = vadd.f32 %v3787, %v3821
      %v3826 = vadd.f32 %v3788, %v3822
      %v3827 = vadd.f32 %v3789, %v3823
      %v3828 = vadd.f32 %v3790, %v3824
      %v3829 = vld [vmem:[#allocation2 + $0x10] sm:$0xff]
      %v3830 = vld [vmem:[#allocation2 + $0x18] sm:$0xff]
      %v3831 = vld [vmem:[#allocation2 + $0x20] sm:$0xf]
      %3832 = vset.pattern.permute.xlu0 89
      %3833 = vperm.xlu0 %3832, %v670
      %v3834 = vpop.permute.xlu0 %3833
      %v3839 = vcombine.high %v3829, %v3829
      %v3840 = vcombine.high %v3830, %v3830
      %3841 = vrot.lane.b32.xlu0 %v3829, 126
      %v3842 = vpop.permute.xlu0 %3841
      %3843 = vrot.lane.b32.xlu0 %v3839, 126
      %v3844 = vpop.permute.xlu0 %3843
      %3845 = vrot.lane.b32.xlu0 %v3830, 126
      %v3846 = vpop.permute.xlu0 %3845
      %3847 = vrot.lane.b32.xlu0 %v3840, 126
      %v3848 = vpop.permute.xlu0 %3847
      %3849 = vrot.lane.b32.xlu0 %v3831, 126
      %v3850 = vpop.permute.xlu0 %3849
      %v3851 = vsel %vm3736, %v3842, %v3844
      %v3852 = vsel %vm3736, %v3844, %v3846
      %v3853 = vsel %vm3736, %v3846, %v3848
      %v3854 = vsel %vm3736, %v3848, %v3850
      %v3859 = vmul.f32 %v3834, %v3851
      %v3860 = vmul.f32 %v3834, %v3852
      %v3861 = vmul.f32 %v3834, %v3853
      %v3862 = vmul.f32 %v3834, %v3854
      %v3863 = vadd.f32 %v3825, %v3859
      %v3864 = vadd.f32 %v3826, %v3860
      %v3865 = vadd.f32 %v3827, %v3861
      %v3866 = vadd.f32 %v3828, %v3862
      %v3867 = vld [vmem:[#allocation2 + $0x14] sm:$0xff]
      %v3868 = vld [vmem:[#allocation2 + $0x1c] sm:$0xff]
      %v3869 = vld [vmem:[#allocation2 + $0x24] sm:$0xf]
      %3870 = vset.pattern.permute.xlu0 114
      %3871 = vperm.xlu0 %3870, %v670
      %v3872 = vpop.permute.xlu0 %3871
      %v3877 = vcombine.high %v3867, %v3867
      %v3878 = vcombine.high %v3868, %v3868
      %3879 = vrot.lane.b32.xlu0 %v3867, 126
      %v3880 = vpop.permute.xlu0 %3879
      %3881 = vrot.lane.b32.xlu0 %v3877, 126
      %v3882 = vpop.permute.xlu0 %3881
      %3883 = vrot.lane.b32.xlu0 %v3868, 126
      %v3884 = vpop.permute.xlu0 %3883
      %3885 = vrot.lane.b32.xlu0 %v3878, 126
      %v3886 = vpop.permute.xlu0 %3885
      %3887 = vrot.lane.b32.xlu0 %v3869, 126
      %v3888 = vpop.permute.xlu0 %3887
      %v3889 = vsel %vm3736, %v3880, %v3882
      %v3890 = vsel %vm3736, %v3882, %v3884
      %v3891 = vsel %vm3736, %v3884, %v3886
      %v3892 = vsel %vm3736, %v3886, %v3888
      %v3897 = vmul.f32 %v3872, %v3889
      %v3898 = vmul.f32 %v3872, %v3890
      %v3899 = vmul.f32 %v3872, %v3891
      %v3900 = vmul.f32 %v3872, %v3892
      %v3901 = vadd.f32 %v3863, %v3897
      %v3902 = vadd.f32 %v3864, %v3898
      %v3903 = vadd.f32 %v3865, %v3899
      %v3904 = vadd.f32 %v3866, %v3900
      %vm3905 = vmand %vm3107, %vm1767
      %vm3906 = vmand %vm3905, %vm1769
      %v3907 = vsel %vm3906, 1, 0
      %v3908 = vlaneseq
      %v3909 = vshrl.u32 %v3908, 7
      %v3910 = vsub.s32 0, %v3909
      %v3911 = vrot.slane %v3907, %v3910
      %v3912 = vlaneseq
      %v3913 = vshrl.u32 %v3912, 7
      %v3914 = vsub.s32 1, %v3913
      %v3915 = vrot.slane %v3907, %v3914
      %v3916 = vlaneseq
      %v3917 = vshrl.u32 %v3916, 7
      %v3918 = vsub.s32 2, %v3917
      %v3919 = vrot.slane %v3907, %v3918
      %v3920 = vlaneseq
      %v3921 = vshrl.u32 %v3920, 7
      %v3922 = vsub.s32 3, %v3921
      %v3923 = vrot.slane %v3907, %v3922
      %vm3924 = vcmp.eq.s32.totalorder %v3911, 1
      %vm3925 = vcmp.eq.s32.totalorder %v3915, 1
      %vm3926 = vcmp.eq.s32.totalorder %v3919, 1
      %vm3927 = vcmp.eq.s32.totalorder %v3923, 1
      %v3928 = vsel %vm3924, %v3901, 0.0
      %v3929 = vsel %vm3925, %v3902, 0.0
      %v3930 = vsel %vm3926, %v3903, 0.0
      %v3931 = vsel %vm3927, %v3904, 0.0
      %v3932 = vadd.f32 %v3710, %v3928
      %v3933 = vadd.f32 %v3711, %v3929
      %v3934 = vadd.f32 %v3712, %v3930
      %v3935 = vadd.f32 %v3713, %v3931
      %v3936 = vld [vmem:[#allocation2 + $0x4] sm:$0xff]
      %v3937 = vld [vmem:[#allocation2 + $0xc] sm:$0xff]
      %v3938 = vld [vmem:[#allocation2 + $0x14] sm:$0xf]
      %3939 = vset.pattern.permute.xlu0 15
      %3940 = vperm.xlu0 %3939, %v670
      %v3941 = vpop.permute.xlu0 %3940
      %v3946 = vcombine.high %v3936, %v3936
      %v3947 = vcombine.high %v3937, %v3937
      %3948 = vrot.lane.b32.xlu0 %v3936, 114
      %v3949 = vpop.permute.xlu0 %3948
      %3950 = vrot.lane.b32.xlu0 %v3946, 114
      %v3951 = vpop.permute.xlu0 %3950
      %3952 = vrot.lane.b32.xlu0 %v3937, 114
      %v3953 = vpop.permute.xlu0 %3952
      %3954 = vrot.lane.b32.xlu0 %v3947, 114
      %v3955 = vpop.permute.xlu0 %3954
      %3956 = vrot.lane.b32.xlu0 %v3938, 114
      %v3957 = vpop.permute.xlu0 %3956
      %vm3958 = vcmask 932864
      %v3959 = vsel %vm3958, %v3949, %v3951
      %v3960 = vsel %vm3958, %v3951, %v3953
      %v3961 = vsel %vm3958, %v3953, %v3955
      %v3962 = vsel %vm3958, %v3955, %v3957
      %v3967 = vmul.f32 %v3941, %v3959
      %v3968 = vmul.f32 %v3941, %v3960
      %v3969 = vmul.f32 %v3941, %v3961
      %v3970 = vmul.f32 %v3941, %v3962
      %v3971 = vadd.f32 %v3967, 0.0
      %v3972 = vadd.f32 %v3968, 0.0
      %v3973 = vadd.f32 %v3969, 0.0
      %v3974 = vadd.f32 %v3970, 0.0
      %v3975 = vld [vmem:[#allocation2 + $0x8] sm:$0xff]
      %v3976 = vld [vmem:[#allocation2 + $0x10] sm:$0xff]
      %v3977 = vld [vmem:[#allocation2 + $0x18] sm:$0xf]
      %3978 = vset.pattern.permute.xlu0 40
      %3979 = vperm.xlu0 %3978, %v670
      %v3980 = vpop.permute.xlu0 %3979
      %v3985 = vcombine.high %v3975, %v3975
      %v3986 = vcombine.high %v3976, %v3976
      %3987 = vrot.lane.b32.xlu0 %v3975, 114
      %v3988 = vpop.permute.xlu0 %3987
      %3989 = vrot.lane.b32.xlu0 %v3985, 114
      %v3990 = vpop.permute.xlu0 %3989
      %3991 = vrot.lane.b32.xlu0 %v3976, 114
      %v3992 = vpop.permute.xlu0 %3991
      %3993 = vrot.lane.b32.xlu0 %v3986, 114
      %v3994 = vpop.permute.xlu0 %3993
      %3995 = vrot.lane.b32.xlu0 %v3977, 114
      %v3996 = vpop.permute.xlu0 %3995
      %v3997 = vsel %vm3958, %v3988, %v3990
      %v3998 = vsel %vm3958, %v3990, %v3992
      %v3999 = vsel %vm3958, %v3992, %v3994
      %v4000 = vsel %vm3958, %v3994, %v3996
      %v4005 = vmul.f32 %v3980, %v3997
      %v4006 = vmul.f32 %v3980, %v3998
      %v4007 = vmul.f32 %v3980, %v3999
      %v4008 = vmul.f32 %v3980, %v4000
      %v4009 = vadd.f32 %v3971, %v4005
      %v4010 = vadd.f32 %v3972, %v4006
      %v4011 = vadd.f32 %v3973, %v4007
      %v4012 = vadd.f32 %v3974, %v4008
      %v4013 = vld [vmem:[#allocation2 + $0xc] sm:$0xff]
      %v4014 = vld [vmem:[#allocation2 + $0x14] sm:$0xff]
      %v4015 = vld [vmem:[#allocation2 + $0x1c] sm:$0xf]
      %4016 = vset.pattern.permute.xlu0 65
      %4017 = vperm.xlu0 %4016, %v670
      %v4018 = vpop.permute.xlu0 %4017
      %v4023 = vcombine.high %v4013, %v4013
      %v4024 = vcombine.high %v4014, %v4014
      %4025 = vrot.lane.b32.xlu0 %v4013, 114
      %v4026 = vpop.permute.xlu0 %4025
      %4027 = vrot.lane.b32.xlu0 %v4023, 114
      %v4028 = vpop.permute.xlu0 %4027
      %4029 = vrot.lane.b32.xlu0 %v4014, 114
      %v4030 = vpop.permute.xlu0 %4029
      %4031 = vrot.lane.b32.xlu0 %v4024, 114
      %v4032 = vpop.permute.xlu0 %4031
      %4033 = vrot.lane.b32.xlu0 %v4015, 114
      %v4034 = vpop.permute.xlu0 %4033
      %v4035 = vsel %vm3958, %v4026, %v4028
      %v4036 = vsel %vm3958, %v4028, %v4030
      %v4037 = vsel %vm3958, %v4030, %v4032
      %v4038 = vsel %vm3958, %v4032, %v4034
      %v4043 = vmul.f32 %v4018, %v4035
      %v4044 = vmul.f32 %v4018, %v4036
      %v4045 = vmul.f32 %v4018, %v4037
      %v4046 = vmul.f32 %v4018, %v4038
      %v4047 = vadd.f32 %v4009, %v4043
      %v4048 = vadd.f32 %v4010, %v4044
      %v4049 = vadd.f32 %v4011, %v4045
      %v4050 = vadd.f32 %v4012, %v4046
      %v4051 = vld [vmem:[#allocation2 + $0x10] sm:$0xff]
      %v4052 = vld [vmem:[#allocation2 + $0x18] sm:$0xff]
      %v4053 = vld [vmem:[#allocation2 + $0x20] sm:$0xf]
      %4054 = vset.pattern.permute.xlu0 90
      %4055 = vperm.xlu0 %4054, %v670
      %v4056 = vpop.permute.xlu0 %4055
      %v4061 = vcombine.high %v4051, %v4051
      %v4062 = vcombine.high %v4052, %v4052
      %4063 = vrot.lane.b32.xlu0 %v4051, 114
      %v4064 = vpop.permute.xlu0 %4063
      %4065 = vrot.lane.b32.xlu0 %v4061, 114
      %v4066 = vpop.permute.xlu0 %4065
      %4067 = vrot.lane.b32.xlu0 %v4052, 114
      %v4068 = vpop.permute.xlu0 %4067
      %4069 = vrot.lane.b32.xlu0 %v4062, 114
      %v4070 = vpop.permute.xlu0 %4069
      %4071 = vrot.lane.b32.xlu0 %v4053, 114
      %v4072 = vpop.permute.xlu0 %4071
      %v4073 = vsel %vm3958, %v4064, %v4066
      %v4074 = vsel %vm3958, %v4066, %v4068
      %v4075 = vsel %vm3958, %v4068, %v4070
      %v4076 = vsel %vm3958, %v4070, %v4072
      %v4081 = vmul.f32 %v4056, %v4073
      %v4082 = vmul.f32 %v4056, %v4074
      %v4083 = vmul.f32 %v4056, %v4075
      %v4084 = vmul.f32 %v4056, %v4076
      %v4085 = vadd.f32 %v4047, %v4081
      %v4086 = vadd.f32 %v4048, %v4082
      %v4087 = vadd.f32 %v4049, %v4083
      %v4088 = vadd.f32 %v4050, %v4084
      %v4089 = vld [vmem:[#allocation2 + $0x14] sm:$0xff]
      %v4090 = vld [vmem:[#allocation2 + $0x1c] sm:$0xff]
      %v4091 = vld [vmem:[#allocation2 + $0x24] sm:$0xf]
      %4092 = vset.pattern.permute.xlu0 115
      %4093 = vperm.xlu0 %4092, %v670
      %v4094 = vpop.permute.xlu0 %4093
      %v4099 = vcombine.high %v4089, %v4089
      %v4100 = vcombine.high %v4090, %v4090
      %4101 = vrot.lane.b32.xlu0 %v4089, 114
      %v4102 = vpop.permute.xlu0 %4101
      %4103 = vrot.lane.b32.xlu0 %v4099, 114
      %v4104 = vpop.permute.xlu0 %4103
      %4105 = vrot.lane.b32.xlu0 %v4090, 114
      %v4106 = vpop.permute.xlu0 %4105
      %4107 = vrot.lane.b32.xlu0 %v4100, 114
      %v4108 = vpop.permute.xlu0 %4107
      %4109 = vrot.lane.b32.xlu0 %v4091, 114
      %v4110 = vpop.permute.xlu0 %4109
      %v4111 = vsel %vm3958, %v4102, %v4104
      %v4112 = vsel %vm3958, %v4104, %v4106
      %v4113 = vsel %vm3958, %v4106, %v4108
      %v4114 = vsel %vm3958, %v4108, %v4110
      %v4119 = vmul.f32 %v4094, %v4111
      %v4120 = vmul.f32 %v4094, %v4112
      %v4121 = vmul.f32 %v4094, %v4113
      %v4122 = vmul.f32 %v4094, %v4114
      %v4123 = vadd.f32 %v4085, %v4119
      %v4124 = vadd.f32 %v4086, %v4120
      %v4125 = vadd.f32 %v4087, %v4121
      %v4126 = vadd.f32 %v4088, %v4122
      %v4127 = vadd.s32 %v668, 1
      %vm4128 = vcmp.ge.s32.totalorder %v4127, 0
      %vm4129 = vcmp.lt.s32.totalorder %v4127, 8
      %vm4130 = vmand %vm4128, %vm4129
      %vm4131 = vmand %vm4130, %vm868
      %vm4132 = vmand %vm4131, %vm870
      %v4133 = vsel %vm4132, 1, 0
      %v4134 = vlaneseq
      %v4135 = vshrl.u32 %v4134, 7
      %v4136 = vsub.s32 0, %v4135
      %v4137 = vrot.slane %v4133, %v4136
      %v4138 = vlaneseq
      %v4139 = vshrl.u32 %v4138, 7
      %v4140 = vsub.s32 1, %v4139
      %v4141 = vrot.slane %v4133, %v4140
      %v4142 = vlaneseq
      %v4143 = vshrl.u32 %v4142, 7
      %v4144 = vsub.s32 2, %v4143
      %v4145 = vrot.slane %v4133, %v4144
      %v4146 = vlaneseq
      %v4147 = vshrl.u32 %v4146, 7
      %v4148 = vsub.s32 3, %v4147
      %v4149 = vrot.slane %v4133, %v4148
      %vm4150 = vcmp.eq.s32.totalorder %v4137, 1
      %vm4151 = vcmp.eq.s32.totalorder %v4141, 1
      %vm4152 = vcmp.eq.s32.totalorder %v4145, 1
      %vm4153 = vcmp.eq.s32.totalorder %v4149, 1
      %v4154 = vsel %vm4150, %v4123, 0.0
      %v4155 = vsel %vm4151, %v4124, 0.0
      %v4156 = vsel %vm4152, %v4125, 0.0
      %v4157 = vsel %vm4153, %v4126, 0.0
      %v4158 = vadd.f32 %v3932, %v4154
      %v4159 = vadd.f32 %v3933, %v4155
      %v4160 = vadd.f32 %v3934, %v4156
      %v4161 = vadd.f32 %v3935, %v4157
      %v4162 = vld [vmem:[#allocation2 + $0x4] sm:$0xff]
      %v4163 = vld [vmem:[#allocation2 + $0xc] sm:$0xff]
      %v4164 = vld [vmem:[#allocation2 + $0x14] sm:$0xf]
      %4165 = vset.pattern.permute.xlu0 16
      %4166 = vperm.xlu0 %4165, %v670
      %v4167 = vpop.permute.xlu0 %4166
      %v4172 = vcombine.high %v4162, %v4162
      %v4173 = vcombine.high %v4163, %v4163
      %4174 = vrot.lane.b32.xlu0 %v4162, 113
      %v4175 = vpop.permute.xlu0 %4174
      %4176 = vrot.lane.b32.xlu0 %v4172, 113
      %v4177 = vpop.permute.xlu0 %4176
      %4178 = vrot.lane.b32.xlu0 %v4163, 113
      %v4179 = vpop.permute.xlu0 %4178
      %4180 = vrot.lane.b32.xlu0 %v4173, 113
      %v4181 = vpop.permute.xlu0 %4180
      %4182 = vrot.lane.b32.xlu0 %v4164, 113
      %v4183 = vpop.permute.xlu0 %4182
      %vm4184 = vcmask 924672
      %v4185 = vsel %vm4184, %v4175, %v4177
      %v4186 = vsel %vm4184, %v4177, %v4179
      %v4187 = vsel %vm4184, %v4179, %v4181
      %v4188 = vsel %vm4184, %v4181, %v4183
      %v4193 = vmul.f32 %v4167, %v4185
      %v4194 = vmul.f32 %v4167, %v4186
      %v4195 = vmul.f32 %v4167, %v4187
      %v4196 = vmul.f32 %v4167, %v4188
      %v4197 = vadd.f32 %v4193, 0.0
      %v4198 = vadd.f32 %v4194, 0.0
      %v4199 = vadd.f32 %v4195, 0.0
      %v4200 = vadd.f32 %v4196, 0.0
      %v4201 = vld [vmem:[#allocation2 + $0x8] sm:$0xff]
      %v4202 = vld [vmem:[#allocation2 + $0x10] sm:$0xff]
      %v4203 = vld [vmem:[#allocation2 + $0x18] sm:$0xf]
      %4204 = vset.pattern.permute.xlu0 41
      %4205 = vperm.xlu0 %4204, %v670
      %v4206 = vpop.permute.xlu0 %4205
      %v4211 = vcombine.high %v4201, %v4201
      %v4212 = vcombine.high %v4202, %v4202
      %4213 = vrot.lane.b32.xlu0 %v4201, 113
      %v4214 = vpop.permute.xlu0 %4213
      %4215 = vrot.lane.b32.xlu0 %v4211, 113
      %v4216 = vpop.permute.xlu0 %4215
      %4217 = vrot.lane.b32.xlu0 %v4202, 113
      %v4218 = vpop.permute.xlu0 %4217
      %4219 = vrot.lane.b32.xlu0 %v4212, 113
      %v4220 = vpop.permute.xlu0 %4219
      %4221 = vrot.lane.b32.xlu0 %v4203, 113
      %v4222 = vpop.permute.xlu0 %4221
      %v4223 = vsel %vm4184, %v4214, %v4216
      %v4224 = vsel %vm4184, %v4216, %v4218
      %v4225 = vsel %vm4184, %v4218, %v4220
      %v4226 = vsel %vm4184, %v4220, %v4222
      %v4231 = vmul.f32 %v4206, %v4223
      %v4232 = vmul.f32 %v4206, %v4224
      %v4233 = vmul.f32 %v4206, %v4225
      %v4234 = vmul.f32 %v4206, %v4226
      %v4235 = vadd.f32 %v4197, %v4231
      %v4236 = vadd.f32 %v4198, %v4232
      %v4237 = vadd.f32 %v4199, %v4233
      %v4238 = vadd.f32 %v4200, %v4234
      %v4239 = vld [vmem:[#allocation2 + $0xc] sm:$0xff]
      %v4240 = vld [vmem:[#allocation2 + $0x14] sm:$0xff]
      %v4241 = vld [vmem:[#allocation2 + $0x1c] sm:$0xf]
      %4242 = vset.pattern.permute.xlu0 66
      %4243 = vperm.xlu0 %4242, %v670
      %v4244 = vpop.permute.xlu0 %4243
      %v4249 = vcombine.high %v4239, %v4239
      %v4250 = vcombine.high %v4240, %v4240
      %4251 = vrot.lane.b32.xlu0 %v4239, 113
      %v4252 = vpop.permute.xlu0 %4251
      %4253 = vrot.lane.b32.xlu0 %v4249, 113
      %v4254 = vpop.permute.xlu0 %4253
      %4255 = vrot.lane.b32.xlu0 %v4240, 113
      %v4256 = vpop.permute.xlu0 %4255
      %4257 = vrot.lane.b32.xlu0 %v4250, 113
      %v4258 = vpop.permute.xlu0 %4257
      %4259 = vrot.lane.b32.xlu0 %v4241, 113
      %v4260 = vpop.permute.xlu0 %4259
      %v4261 = vsel %vm4184, %v4252, %v4254
      %v4262 = vsel %vm4184, %v4254, %v4256
      %v4263 = vsel %vm4184, %v4256, %v4258
      %v4264 = vsel %vm4184, %v4258, %v4260
      %v4269 = vmul.f32 %v4244, %v4261
      %v4270 = vmul.f32 %v4244, %v4262
      %v4271 = vmul.f32 %v4244, %v4263
      %v4272 = vmul.f32 %v4244, %v4264
      %v4273 = vadd.f32 %v4235, %v4269
      %v4274 = vadd.f32 %v4236, %v4270
      %v4275 = vadd.f32 %v4237, %v4271
      %v4276 = vadd.f32 %v4238, %v4272
      %v4277 = vld [vmem:[#allocation2 + $0x10] sm:$0xff]
      %v4278 = vld [vmem:[#allocation2 + $0x18] sm:$0xff]
      %v4279 = vld [vmem:[#allocation2 + $0x20] sm:$0xf]
      %4280 = vset.pattern.permute.xlu0 91
      %4281 = vperm.xlu0 %4280, %v670
      %v4282 = vpop.permute.xlu0 %4281
      %v4287 = vcombine.high %v4277, %v4277
      %v4288 = vcombine.high %v4278, %v4278
      %4289 = vrot.lane.b32.xlu0 %v4277, 113
      %v4290 = vpop.permute.xlu0 %4289
      %4291 = vrot.lane.b32.xlu0 %v4287, 113
      %v4292 = vpop.permute.xlu0 %4291
      %4293 = vrot.lane.b32.xlu0 %v4278, 113
      %v4294 = vpop.permute.xlu0 %4293
      %4295 = vrot.lane.b32.xlu0 %v4288, 113
      %v4296 = vpop.permute.xlu0 %4295
      %4297 = vrot.lane.b32.xlu0 %v4279, 113
      %v4298 = vpop.permute.xlu0 %4297
      %v4299 = vsel %vm4184, %v4290, %v4292
      %v4300 = vsel %vm4184, %v4292, %v4294
      %v4301 = vsel %vm4184, %v4294, %v4296
      %v4302 = vsel %vm4184, %v4296, %v4298
      %v4307 = vmul.f32 %v4282, %v4299
      %v4308 = vmul.f32 %v4282, %v4300
      %v4309 = vmul.f32 %v4282, %v4301
      %v4310 = vmul.f32 %v4282, %v4302
      %v4311 = vadd.f32 %v4273, %v4307
      %v4312 = vadd.f32 %v4274, %v4308
      %v4313 = vadd.f32 %v4275, %v4309
      %v4314 = vadd.f32 %v4276, %v4310
      %v4315 = vld [vmem:[#allocation2 + $0x14] sm:$0xff]
      %v4316 = vld [vmem:[#allocation2 + $0x1c] sm:$0xff]
      %v4317 = vld [vmem:[#allocation2 + $0x24] sm:$0xf]
      %4318 = vset.pattern.permute.xlu0 116
      %4319 = vperm.xlu0 %4318, %v670
      %v4320 = vpop.permute.xlu0 %4319
      %v4325 = vcombine.high %v4315, %v4315
      %v4326 = vcombine.high %v4316, %v4316
      %4327 = vrot.lane.b32.xlu0 %v4315, 113
      %v4328 = vpop.permute.xlu0 %4327
      %4329 = vrot.lane.b32.xlu0 %v4325, 113
      %v4330 = vpop.permute.xlu0 %4329
      %4331 = vrot.lane.b32.xlu0 %v4316, 113
      %v4332 = vpop.permute.xlu0 %4331
      %4333 = vrot.lane.b32.xlu0 %v4326, 113
      %v4334 = vpop.permute.xlu0 %4333
      %4335 = vrot.lane.b32.xlu0 %v4317, 113
      %v4336 = vpop.permute.xlu0 %4335
      %v4337 = vsel %vm4184, %v4328, %v4330
      %v4338 = vsel %vm4184, %v4330, %v4332
      %v4339 = vsel %vm4184, %v4332, %v4334
      %v4340 = vsel %vm4184, %v4334, %v4336
      %v4345 = vmul.f32 %v4320, %v4337
      %v4346 = vmul.f32 %v4320, %v4338
      %v4347 = vmul.f32 %v4320, %v4339
      %v4348 = vmul.f32 %v4320, %v4340
      %v4349 = vadd.f32 %v4311, %v4345
      %v4350 = vadd.f32 %v4312, %v4346
      %v4351 = vadd.f32 %v4313, %v4347
      %v4352 = vadd.f32 %v4314, %v4348
      %vm4353 = vmand %vm4130, %vm1093
      %vm4354 = vmand %vm4353, %vm1095
      %v4355 = vsel %vm4354, 1, 0
      %v4356 = vlaneseq
      %v4357 = vshrl.u32 %v4356, 7
      %v4358 = vsub.s32 0, %v4357
      %v4359 = vrot.slane %v4355, %v4358
      %v4360 = vlaneseq
      %v4361 = vshrl.u32 %v4360, 7
      %v4362 = vsub.s32 1, %v4361
      %v4363 = vrot.slane %v4355, %v4362
      %v4364 = vlaneseq
      %v4365 = vshrl.u32 %v4364, 7
      %v4366 = vsub.s32 2, %v4365
      %v4367 = vrot.slane %v4355, %v4366
      %v4368 = vlaneseq
      %v4369 = vshrl.u32 %v4368, 7
      %v4370 = vsub.s32 3, %v4369
      %v4371 = vrot.slane %v4355, %v4370
      %vm4372 = vcmp.eq.s32.totalorder %v4359, 1
      %vm4373 = vcmp.eq.s32.totalorder %v4363, 1
      %vm4374 = vcmp.eq.s32.totalorder %v4367, 1
      %vm4375 = vcmp.eq.s32.totalorder %v4371, 1
      %v4376 = vsel %vm4372, %v4349, 0.0
      %v4377 = vsel %vm4373, %v4350, 0.0
      %v4378 = vsel %vm4374, %v4351, 0.0
      %v4379 = vsel %vm4375, %v4352, 0.0
      %v4380 = vadd.f32 %v4158, %v4376
      %v4381 = vadd.f32 %v4159, %v4377
      %v4382 = vadd.f32 %v4160, %v4378
      %v4383 = vadd.f32 %v4161, %v4379
      %v4384 = vld [vmem:[#allocation2 + $0x4] sm:$0xff]
      %v4385 = vld [vmem:[#allocation2 + $0xc] sm:$0xff]
      %v4386 = vld [vmem:[#allocation2 + $0x14] sm:$0xf]
      %4387 = vset.pattern.permute.xlu0 17
      %4388 = vperm.xlu0 %4387, %v670
      %v4389 = vpop.permute.xlu0 %4388
      %v4394 = vcombine.high %v4384, %v4384
      %v4395 = vcombine.high %v4385, %v4385
      %4396 = vrot.lane.b32.xlu0 %v4384, 112
      %v4397 = vpop.permute.xlu0 %4396
      %4398 = vrot.lane.b32.xlu0 %v4394, 112
      %v4399 = vpop.permute.xlu0 %4398
      %4400 = vrot.lane.b32.xlu0 %v4385, 112
      %v4401 = vpop.permute.xlu0 %4400
      %4402 = vrot.lane.b32.xlu0 %v4395, 112
      %v4403 = vpop.permute.xlu0 %4402
      %4404 = vrot.lane.b32.xlu0 %v4386, 112
      %v4405 = vpop.permute.xlu0 %4404
      %vm4406 = vcmask 916480
      %v4407 = vsel %vm4406, %v4397, %v4399
      %v4408 = vsel %vm4406, %v4399, %v4401
      %v4409 = vsel %vm4406, %v4401, %v4403
      %v4410 = vsel %vm4406, %v4403, %v4405
      %v4415 = vmul.f32 %v4389, %v4407
      %v4416 = vmul.f32 %v4389, %v4408
      %v4417 = vmul.f32 %v4389, %v4409
      %v4418 = vmul.f32 %v4389, %v4410
      %v4419 = vadd.f32 %v4415, 0.0
      %v4420 = vadd.f32 %v4416, 0.0
      %v4421 = vadd.f32 %v4417, 0.0
      %v4422 = vadd.f32 %v4418, 0.0
      %v4423 = vld [vmem:[#allocation2 + $0x8] sm:$0xff]
      %v4424 = vld [vmem:[#allocation2 + $0x10] sm:$0xff]
      %v4425 = vld [vmem:[#allocation2 + $0x18] sm:$0xf]
      %4426 = vset.pattern.permute.xlu0 42
      %4427 = vperm.xlu0 %4426, %v670
      %v4428 = vpop.permute.xlu0 %4427
      %v4433 = vcombine.high %v4423, %v4423
      %v4434 = vcombine.high %v4424, %v4424
      %4435 = vrot.lane.b32.xlu0 %v4423, 112
      %v4436 = vpop.permute.xlu0 %4435
      %4437 = vrot.lane.b32.xlu0 %v4433, 112
      %v4438 = vpop.permute.xlu0 %4437
      %4439 = vrot.lane.b32.xlu0 %v4424, 112
      %v4440 = vpop.permute.xlu0 %4439
      %4441 = vrot.lane.b32.xlu0 %v4434, 112
      %v4442 = vpop.permute.xlu0 %4441
      %4443 = vrot.lane.b32.xlu0 %v4425, 112
      %v4444 = vpop.permute.xlu0 %4443
      %v4445 = vsel %vm4406, %v4436, %v4438
      %v4446 = vsel %vm4406, %v4438, %v4440
      %v4447 = vsel %vm4406, %v4440, %v4442
      %v4448 = vsel %vm4406, %v4442, %v4444
      %v4453 = vmul.f32 %v4428, %v4445
      %v4454 = vmul.f32 %v4428, %v4446
      %v4455 = vmul.f32 %v4428, %v4447
      %v4456 = vmul.f32 %v4428, %v4448
      %v4457 = vadd.f32 %v4419, %v4453
      %v4458 = vadd.f32 %v4420, %v4454
      %v4459 = vadd.f32 %v4421, %v4455
      %v4460 = vadd.f32 %v4422, %v4456
      %v4461 = vld [vmem:[#allocation2 + $0xc] sm:$0xff]
      %v4462 = vld [vmem:[#allocation2 + $0x14] sm:$0xff]
      %v4463 = vld [vmem:[#allocation2 + $0x1c] sm:$0xf]
      %4464 = vset.pattern.permute.xlu0 67
      %4465 = vperm.xlu0 %4464, %v670
      %v4466 = vpop.permute.xlu0 %4465
      %v4471 = vcombine.high %v4461, %v4461
      %v4472 = vcombine.high %v4462, %v4462
      %4473 = vrot.lane.b32.xlu0 %v4461, 112
      %v4474 = vpop.permute.xlu0 %4473
      %4475 = vrot.lane.b32.xlu0 %v4471, 112
      %v4476 = vpop.permute.xlu0 %4475
      %4477 = vrot.lane.b32.xlu0 %v4462, 112
      %v4478 = vpop.permute.xlu0 %4477
      %4479 = vrot.lane.b32.xlu0 %v4472, 112
      %v4480 = vpop.permute.xlu0 %4479
      %4481 = vrot.lane.b32.xlu0 %v4463, 112
      %v4482 = vpop.permute.xlu0 %4481
      %v4483 = vsel %vm4406, %v4474, %v4476
      %v4484 = vsel %vm4406, %v4476, %v4478
      %v4485 = vsel %vm4406, %v4478, %v4480
      %v4486 = vsel %vm4406, %v4480, %v4482
      %v4491 = vmul.f32 %v4466, %v4483
      %v4492 = vmul.f32 %v4466, %v4484
      %v4493 = vmul.f32 %v4466, %v4485
      %v4494 = vmul.f32 %v4466, %v4486
      %v4495 = vadd.f32 %v4457, %v4491
      %v4496 = vadd.f32 %v4458, %v4492
      %v4497 = vadd.f32 %v4459, %v4493
      %v4498 = vadd.f32 %v4460, %v4494
      %v4499 = vld [vmem:[#allocation2 + $0x10] sm:$0xff]
      %v4500 = vld [vmem:[#allocation2 + $0x18] sm:$0xff]
      %v4501 = vld [vmem:[#allocation2 + $0x20] sm:$0xf]
      %4502 = vset.pattern.permute.xlu0 92
      %4503 = vperm.xlu0 %4502, %v670
      %v4504 = vpop.permute.xlu0 %4503
      %v4509 = vcombine.high %v4499, %v4499
      %v4510 = vcombine.high %v4500, %v4500
      %4511 = vrot.lane.b32.xlu0 %v4499, 112
      %v4512 = vpop.permute.xlu0 %4511
      %4513 = vrot.lane.b32.xlu0 %v4509, 112
      %v4514 = vpop.permute.xlu0 %4513
      %4515 = vrot.lane.b32.xlu0 %v4500, 112
      %v4516 = vpop.permute.xlu0 %4515
      %4517 = vrot.lane.b32.xlu0 %v4510, 112
      %v4518 = vpop.permute.xlu0 %4517
      %4519 = vrot.lane.b32.xlu0 %v4501, 112
      %v4520 = vpop.permute.xlu0 %4519
      %v4521 = vsel %vm4406, %v4512, %v4514
      %v4522 = vsel %vm4406, %v4514, %v4516
      %v4523 = vsel %vm4406, %v4516, %v4518
      %v4524 = vsel %vm4406, %v4518, %v4520
      %v4529 = vmul.f32 %v4504, %v4521
      %v4530 = vmul.f32 %v4504, %v4522
      %v4531 = vmul.f32 %v4504, %v4523
      %v4532 = vmul.f32 %v4504, %v4524
      %v4533 = vadd.f32 %v4495, %v4529
      %v4534 = vadd.f32 %v4496, %v4530
      %v4535 = vadd.f32 %v4497, %v4531
      %v4536 = vadd.f32 %v4498, %v4532
      %v4537 = vld [vmem:[#allocation2 + $0x14] sm:$0xff]
      %v4538 = vld [vmem:[#allocation2 + $0x1c] sm:$0xff]
      %v4539 = vld [vmem:[#allocation2 + $0x24] sm:$0xf]
      %4540 = vset.pattern.permute.xlu0 117
      %4541 = vperm.xlu0 %4540, %v670
      %v4542 = vpop.permute.xlu0 %4541
      %v4547 = vcombine.high %v4537, %v4537
      %v4548 = vcombine.high %v4538, %v4538
      %4549 = vrot.lane.b32.xlu0 %v4537, 112
      %v4550 = vpop.permute.xlu0 %4549
      %4551 = vrot.lane.b32.xlu0 %v4547, 112
      %v4552 = vpop.permute.xlu0 %4551
      %4553 = vrot.lane.b32.xlu0 %v4538, 112
      %v4554 = vpop.permute.xlu0 %4553
      %4555 = vrot.lane.b32.xlu0 %v4548, 112
      %v4556 = vpop.permute.xlu0 %4555
      %4557 = vrot.lane.b32.xlu0 %v4539, 112
      %v4558 = vpop.permute.xlu0 %4557
      %v4559 = vsel %vm4406, %v4550, %v4552
      %v4560 = vsel %vm4406, %v4552, %v4554
      %v4561 = vsel %vm4406, %v4554, %v4556
      %v4562 = vsel %vm4406, %v4556, %v4558
      %v4567 = vmul.f32 %v4542, %v4559
      %v4568 = vmul.f32 %v4542, %v4560
      %v4569 = vmul.f32 %v4542, %v4561
      %v4570 = vmul.f32 %v4542, %v4562
      %v4571 = vadd.f32 %v4533, %v4567
      %v4572 = vadd.f32 %v4534, %v4568
      %v4573 = vadd.f32 %v4535, %v4569
      %v4574 = vadd.f32 %v4536, %v4570
      %vm4575 = vmand %vm4130, %vm1317
      %vm4576 = vmand %vm4575, %vm1319
      %v4577 = vsel %vm4576, 1, 0
      %v4578 = vlaneseq
      %v4579 = vshrl.u32 %v4578, 7
      %v4580 = vsub.s32 0, %v4579
      %v4581 = vrot.slane %v4577, %v4580
      %v4582 = vlaneseq
      %v4583 = vshrl.u32 %v4582, 7
      %v4584 = vsub.s32 1, %v4583
      %v4585 = vrot.slane %v4577, %v4584
      %v4586 = vlaneseq
      %v4587 = vshrl.u32 %v4586, 7
      %v4588 = vsub.s32 2, %v4587
      %v4589 = vrot.slane %v4577, %v4588
      %v4590 = vlaneseq
      %v4591 = vshrl.u32 %v4590, 7
      %v4592 = vsub.s32 3, %v4591
      %v4593 = vrot.slane %v4577, %v4592
      %vm4594 = vcmp.eq.s32.totalorder %v4581, 1
      %vm4595 = vcmp.eq.s32.totalorder %v4585, 1
      %vm4596 = vcmp.eq.s32.totalorder %v4589, 1
      %vm4597 = vcmp.eq.s32.totalorder %v4593, 1
      %v4598 = vsel %vm4594, %v4571, 0.0
      %v4599 = vsel %vm4595, %v4572, 0.0
      %v4600 = vsel %vm4596, %v4573, 0.0
      %v4601 = vsel %vm4597, %v4574, 0.0
      %v4602 = vadd.f32 %v4380, %v4598
      %v4603 = vadd.f32 %v4381, %v4599
      %v4604 = vadd.f32 %v4382, %v4600
      %v4605 = vadd.f32 %v4383, %v4601
      %v4606 = vld [vmem:[#allocation2 + $0x4] sm:$0xff]
      %v4607 = vld [vmem:[#allocation2 + $0xc] sm:$0xff]
      %v4608 = vld [vmem:[#allocation2 + $0x14] sm:$0xf]
      %4609 = vset.pattern.permute.xlu0 18
      %4610 = vperm.xlu0 %4609, %v670
      %v4611 = vpop.permute.xlu0 %4610
      %v4616 = vcombine.high %v4606, %v4606
      %v4617 = vcombine.high %v4607, %v4607
      %4618 = vrot.lane.b32.xlu0 %v4606, 111
      %v4619 = vpop.permute.xlu0 %4618
      %4620 = vrot.lane.b32.xlu0 %v4616, 111
      %v4621 = vpop.permute.xlu0 %4620
      %4622 = vrot.lane.b32.xlu0 %v4607, 111
      %v4623 = vpop.permute.xlu0 %4622
      %4624 = vrot.lane.b32.xlu0 %v4617, 111
      %v4625 = vpop.permute.xlu0 %4624
      %4626 = vrot.lane.b32.xlu0 %v4608, 111
      %v4627 = vpop.permute.xlu0 %4626
      %vm4628 = vcmask 908288
      %v4629 = vsel %vm4628, %v4619, %v4621
      %v4630 = vsel %vm4628, %v4621, %v4623
      %v4631 = vsel %vm4628, %v4623, %v4625
      %v4632 = vsel %vm4628, %v4625, %v4627
      %v4637 = vmul.f32 %v4611, %v4629
      %v4638 = vmul.f32 %v4611, %v4630
      %v4639 = vmul.f32 %v4611, %v4631
      %v4640 = vmul.f32 %v4611, %v4632
      %v4641 = vadd.f32 %v4637, 0.0
      %v4642 = vadd.f32 %v4638, 0.0
      %v4643 = vadd.f32 %v4639, 0.0
      %v4644 = vadd.f32 %v4640, 0.0
      %v4645 = vld [vmem:[#allocation2 + $0x8] sm:$0xff]
      %v4646 = vld [vmem:[#allocation2 + $0x10] sm:$0xff]
      %v4647 = vld [vmem:[#allocation2 + $0x18] sm:$0xf]
      %4648 = vset.pattern.permute.xlu0 43
      %4649 = vperm.xlu0 %4648, %v670
      %v4650 = vpop.permute.xlu0 %4649
      %v4655 = vcombine.high %v4645, %v4645
      %v4656 = vcombine.high %v4646, %v4646
      %4657 = vrot.lane.b32.xlu0 %v4645, 111
      %v4658 = vpop.permute.xlu0 %4657
      %4659 = vrot.lane.b32.xlu0 %v4655, 111
      %v4660 = vpop.permute.xlu0 %4659
      %4661 = vrot.lane.b32.xlu0 %v4646, 111
      %v4662 = vpop.permute.xlu0 %4661
      %4663 = vrot.lane.b32.xlu0 %v4656, 111
      %v4664 = vpop.permute.xlu0 %4663
      %4665 = vrot.lane.b32.xlu0 %v4647, 111
      %v4666 = vpop.permute.xlu0 %4665
      %v4667 = vsel %vm4628, %v4658, %v4660
      %v4668 = vsel %vm4628, %v4660, %v4662
      %v4669 = vsel %vm4628, %v4662, %v4664
      %v4670 = vsel %vm4628, %v4664, %v4666
      %v4675 = vmul.f32 %v4650, %v4667
      %v4676 = vmul.f32 %v4650, %v4668
      %v4677 = vmul.f32 %v4650, %v4669
      %v4678 = vmul.f32 %v4650, %v4670
      %v4679 = vadd.f32 %v4641, %v4675
      %v4680 = vadd.f32 %v4642, %v4676
      %v4681 = vadd.f32 %v4643, %v4677
      %v4682 = vadd.f32 %v4644, %v4678
      %v4683 = vld [vmem:[#allocation2 + $0xc] sm:$0xff]
      %v4684 = vld [vmem:[#allocation2 + $0x14] sm:$0xff]
      %v4685 = vld [vmem:[#allocation2 + $0x1c] sm:$0xf]
      %4686 = vset.pattern.permute.xlu0 68
      %4687 = vperm.xlu0 %4686, %v670
      %v4688 = vpop.permute.xlu0 %4687
      %v4693 = vcombine.high %v4683, %v4683
      %v4694 = vcombine.high %v4684, %v4684
      %4695 = vrot.lane.b32.xlu0 %v4683, 111
      %v4696 = vpop.permute.xlu0 %4695
      %4697 = vrot.lane.b32.xlu0 %v4693, 111
      %v4698 = vpop.permute.xlu0 %4697
      %4699 = vrot.lane.b32.xlu0 %v4684, 111
      %v4700 = vpop.permute.xlu0 %4699
      %4701 = vrot.lane.b32.xlu0 %v4694, 111
      %v4702 = vpop.permute.xlu0 %4701
      %4703 = vrot.lane.b32.xlu0 %v4685, 111
      %v4704 = vpop.permute.xlu0 %4703
      %v4705 = vsel %vm4628, %v4696, %v4698
      %v4706 = vsel %vm4628, %v4698, %v4700
      %v4707 = vsel %vm4628, %v4700, %v4702
      %v4708 = vsel %vm4628, %v4702, %v4704
      %v4713 = vmul.f32 %v4688, %v4705
      %v4714 = vmul.f32 %v4688, %v4706
      %v4715 = vmul.f32 %v4688, %v4707
      %v4716 = vmul.f32 %v4688, %v4708
      %v4717 = vadd.f32 %v4679, %v4713
      %v4718 = vadd.f32 %v4680, %v4714
      %v4719 = vadd.f32 %v4681, %v4715
      %v4720 = vadd.f32 %v4682, %v4716
      %v4721 = vld [vmem:[#allocation2 + $0x10] sm:$0xff]
      %v4722 = vld [vmem:[#allocation2 + $0x18] sm:$0xff]
      %v4723 = vld [vmem:[#allocation2 + $0x20] sm:$0xf]
      %4724 = vset.pattern.permute.xlu0 93
      %4725 = vperm.xlu0 %4724, %v670
      %v4726 = vpop.permute.xlu0 %4725
      %v4731 = vcombine.high %v4721, %v4721
      %v4732 = vcombine.high %v4722, %v4722
      %4733 = vrot.lane.b32.xlu0 %v4721, 111
      %v4734 = vpop.permute.xlu0 %4733
      %4735 = vrot.lane.b32.xlu0 %v4731, 111
      %v4736 = vpop.permute.xlu0 %4735
      %4737 = vrot.lane.b32.xlu0 %v4722, 111
      %v4738 = vpop.permute.xlu0 %4737
      %4739 = vrot.lane.b32.xlu0 %v4732, 111
      %v4740 = vpop.permute.xlu0 %4739
      %4741 = vrot.lane.b32.xlu0 %v4723, 111
      %v4742 = vpop.permute.xlu0 %4741
      %v4743 = vsel %vm4628, %v4734, %v4736
      %v4744 = vsel %vm4628, %v4736, %v4738
      %v4745 = vsel %vm4628, %v4738, %v4740
      %v4746 = vsel %vm4628, %v4740, %v4742
      %v4751 = vmul.f32 %v4726, %v4743
      %v4752 = vmul.f32 %v4726, %v4744
      %v4753 = vmul.f32 %v4726, %v4745
      %v4754 = vmul.f32 %v4726, %v4746
      %v4755 = vadd.f32 %v4717, %v4751
      %v4756 = vadd.f32 %v4718, %v4752
      %v4757 = vadd.f32 %v4719, %v4753
      %v4758 = vadd.f32 %v4720, %v4754
      %v4759 = vld [vmem:[#allocation2 + $0x14] sm:$0xff]
      %v4760 = vld [vmem:[#allocation2 + $0x1c] sm:$0xff]
      %v4761 = vld [vmem:[#allocation2 + $0x24] sm:$0xf]
      %4762 = vset.pattern.permute.xlu0 118
      %4763 = vperm.xlu0 %4762, %v670
      %v4764 = vpop.permute.xlu0 %4763
      %v4769 = vcombine.high %v4759, %v4759
      %v4770 = vcombine.high %v4760, %v4760
      %4771 = vrot.lane.b32.xlu0 %v4759, 111
      %v4772 = vpop.permute.xlu0 %4771
      %4773 = vrot.lane.b32.xlu0 %v4769, 111
      %v4774 = vpop.permute.xlu0 %4773
      %4775 = vrot.lane.b32.xlu0 %v4760, 111
      %v4776 = vpop.permute.xlu0 %4775
      %4777 = vrot.lane.b32.xlu0 %v4770, 111
      %v4778 = vpop.permute.xlu0 %4777
      %4779 = vrot.lane.b32.xlu0 %v4761, 111
      %v4780 = vpop.permute.xlu0 %4779
      %v4781 = vsel %vm4628, %v4772, %v4774
      %v4782 = vsel %vm4628, %v4774, %v4776
      %v4783 = vsel %vm4628, %v4776, %v4778
      %v4784 = vsel %vm4628, %v4778, %v4780
      %v4789 = vmul.f32 %v4764, %v4781
      %v4790 = vmul.f32 %v4764, %v4782
      %v4791 = vmul.f32 %v4764, %v4783
      %v4792 = vmul.f32 %v4764, %v4784
      %v4793 = vadd.f32 %v4755, %v4789
      %v4794 = vadd.f32 %v4756, %v4790
      %v4795 = vadd.f32 %v4757, %v4791
      %v4796 = vadd.f32 %v4758, %v4792
      %vm4797 = vmand %vm4130, %vm1542
      %vm4798 = vmand %vm4797, %vm1544
      %v4799 = vsel %vm4798, 1, 0
      %v4800 = vlaneseq
      %v4801 = vshrl.u32 %v4800, 7
      %v4802 = vsub.s32 0, %v4801
      %v4803 = vrot.slane %v4799, %v4802
      %v4804 = vlaneseq
      %v4805 = vshrl.u32 %v4804, 7
      %v4806 = vsub.s32 1, %v4805
      %v4807 = vrot.slane %v4799, %v4806
      %v4808 = vlaneseq
      %v4809 = vshrl.u32 %v4808, 7
      %v4810 = vsub.s32 2, %v4809
      %v4811 = vrot.slane %v4799, %v4810
      %v4812 = vlaneseq
      %v4813 = vshrl.u32 %v4812, 7
      %v4814 = vsub.s32 3, %v4813
      %v4815 = vrot.slane %v4799, %v4814
      %vm4816 = vcmp.eq.s32.totalorder %v4803, 1
      %vm4817 = vcmp.eq.s32.totalorder %v4807, 1
      %vm4818 = vcmp.eq.s32.totalorder %v4811, 1
      %vm4819 = vcmp.eq.s32.totalorder %v4815, 1
      %v4820 = vsel %vm4816, %v4793, 0.0
      %v4821 = vsel %vm4817, %v4794, 0.0
      %v4822 = vsel %vm4818, %v4795, 0.0
      %v4823 = vsel %vm4819, %v4796, 0.0
      %v4824 = vadd.f32 %v4602, %v4820
      %v4825 = vadd.f32 %v4603, %v4821
      %v4826 = vadd.f32 %v4604, %v4822
      %v4827 = vadd.f32 %v4605, %v4823
      %v4828 = vld [vmem:[#allocation2 + $0x4] sm:$0xff]
      %v4829 = vld [vmem:[#allocation2 + $0xc] sm:$0xff]
      %v4830 = vld [vmem:[#allocation2 + $0x14] sm:$0xf]
      %4831 = vset.pattern.permute.xlu0 19
      %4832 = vperm.xlu0 %4831, %v670
      %v4833 = vpop.permute.xlu0 %4832
      %v4838 = vcombine.high %v4828, %v4828
      %v4839 = vcombine.high %v4829, %v4829
      %4840 = vrot.lane.b32.xlu0 %v4828, 110
      %v4841 = vpop.permute.xlu0 %4840
      %4842 = vrot.lane.b32.xlu0 %v4838, 110
      %v4843 = vpop.permute.xlu0 %4842
      %4844 = vrot.lane.b32.xlu0 %v4829, 110
      %v4845 = vpop.permute.xlu0 %4844
      %4846 = vrot.lane.b32.xlu0 %v4839, 110
      %v4847 = vpop.permute.xlu0 %4846
      %4848 = vrot.lane.b32.xlu0 %v4830, 110
      %v4849 = vpop.permute.xlu0 %4848
      %vm4850 = vcmask 900096
      %v4851 = vsel %vm4850, %v4841, %v4843
      %v4852 = vsel %vm4850, %v4843, %v4845
      %v4853 = vsel %vm4850, %v4845, %v4847
      %v4854 = vsel %vm4850, %v4847, %v4849
      %v4859 = vmul.f32 %v4833, %v4851
      %v4860 = vmul.f32 %v4833, %v4852
      %v4861 = vmul.f32 %v4833, %v4853
      %v4862 = vmul.f32 %v4833, %v4854
      %v4863 = vadd.f32 %v4859, 0.0
      %v4864 = vadd.f32 %v4860, 0.0
      %v4865 = vadd.f32 %v4861, 0.0
      %v4866 = vadd.f32 %v4862, 0.0
      %v4867 = vld [vmem:[#allocation2 + $0x8] sm:$0xff]
      %v4868 = vld [vmem:[#allocation2 + $0x10] sm:$0xff]
      %v4869 = vld [vmem:[#allocation2 + $0x18] sm:$0xf]
      %4870 = vset.pattern.permute.xlu0 44
      %4871 = vperm.xlu0 %4870, %v670
      %v4872 = vpop.permute.xlu0 %4871
      %v4877 = vcombine.high %v4867, %v4867
      %v4878 = vcombine.high %v4868, %v4868
      %4879 = vrot.lane.b32.xlu0 %v4867, 110
      %v4880 = vpop.permute.xlu0 %4879
      %4881 = vrot.lane.b32.xlu0 %v4877, 110
      %v4882 = vpop.permute.xlu0 %4881
      %4883 = vrot.lane.b32.xlu0 %v4868, 110
      %v4884 = vpop.permute.xlu0 %4883
      %4885 = vrot.lane.b32.xlu0 %v4878, 110
      %v4886 = vpop.permute.xlu0 %4885
      %4887 = vrot.lane.b32.xlu0 %v4869, 110
      %v4888 = vpop.permute.xlu0 %4887
      %v4889 = vsel %vm4850, %v4880, %v4882
      %v4890 = vsel %vm4850, %v4882, %v4884
      %v4891 = vsel %vm4850, %v4884, %v4886
      %v4892 = vsel %vm4850, %v4886, %v4888
      %v4897 = vmul.f32 %v4872, %v4889
      %v4898 = vmul.f32 %v4872, %v4890
      %v4899 = vmul.f32 %v4872, %v4891
      %v4900 = vmul.f32 %v4872, %v4892
      %v4901 = vadd.f32 %v4863, %v4897
      %v4902 = vadd.f32 %v4864, %v4898
      %v4903 = vadd.f32 %v4865, %v4899
      %v4904 = vadd.f32 %v4866, %v4900
      %v4905 = vld [vmem:[#allocation2 + $0xc] sm:$0xff]
      %v4906 = vld [vmem:[#allocation2 + $0x14] sm:$0xff]
      %v4907 = vld [vmem:[#allocation2 + $0x1c] sm:$0xf]
      %4908 = vset.pattern.permute.xlu0 69
      %4909 = vperm.xlu0 %4908, %v670
      %v4910 = vpop.permute.xlu0 %4909
      %v4915 = vcombine.high %v4905, %v4905
      %v4916 = vcombine.high %v4906, %v4906
      %4917 = vrot.lane.b32.xlu0 %v4905, 110
      %v4918 = vpop.permute.xlu0 %4917
      %4919 = vrot.lane.b32.xlu0 %v4915, 110
      %v4920 = vpop.permute.xlu0 %4919
      %4921 = vrot.lane.b32.xlu0 %v4906, 110
      %v4922 = vpop.permute.xlu0 %4921
      %4923 = vrot.lane.b32.xlu0 %v4916, 110
      %v4924 = vpop.permute.xlu0 %4923
      %4925 = vrot.lane.b32.xlu0 %v4907, 110
      %v4926 = vpop.permute.xlu0 %4925
      %v4927 = vsel %vm4850, %v4918, %v4920
      %v4928 = vsel %vm4850, %v4920, %v4922
      %v4929 = vsel %vm4850, %v4922, %v4924
      %v4930 = vsel %vm4850, %v4924, %v4926
      %v4935 = vmul.f32 %v4910, %v4927
      %v4936 = vmul.f32 %v4910, %v4928
      %v4937 = vmul.f32 %v4910, %v4929
      %v4938 = vmul.f32 %v4910, %v4930
      %v4939 = vadd.f32 %v4901, %v4935
      %v4940 = vadd.f32 %v4902, %v4936
      %v4941 = vadd.f32 %v4903, %v4937
      %v4942 = vadd.f32 %v4904, %v4938
      %v4943 = vld [vmem:[#allocation2 + $0x10] sm:$0xff]
      %v4944 = vld [vmem:[#allocation2 + $0x18] sm:$0xff]
      %v4945 = vld [vmem:[#allocation2 + $0x20] sm:$0xf]
      %4946 = vset.pattern.permute.xlu0 94
      %4947 = vperm.xlu0 %4946, %v670
      %v4948 = vpop.permute.xlu0 %4947
      %v4953 = vcombine.high %v4943, %v4943
      %v4954 = vcombine.high %v4944, %v4944
      %4955 = vrot.lane.b32.xlu0 %v4943, 110
      %v4956 = vpop.permute.xlu0 %4955
      %4957 = vrot.lane.b32.xlu0 %v4953, 110
      %v4958 = vpop.permute.xlu0 %4957
      %4959 = vrot.lane.b32.xlu0 %v4944, 110
      %v4960 = vpop.permute.xlu0 %4959
      %4961 = vrot.lane.b32.xlu0 %v4954, 110
      %v4962 = vpop.permute.xlu0 %4961
      %4963 = vrot.lane.b32.xlu0 %v4945, 110
      %v4964 = vpop.permute.xlu0 %4963
      %v4965 = vsel %vm4850, %v4956, %v4958
      %v4966 = vsel %vm4850, %v4958, %v4960
      %v4967 = vsel %vm4850, %v4960, %v4962
      %v4968 = vsel %vm4850, %v4962, %v4964
      %v4973 = vmul.f32 %v4948, %v4965
      %v4974 = vmul.f32 %v4948, %v4966
      %v4975 = vmul.f32 %v4948, %v4967
      %v4976 = vmul.f32 %v4948, %v4968
      %v4977 = vadd.f32 %v4939, %v4973
      %v4978 = vadd.f32 %v4940, %v4974
      %v4979 = vadd.f32 %v4941, %v4975
      %v4980 = vadd.f32 %v4942, %v4976
      %v4981 = vld [vmem:[#allocation2 + $0x14] sm:$0xff]
      %v4982 = vld [vmem:[#allocation2 + $0x1c] sm:$0xff]
      %v4983 = vld [vmem:[#allocation2 + $0x24] sm:$0xf]
      %4984 = vset.pattern.permute.xlu0 119
      %4985 = vperm.xlu0 %4984, %v670
      %v4986 = vpop.permute.xlu0 %4985
      %v4991 = vcombine.high %v4981, %v4981
      %v4992 = vcombine.high %v4982, %v4982
      %4993 = vrot.lane.b32.xlu0 %v4981, 110
      %v4994 = vpop.permute.xlu0 %4993
      %4995 = vrot.lane.b32.xlu0 %v4991, 110
      %v4996 = vpop.permute.xlu0 %4995
      %4997 = vrot.lane.b32.xlu0 %v4982, 110
      %v4998 = vpop.permute.xlu0 %4997
      %4999 = vrot.lane.b32.xlu0 %v4992, 110
      %v5000 = vpop.permute.xlu0 %4999
      %5001 = vrot.lane.b32.xlu0 %v4983, 110
      %v5002 = vpop.permute.xlu0 %5001
      %v5003 = vsel %vm4850, %v4994, %v4996
      %v5004 = vsel %vm4850, %v4996, %v4998
      %v5005 = vsel %vm4850, %v4998, %v5000
      %v5006 = vsel %vm4850, %v5000, %v5002
      %v5011 = vmul.f32 %v4986, %v5003
      %v5012 = vmul.f32 %v4986, %v5004
      %v5013 = vmul.f32 %v4986, %v5005
      %v5014 = vmul.f32 %v4986, %v5006
      %v5015 = vadd.f32 %v4977, %v5011
      %v5016 = vadd.f32 %v4978, %v5012
      %v5017 = vadd.f32 %v4979, %v5013
      %v5018 = vadd.f32 %v4980, %v5014
      %vm5019 = vmand %vm4130, %vm1767
      %vm5020 = vmand %vm5019, %vm1769
      %v5021 = vsel %vm5020, 1, 0
      %v5022 = vlaneseq
      %v5023 = vshrl.u32 %v5022, 7
      %v5024 = vsub.s32 0, %v5023
      %v5025 = vrot.slane %v5021, %v5024
      %v5026 = vlaneseq
      %v5027 = vshrl.u32 %v5026, 7
      %v5028 = vsub.s32 1, %v5027
      %v5029 = vrot.slane %v5021, %v5028
      %v5030 = vlaneseq
      %v5031 = vshrl.u32 %v5030, 7
      %v5032 = vsub.s32 2, %v5031
      %v5033 = vrot.slane %v5021, %v5032
      %v5034 = vlaneseq
      %v5035 = vshrl.u32 %v5034, 7
      %v5036 = vsub.s32 3, %v5035
      %v5037 = vrot.slane %v5021, %v5036
      %vm5038 = vcmp.eq.s32.totalorder %v5025, 1
      %vm5039 = vcmp.eq.s32.totalorder %v5029, 1
      %vm5040 = vcmp.eq.s32.totalorder %v5033, 1
      %vm5041 = vcmp.eq.s32.totalorder %v5037, 1
      %v5042 = vsel %vm5038, %v5015, 0.0
      %v5043 = vsel %vm5039, %v5016, 0.0
      %v5044 = vsel %vm5040, %v5017, 0.0
      %v5045 = vsel %vm5041, %v5018, 0.0
      %v5046 = vadd.f32 %v4824, %v5042
      %v5047 = vadd.f32 %v4825, %v5043
      %v5048 = vadd.f32 %v4826, %v5044
      %v5049 = vadd.f32 %v4827, %v5045
      %v5050 = vld [vmem:[#allocation2 + $0x4] sm:$0xff]
      %v5051 = vld [vmem:[#allocation2 + $0xc] sm:$0xff]
      %v5052 = vld [vmem:[#allocation2 + $0x14] sm:$0xf]
      %5053 = vset.pattern.permute.xlu0 20
      %5054 = vperm.xlu0 %5053, %v670
      %v5055 = vpop.permute.xlu0 %5054
      %v5060 = vcombine.high %v5050, %v5050
      %v5061 = vcombine.high %v5051, %v5051
      %5062 = vrot.lane.b32.xlu0 %v5050, 98
      %v5063 = vpop.permute.xlu0 %5062
      %5064 = vrot.lane.b32.xlu0 %v5060, 98
      %v5065 = vpop.permute.xlu0 %5064
      %5066 = vrot.lane.b32.xlu0 %v5051, 98
      %v5067 = vpop.permute.xlu0 %5066
      %5068 = vrot.lane.b32.xlu0 %v5061, 98
      %v5069 = vpop.permute.xlu0 %5068
      %5070 = vrot.lane.b32.xlu0 %v5052, 98
      %v5071 = vpop.permute.xlu0 %5070
      %vm5072 = vcmask 801792
      %v5073 = vsel %vm5072, %v5063, %v5065
      %v5074 = vsel %vm5072, %v5065, %v5067
      %v5075 = vsel %vm5072, %v5067, %v5069
      %v5076 = vsel %vm5072, %v5069, %v5071
      %v5081 = vmul.f32 %v5055, %v5073
      %v5082 = vmul.f32 %v5055, %v5074
      %v5083 = vmul.f32 %v5055, %v5075
      %v5084 = vmul.f32 %v5055, %v5076
      %v5085 = vadd.f32 %v5081, 0.0
      %v5086 = vadd.f32 %v5082, 0.0
      %v5087 = vadd.f32 %v5083, 0.0
      %v5088 = vadd.f32 %v5084, 0.0
      %v5089 = vld [vmem:[#allocation2 + $0x8] sm:$0xff]
      %v5090 = vld [vmem:[#allocation2 + $0x10] sm:$0xff]
      %v5091 = vld [vmem:[#allocation2 + $0x18] sm:$0xf]
      %5092 = vset.pattern.permute.xlu0 45
      %5093 = vperm.xlu0 %5092, %v670
      %v5094 = vpop.permute.xlu0 %5093
      %v5099 = vcombine.high %v5089, %v5089
      %v5100 = vcombine.high %v5090, %v5090
      %5101 = vrot.lane.b32.xlu0 %v5089, 98
      %v5102 = vpop.permute.xlu0 %5101
      %5103 = vrot.lane.b32.xlu0 %v5099, 98
      %v5104 = vpop.permute.xlu0 %5103
      %5105 = vrot.lane.b32.xlu0 %v5090, 98
      %v5106 = vpop.permute.xlu0 %5105
      %5107 = vrot.lane.b32.xlu0 %v5100, 98
      %v5108 = vpop.permute.xlu0 %5107
      %5109 = vrot.lane.b32.xlu0 %v5091, 98
      %v5110 = vpop.permute.xlu0 %5109
      %v5111 = vsel %vm5072, %v5102, %v5104
      %v5112 = vsel %vm5072, %v5104, %v5106
      %v5113 = vsel %vm5072, %v5106, %v5108
      %v5114 = vsel %vm5072, %v5108, %v5110
      %v5119 = vmul.f32 %v5094, %v5111
      %v5120 = vmul.f32 %v5094, %v5112
      %v5121 = vmul.f32 %v5094, %v5113
      %v5122 = vmul.f32 %v5094, %v5114
      %v5123 = vadd.f32 %v5085, %v5119
      %v5124 = vadd.f32 %v5086, %v5120
      %v5125 = vadd.f32 %v5087, %v5121
      %v5126 = vadd.f32 %v5088, %v5122
      %v5127 = vld [vmem:[#allocation2 + $0xc] sm:$0xff]
      %v5128 = vld [vmem:[#allocation2 + $0x14] sm:$0xff]
      %v5129 = vld [vmem:[#allocation2 + $0x1c] sm:$0xf]
      %5130 = vset.pattern.permute.xlu0 70
      %5131 = vperm.xlu0 %5130, %v670
      %v5132 = vpop.permute.xlu0 %5131
      %v5137 = vcombine.high %v5127, %v5127
      %v5138 = vcombine.high %v5128, %v5128
      %5139 = vrot.lane.b32.xlu0 %v5127, 98
      %v5140 = vpop.permute.xlu0 %5139
      %5141 = vrot.lane.b32.xlu0 %v5137, 98
      %v5142 = vpop.permute.xlu0 %5141
      %5143 = vrot.lane.b32.xlu0 %v5128, 98
      %v5144 = vpop.permute.xlu0 %5143
      %5145 = vrot.lane.b32.xlu0 %v5138, 98
      %v5146 = vpop.permute.xlu0 %5145
      %5147 = vrot.lane.b32.xlu0 %v5129, 98
      %v5148 = vpop.permute.xlu0 %5147
      %v5149 = vsel %vm5072, %v5140, %v5142
      %v5150 = vsel %vm5072, %v5142, %v5144
      %v5151 = vsel %vm5072, %v5144, %v5146
      %v5152 = vsel %vm5072, %v5146, %v5148
      %v5157 = vmul.f32 %v5132, %v5149
      %v5158 = vmul.f32 %v5132, %v5150
      %v5159 = vmul.f32 %v5132, %v5151
      %v5160 = vmul.f32 %v5132, %v5152
      %v5161 = vadd.f32 %v5123, %v5157
      %v5162 = vadd.f32 %v5124, %v5158
      %v5163 = vadd.f32 %v5125, %v5159
      %v5164 = vadd.f32 %v5126, %v5160
      %v5165 = vld [vmem:[#allocation2 + $0x10] sm:$0xff]
      %v5166 = vld [vmem:[#allocation2 + $0x18] sm:$0xff]
      %v5167 = vld [vmem:[#allocation2 + $0x20] sm:$0xf]
      %5168 = vset.pattern.permute.xlu0 95
      %5169 = vperm.xlu0 %5168, %v670
      %v5170 = vpop.permute.xlu0 %5169
      %v5175 = vcombine.high %v5165, %v5165
      %v5176 = vcombine.high %v5166, %v5166
      %5177 = vrot.lane.b32.xlu0 %v5165, 98
      %v5178 = vpop.permute.xlu0 %5177
      %5179 = vrot.lane.b32.xlu0 %v5175, 98
      %v5180 = vpop.permute.xlu0 %5179
      %5181 = vrot.lane.b32.xlu0 %v5166, 98
      %v5182 = vpop.permute.xlu0 %5181
      %5183 = vrot.lane.b32.xlu0 %v5176, 98
      %v5184 = vpop.permute.xlu0 %5183
      %5185 = vrot.lane.b32.xlu0 %v5167, 98
      %v5186 = vpop.permute.xlu0 %5185
      %v5187 = vsel %vm5072, %v5178, %v5180
      %v5188 = vsel %vm5072, %v5180, %v5182
      %v5189 = vsel %vm5072, %v5182, %v5184
      %v5190 = vsel %vm5072, %v5184, %v5186
      %v5195 = vmul.f32 %v5170, %v5187
      %v5196 = vmul.f32 %v5170, %v5188
      %v5197 = vmul.f32 %v5170, %v5189
      %v5198 = vmul.f32 %v5170, %v5190
      %v5199 = vadd.f32 %v5161, %v5195
      %v5200 = vadd.f32 %v5162, %v5196
      %v5201 = vadd.f32 %v5163, %v5197
      %v5202 = vadd.f32 %v5164, %v5198
      %v5203 = vld [vmem:[#allocation2 + $0x14] sm:$0xff]
      %v5204 = vld [vmem:[#allocation2 + $0x1c] sm:$0xff]
      %v5205 = vld [vmem:[#allocation2 + $0x24] sm:$0xf]
      %5206 = vset.pattern.permute.xlu0 120
      %5207 = vperm.xlu0 %5206, %v670
      %v5208 = vpop.permute.xlu0 %5207
      %v5213 = vcombine.high %v5203, %v5203
      %v5214 = vcombine.high %v5204, %v5204
      %5215 = vrot.lane.b32.xlu0 %v5203, 98
      %v5216 = vpop.permute.xlu0 %5215
      %5217 = vrot.lane.b32.xlu0 %v5213, 98
      %v5218 = vpop.permute.xlu0 %5217
      %5219 = vrot.lane.b32.xlu0 %v5204, 98
      %v5220 = vpop.permute.xlu0 %5219
      %5221 = vrot.lane.b32.xlu0 %v5214, 98
      %v5222 = vpop.permute.xlu0 %5221
      %5223 = vrot.lane.b32.xlu0 %v5205, 98
      %v5224 = vpop.permute.xlu0 %5223
      %v5225 = vsel %vm5072, %v5216, %v5218
      %v5226 = vsel %vm5072, %v5218, %v5220
      %v5227 = vsel %vm5072, %v5220, %v5222
      %v5228 = vsel %vm5072, %v5222, %v5224
      %v5233 = vmul.f32 %v5208, %v5225
      %v5234 = vmul.f32 %v5208, %v5226
      %v5235 = vmul.f32 %v5208, %v5227
      %v5236 = vmul.f32 %v5208, %v5228
      %v5237 = vadd.f32 %v5199, %v5233
      %v5238 = vadd.f32 %v5200, %v5234
      %v5239 = vadd.f32 %v5201, %v5235
      %v5240 = vadd.f32 %v5202, %v5236
      %v5241 = vadd.s32 %v668, 2
      %vm5242 = vcmp.ge.s32.totalorder %v5241, 0
      %vm5243 = vcmp.lt.s32.totalorder %v5241, 8
      %vm5244 = vmand %vm5242, %vm5243
      %vm5245 = vmand %vm5244, %vm868
      %vm5246 = vmand %vm5245, %vm870
      %v5247 = vsel %vm5246, 1, 0
      %v5248 = vlaneseq
      %v5249 = vshrl.u32 %v5248, 7
      %v5250 = vsub.s32 0, %v5249
      %v5251 = vrot.slane %v5247, %v5250
      %v5252 = vlaneseq
      %v5253 = vshrl.u32 %v5252, 7
      %v5254 = vsub.s32 1, %v5253
      %v5255 = vrot.slane %v5247, %v5254
      %v5256 = vlaneseq
      %v5257 = vshrl.u32 %v5256, 7
      %v5258 = vsub.s32 2, %v5257
      %v5259 = vrot.slane %v5247, %v5258
      %v5260 = vlaneseq
      %v5261 = vshrl.u32 %v5260, 7
      %v5262 = vsub.s32 3, %v5261
      %v5263 = vrot.slane %v5247, %v5262
      %vm5264 = vcmp.eq.s32.totalorder %v5251, 1
      %vm5265 = vcmp.eq.s32.totalorder %v5255, 1
      %vm5266 = vcmp.eq.s32.totalorder %v5259, 1
      %vm5267 = vcmp.eq.s32.totalorder %v5263, 1
      %v5268 = vsel %vm5264, %v5237, 0.0
      %v5269 = vsel %vm5265, %v5238, 0.0
      %v5270 = vsel %vm5266, %v5239, 0.0
      %v5271 = vsel %vm5267, %v5240, 0.0
      %v5272 = vadd.f32 %v5046, %v5268
      %v5273 = vadd.f32 %v5047, %v5269
      %v5274 = vadd.f32 %v5048, %v5270
      %v5275 = vadd.f32 %v5049, %v5271
      %v5276 = vld [vmem:[#allocation2 + $0x4] sm:$0xff]
      %v5277 = vld [vmem:[#allocation2 + $0xc] sm:$0xff]
      %v5278 = vld [vmem:[#allocation2 + $0x14] sm:$0xf]
      %5279 = vset.pattern.permute.xlu0 21
      %5280 = vperm.xlu0 %5279, %v670
      %v5281 = vpop.permute.xlu0 %5280
      %v5286 = vcombine.high %v5276, %v5276
      %v5287 = vcombine.high %v5277, %v5277
      %5288 = vrot.lane.b32.xlu0 %v5276, 97
      %v5289 = vpop.permute.xlu0 %5288
      %5290 = vrot.lane.b32.xlu0 %v5286, 97
      %v5291 = vpop.permute.xlu0 %5290
      %5292 = vrot.lane.b32.xlu0 %v5277, 97
      %v5293 = vpop.permute.xlu0 %5292
      %5294 = vrot.lane.b32.xlu0 %v5287, 97
      %v5295 = vpop.permute.xlu0 %5294
      %5296 = vrot.lane.b32.xlu0 %v5278, 97
      %v5297 = vpop.permute.xlu0 %5296
      %vm5298 = vcmask 793600
      %v5299 = vsel %vm5298, %v5289, %v5291
      %v5300 = vsel %vm5298, %v5291, %v5293
      %v5301 = vsel %vm5298, %v5293, %v5295
      %v5302 = vsel %vm5298, %v5295, %v5297
      %v5307 = vmul.f32 %v5281, %v5299
      %v5308 = vmul.f32 %v5281, %v5300
      %v5309 = vmul.f32 %v5281, %v5301
      %v5310 = vmul.f32 %v5281, %v5302
      %v5311 = vadd.f32 %v5307, 0.0
      %v5312 = vadd.f32 %v5308, 0.0
      %v5313 = vadd.f32 %v5309, 0.0
      %v5314 = vadd.f32 %v5310, 0.0
      %v5315 = vld [vmem:[#allocation2 + $0x8] sm:$0xff]
      %v5316 = vld [vmem:[#allocation2 + $0x10] sm:$0xff]
      %v5317 = vld [vmem:[#allocation2 + $0x18] sm:$0xf]
      %5318 = vset.pattern.permute.xlu0 46
      %5319 = vperm.xlu0 %5318, %v670
      %v5320 = vpop.permute.xlu0 %5319
      %v5325 = vcombine.high %v5315, %v5315
      %v5326 = vcombine.high %v5316, %v5316
      %5327 = vrot.lane.b32.xlu0 %v5315, 97
      %v5328 = vpop.permute.xlu0 %5327
      %5329 = vrot.lane.b32.xlu0 %v5325, 97
      %v5330 = vpop.permute.xlu0 %5329
      %5331 = vrot.lane.b32.xlu0 %v5316, 97
      %v5332 = vpop.permute.xlu0 %5331
      %5333 = vrot.lane.b32.xlu0 %v5326, 97
      %v5334 = vpop.permute.xlu0 %5333
      %5335 = vrot.lane.b32.xlu0 %v5317, 97
      %v5336 = vpop.permute.xlu0 %5335
      %v5337 = vsel %vm5298, %v5328, %v5330
      %v5338 = vsel %vm5298, %v5330, %v5332
      %v5339 = vsel %vm5298, %v5332, %v5334
      %v5340 = vsel %vm5298, %v5334, %v5336
      %v5345 = vmul.f32 %v5320, %v5337
      %v5346 = vmul.f32 %v5320, %v5338
      %v5347 = vmul.f32 %v5320, %v5339
      %v5348 = vmul.f32 %v5320, %v5340
      %v5349 = vadd.f32 %v5311, %v5345
      %v5350 = vadd.f32 %v5312, %v5346
      %v5351 = vadd.f32 %v5313, %v5347
      %v5352 = vadd.f32 %v5314, %v5348
      %v5353 = vld [vmem:[#allocation2 + $0xc] sm:$0xff]
      %v5354 = vld [vmem:[#allocation2 + $0x14] sm:$0xff]
      %v5355 = vld [vmem:[#allocation2 + $0x1c] sm:$0xf]
      %5356 = vset.pattern.permute.xlu0 71
      %5357 = vperm.xlu0 %5356, %v670
      %v5358 = vpop.permute.xlu0 %5357
      %v5363 = vcombine.high %v5353, %v5353
      %v5364 = vcombine.high %v5354, %v5354
      %5365 = vrot.lane.b32.xlu0 %v5353, 97
      %v5366 = vpop.permute.xlu0 %5365
      %5367 = vrot.lane.b32.xlu0 %v5363, 97
      %v5368 = vpop.permute.xlu0 %5367
      %5369 = vrot.lane.b32.xlu0 %v5354, 97
      %v5370 = vpop.permute.xlu0 %5369
      %5371 = vrot.lane.b32.xlu0 %v5364, 97
      %v5372 = vpop.permute.xlu0 %5371
      %5373 = vrot.lane.b32.xlu0 %v5355, 97
      %v5374 = vpop.permute.xlu0 %5373
      %v5375 = vsel %vm5298, %v5366, %v5368
      %v5376 = vsel %vm5298, %v5368, %v5370
      %v5377 = vsel %vm5298, %v5370, %v5372
      %v5378 = vsel %vm5298, %v5372, %v5374
      %v5383 = vmul.f32 %v5358, %v5375
      %v5384 = vmul.f32 %v5358, %v5376
      %v5385 = vmul.f32 %v5358, %v5377
      %v5386 = vmul.f32 %v5358, %v5378
      %v5387 = vadd.f32 %v5349, %v5383
      %v5388 = vadd.f32 %v5350, %v5384
      %v5389 = vadd.f32 %v5351, %v5385
      %v5390 = vadd.f32 %v5352, %v5386
      %v5391 = vld [vmem:[#allocation2 + $0x10] sm:$0xff]
      %v5392 = vld [vmem:[#allocation2 + $0x18] sm:$0xff]
      %v5393 = vld [vmem:[#allocation2 + $0x20] sm:$0xf]
      %5394 = vset.pattern.permute.xlu0 96
      %5395 = vperm.xlu0 %5394, %v670
      %v5396 = vpop.permute.xlu0 %5395
      %v5401 = vcombine.high %v5391, %v5391
      %v5402 = vcombine.high %v5392, %v5392
      %5403 = vrot.lane.b32.xlu0 %v5391, 97
      %v5404 = vpop.permute.xlu0 %5403
      %5405 = vrot.lane.b32.xlu0 %v5401, 97
      %v5406 = vpop.permute.xlu0 %5405
      %5407 = vrot.lane.b32.xlu0 %v5392, 97
      %v5408 = vpop.permute.xlu0 %5407
      %5409 = vrot.lane.b32.xlu0 %v5402, 97
      %v5410 = vpop.permute.xlu0 %5409
      %5411 = vrot.lane.b32.xlu0 %v5393, 97
      %v5412 = vpop.permute.xlu0 %5411
      %v5413 = vsel %vm5298, %v5404, %v5406
      %v5414 = vsel %vm5298, %v5406, %v5408
      %v5415 = vsel %vm5298, %v5408, %v5410
      %v5416 = vsel %vm5298, %v5410, %v5412
      %v5421 = vmul.f32 %v5396, %v5413
      %v5422 = vmul.f32 %v5396, %v5414
      %v5423 = vmul.f32 %v5396, %v5415
      %v5424 = vmul.f32 %v5396, %v5416
      %v5425 = vadd.f32 %v5387, %v5421
      %v5426 = vadd.f32 %v5388, %v5422
      %v5427 = vadd.f32 %v5389, %v5423
      %v5428 = vadd.f32 %v5390, %v5424
      %v5429 = vld [vmem:[#allocation2 + $0x14] sm:$0xff]
      %v5430 = vld [vmem:[#allocation2 + $0x1c] sm:$0xff]
      %v5431 = vld [vmem:[#allocation2 + $0x24] sm:$0xf]
      %5432 = vset.pattern.permute.xlu0 121
      %5433 = vperm.xlu0 %5432, %v670
      %v5434 = vpop.permute.xlu0 %5433
      %v5439 = vcombine.high %v5429, %v5429
      %v5440 = vcombine.high %v5430, %v5430
      %5441 = vrot.lane.b32.xlu0 %v5429, 97
      %v5442 = vpop.permute.xlu0 %5441
      %5443 = vrot.lane.b32.xlu0 %v5439, 97
      %v5444 = vpop.permute.xlu0 %5443
      %5445 = vrot.lane.b32.xlu0 %v5430, 97
      %v5446 = vpop.permute.xlu0 %5445
      %5447 = vrot.lane.b32.xlu0 %v5440, 97
      %v5448 = vpop.permute.xlu0 %5447
      %5449 = vrot.lane.b32.xlu0 %v5431, 97
      %v5450 = vpop.permute.xlu0 %5449
      %v5451 = vsel %vm5298, %v5442, %v5444
      %v5452 = vsel %vm5298, %v5444, %v5446
      %v5453 = vsel %vm5298, %v5446, %v5448
      %v5454 = vsel %vm5298, %v5448, %v5450
      %v5459 = vmul.f32 %v5434, %v5451
      %v5460 = vmul.f32 %v5434, %v5452
      %v5461 = vmul.f32 %v5434, %v5453
      %v5462 = vmul.f32 %v5434, %v5454
      %v5463 = vadd.f32 %v5425, %v5459
      %v5464 = vadd.f32 %v5426, %v5460
      %v5465 = vadd.f32 %v5427, %v5461
      %v5466 = vadd.f32 %v5428, %v5462
      %vm5467 = vmand %vm5244, %vm1093
      %vm5468 = vmand %vm5467, %vm1095
      %v5469 = vsel %vm5468, 1, 0
      %v5470 = vlaneseq
      %v5471 = vshrl.u32 %v5470, 7
      %v5472 = vsub.s32 0, %v5471
      %v5473 = vrot.slane %v5469, %v5472
      %v5474 = vlaneseq
      %v5475 = vshrl.u32 %v5474, 7
      %v5476 = vsub.s32 1, %v5475
      %v5477 = vrot.slane %v5469, %v5476
      %v5478 = vlaneseq
      %v5479 = vshrl.u32 %v5478, 7
      %v5480 = vsub.s32 2, %v5479
      %v5481 = vrot.slane %v5469, %v5480
      %v5482 = vlaneseq
      %v5483 = vshrl.u32 %v5482, 7
      %v5484 = vsub.s32 3, %v5483
      %v5485 = vrot.slane %v5469, %v5484
      %vm5486 = vcmp.eq.s32.totalorder %v5473, 1
      %vm5487 = vcmp.eq.s32.totalorder %v5477, 1
      %vm5488 = vcmp.eq.s32.totalorder %v5481, 1
      %vm5489 = vcmp.eq.s32.totalorder %v5485, 1
      %v5490 = vsel %vm5486, %v5463, 0.0
      %v5491 = vsel %vm5487, %v5464, 0.0
      %v5492 = vsel %vm5488, %v5465, 0.0
      %v5493 = vsel %vm5489, %v5466, 0.0
      %v5494 = vadd.f32 %v5272, %v5490
      %v5495 = vadd.f32 %v5273, %v5491
      %v5496 = vadd.f32 %v5274, %v5492
      %v5497 = vadd.f32 %v5275, %v5493
      %v5498 = vld [vmem:[#allocation2 + $0x4] sm:$0xff]
      %v5499 = vld [vmem:[#allocation2 + $0xc] sm:$0xff]
      %v5500 = vld [vmem:[#allocation2 + $0x14] sm:$0xf]
      %5501 = vset.pattern.permute.xlu0 22
      %5502 = vperm.xlu0 %5501, %v670
      %v5503 = vpop.permute.xlu0 %5502
      %v5508 = vcombine.high %v5498, %v5498
      %v5509 = vcombine.high %v5499, %v5499
      %5510 = vrot.lane.b32.xlu0 %v5498, 96
      %v5511 = vpop.permute.xlu0 %5510
      %5512 = vrot.lane.b32.xlu0 %v5508, 96
      %v5513 = vpop.permute.xlu0 %5512
      %5514 = vrot.lane.b32.xlu0 %v5499, 96
      %v5515 = vpop.permute.xlu0 %5514
      %5516 = vrot.lane.b32.xlu0 %v5509, 96
      %v5517 = vpop.permute.xlu0 %5516
      %5518 = vrot.lane.b32.xlu0 %v5500, 96
      %v5519 = vpop.permute.xlu0 %5518
      %vm5520 = vcmask 785408
      %v5521 = vsel %vm5520, %v5511, %v5513
      %v5522 = vsel %vm5520, %v5513, %v5515
      %v5523 = vsel %vm5520, %v5515, %v5517
      %v5524 = vsel %vm5520, %v5517, %v5519
      %v5529 = vmul.f32 %v5503, %v5521
      %v5530 = vmul.f32 %v5503, %v5522
      %v5531 = vmul.f32 %v5503, %v5523
      %v5532 = vmul.f32 %v5503, %v5524
      %v5533 = vadd.f32 %v5529, 0.0
      %v5534 = vadd.f32 %v5530, 0.0
      %v5535 = vadd.f32 %v5531, 0.0
      %v5536 = vadd.f32 %v5532, 0.0
      %v5537 = vld [vmem:[#allocation2 + $0x8] sm:$0xff]
      %v5538 = vld [vmem:[#allocation2 + $0x10] sm:$0xff]
      %v5539 = vld [vmem:[#allocation2 + $0x18] sm:$0xf]
      %5540 = vset.pattern.permute.xlu0 47
      %5541 = vperm.xlu0 %5540, %v670
      %v5542 = vpop.permute.xlu0 %5541
      %v5547 = vcombine.high %v5537, %v5537
      %v5548 = vcombine.high %v5538, %v5538
      %5549 = vrot.lane.b32.xlu0 %v5537, 96
      %v5550 = vpop.permute.xlu0 %5549
      %5551 = vrot.lane.b32.xlu0 %v5547, 96
      %v5552 = vpop.permute.xlu0 %5551
      %5553 = vrot.lane.b32.xlu0 %v5538, 96
      %v5554 = vpop.permute.xlu0 %5553
      %5555 = vrot.lane.b32.xlu0 %v5548, 96
      %v5556 = vpop.permute.xlu0 %5555
      %5557 = vrot.lane.b32.xlu0 %v5539, 96
      %v5558 = vpop.permute.xlu0 %5557
      %v5559 = vsel %vm5520, %v5550, %v5552
      %v5560 = vsel %vm5520, %v5552, %v5554
      %v5561 = vsel %vm5520, %v5554, %v5556
      %v5562 = vsel %vm5520, %v5556, %v5558
      %v5567 = vmul.f32 %v5542, %v5559
      %v5568 = vmul.f32 %v5542, %v5560
      %v5569 = vmul.f32 %v5542, %v5561
      %v5570 = vmul.f32 %v5542, %v5562
      %v5571 = vadd.f32 %v5533, %v5567
      %v5572 = vadd.f32 %v5534, %v5568
      %v5573 = vadd.f32 %v5535, %v5569
      %v5574 = vadd.f32 %v5536, %v5570
      %v5575 = vld [vmem:[#allocation2 + $0xc] sm:$0xff]
      %v5576 = vld [vmem:[#allocation2 + $0x14] sm:$0xff]
      %v5577 = vld [vmem:[#allocation2 + $0x1c] sm:$0xf]
      %5578 = vset.pattern.permute.xlu0 72
      %5579 = vperm.xlu0 %5578, %v670
      %v5580 = vpop.permute.xlu0 %5579
      %v5585 = vcombine.high %v5575, %v5575
      %v5586 = vcombine.high %v5576, %v5576
      %5587 = vrot.lane.b32.xlu0 %v5575, 96
      %v5588 = vpop.permute.xlu0 %5587
      %5589 = vrot.lane.b32.xlu0 %v5585, 96
      %v5590 = vpop.permute.xlu0 %5589
      %5591 = vrot.lane.b32.xlu0 %v5576, 96
      %v5592 = vpop.permute.xlu0 %5591
      %5593 = vrot.lane.b32.xlu0 %v5586, 96
      %v5594 = vpop.permute.xlu0 %5593
      %5595 = vrot.lane.b32.xlu0 %v5577, 96
      %v5596 = vpop.permute.xlu0 %5595
      %v5597 = vsel %vm5520, %v5588, %v5590
      %v5598 = vsel %vm5520, %v5590, %v5592
      %v5599 = vsel %vm5520, %v5592, %v5594
      %v5600 = vsel %vm5520, %v5594, %v5596
      %v5605 = vmul.f32 %v5580, %v5597
      %v5606 = vmul.f32 %v5580, %v5598
      %v5607 = vmul.f32 %v5580, %v5599
      %v5608 = vmul.f32 %v5580, %v5600
      %v5609 = vadd.f32 %v5571, %v5605
      %v5610 = vadd.f32 %v5572, %v5606
      %v5611 = vadd.f32 %v5573, %v5607
      %v5612 = vadd.f32 %v5574, %v5608
      %v5613 = vld [vmem:[#allocation2 + $0x10] sm:$0xff]
      %v5614 = vld [vmem:[#allocation2 + $0x18] sm:$0xff]
      %v5615 = vld [vmem:[#allocation2 + $0x20] sm:$0xf]
      %5616 = vset.pattern.permute.xlu0 97
      %5617 = vperm.xlu0 %5616, %v670
      %v5618 = vpop.permute.xlu0 %5617
      %v5623 = vcombine.high %v5613, %v5613
      %v5624 = vcombine.high %v5614, %v5614
      %5625 = vrot.lane.b32.xlu0 %v5613, 96
      %v5626 = vpop.permute.xlu0 %5625
      %5627 = vrot.lane.b32.xlu0 %v5623, 96
      %v5628 = vpop.permute.xlu0 %5627
      %5629 = vrot.lane.b32.xlu0 %v5614, 96
      %v5630 = vpop.permute.xlu0 %5629
      %5631 = vrot.lane.b32.xlu0 %v5624, 96
      %v5632 = vpop.permute.xlu0 %5631
      %5633 = vrot.lane.b32.xlu0 %v5615, 96
      %v5634 = vpop.permute.xlu0 %5633
      %v5635 = vsel %vm5520, %v5626, %v5628
      %v5636 = vsel %vm5520, %v5628, %v5630
      %v5637 = vsel %vm5520, %v5630, %v5632
      %v5638 = vsel %vm5520, %v5632, %v5634
      %v5643 = vmul.f32 %v5618, %v5635
      %v5644 = vmul.f32 %v5618, %v5636
      %v5645 = vmul.f32 %v5618, %v5637
      %v5646 = vmul.f32 %v5618, %v5638
      %v5647 = vadd.f32 %v5609, %v5643
      %v5648 = vadd.f32 %v5610, %v5644
      %v5649 = vadd.f32 %v5611, %v5645
      %v5650 = vadd.f32 %v5612, %v5646
      %v5651 = vld [vmem:[#allocation2 + $0x14] sm:$0xff]
      %v5652 = vld [vmem:[#allocation2 + $0x1c] sm:$0xff]
      %v5653 = vld [vmem:[#allocation2 + $0x24] sm:$0xf]
      %5654 = vset.pattern.permute.xlu0 122
      %5655 = vperm.xlu0 %5654, %v670
      %v5656 = vpop.permute.xlu0 %5655
      %v5661 = vcombine.high %v5651, %v5651
      %v5662 = vcombine.high %v5652, %v5652
      %5663 = vrot.lane.b32.xlu0 %v5651, 96
      %v5664 = vpop.permute.xlu0 %5663
      %5665 = vrot.lane.b32.xlu0 %v5661, 96
      %v5666 = vpop.permute.xlu0 %5665
      %5667 = vrot.lane.b32.xlu0 %v5652, 96
      %v5668 = vpop.permute.xlu0 %5667
      %5669 = vrot.lane.b32.xlu0 %v5662, 96
      %v5670 = vpop.permute.xlu0 %5669
      %5671 = vrot.lane.b32.xlu0 %v5653, 96
      %v5672 = vpop.permute.xlu0 %5671
      %v5673 = vsel %vm5520, %v5664, %v5666
      %v5674 = vsel %vm5520, %v5666, %v5668
      %v5675 = vsel %vm5520, %v5668, %v5670
      %v5676 = vsel %vm5520, %v5670, %v5672
      %v5681 = vmul.f32 %v5656, %v5673
      %v5682 = vmul.f32 %v5656, %v5674
      %v5683 = vmul.f32 %v5656, %v5675
      %v5684 = vmul.f32 %v5656, %v5676
      %v5685 = vadd.f32 %v5647, %v5681
      %v5686 = vadd.f32 %v5648, %v5682
      %v5687 = vadd.f32 %v5649, %v5683
      %v5688 = vadd.f32 %v5650, %v5684
      %vm5689 = vmand %vm5244, %vm1317
      %vm5690 = vmand %vm5689, %vm1319
      %v5691 = vsel %vm5690, 1, 0
      %v5692 = vlaneseq
      %v5693 = vshrl.u32 %v5692, 7
      %v5694 = vsub.s32 0, %v5693
      %v5695 = vrot.slane %v5691, %v5694
      %v5696 = vlaneseq
      %v5697 = vshrl.u32 %v5696, 7
      %v5698 = vsub.s32 1, %v5697
      %v5699 = vrot.slane %v5691, %v5698
      %v5700 = vlaneseq
      %v5701 = vshrl.u32 %v5700, 7
      %v5702 = vsub.s32 2, %v5701
      %v5703 = vrot.slane %v5691, %v5702
      %v5704 = vlaneseq
      %v5705 = vshrl.u32 %v5704, 7
      %v5706 = vsub.s32 3, %v5705
      %v5707 = vrot.slane %v5691, %v5706
      %vm5708 = vcmp.eq.s32.totalorder %v5695, 1
      %vm5709 = vcmp.eq.s32.totalorder %v5699, 1
      %vm5710 = vcmp.eq.s32.totalorder %v5703, 1
      %vm5711 = vcmp.eq.s32.totalorder %v5707, 1
      %v5712 = vsel %vm5708, %v5685, 0.0
      %v5713 = vsel %vm5709, %v5686, 0.0
      %v5714 = vsel %vm5710, %v5687, 0.0
      %v5715 = vsel %vm5711, %v5688, 0.0
      %v5716 = vadd.f32 %v5494, %v5712
      %v5717 = vadd.f32 %v5495, %v5713
      %v5718 = vadd.f32 %v5496, %v5714
      %v5719 = vadd.f32 %v5497, %v5715
      %v5720 = vld [vmem:[#allocation2 + $0x4] sm:$0xff]
      %v5721 = vld [vmem:[#allocation2 + $0xc] sm:$0xff]
      %v5722 = vld [vmem:[#allocation2 + $0x14] sm:$0xf]
      %5723 = vset.pattern.permute.xlu0 23
      %5724 = vperm.xlu0 %5723, %v670
      %v5725 = vpop.permute.xlu0 %5724
      %v5730 = vcombine.high %v5720, %v5720
      %v5731 = vcombine.high %v5721, %v5721
      %5732 = vrot.lane.b32.xlu0 %v5720, 95
      %v5733 = vpop.permute.xlu0 %5732
      %5734 = vrot.lane.b32.xlu0 %v5730, 95
      %v5735 = vpop.permute.xlu0 %5734
      %5736 = vrot.lane.b32.xlu0 %v5721, 95
      %v5737 = vpop.permute.xlu0 %5736
      %5738 = vrot.lane.b32.xlu0 %v5731, 95
      %v5739 = vpop.permute.xlu0 %5738
      %5740 = vrot.lane.b32.xlu0 %v5722, 95
      %v5741 = vpop.permute.xlu0 %5740
      %vm5742 = vcmask 777216
      %v5743 = vsel %vm5742, %v5733, %v5735
      %v5744 = vsel %vm5742, %v5735, %v5737
      %v5745 = vsel %vm5742, %v5737, %v5739
      %v5746 = vsel %vm5742, %v5739, %v5741
      %v5751 = vmul.f32 %v5725, %v5743
      %v5752 = vmul.f32 %v5725, %v5744
      %v5753 = vmul.f32 %v5725, %v5745
      %v5754 = vmul.f32 %v5725, %v5746
      %v5755 = vadd.f32 %v5751, 0.0
      %v5756 = vadd.f32 %v5752, 0.0
      %v5757 = vadd.f32 %v5753, 0.0
      %v5758 = vadd.f32 %v5754, 0.0
      %v5759 = vld [vmem:[#allocation2 + $0x8] sm:$0xff]
      %v5760 = vld [vmem:[#allocation2 + $0x10] sm:$0xff]
      %v5761 = vld [vmem:[#allocation2 + $0x18] sm:$0xf]
      %5762 = vset.pattern.permute.xlu0 48
      %5763 = vperm.xlu0 %5762, %v670
      %v5764 = vpop.permute.xlu0 %5763
      %v5769 = vcombine.high %v5759, %v5759
      %v5770 = vcombine.high %v5760, %v5760
      %5771 = vrot.lane.b32.xlu0 %v5759, 95
      %v5772 = vpop.permute.xlu0 %5771
      %5773 = vrot.lane.b32.xlu0 %v5769, 95
      %v5774 = vpop.permute.xlu0 %5773
      %5775 = vrot.lane.b32.xlu0 %v5760, 95
      %v5776 = vpop.permute.xlu0 %5775
      %5777 = vrot.lane.b32.xlu0 %v5770, 95
      %v5778 = vpop.permute.xlu0 %5777
      %5779 = vrot.lane.b32.xlu0 %v5761, 95
      %v5780 = vpop.permute.xlu0 %5779
      %v5781 = vsel %vm5742, %v5772, %v5774
      %v5782 = vsel %vm5742, %v5774, %v5776
      %v5783 = vsel %vm5742, %v5776, %v5778
      %v5784 = vsel %vm5742, %v5778, %v5780
      %v5789 = vmul.f32 %v5764, %v5781
      %v5790 = vmul.f32 %v5764, %v5782
      %v5791 = vmul.f32 %v5764, %v5783
      %v5792 = vmul.f32 %v5764, %v5784
      %v5793 = vadd.f32 %v5755, %v5789
      %v5794 = vadd.f32 %v5756, %v5790
      %v5795 = vadd.f32 %v5757, %v5791
      %v5796 = vadd.f32 %v5758, %v5792
      %v5797 = vld [vmem:[#allocation2 + $0xc] sm:$0xff]
      %v5798 = vld [vmem:[#allocation2 + $0x14] sm:$0xff]
      %v5799 = vld [vmem:[#allocation2 + $0x1c] sm:$0xf]
      %5800 = vset.pattern.permute.xlu0 73
      %5801 = vperm.xlu0 %5800, %v670
      %v5802 = vpop.permute.xlu0 %5801
      %v5807 = vcombine.high %v5797, %v5797
      %v5808 = vcombine.high %v5798, %v5798
      %5809 = vrot.lane.b32.xlu0 %v5797, 95
      %v5810 = vpop.permute.xlu0 %5809
      %5811 = vrot.lane.b32.xlu0 %v5807, 95
      %v5812 = vpop.permute.xlu0 %5811
      %5813 = vrot.lane.b32.xlu0 %v5798, 95
      %v5814 = vpop.permute.xlu0 %5813
      %5815 = vrot.lane.b32.xlu0 %v5808, 95
      %v5816 = vpop.permute.xlu0 %5815
      %5817 = vrot.lane.b32.xlu0 %v5799, 95
      %v5818 = vpop.permute.xlu0 %5817
      %v5819 = vsel %vm5742, %v5810, %v5812
      %v5820 = vsel %vm5742, %v5812, %v5814
      %v5821 = vsel %vm5742, %v5814, %v5816
      %v5822 = vsel %vm5742, %v5816, %v5818
      %v5827 = vmul.f32 %v5802, %v5819
      %v5828 = vmul.f32 %v5802, %v5820
      %v5829 = vmul.f32 %v5802, %v5821
      %v5830 = vmul.f32 %v5802, %v5822
      %v5831 = vadd.f32 %v5793, %v5827
      %v5832 = vadd.f32 %v5794, %v5828
      %v5833 = vadd.f32 %v5795, %v5829
      %v5834 = vadd.f32 %v5796, %v5830
      %v5835 = vld [vmem:[#allocation2 + $0x10] sm:$0xff]
      %v5836 = vld [vmem:[#allocation2 + $0x18] sm:$0xff]
      %v5837 = vld [vmem:[#allocation2 + $0x20] sm:$0xf]
      %5838 = vset.pattern.permute.xlu0 98
      %5839 = vperm.xlu0 %5838, %v670
      %v5840 = vpop.permute.xlu0 %5839
      %v5845 = vcombine.high %v5835, %v5835
      %v5846 = vcombine.high %v5836, %v5836
      %5847 = vrot.lane.b32.xlu0 %v5835, 95
      %v5848 = vpop.permute.xlu0 %5847
      %5849 = vrot.lane.b32.xlu0 %v5845, 95
      %v5850 = vpop.permute.xlu0 %5849
      %5851 = vrot.lane.b32.xlu0 %v5836, 95
      %v5852 = vpop.permute.xlu0 %5851
      %5853 = vrot.lane.b32.xlu0 %v5846, 95
      %v5854 = vpop.permute.xlu0 %5853
      %5855 = vrot.lane.b32.xlu0 %v5837, 95
      %v5856 = vpop.permute.xlu0 %5855
      %v5857 = vsel %vm5742, %v5848, %v5850
      %v5858 = vsel %vm5742, %v5850, %v5852
      %v5859 = vsel %vm5742, %v5852, %v5854
      %v5860 = vsel %vm5742, %v5854, %v5856
      %v5865 = vmul.f32 %v5840, %v5857
      %v5866 = vmul.f32 %v5840, %v5858
      %v5867 = vmul.f32 %v5840, %v5859
      %v5868 = vmul.f32 %v5840, %v5860
      %v5869 = vadd.f32 %v5831, %v5865
      %v5870 = vadd.f32 %v5832, %v5866
      %v5871 = vadd.f32 %v5833, %v5867
      %v5872 = vadd.f32 %v5834, %v5868
      %v5873 = vld [vmem:[#allocation2 + $0x14] sm:$0xff]
      %v5874 = vld [vmem:[#allocation2 + $0x1c] sm:$0xff]
      %v5875 = vld [vmem:[#allocation2 + $0x24] sm:$0xf]
      %5876 = vset.pattern.permute.xlu0 123
      %5877 = vperm.xlu0 %5876, %v670
      %v5878 = vpop.permute.xlu0 %5877
      %v5883 = vcombine.high %v5873, %v5873
      %v5884 = vcombine.high %v5874, %v5874
      %5885 = vrot.lane.b32.xlu0 %v5873, 95
      %v5886 = vpop.permute.xlu0 %5885
      %5887 = vrot.lane.b32.xlu0 %v5883, 95
      %v5888 = vpop.permute.xlu0 %5887
      %5889 = vrot.lane.b32.xlu0 %v5874, 95
      %v5890 = vpop.permute.xlu0 %5889
      %5891 = vrot.lane.b32.xlu0 %v5884, 95
      %v5892 = vpop.permute.xlu0 %5891
      %5893 = vrot.lane.b32.xlu0 %v5875, 95
      %v5894 = vpop.permute.xlu0 %5893
      %v5895 = vsel %vm5742, %v5886, %v5888
      %v5896 = vsel %vm5742, %v5888, %v5890
      %v5897 = vsel %vm5742, %v5890, %v5892
      %v5898 = vsel %vm5742, %v5892, %v5894
      %v5903 = vmul.f32 %v5878, %v5895
      %v5904 = vmul.f32 %v5878, %v5896
      %v5905 = vmul.f32 %v5878, %v5897
      %v5906 = vmul.f32 %v5878, %v5898
      %v5907 = vadd.f32 %v5869, %v5903
      %v5908 = vadd.f32 %v5870, %v5904
      %v5909 = vadd.f32 %v5871, %v5905
      %v5910 = vadd.f32 %v5872, %v5906
      %vm5911 = vmand %vm5244, %vm1542
      %vm5912 = vmand %vm5911, %vm1544
      %v5913 = vsel %vm5912, 1, 0
      %v5914 = vlaneseq
      %v5915 = vshrl.u32 %v5914, 7
      %v5916 = vsub.s32 0, %v5915
      %v5917 = vrot.slane %v5913, %v5916
      %v5918 = vlaneseq
      %v5919 = vshrl.u32 %v5918, 7
      %v5920 = vsub.s32 1, %v5919
      %v5921 = vrot.slane %v5913, %v5920
      %v5922 = vlaneseq
      %v5923 = vshrl.u32 %v5922, 7
      %v5924 = vsub.s32 2, %v5923
      %v5925 = vrot.slane %v5913, %v5924
      %v5926 = vlaneseq
      %v5927 = vshrl.u32 %v5926, 7
      %v5928 = vsub.s32 3, %v5927
      %v5929 = vrot.slane %v5913, %v5928
      %vm5930 = vcmp.eq.s32.totalorder %v5917, 1
      %vm5931 = vcmp.eq.s32.totalorder %v5921, 1
      %vm5932 = vcmp.eq.s32.totalorder %v5925, 1
      %vm5933 = vcmp.eq.s32.totalorder %v5929, 1
      %v5934 = vsel %vm5930, %v5907, 0.0
      %v5935 = vsel %vm5931, %v5908, 0.0
      %v5936 = vsel %vm5932, %v5909, 0.0
      %v5937 = vsel %vm5933, %v5910, 0.0
      %v5938 = vadd.f32 %v5716, %v5934
      %v5939 = vadd.f32 %v5717, %v5935
      %v5940 = vadd.f32 %v5718, %v5936
      %v5941 = vadd.f32 %v5719, %v5937
      %v5942 = vld [vmem:[#allocation2 + $0x4] sm:$0xff]
      %v5943 = vld [vmem:[#allocation2 + $0xc] sm:$0xff]
      %v5944 = vld [vmem:[#allocation2 + $0x14] sm:$0xf]
      %5945 = vset.pattern.permute.xlu0 24
      %5946 = vperm.xlu0 %5945, %v670
      %v5947 = vpop.permute.xlu0 %5946
      %v5952 = vcombine.high %v5942, %v5942
      %v5953 = vcombine.high %v5943, %v5943
      %5954 = vrot.lane.b32.xlu0 %v5942, 94
      %v5955 = vpop.permute.xlu0 %5954
      %5956 = vrot.lane.b32.xlu0 %v5952, 94
      %v5957 = vpop.permute.xlu0 %5956
      %5958 = vrot.lane.b32.xlu0 %v5943, 94
      %v5959 = vpop.permute.xlu0 %5958
      %5960 = vrot.lane.b32.xlu0 %v5953, 94
      %v5961 = vpop.permute.xlu0 %5960
      %5962 = vrot.lane.b32.xlu0 %v5944, 94
      %v5963 = vpop.permute.xlu0 %5962
      %vm5964 = vcmask 769024
      %v5965 = vsel %vm5964, %v5955, %v5957
      %v5966 = vsel %vm5964, %v5957, %v5959
      %v5967 = vsel %vm5964, %v5959, %v5961
      %v5968 = vsel %vm5964, %v5961, %v5963
      %v5973 = vmul.f32 %v5947, %v5965
      %v5974 = vmul.f32 %v5947, %v5966
      %v5975 = vmul.f32 %v5947, %v5967
      %v5976 = vmul.f32 %v5947, %v5968
      %v5977 = vadd.f32 %v5973, 0.0
      %v5978 = vadd.f32 %v5974, 0.0
      %v5979 = vadd.f32 %v5975, 0.0
      %v5980 = vadd.f32 %v5976, 0.0
      %v5981 = vld [vmem:[#allocation2 + $0x8] sm:$0xff]
      %v5982 = vld [vmem:[#allocation2 + $0x10] sm:$0xff]
      %v5983 = vld [vmem:[#allocation2 + $0x18] sm:$0xf]
      %5984 = vset.pattern.permute.xlu0 49
      %5985 = vperm.xlu0 %5984, %v670
      %v5986 = vpop.permute.xlu0 %5985
      %v5991 = vcombine.high %v5981, %v5981
      %v5992 = vcombine.high %v5982, %v5982
      %5993 = vrot.lane.b32.xlu0 %v5981, 94
      %v5994 = vpop.permute.xlu0 %5993
      %5995 = vrot.lane.b32.xlu0 %v5991, 94
      %v5996 = vpop.permute.xlu0 %5995
      %5997 = vrot.lane.b32.xlu0 %v5982, 94
      %v5998 = vpop.permute.xlu0 %5997
      %5999 = vrot.lane.b32.xlu0 %v5992, 94
      %v6000 = vpop.permute.xlu0 %5999
      %6001 = vrot.lane.b32.xlu0 %v5983, 94
      %v6002 = vpop.permute.xlu0 %6001
      %v6003 = vsel %vm5964, %v5994, %v5996
      %v6004 = vsel %vm5964, %v5996, %v5998
      %v6005 = vsel %vm5964, %v5998, %v6000
      %v6006 = vsel %vm5964, %v6000, %v6002
      %v6011 = vmul.f32 %v5986, %v6003
      %v6012 = vmul.f32 %v5986, %v6004
      %v6013 = vmul.f32 %v5986, %v6005
      %v6014 = vmul.f32 %v5986, %v6006
      %v6015 = vadd.f32 %v5977, %v6011
      %v6016 = vadd.f32 %v5978, %v6012
      %v6017 = vadd.f32 %v5979, %v6013
      %v6018 = vadd.f32 %v5980, %v6014
      %v6019 = vld [vmem:[#allocation2 + $0xc] sm:$0xff]
      %v6020 = vld [vmem:[#allocation2 + $0x14] sm:$0xff]
      %v6021 = vld [vmem:[#allocation2 + $0x1c] sm:$0xf]
      %6022 = vset.pattern.permute.xlu0 74
      %6023 = vperm.xlu0 %6022, %v670
      %v6024 = vpop.permute.xlu0 %6023
      %v6029 = vcombine.high %v6019, %v6019
      %v6030 = vcombine.high %v6020, %v6020
      %6031 = vrot.lane.b32.xlu0 %v6019, 94
      %v6032 = vpop.permute.xlu0 %6031
      %6033 = vrot.lane.b32.xlu0 %v6029, 94
      %v6034 = vpop.permute.xlu0 %6033
      %6035 = vrot.lane.b32.xlu0 %v6020, 94
      %v6036 = vpop.permute.xlu0 %6035
      %6037 = vrot.lane.b32.xlu0 %v6030, 94
      %v6038 = vpop.permute.xlu0 %6037
      %6039 = vrot.lane.b32.xlu0 %v6021, 94
      %v6040 = vpop.permute.xlu0 %6039
      %v6041 = vsel %vm5964, %v6032, %v6034
      %v6042 = vsel %vm5964, %v6034, %v6036
      %v6043 = vsel %vm5964, %v6036, %v6038
      %v6044 = vsel %vm5964, %v6038, %v6040
      %v6049 = vmul.f32 %v6024, %v6041
      %v6050 = vmul.f32 %v6024, %v6042
      %v6051 = vmul.f32 %v6024, %v6043
      %v6052 = vmul.f32 %v6024, %v6044
      %v6053 = vadd.f32 %v6015, %v6049
      %v6054 = vadd.f32 %v6016, %v6050
      %v6055 = vadd.f32 %v6017, %v6051
      %v6056 = vadd.f32 %v6018, %v6052
      %v6057 = vld [vmem:[#allocation2 + $0x10] sm:$0xff]
      %v6058 = vld [vmem:[#allocation2 + $0x18] sm:$0xff]
      %v6059 = vld [vmem:[#allocation2 + $0x20] sm:$0xf]
      %6060 = vset.pattern.permute.xlu0 99
      %6061 = vperm.xlu0 %6060, %v670
      %v6062 = vpop.permute.xlu0 %6061
      %v6067 = vcombine.high %v6057, %v6057
      %v6068 = vcombine.high %v6058, %v6058
      %6069 = vrot.lane.b32.xlu0 %v6057, 94
      %v6070 = vpop.permute.xlu0 %6069
      %6071 = vrot.lane.b32.xlu0 %v6067, 94
      %v6072 = vpop.permute.xlu0 %6071
      %6073 = vrot.lane.b32.xlu0 %v6058, 94
      %v6074 = vpop.permute.xlu0 %6073
      %6075 = vrot.lane.b32.xlu0 %v6068, 94
      %v6076 = vpop.permute.xlu0 %6075
      %6077 = vrot.lane.b32.xlu0 %v6059, 94
      %v6078 = vpop.permute.xlu0 %6077
      %v6079 = vsel %vm5964, %v6070, %v6072
      %v6080 = vsel %vm5964, %v6072, %v6074
      %v6081 = vsel %vm5964, %v6074, %v6076
      %v6082 = vsel %vm5964, %v6076, %v6078
      %v6087 = vmul.f32 %v6062, %v6079
      %v6088 = vmul.f32 %v6062, %v6080
      %v6089 = vmul.f32 %v6062, %v6081
      %v6090 = vmul.f32 %v6062, %v6082
      %v6091 = vadd.f32 %v6053, %v6087
      %v6092 = vadd.f32 %v6054, %v6088
      %v6093 = vadd.f32 %v6055, %v6089
      %v6094 = vadd.f32 %v6056, %v6090
      %v6095 = vld [vmem:[#allocation2 + $0x14] sm:$0xff]
      %v6096 = vld [vmem:[#allocation2 + $0x1c] sm:$0xff]
      %v6097 = vld [vmem:[#allocation2 + $0x24] sm:$0xf]
      %6098 = vset.pattern.permute.xlu0 124
      %6099 = vperm.xlu0 %6098, %v670
      %v6100 = vpop.permute.xlu0 %6099
      %v6105 = vcombine.high %v6095, %v6095
      %v6106 = vcombine.high %v6096, %v6096
      %6107 = vrot.lane.b32.xlu0 %v6095, 94
      %v6108 = vpop.permute.xlu0 %6107
      %6109 = vrot.lane.b32.xlu0 %v6105, 94
      %v6110 = vpop.permute.xlu0 %6109
      %6111 = vrot.lane.b32.xlu0 %v6096, 94
      %v6112 = vpop.permute.xlu0 %6111
      %6113 = vrot.lane.b32.xlu0 %v6106, 94
      %v6114 = vpop.permute.xlu0 %6113
      %6115 = vrot.lane.b32.xlu0 %v6097, 94
      %v6116 = vpop.permute.xlu0 %6115
      %v6117 = vsel %vm5964, %v6108, %v6110
      %v6118 = vsel %vm5964, %v6110, %v6112
      %v6119 = vsel %vm5964, %v6112, %v6114
      %v6120 = vsel %vm5964, %v6114, %v6116
      %v6125 = vmul.f32 %v6100, %v6117
      %v6126 = vmul.f32 %v6100, %v6118
      %v6127 = vmul.f32 %v6100, %v6119
      %v6128 = vmul.f32 %v6100, %v6120
      %v6129 = vadd.f32 %v6091, %v6125
      %v6130 = vadd.f32 %v6092, %v6126
      %v6131 = vadd.f32 %v6093, %v6127
      %v6132 = vadd.f32 %v6094, %v6128
      %vm6133 = vmand %vm5244, %vm1767
      %vm6134 = vmand %vm6133, %vm1769
      %v6135 = vsel %vm6134, 1, 0
      %v6136 = vlaneseq
      %v6137 = vshrl.u32 %v6136, 7
      %v6138 = vsub.s32 0, %v6137
      %v6139 = vrot.slane %v6135, %v6138
      %v6140 = vlaneseq
      %v6141 = vshrl.u32 %v6140, 7
      %v6142 = vsub.s32 1, %v6141
      %v6143 = vrot.slane %v6135, %v6142
      %v6144 = vlaneseq
      %v6145 = vshrl.u32 %v6144, 7
      %v6146 = vsub.s32 2, %v6145
      %v6147 = vrot.slane %v6135, %v6146
      %v6148 = vlaneseq
      %v6149 = vshrl.u32 %v6148, 7
      %v6150 = vsub.s32 3, %v6149
      %v6151 = vrot.slane %v6135, %v6150
      %vm6152 = vcmp.eq.s32.totalorder %v6139, 1
      %vm6153 = vcmp.eq.s32.totalorder %v6143, 1
      %vm6154 = vcmp.eq.s32.totalorder %v6147, 1
      %vm6155 = vcmp.eq.s32.totalorder %v6151, 1
      %v6156 = vsel %vm6152, %v6129, 0.0
      %v6157 = vsel %vm6153, %v6130, 0.0
      %v6158 = vsel %vm6154, %v6131, 0.0
      %v6159 = vsel %vm6155, %v6132, 0.0
      %v6160 = vadd.f32 %v5938, %v6156
      %v6161 = vadd.f32 %v5939, %v6157
      %v6162 = vadd.f32 %v5940, %v6158
      %v6163 = vadd.f32 %v5941, %v6159
      %v6164 = vld [vmem:[%s6] sm:$0xf]
      %6166 = vset.pattern.permute.xlu0 0
      %6167 = vperm.xlu0 %6166, %v6164
      %v6168 = vpop.permute.xlu0 %6167
      %v6170 = vadd.f32 %v6160, %v6168
      %v6171 = vadd.f32 %v6161, %v6168
      %v6172 = vadd.f32 %v6162, %v6168
      %v6173 = vadd.f32 %v6163, %v6168
      %v6174 = vsub.f32 0.0, %v6170
      %v6175 = vsub.f32 0.0, %v6171
      %v6176 = vsub.f32 0.0, %v6172
      %v6177 = vsub.f32 0.0, %v6173
      %v6178 = vmul.f32 %v6174, 1.442695
      %v6179 = vpow.pop %v6178
      %v6180 = vmul.f32 %v6175, 1.442695
      %v6181 = vpow.pop %v6180
      %v6182 = vmul.f32 %v6176, 1.442695
      %v6183 = vpow.pop %v6182
      %v6184 = vmul.f32 %v6177, 1.442695
      %v6185 = vpow.pop %v6184
      %v6186 = vadd.f32 %v6179, 1.0
      %v6187 = vadd.f32 %v6181, 1.0
      %v6188 = vadd.f32 %v6183, 1.0
      %v6189 = vadd.f32 %v6185, 1.0
      %v6190 = vrcp.pop %v6186
      %v6191 = vmul.f32 1.0, %v6190
      %v6192 = vrcp.pop %v6187
      %v6193 = vmul.f32 1.0, %v6192
      %v6194 = vrcp.pop %v6188
      %v6195 = vmul.f32 1.0, %v6194
      %v6196 = vrcp.pop %v6189
      %v6197 = vmul.f32 1.0, %v6196
      %v6198 = vmul.f32 %v426, %v6191
      %v6199 = vmul.f32 %v428, %v6193
      %v6200 = vmul.f32 %v497, %v6195
      %v6201 = vmul.f32 %v499, %v6197
      %v6206 = vcombine.low %v6198, %v6199
      %v6207 = vcombine.low %v6200, %v6201
      %6210 = vst [vmem:[%s332] sm:$0xff] %v6206
      %6211 = vst [vmem:[%s332 + $0x8] sm:$0xff] %v6207
      %p6212 = scmp.lt.s32.totalorder %s20, 1
      %s6213 = scalar_select %p6212, %s20, 1
      %s6214 = smul.addr %s6213, 4
      %s6215 = smul.addr %s6214, 4
      %s6216 = scalar_lea.vmem %s9, %s6215
      // Predicated region
      $region57: #{depth_gating_forward.1} parent=55 // pred_check
        %p6217 = pneg %p232
      $region58: #{depth_gating_forward.1} parent=55 // pred_check_branch
        %6219 = sbr.rel (%p6217) target = $region60
      $region59: #{depth_gating_forward.1} parent=55 // pred_region
        _
      $region60: #{depth_gating_forward.1} parent=55 // pred_fallthru
        _
    $region56: #{depth_gating_forward.1} parent=5 // pred_fallthru
      _
    %p6220 = scmp.le.s32.totalorder 2, %s15
    // Predicated region
    $region61: #{depth_gating_forward.1} parent=5 // pred_check
      %p6221 = pneg %p6220
    $region62: #{depth_gating_forward.1} parent=5 // pred_check_branch
      %6223 = sbr.rel (%p6221) target = $region64
    $region63: #{depth_gating_forward.1} parent=5 // pred_region
      %s6224 = ssub.s32 %s15, 2
      // Predicated region
      $region65: #{depth_gating_forward.1} parent=63 // pred_check
        %p6225 = pneg %p238
      $region66: #{depth_gating_forward.1} parent=63 // pred_check_branch
        %6227 = sbr.rel (%p6225) target = $region68
      $region67: #{depth_gating_forward.1} parent=63 // pred_region
        %p6228 = scmp.lt.s32.totalorder %s21, 1
        %s6229 = scalar_select %p6228, %s21, 1
        %s6230 = smul.addr %s6229, 4
        %s6231 = smul.addr %s6230, 4
        %s6232 = scalar_lea.vmem %s9, %s6231
      $region68: #{depth_gating_forward.1} parent=63 // pred_fallthru
        _
    $region64: #{depth_gating_forward.1} parent=5 // pred_fallthru
      _
  $region6: #{depth_gating_forward.1} parent=0 // loop_footer
    %s19 = sadd.s32 1, %s15
  $region7: #{depth_gating_forward.1} parent=0 // loop_footer_branch
    %14 = sbr.rel target = $region3
  $region8: #{depth_gating_forward.1} parent=0 // loop_exit
    _

</llo_original>
